<compile_context>
chip_gen: v7x
topology: tpu7x:2x2x1
jax: 0.10.0
libtpu: 0.0.40
codegen_flags: <defaults>
</compile_context>

<pallas_src>
import functools

import jax
import jax.numpy as jnp
from jax.experimental import pallas as pl
from jax.experimental.pallas import tpu as pltpu


def _block_kernel(n_head, head_size, t_q, compute_dtype, exact_softmax,
                  x_ref,
                  ln1_g_ref, ln1_b_ref,
                  wq_ref, wkv_ref,
                  wproj_ref, bproj_ref,
                  ln2_g_ref, ln2_b_ref,
                  w1_ref, b1_ref, w2_ref, b2_ref,
                  o_ref,
                  k_sc, v_sc):
    eps = 1e-5
    cdt = compute_dtype
    nh, hd, TQ = n_head, head_size, t_q
    TK = TQ                                  # kv block size == q tile size
    C = nh * hd
    scale = hd ** -0.5
    qi = pl.program_id(1)

    def layernorm(v, g, b):                  # PyTorch LayerNorm (biased var, eps=1e-5)
        mu = jnp.mean(v, axis=-1, keepdims=True)
        var = jnp.mean((v - mu) ** 2, axis=-1, keepdims=True)
        return (v - mu) * jax.lax.rsqrt(var + eps) * g + b

    ln1_g = ln1_g_ref[...]                   # (1, C)
    ln1_b = ln1_b_ref[...]

    x_q = x_ref[0].astype(jnp.float32)       # (TQ, C) rows of this q tile
    xn_q = layernorm(x_q, ln1_g, ln1_b)      # (TQ, C)
    xn_c = xn_q.astype(cdt)

    # ---- K/V for *this* row block -> persistent VMEM cache (once per row block) ----
    kvb = jnp.dot(xn_c, wkv_ref[...], preferred_element_type=jnp.float32)   # (TQ, 2C)
    k_sc[qi] = kvb[:, :C].reshape(TQ, nh, hd).transpose(1, 0, 2).astype(cdt)  # (nh,TK,hd)
    v_sc[qi] = kvb[:, C:].reshape(TQ, nh, hd).transpose(1, 0, 2).astype(cdt)

    # ---- Q for this tile (softmax scale folded into q) ----
    q = jnp.dot(xn_c, wq_ref[...], preferred_element_type=jnp.float32) * scale
    q_h = q.reshape(TQ, nh, hd).transpose(1, 0, 2).astype(cdt)               # (nh,TQ,hd)

    # ---- causal flash attention over the qi+1 visible kv blocks (skip masked) ----
    q0 = qi * TQ

    def kv_step(j, carry):
        m_p, l_p, acc_p = carry
        k_blk = k_sc[j]                                                       # (nh,TK,hd)
        v_blk = v_sc[j]
        s = jnp.einsum('hqd,hkd->hqk', q_h, k_blk,
                       preferred_element_type=jnp.float32)                    # (nh,TQ,TK)
        rows = q0 + jax.lax.broadcasted_iota(jnp.int32, (1, TQ, TK), 1)
        cols = j * TK + jax.lax.broadcasted_iota(jnp.int32, (1, TQ, TK), 2)
        s = jnp.where(cols <= rows, s, -1e30)                                 # finite fill
        m_c = jnp.maximum(m_p, jnp.max(s, axis=-1, keepdims=True))
        alpha = jnp.exp(m_p - m_c)
        p = jnp.exp(s - m_c)
        l_c = alpha * l_p + jnp.sum(p, axis=-1, keepdims=True)
        acc_c = alpha * acc_p + jnp.einsum('hqk,hkd->hqd', p.astype(cdt), v_blk,
                                           preferred_element_type=jnp.float32)
        return m_c, l_c, acc_c

    carry0 = (jnp.full((nh, TQ, 1), -1e30, jnp.float32),
              jnp.zeros((nh, TQ, 1), jnp.float32),
              jnp.zeros((nh, TQ, hd), jnp.float32))
    _, l_i, acc = jax.lax.fori_loop(0, qi + 1, kv_step, carry0)

    if exact_softmax:
        out_h = acc / l_i                                                     # f32 path
    else:
        out_h = acc * pl.reciprocal(l_i, approx=True)                         # EUP vrcp
    att = out_h.transpose(1, 0, 2).reshape(TQ, C)                             # head concat
    att = jnp.dot(att.astype(cdt), wproj_ref[...],
                  preferred_element_type=jnp.float32) + bproj_ref[...]

    x1 = x_q + att                                                            # residual 1

    # ---- FeedForward: Linear(C,4C) -> ReLU -> Linear(4C,C) ----
    xn2 = layernorm(x1, ln2_g_ref[...], ln2_b_ref[...])
    h1 = jnp.dot(xn2.astype(cdt), w1_ref[...],
                 preferred_element_type=jnp.float32) + b1_ref[...]
    h1 = jnp.maximum(h1, 0.0)
    ff = jnp.dot(h1.astype(cdt), w2_ref[...],
                 preferred_element_type=jnp.float32) + b2_ref[...]

    o_ref[0] = (x1 + ff).astype(o_ref.dtype)                                  # residual 2


def _transformer_block(x, params, *, n_head, q_tile, compute_dtype, single_buffer):
    (ln1_g, ln1_b, wq, wk, wv, wproj, bproj,
     ln2_g, ln2_b, w1, b1, w2, b2) = params
    B, T, C = x.shape
    assert C % n_head == 0
    head_size = C // n_head
    TQ = min(q_tile, T)
    assert T % TQ == 0, "sequence length must be divisible by the q tile"
    n_blk = T // TQ
    cdt = compute_dtype
    exact = jnp.dtype(cdt) == jnp.dtype(jnp.float32)

    # Fuse K|V into one lane-dense right-multiply; cast matmul weights to the
    # MXU compute dtype (accumulation stays f32 inside the kernel).
    wkv = jnp.concatenate([wk, wv], axis=-1).astype(cdt)
    wq_c, wproj_c = wq.astype(cdt), wproj.astype(cdt)
    w1_c, w2_c = w1.astype(cdt), w2.astype(cdt)

    if single_buffer:
        # Constant-index operands are revisited every step: double buffering them
        # never overlaps anything, it only doubles VMEM -> single buffer.
        const = lambda shp: pl.BlockSpec(shp, lambda b, qi: (0,) * len(shp),
                                         pipeline_mode=pl.Buffered(1))
    else:
        const = lambda shp: pl.BlockSpec(shp, lambda b, qi: (0,) * len(shp))

    kernel = functools.partial(_block_kernel, n_head, head_size, TQ, cdt, exact)

    # ---- VMEM budget: size from the actual resident set, leave physical headroom ----
    csz = jnp.dtype(cdt).itemsize
    r8 = lambda n: ((n + 7) // 8) * 8
    r128 = lambda n: ((n + 127) // 128) * 128
    wbuf = 1 if single_buffer else 2
    need = (2 * r8(TQ) * r128(C) * 4                                   # x tile (2 bufs)
            + 2 * r8(TQ) * r128(C) * 4                                 # out tile (2 bufs)
            + wbuf * 12 * C * r128(C) * csz                            # matmul weights
            + 2 * n_blk * n_head * r8(TQ) * r128(head_size) * csz      # K/V cache
            + 2 * n_head * r8(TQ) * r128(TQ) * 4                       # scores / probs
            + 2 * n_head * r8(TQ) * r128(head_size) * 4                # attn accumulator
            + 2 * r8(TQ) * r128(4 * C) * 4                             # FFN hidden
            + (2 << 20))                                               # params + slack
    vmem_limit = max(int(need * 1.4), 32 << 20)
    try:
        phys = int(pltpu.get_tpu_info().vmem_capacity_bytes)
    except Exception:
        phys = 128 << 20
    vmem_limit = min(vmem_limit, phys * 7 // 8)                        # 56 MiB cap on v7x

    return pl.pallas_call(
        kernel,
        out_shape=jax.ShapeDtypeStruct((B, T, C), x.dtype),
        grid_spec=pltpu.PrefetchScalarGridSpec(
            num_scalar_prefetch=0,
            grid=(B, n_blk),                                            # q axis innermost
            in_specs=[
                pl.BlockSpec((1, TQ, C), lambda b, qi: (b, qi, 0)),     # x q-tile
                const((1, C)), const((1, C)),                           # ln1 gamma, beta
                const((C, C)), const((C, 2 * C)),                       # Wq, W[k|v] fused
                const((C, C)), const((1, C)),                           # proj W, b
                const((1, C)), const((1, C)),                           # ln2 gamma, beta
                const((C, 4 * C)), const((1, 4 * C)),                   # ff W1, b1
                const((4 * C, C)), const((1, C)),                       # ff W2, b2
            ],
            out_specs=pl.BlockSpec((1, TQ, C), lambda b, qi: (b, qi, 0)),
            scratch_shapes=[
                pltpu.VMEM((n_blk, n_head, TQ, head_size), cdt),        # K cache
                pltpu.VMEM((n_blk, n_head, TQ, head_size), cdt),        # V cache
            ],
        ),
        compiler_params=pltpu.CompilerParams(
            # The q axis carries the K/V cache -> must stay sequential ("arbitrary");
            # the batch axis still shards across the two TensorCores on v7x.
            dimension_semantics=("parallel", "arbitrary"),
            vmem_limit_bytes=int(vmem_limit),
        ),
    )(x, ln1_g, ln1_b, wq_c, wkv, wproj_c, bproj,
      ln2_g, ln2_b, w1_c, b1, w2_c, b2)


def transformer_block(x, params, *, n_head, q_tile=128, compute_dtype=jnp.bfloat16):
    try:
        out = _transformer_block(x, params, n_head=n_head, q_tile=q_tile,
                                 compute_dtype=compute_dtype, single_buffer=True)
        return jax.block_until_ready(out)
    except Exception:
        # Fallback if pl.Buffered(1) single-buffering is rejected by this jax build.
        out = _transformer_block(x, params, n_head=n_head, q_tile=q_tile,
                                 compute_dtype=compute_dtype, single_buffer=False)
        return jax.block_until_ready(out)


def _reference(x, params, *, n_head):
    """Pure-JAX f32 reference of the PyTorch Block.forward (dropout = identity)."""
    (ln1_g, ln1_b, wq, wk, wv, wproj, bproj,
     ln2_g, ln2_b, w1, b1, w2, b2) = params
    B, T, C = x.shape
    H = C // n_head
    eps = 1e-5

    def ln(v, g, b):
        mu = jnp.mean(v, -1, keepdims=True)
        var = jnp.mean((v - mu) ** 2, -1, keepdims=True)
        return (v - mu) / jnp.sqrt(var + eps) * g[0] + b[0]

    xn = ln(x, ln1_g, ln1_b)
    mask = jnp.tril(jnp.ones((T, T), bool))
    outs = []
    for h in range(n_head):
        sl = slice(h * H, (h + 1) * H)
        q, k, v = xn @ wq[:, sl], xn @ wk[:, sl], xn @ wv[:, sl]
        s = (q @ jnp.swapaxes(k, -1, -2)) * (H ** -0.5)
        s = jnp.where(mask, s, -jnp.inf)
        p = jax.nn.softmax(s, axis=-1)
        outs.append(p @ v)
    att = jnp.concatenate(outs, -1) @ wproj + bproj[0]
    x1 = x + att
    xn2 = ln(x1, ln2_g, ln2_b)
    ff = jnp.maximum(xn2 @ w1 + b1[0], 0.0) @ w2 + b2[0]
    return x1 + ff


if __name__ == "__main__":
    # Small shapes consistent with the module: B=2, T=block_size=16, n_embed=32, n_head=4
    B, T, C, n_head = 2, 16, 32, 4

    key = jax.random.PRNGKey(0)
    ks = jax.random.split(key, 16)
    s = 0.1
    params = (
        jnp.ones((1, C), jnp.float32),                              # ln1 gamma
        jnp.zeros((1, C), jnp.float32),                             # ln1 beta
        jax.random.normal(ks[1], (C, C), jnp.float32) * s,          # Wq (heads concat)
        jax.random.normal(ks[2], (C, C), jnp.float32) * s,          # Wk
        jax.random.normal(ks[3], (C, C), jnp.float32) * s,          # Wv
        jax.random.normal(ks[4], (C, C), jnp.float32) * s,          # proj W
        jax.random.normal(ks[5], (1, C), jnp.float32) * s,          # proj b
        jnp.ones((1, C), jnp.float32),                              # ln2 gamma
        jnp.zeros((1, C), jnp.float32),                             # ln2 beta
        jax.random.normal(ks[6], (C, 4 * C), jnp.float32) * s,      # ff W1
        jax.random.normal(ks[7], (1, 4 * C), jnp.float32) * s,      # ff b1
        jax.random.normal(ks[8], (4 * C, C), jnp.float32) * s,      # ff W2
        jax.random.normal(ks[9], (1, C), jnp.float32) * s,          # ff b2
    )

    x = jax.random.normal(ks[0], (B, T, C), jnp.float32)
    ref = _reference(x, params, n_head=n_head)

    # f32 compute path, single q-tile per batch: tight structural/semantic check.
    out_f32 = transformer_block(x, params, n_head=n_head, compute_dtype=jnp.float32)
    assert out_f32.shape == (B, T, C)
    assert jnp.allclose(out_f32, ref, atol=5e-3, rtol=5e-3), "f32 path mismatch"

    # f32, two q-tiles per batch: exercises the VMEM K/V cache carried across the
    # q axis, the online-softmax kv-block loop and causal block skipping.
    out_f32_t = transformer_block(x, params, n_head=n_head, q_tile=8,
                                  compute_dtype=jnp.float32)
    assert jnp.allclose(out_f32_t, ref, atol=5e-3, rtol=5e-3), "tiled f32 path mismatch"

    # bf16 MXU path (default): looser tolerance vs. the f32 reference.
    out_bf16 = transformer_block(x, params, n_head=n_head, q_tile=8,
                                 compute_dtype=jnp.bfloat16)
    assert out_bf16.shape == (B, T, C)
    assert jnp.allclose(out_bf16, ref, atol=5e-2, rtol=5e-2), "bf16 path mismatch"

    print("KERNEL_OK")
</pallas_src>

<mosaic_0001>
module attributes {stable_mosaic.version = 11 : i64} {
  func.func @_block_kernel(%arg0: i32, %arg1: i32, %arg2: memref<1x16x32xf32, #tpu.memory_space<vmem>>, %arg3: memref<1x32xf32, #tpu.memory_space<vmem>>, %arg4: memref<1x32xf32, #tpu.memory_space<vmem>>, %arg5: memref<32x32xf32, #tpu.memory_space<vmem>>, %arg6: memref<32x64xf32, #tpu.memory_space<vmem>>, %arg7: memref<32x32xf32, #tpu.memory_space<vmem>>, %arg8: memref<1x32xf32, #tpu.memory_space<vmem>>, %arg9: memref<1x32xf32, #tpu.memory_space<vmem>>, %arg10: memref<1x32xf32, #tpu.memory_space<vmem>>, %arg11: memref<32x128xf32, #tpu.memory_space<vmem>>, %arg12: memref<1x128xf32, #tpu.memory_space<vmem>>, %arg13: memref<128x32xf32, #tpu.memory_space<vmem>>, %arg14: memref<1x32xf32, #tpu.memory_space<vmem>>, %arg15: memref<1x16x32xf32, #tpu.memory_space<vmem>>, %arg16: memref<1x4x16x8xf32, #tpu.memory_space<vmem>>, %arg17: memref<1x4x16x8xf32, #tpu.memory_space<vmem>>) attributes {dimension_semantics = [#tpu.dimension_semantics<parallel>, #tpu.dimension_semantics<arbitrary>], iteration_bounds = array<i64: 2, 1>, scalar_prefetch = 0 : i64, scratch_operands = 2 : i64, tpu.core_type = #tpu.core_type<tc>, window_params = [{transform_indices = @transform_0, window_bounds = array<i64: 1, 16, 32>}, {pipeline_mode = #tpu.pipeline_mode<synchronous>, transform_indices = @transform_1, window_bounds = array<i64: 1, 32>}, {pipeline_mode = #tpu.pipeline_mode<synchronous>, transform_indices = @transform_2, window_bounds = array<i64: 1, 32>}, {pipeline_mode = #tpu.pipeline_mode<synchronous>, transform_indices = @transform_3, window_bounds = array<i64: 32, 32>}, {pipeline_mode = #tpu.pipeline_mode<synchronous>, transform_indices = @transform_4, window_bounds = array<i64: 32, 64>}, {pipeline_mode = #tpu.pipeline_mode<synchronous>, transform_indices = @transform_5, window_bounds = array<i64: 32, 32>}, {pipeline_mode = #tpu.pipeline_mode<synchronous>, transform_indices = @transform_6, window_bounds = array<i64: 1, 32>}, {pipeline_mode = #tpu.pipeline_mode<synchronous>, transform_indices = @transform_7, window_bounds = array<i64: 1, 32>}, {pipeline_mode = #tpu.pipeline_mode<synchronous>, transform_indices = @transform_8, window_bounds = array<i64: 1, 32>}, {pipeline_mode = #tpu.pipeline_mode<synchronous>, transform_indices = @transform_9, window_bounds = array<i64: 32, 128>}, {pipeline_mode = #tpu.pipeline_mode<synchronous>, transform_indices = @transform_10, window_bounds = array<i64: 1, 128>}, {pipeline_mode = #tpu.pipeline_mode<synchronous>, transform_indices = @transform_11, window_bounds = array<i64: 128, 32>}, {pipeline_mode = #tpu.pipeline_mode<synchronous>, transform_indices = @transform_12, window_bounds = array<i64: 1, 32>}, {transform_indices = @transform_13, window_bounds = array<i64: 1, 16, 32>}]} {
    %c0 = arith.constant 0 : index
    %c0_0 = arith.constant 0 : index
    %0 = vector.load %arg3[%c0, %c0_0] : memref<1x32xf32, #tpu.memory_space<vmem>>, vector<1x32xf32>
    %c0_1 = arith.constant 0 : index
    %c0_2 = arith.constant 0 : index
    %1 = vector.load %arg4[%c0_1, %c0_2] : memref<1x32xf32, #tpu.memory_space<vmem>>, vector<1x32xf32>
    %c0_3 = arith.constant 0 : index
    %c0_4 = arith.constant 0 : index
    %c0_5 = arith.constant 0 : index
    %2 = vector.load %arg2[%c0_3, %c0_4, %c0_5] : memref<1x16x32xf32, #tpu.memory_space<vmem>>, vector<1x16x32xf32>
    %3 = vector.shape_cast %2 : vector<1x16x32xf32> to vector<16x32xf32>
    %cst = arith.constant dense<0.000000e+00> : vector<16xf32>
    %4 = vector.multi_reduction <add>, %3, %cst [1] : vector<16x32xf32> to vector<16xf32>
    %5 = vector.shape_cast %4 : vector<16xf32> to vector<16x1xf32>
    %cst_6 = arith.constant 3.200000e+01 : f32
    %6 = vector.broadcast %cst_6 : f32 to vector<16x1xf32>
    %7 = arith.divf %5, %6 : vector<16x1xf32>
    %8 = vector.broadcast %7 : vector<16x1xf32> to vector<16x32xf32>
    %9 = arith.subf %3, %8 : vector<16x32xf32>
    %10 = arith.mulf %9, %9 : vector<16x32xf32>
    %cst_7 = arith.constant dense<0.000000e+00> : vector<16xf32>
    %11 = vector.multi_reduction <add>, %10, %cst_7 [1] : vector<16x32xf32> to vector<16xf32>
    %12 = vector.shape_cast %11 : vector<16xf32> to vector<16x1xf32>
    %cst_8 = arith.constant 3.200000e+01 : f32
    %13 = vector.broadcast %cst_8 : f32 to vector<16x1xf32>
    %14 = arith.divf %12, %13 : vector<16x1xf32>
    %15 = vector.broadcast %7 : vector<16x1xf32> to vector<16x32xf32>
    %16 = arith.subf %3, %15 : vector<16x32xf32>
    %cst_9 = arith.constant 9.99999974E-6 : f32
    %17 = vector.broadcast %cst_9 : f32 to vector<16x1xf32>
    %18 = arith.addf %14, %17 : vector<16x1xf32>
    %19 = math.rsqrt %18 : vector<16x1xf32>
    %20 = vector.broadcast %19 : vector<16x1xf32> to vector<16x32xf32>
    %21 = arith.mulf %16, %20 : vector<16x32xf32>
    %22 = vector.broadcast %0 : vector<1x32xf32> to vector<16x32xf32>
    %23 = arith.mulf %21, %22 : vector<16x32xf32>
    %24 = vector.broadcast %1 : vector<1x32xf32> to vector<16x32xf32>
    %25 = arith.addf %23, %24 : vector<16x32xf32>
    %c0_10 = arith.constant 0 : index
    %c0_11 = arith.constant 0 : index
    %26 = vector.load %arg6[%c0_10, %c0_11] : memref<32x64xf32, #tpu.memory_space<vmem>>, vector<32x64xf32>
    %cst_12 = arith.constant dense<0.000000e+00> : vector<16x64xf32>
    %27 = tpu.matmul %25, %26, %cst_12 {dimension_numbers = #tpu.dot_dimension_numbers<[1], [0], [0], [1], [0, 0, 1, 1], [], []>} : vector<16x32xf32>, vector<32x64xf32>, vector<16x64xf32> -> vector<16x64xf32>
    %28 = vector.extract_strided_slice %27 {offsets = [0, 0], sizes = [16, 32], strides = [1, 1]} : vector<16x64xf32> to vector<16x32xf32>
    %29 = vector.shape_cast %28 : vector<16x32xf32> to vector<16x4x8xf32>
    %30 = tpu.transpose %29, [1, 0, 2] : vector<16x4x8xf32> -> vector<4x16x8xf32>
    %31 = arith.index_cast %arg1 : i32 to index
    %c0_13 = arith.constant 0 : index
    %c0_14 = arith.constant 0 : index
    %c0_15 = arith.constant 0 : index
    %32 = vector.load %arg16[%31, %c0_13, %c0_14, %c0_15] : memref<1x4x16x8xf32, #tpu.memory_space<vmem>>, vector<1x4x16x8xf32>
    %33 = vector.shape_cast %32 : vector<1x4x16x8xf32> to vector<4x16x8xf32>
    %34 = vector.shape_cast %30 : vector<4x16x8xf32> to vector<1x4x16x8xf32>
    tpu.vector_store %arg16[%31, %c0_13, %c0_14, %c0_15], %34 {strides = array<i32>} : memref<1x4x16x8xf32, #tpu.memory_space<vmem>>, vector<1x4x16x8xf32>,
    %35 = vector.extract_strided_slice %27 {offsets = [0, 32], sizes = [16, 32], strides = [1, 1]} : vector<16x64xf32> to vector<16x32xf32>
    %36 = vector.shape_cast %35 : vector<16x32xf32> to vector<16x4x8xf32>
    %37 = tpu.transpose %36, [1, 0, 2] : vector<16x4x8xf32> -> vector<4x16x8xf32>
    %38 = arith.index_cast %arg1 : i32 to index
    %c0_16 = arith.constant 0 : index
    %c0_17 = arith.constant 0 : index
    %c0_18 = arith.constant 0 : index
    %39 = vector.load %arg17[%38, %c0_16, %c0_17, %c0_18] : memref<1x4x16x8xf32, #tpu.memory_space<vmem>>, vector<1x4x16x8xf32>
    %40 = vector.shape_cast %39 : vector<1x4x16x8xf32> to vector<4x16x8xf32>
    %41 = vector.shape_cast %37 : vector<4x16x8xf32> to vector<1x4x16x8xf32>
    tpu.vector_store %arg17[%38, %c0_16, %c0_17, %c0_18], %41 {strides = array<i32>} : memref<1x4x16x8xf32, #tpu.memory_space<vmem>>, vector<1x4x16x8xf32>,
    %c0_19 = arith.constant 0 : index
    %c0_20 = arith.constant 0 : index
    %42 = vector.load %arg5[%c0_19, %c0_20] : memref<32x32xf32, #tpu.memory_space<vmem>>, vector<32x32xf32>
    %cst_21 = arith.constant dense<0.000000e+00> : vector<16x32xf32>
    %43 = tpu.matmul %25, %42, %cst_21 {dimension_numbers = #tpu.dot_dimension_numbers<[1], [0], [0], [1], [0, 0, 1, 1], [], []>} : vector<16x32xf32>, vector<32x32xf32>, vector<16x32xf32> -> vector<16x32xf32>
    %cst_22 = arith.constant 0.353553385 : f32
    %44 = vector.broadcast %cst_22 : f32 to vector<16x32xf32>
    %45 = arith.mulf %43, %44 : vector<16x32xf32>
    %46 = vector.shape_cast %45 : vector<16x32xf32> to vector<16x4x8xf32>
    %47 = tpu.transpose %46, [1, 0, 2] : vector<16x4x8xf32> -> vector<4x16x8xf32>
    %c16_i32 = arith.constant 16 : i32
    %48 = arith.muli %arg1, %c16_i32 : i32
    %cst_23 = arith.constant -1.000000e+30 : f32
    %49 = vector.broadcast %cst_23 : f32 to vector<4x16x1xf32>
    %cst_24 = arith.constant 0.000000e+00 : f32
    %50 = vector.broadcast %cst_24 : f32 to vector<4x16x1xf32>
    %cst_25 = arith.constant 0.000000e+00 : f32
    %51 = vector.broadcast %cst_25 : f32 to vector<4x16x8xf32>
    %c1_i32 = arith.constant 1 : i32
    %52 = arith.addi %arg1, %c1_i32 : i32
    %c0_i32 = arith.constant 0 : i32
    %53 = arith.subi %52, %c0_i32 : i32
    %54 = arith.addi %c0_i32, %53 : i32
    %c1_i32_26 = arith.constant 1 : i32
    %55:3 = scf.for %arg18 = %c0_i32 to %54 step %c1_i32_26 iter_args(%arg19 = %49, %arg20 = %50, %arg21 = %51) -> (vector<4x16x1xf32>, vector<4x16x1xf32>, vector<4x16x8xf32>)  : i32 {
      %106 = arith.index_cast %arg18 : i32 to index
      %c0_55 = arith.constant 0 : index
      %c0_56 = arith.constant 0 : index
      %c0_57 = arith.constant 0 : index
      %107 = vector.load %arg16[%106, %c0_55, %c0_56, %c0_57] : memref<1x4x16x8xf32, #tpu.memory_space<vmem>>, vector<1x4x16x8xf32>
      %108 = vector.shape_cast %107 : vector<1x4x16x8xf32> to vector<4x16x8xf32>
      %109 = arith.index_cast %arg18 : i32 to index
      %c0_58 = arith.constant 0 : index
      %c0_59 = arith.constant 0 : index
      %c0_60 = arith.constant 0 : index
      %110 = vector.load %arg17[%109, %c0_58, %c0_59, %c0_60] : memref<1x4x16x8xf32, #tpu.memory_space<vmem>>, vector<1x4x16x8xf32>
      %111 = vector.shape_cast %110 : vector<1x4x16x8xf32> to vector<4x16x8xf32>
      "tpu.trace_start"() <{level = 10 : i32, message = "hqd,hkd->hqk"}> : () -> ()
      %cst_61 = arith.constant dense<0.000000e+00> : vector<4x16x16xf32>
      %112 = tpu.matmul %47, %108, %cst_61 {dimension_numbers = #tpu.dot_dimension_numbers<[2], [2], [1], [1], [0, 0, 0, 1, 1, 1], [0], [0]>} : vector<4x16x8xf32>, vector<4x16x8xf32>, vector<4x16x16xf32> -> vector<4x16x16xf32>
      "tpu.trace_stop"() : () -> ()
      %113 = tpu.iota {dimensions = array<i32: 1>} : vector<1x16x16xi32>
      %114 = vector.broadcast %48 : i32 to vector<1x16x16xi32>
      %115 = arith.addi %114, %113 : vector<1x16x16xi32>
      %c16_i32_62 = arith.constant 16 : i32
      %116 = arith.muli %arg18, %c16_i32_62 : i32
      %117 = tpu.iota {dimensions = array<i32: 2>} : vector<1x16x16xi32>
      %118 = vector.broadcast %116 : i32 to vector<1x16x16xi32>
      %119 = arith.addi %118, %117 : vector<1x16x16xi32>
      %120 = arith.cmpi sle, %119, %115 : vector<1x16x16xi32>
      %cst_63 = arith.constant -1.000000e+30 : f32
      %121 = vector.shape_cast %120 : vector<1x16x16xi1> to vector<1x16x16xi1>
      %122 = vector.broadcast %121 : vector<1x16x16xi1> to vector<4x16x16xi1>
      %123 = vector.broadcast %cst_63 : f32 to vector<4x16x16xf32>
      %124 = arith.select %122, %112, %123 : vector<4x16x16xi1>, vector<4x16x16xf32>
      %cst_64 = arith.constant dense<0xFF800000> : vector<4x16xf32>
      %125 = vector.multi_reduction <maximumf>, %124, %cst_64 [2] : vector<4x16x16xf32> to vector<4x16xf32>
      %126 = vector.shape_cast %125 : vector<4x16xf32> to vector<4x16x1xf32>
      %127 = arith.maximumf %arg19, %126 : vector<4x16x1xf32>
      %128 = arith.subf %arg19, %127 : vector<4x16x1xf32>
      %129 = math.exp %128 : vector<4x16x1xf32>
      %130 = vector.broadcast %127 : vector<4x16x1xf32> to vector<4x16x16xf32>
      %131 = arith.subf %124, %130 : vector<4x16x16xf32>
      %132 = math.exp %131 : vector<4x16x16xf32>
      %133 = arith.mulf %129, %arg20 : vector<4x16x1xf32>
      %cst_65 = arith.constant dense<0.000000e+00> : vector<4x16xf32>
      %134 = vector.multi_reduction <add>, %132, %cst_65 [2] : vector<4x16x16xf32> to vector<4x16xf32>
      %135 = vector.shape_cast %134 : vector<4x16xf32> to vector<4x16x1xf32>
      %136 = arith.addf %133, %135 : vector<4x16x1xf32>
      %137 = vector.broadcast %129 : vector<4x16x1xf32> to vector<4x16x8xf32>
      %138 = arith.mulf %137, %arg21 : vector<4x16x8xf32>
      "tpu.trace_start"() <{level = 10 : i32, message = "hqk,hkd->hqd"}> : () -> ()
      %cst_66 = arith.constant dense<0.000000e+00> : vector<4x16x8xf32>
      %139 = tpu.matmul %132, %111, %cst_66 {dimension_numbers = #tpu.dot_dimension_numbers<[2], [1], [1], [2], [0, 0, 0, 1, 1, 2], [0], [0]>} : vector<4x16x16xf32>, vector<4x16x8xf32>, vector<4x16x8xf32> -> vector<4x16x8xf32>
      "tpu.trace_stop"() : () -> ()
      %140 = arith.addf %138, %139 : vector<4x16x8xf32>
      scf.yield %127, %136, %140 : vector<4x16x1xf32>, vector<4x16x1xf32>, vector<4x16x8xf32>
    }
    %56 = vector.broadcast %55#1 : vector<4x16x1xf32> to vector<4x16x8xf32>
    %57 = arith.divf %55#2, %56 : vector<4x16x8xf32>
    %58 = tpu.transpose %57, [1, 0, 2] : vector<4x16x8xf32> -> vector<16x4x8xf32>
    %59 = vector.shape_cast %58 : vector<16x4x8xf32> to vector<16x32xf32>
    %c0_27 = arith.constant 0 : index
    %c0_28 = arith.constant 0 : index
    %60 = vector.load %arg7[%c0_27, %c0_28] : memref<32x32xf32, #tpu.memory_space<vmem>>, vector<32x32xf32>
    %cst_29 = arith.constant dense<0.000000e+00> : vector<16x32xf32>
    %61 = tpu.matmul %59, %60, %cst_29 {dimension_numbers = #tpu.dot_dimension_numbers<[1], [0], [0], [1], [0, 0, 1, 1], [], []>} : vector<16x32xf32>, vector<32x32xf32>, vector<16x32xf32> -> vector<16x32xf32>
    %c0_30 = arith.constant 0 : index
    %c0_31 = arith.constant 0 : index
    %62 = vector.load %arg8[%c0_30, %c0_31] : memref<1x32xf32, #tpu.memory_space<vmem>>, vector<1x32xf32>
    %63 = vector.broadcast %62 : vector<1x32xf32> to vector<16x32xf32>
    %64 = arith.addf %61, %63 : vector<16x32xf32>
    %65 = arith.addf %3, %64 : vector<16x32xf32>
    %c0_32 = arith.constant 0 : index
    %c0_33 = arith.constant 0 : index
    %66 = vector.load %arg9[%c0_32, %c0_33] : memref<1x32xf32, #tpu.memory_space<vmem>>, vector<1x32xf32>
    %c0_34 = arith.constant 0 : index
    %c0_35 = arith.constant 0 : index
    %67 = vector.load %arg10[%c0_34, %c0_35] : memref<1x32xf32, #tpu.memory_space<vmem>>, vector<1x32xf32>
    %cst_36 = arith.constant dense<0.000000e+00> : vector<16xf32>
    %68 = vector.multi_reduction <add>, %65, %cst_36 [1] : vector<16x32xf32> to vector<16xf32>
    %69 = vector.shape_cast %68 : vector<16xf32> to vector<16x1xf32>
    %cst_37 = arith.constant 3.200000e+01 : f32
    %70 = vector.broadcast %cst_37 : f32 to vector<16x1xf32>
    %71 = arith.divf %69, %70 : vector<16x1xf32>
    %72 = vector.broadcast %71 : vector<16x1xf32> to vector<16x32xf32>
    %73 = arith.subf %65, %72 : vector<16x32xf32>
    %74 = arith.mulf %73, %73 : vector<16x32xf32>
    %cst_38 = arith.constant dense<0.000000e+00> : vector<16xf32>
    %75 = vector.multi_reduction <add>, %74, %cst_38 [1] : vector<16x32xf32> to vector<16xf32>
    %76 = vector.shape_cast %75 : vector<16xf32> to vector<16x1xf32>
    %cst_39 = arith.constant 3.200000e+01 : f32
    %77 = vector.broadcast %cst_39 : f32 to vector<16x1xf32>
    %78 = arith.divf %76, %77 : vector<16x1xf32>
    %79 = vector.broadcast %71 : vector<16x1xf32> to vector<16x32xf32>
    %80 = arith.subf %65, %79 : vector<16x32xf32>
    %cst_40 = arith.constant 9.99999974E-6 : f32
    %81 = vector.broadcast %cst_40 : f32 to vector<16x1xf32>
    %82 = arith.addf %78, %81 : vector<16x1xf32>
    %83 = math.rsqrt %82 : vector<16x1xf32>
    %84 = vector.broadcast %83 : vector<16x1xf32> to vector<16x32xf32>
    %85 = arith.mulf %80, %84 : vector<16x32xf32>
    %86 = vector.broadcast %66 : vector<1x32xf32> to vector<16x32xf32>
    %87 = arith.mulf %85, %86 : vector<16x32xf32>
    %88 = vector.broadcast %67 : vector<1x32xf32> to vector<16x32xf32>
    %89 = arith.addf %87, %88 : vector<16x32xf32>
    %c0_41 = arith.constant 0 : index
    %c0_42 = arith.constant 0 : index
    %90 = vector.load %arg11[%c0_41, %c0_42] : memref<32x128xf32, #tpu.memory_space<vmem>>, vector<32x128xf32>
    %cst_43 = arith.constant dense<0.000000e+00> : vector<16x128xf32>
    %91 = tpu.matmul %89, %90, %cst_43 {dimension_numbers = #tpu.dot_dimension_numbers<[1], [0], [0], [1], [0, 0, 1, 1], [], []>} : vector<16x32xf32>, vector<32x128xf32>, vector<16x128xf32> -> vector<16x128xf32>
    %c0_44 = arith.constant 0 : index
    %c0_45 = arith.constant 0 : index
    %92 = vector.load %arg12[%c0_44, %c0_45] : memref<1x128xf32, #tpu.memory_space<vmem>>, vector<1x128xf32>
    %93 = vector.broadcast %92 : vector<1x128xf32> to vector<16x128xf32>
    %94 = arith.addf %91, %93 : vector<16x128xf32>
    %cst_46 = arith.constant 0.000000e+00 : f32
    %95 = vector.broadcast %cst_46 : f32 to vector<16x128xf32>
    %96 = arith.maximumf %94, %95 : vector<16x128xf32>
    %c0_47 = arith.constant 0 : index
    %c0_48 = arith.constant 0 : index
    %97 = vector.load %arg13[%c0_47, %c0_48] : memref<128x32xf32, #tpu.memory_space<vmem>>, vector<128x32xf32>
    %cst_49 = arith.constant dense<0.000000e+00> : vector<16x32xf32>
    %98 = tpu.matmul %96, %97, %cst_49 {dimension_numbers = #tpu.dot_dimension_numbers<[1], [0], [0], [1], [0, 0, 1, 1], [], []>} : vector<16x128xf32>, vector<128x32xf32>, vector<16x32xf32> -> vector<16x32xf32>
    %c0_50 = arith.constant 0 : index
    %c0_51 = arith.constant 0 : index
    %99 = vector.load %arg14[%c0_50, %c0_51] : memref<1x32xf32, #tpu.memory_space<vmem>>, vector<1x32xf32>
    %100 = vector.broadcast %99 : vector<1x32xf32> to vector<16x32xf32>
    %101 = arith.addf %98, %100 : vector<16x32xf32>
    %102 = arith.addf %65, %101 : vector<16x32xf32>
    %c0_52 = arith.constant 0 : index
    %c0_53 = arith.constant 0 : index
    %c0_54 = arith.constant 0 : index
    %103 = vector.load %arg15[%c0_52, %c0_53, %c0_54] : memref<1x16x32xf32, #tpu.memory_space<vmem>>, vector<1x16x32xf32>
    %104 = vector.shape_cast %103 : vector<1x16x32xf32> to vector<16x32xf32>
    %105 = vector.shape_cast %102 : vector<16x32xf32> to vector<1x16x32xf32>
    tpu.vector_store %arg15[%c0_52, %c0_53, %c0_54], %105 {strides = array<i32>} : memref<1x16x32xf32, #tpu.memory_space<vmem>>, vector<1x16x32xf32>,
    return
  }
  func.func @transform_0(%arg0: i32, %arg1: i32) -> (i32, i32, i32) {
    %c0_i32 = arith.constant 0 : i32
    %c0_i32_0 = arith.constant 0 : i32
    return %arg0, %arg1, %c0_i32 : i32, i32, i32
  }
  func.func @transform_1(%arg0: i32, %arg1: i32) -> (i32, i32) {
    %c0_i32 = arith.constant 0 : i32
    %c0_i32_0 = arith.constant 0 : i32
    %c0_i32_1 = arith.constant 0 : i32
    return %c0_i32, %c0_i32_0 : i32, i32
  }
  func.func @transform_2(%arg0: i32, %arg1: i32) -> (i32, i32) {
    %c0_i32 = arith.constant 0 : i32
    %c0_i32_0 = arith.constant 0 : i32
    %c0_i32_1 = arith.constant 0 : i32
    return %c0_i32, %c0_i32_0 : i32, i32
  }
  func.func @transform_3(%arg0: i32, %arg1: i32) -> (i32, i32) {
    %c0_i32 = arith.constant 0 : i32
    %c0_i32_0 = arith.constant 0 : i32
    %c0_i32_1 = arith.constant 0 : i32
    return %c0_i32, %c0_i32_0 : i32, i32
  }
  func.func @transform_4(%arg0: i32, %arg1: i32) -> (i32, i32) {
    %c0_i32 = arith.constant 0 : i32
    %c0_i32_0 = arith.constant 0 : i32
    %c0_i32_1 = arith.constant 0 : i32
    return %c0_i32, %c0_i32_0 : i32, i32
  }
  func.func @transform_5(%arg0: i32, %arg1: i32) -> (i32, i32) {
    %c0_i32 = arith.constant 0 : i32
    %c0_i32_0 = arith.constant 0 : i32
    %c0_i32_1 = arith.constant 0 : i32
    return %c0_i32, %c0_i32_0 : i32, i32
  }
  func.func @transform_6(%arg0: i32, %arg1: i32) -> (i32, i32) {
    %c0_i32 = arith.constant 0 : i32
    %c0_i32_0 = arith.constant 0 : i32
    %c0_i32_1 = arith.constant 0 : i32
    return %c0_i32, %c0_i32_0 : i32, i32
  }
  func.func @transform_7(%arg0: i32, %arg1: i32) -> (i32, i32) {
    %c0_i32 = arith.constant 0 : i32
    %c0_i32_0 = arith.constant 0 : i32
    %c0_i32_1 = arith.constant 0 : i32
    return %c0_i32, %c0_i32_0 : i32, i32
  }
  func.func @transform_8(%arg0: i32, %arg1: i32) -> (i32, i32) {
    %c0_i32 = arith.constant 0 : i32
    %c0_i32_0 = arith.constant 0 : i32
    %c0_i32_1 = arith.constant 0 : i32
    return %c0_i32, %c0_i32_0 : i32, i32
  }
  func.func @transform_9(%arg0: i32, %arg1: i32) -> (i32, i32) {
    %c0_i32 = arith.constant 0 : i32
    %c0_i32_0 = arith.constant 0 : i32
    %c0_i32_1 = arith.constant 0 : i32
    return %c0_i32, %c0_i32_0 : i32, i32
  }
  func.func @transform_10(%arg0: i32, %arg1: i32) -> (i32, i32) {
    %c0_i32 = arith.constant 0 : i32
    %c0_i32_0 = arith.constant 0 : i32
    %c0_i32_1 = arith.constant 0 : i32
    return %c0_i32, %c0_i32_0 : i32, i32
  }
  func.func @transform_11(%arg0: i32, %arg1: i32) -> (i32, i32) {
    %c0_i32 = arith.constant 0 : i32
    %c0_i32_0 = arith.constant 0 : i32
    %c0_i32_1 = arith.constant 0 : i32
    return %c0_i32, %c0_i32_0 : i32, i32
  }
  func.func @transform_12(%arg0: i32, %arg1: i32) -> (i32, i32) {
    %c0_i32 = arith.constant 0 : i32
    %c0_i32_0 = arith.constant 0 : i32
    %c0_i32_1 = arith.constant 0 : i32
    return %c0_i32, %c0_i32_0 : i32, i32
  }
  func.func @transform_13(%arg0: i32, %arg1: i32) -> (i32, i32, i32) {
    %c0_i32 = arith.constant 0 : i32
    %c0_i32_0 = arith.constant 0 : i32
    return %arg0, %arg1, %c0_i32 : i32, i32, i32
  }
}

module attributes {stable_mosaic.version = 11 : i64} {
  func.func @_block_kernel(%arg0: i32, %arg1: i32, %arg2: memref<1x16x32xf32, #tpu.memory_space<vmem>>, %arg3: memref<1x32xf32, #tpu.memory_space<vmem>>, %arg4: memref<1x32xf32, #tpu.memory_space<vmem>>, %arg5: memref<32x32xf32, #tpu.memory_space<vmem>>, %arg6: memref<32x64xf32, #tpu.memory_space<vmem>>, %arg7: memref<32x32xf32, #tpu.memory_space<vmem>>, %arg8: memref<1x32xf32, #tpu.memory_space<vmem>>, %arg9: memref<1x32xf32, #tpu.memory_space<vmem>>, %arg10: memref<1x32xf32, #tpu.memory_space<vmem>>, %arg11: memref<32x128xf32, #tpu.memory_space<vmem>>, %arg12: memref<1x128xf32, #tpu.memory_space<vmem>>, %arg13: memref<128x32xf32, #tpu.memory_space<vmem>>, %arg14: memref<1x32xf32, #tpu.memory_space<vmem>>, %arg15: memref<1x16x32xf32, #tpu.memory_space<vmem>>, %arg16: memref<1x4x16x8xf32, #tpu.memory_space<vmem>>, %arg17: memref<1x4x16x8xf32, #tpu.memory_space<vmem>>) attributes {dimension_semantics = [#tpu.dimension_semantics<parallel>, #tpu.dimension_semantics<arbitrary>], iteration_bounds = array<i64: 2, 1>, scalar_prefetch = 0 : i64, scratch_operands = 2 : i64, tpu.core_type = #tpu.core_type<tc>, window_params = [{transform_indices = @transform_0, window_bounds = array<i64: 1, 16, 32>}, {pipeline_mode = #tpu.pipeline_mode<synchronous>, transform_indices = @transform_1, window_bounds = array<i64: 1, 32>}, {pipeline_mode = #tpu.pipeline_mode<synchronous>, transform_indices = @transform_2, window_bounds = array<i64: 1, 32>}, {pipeline_mode = #tpu.pipeline_mode<synchronous>, transform_indices = @transform_3, window_bounds = array<i64: 32, 32>}, {pipeline_mode = #tpu.pipeline_mode<synchronous>, transform_indices = @transform_4, window_bounds = array<i64: 32, 64>}, {pipeline_mode = #tpu.pipeline_mode<synchronous>, transform_indices = @transform_5, window_bounds = array<i64: 32, 32>}, {pipeline_mode = #tpu.pipeline_mode<synchronous>, transform_indices = @transform_6, window_bounds = array<i64: 1, 32>}, {pipeline_mode = #tpu.pipeline_mode<synchronous>, transform_indices = @transform_7, window_bounds = array<i64: 1, 32>}, {pipeline_mode = #tpu.pipeline_mode<synchronous>, transform_indices = @transform_8, window_bounds = array<i64: 1, 32>}, {pipeline_mode = #tpu.pipeline_mode<synchronous>, transform_indices = @transform_9, window_bounds = array<i64: 32, 128>}, {pipeline_mode = #tpu.pipeline_mode<synchronous>, transform_indices = @transform_10, window_bounds = array<i64: 1, 128>}, {pipeline_mode = #tpu.pipeline_mode<synchronous>, transform_indices = @transform_11, window_bounds = array<i64: 128, 32>}, {pipeline_mode = #tpu.pipeline_mode<synchronous>, transform_indices = @transform_12, window_bounds = array<i64: 1, 32>}, {transform_indices = @transform_13, window_bounds = array<i64: 1, 16, 32>}]} {
    %c0 = arith.constant 0 : index
    %c0_0 = arith.constant 0 : index
    %0 = vector.load %arg3[%c0, %c0_0] : memref<1x32xf32, #tpu.memory_space<vmem>>, vector<1x32xf32>
    %c0_1 = arith.constant 0 : index
    %c0_2 = arith.constant 0 : index
    %1 = vector.load %arg4[%c0_1, %c0_2] : memref<1x32xf32, #tpu.memory_space<vmem>>, vector<1x32xf32>
    %c0_3 = arith.constant 0 : index
    %c0_4 = arith.constant 0 : index
    %c0_5 = arith.constant 0 : index
    %2 = vector.load %arg2[%c0_3, %c0_4, %c0_5] : memref<1x16x32xf32, #tpu.memory_space<vmem>>, vector<1x16x32xf32>
    %3 = vector.shape_cast %2 : vector<1x16x32xf32> to vector<16x32xf32>
    %cst = arith.constant dense<0.000000e+00> : vector<16xf32>
    %4 = vector.multi_reduction <add>, %3, %cst [1] : vector<16x32xf32> to vector<16xf32>
    %5 = vector.shape_cast %4 : vector<16xf32> to vector<16x1xf32>
    %cst_6 = arith.constant 3.200000e+01 : f32
    %6 = vector.broadcast %cst_6 : f32 to vector<16x1xf32>
    %7 = arith.divf %5, %6 : vector<16x1xf32>
    %8 = vector.broadcast %7 : vector<16x1xf32> to vector<16x32xf32>
    %9 = arith.subf %3, %8 : vector<16x32xf32>
    %10 = arith.mulf %9, %9 : vector<16x32xf32>
    %cst_7 = arith.constant dense<0.000000e+00> : vector<16xf32>
    %11 = vector.multi_reduction <add>, %10, %cst_7 [1] : vector<16x32xf32> to vector<16xf32>
    %12 = vector.shape_cast %11 : vector<16xf32> to vector<16x1xf32>
    %cst_8 = arith.constant 3.200000e+01 : f32
    %13 = vector.broadcast %cst_8 : f32 to vector<16x1xf32>
    %14 = arith.divf %12, %13 : vector<16x1xf32>
    %15 = vector.broadcast %7 : vector<16x1xf32> to vector<16x32xf32>
    %16 = arith.subf %3, %15 : vector<16x32xf32>
    %cst_9 = arith.constant 9.99999974E-6 : f32
    %17 = vector.broadcast %cst_9 : f32 to vector<16x1xf32>
    %18 = arith.addf %14, %17 : vector<16x1xf32>
    %19 = math.rsqrt %18 : vector<16x1xf32>
    %20 = vector.broadcast %19 : vector<16x1xf32> to vector<16x32xf32>
    %21 = arith.mulf %16, %20 : vector<16x32xf32>
    %22 = vector.broadcast %0 : vector<1x32xf32> to vector<16x32xf32>
    %23 = arith.mulf %21, %22 : vector<16x32xf32>
    %24 = vector.broadcast %1 : vector<1x32xf32> to vector<16x32xf32>
    %25 = arith.addf %23, %24 : vector<16x32xf32>
    %c0_10 = arith.constant 0 : index
    %c0_11 = arith.constant 0 : index
    %26 = vector.load %arg6[%c0_10, %c0_11] : memref<32x64xf32, #tpu.memory_space<vmem>>, vector<32x64xf32>
    %cst_12 = arith.constant dense<0.000000e+00> : vector<16x64xf32>
    %27 = tpu.matmul %25, %26, %cst_12 {dimension_numbers = #tpu.dot_dimension_numbers<[1], [0], [0], [1], [0, 0, 1, 1], [], []>} : vector<16x32xf32>, vector<32x64xf32>, vector<16x64xf32> -> vector<16x64xf32>
    %28 = vector.extract_strided_slice %27 {offsets = [0, 0], sizes = [16, 32], strides = [1, 1]} : vector<16x64xf32> to vector<16x32xf32>
    %29 = vector.shape_cast %28 : vector<16x32xf32> to vector<16x4x8xf32>
    %30 = tpu.transpose %29, [1, 0, 2] : vector<16x4x8xf32> -> vector<4x16x8xf32>
    %31 = arith.index_cast %arg1 : i32 to index
    %c0_13 = arith.constant 0 : index
    %c0_14 = arith.constant 0 : index
    %c0_15 = arith.constant 0 : index
    %32 = vector.load %arg16[%31, %c0_13, %c0_14, %c0_15] : memref<1x4x16x8xf32, #tpu.memory_space<vmem>>, vector<1x4x16x8xf32>
    %33 = vector.shape_cast %32 : vector<1x4x16x8xf32> to vector<4x16x8xf32>
    %34 = vector.shape_cast %30 : vector<4x16x8xf32> to vector<1x4x16x8xf32>
    tpu.vector_store %arg16[%31, %c0_13, %c0_14, %c0_15], %34 {strides = array<i32>} : memref<1x4x16x8xf32, #tpu.memory_space<vmem>>, vector<1x4x16x8xf32>,
    %35 = vector.extract_strided_slice %27 {offsets = [0, 32], sizes = [16, 32], strides = [1, 1]} : vector<16x64xf32> to vector<16x32xf32>
    %36 = vector.shape_cast %35 : vector<16x32xf32> to vector<16x4x8xf32>
    %37 = tpu.transpose %36, [1, 0, 2] : vector<16x4x8xf32> -> vector<4x16x8xf32>
    %38 = arith.index_cast %arg1 : i32 to index
    %c0_16 = arith.constant 0 : index
    %c0_17 = arith.constant 0 : index
    %c0_18 = arith.constant 0 : index
    %39 = vector.load %arg17[%38, %c0_16, %c0_17, %c0_18] : memref<1x4x16x8xf32, #tpu.memory_space<vmem>>, vector<1x4x16x8xf32>
    %40 = vector.shape_cast %39 : vector<1x4x16x8xf32> to vector<4x16x8xf32>
    %41 = vector.shape_cast %37 : vector<4x16x8xf32> to vector<1x4x16x8xf32>
    tpu.vector_store %arg17[%38, %c0_16, %c0_17, %c0_18], %41 {strides = array<i32>} : memref<1x4x16x8xf32, #tpu.memory_space<vmem>>, vector<1x4x16x8xf32>,
    %c0_19 = arith.constant 0 : index
    %c0_20 = arith.constant 0 : index
    %42 = vector.load %arg5[%c0_19, %c0_20] : memref<32x32xf32, #tpu.memory_space<vmem>>, vector<32x32xf32>
    %cst_21 = arith.constant dense<0.000000e+00> : vector<16x32xf32>
    %43 = tpu.matmul %25, %42, %cst_21 {dimension_numbers = #tpu.dot_dimension_numbers<[1], [0], [0], [1], [0, 0, 1, 1], [], []>} : vector<16x32xf32>, vector<32x32xf32>, vector<16x32xf32> -> vector<16x32xf32>
    %cst_22 = arith.constant 0.353553385 : f32
    %44 = vector.broadcast %cst_22 : f32 to vector<16x32xf32>
    %45 = arith.mulf %43, %44 : vector<16x32xf32>
    %46 = vector.shape_cast %45 : vector<16x32xf32> to vector<16x4x8xf32>
    %47 = tpu.transpose %46, [1, 0, 2] : vector<16x4x8xf32> -> vector<4x16x8xf32>
    %c16_i32 = arith.constant 16 : i32
    %48 = arith.muli %arg1, %c16_i32 : i32
    %cst_23 = arith.constant -1.000000e+30 : f32
    %49 = vector.broadcast %cst_23 : f32 to vector<4x16x1xf32>
    %cst_24 = arith.constant 0.000000e+00 : f32
    %50 = vector.broadcast %cst_24 : f32 to vector<4x16x1xf32>
    %cst_25 = arith.constant 0.000000e+00 : f32
    %51 = vector.broadcast %cst_25 : f32 to vector<4x16x8xf32>
    %c1_i32 = arith.constant 1 : i32
    %52 = arith.addi %arg1, %c1_i32 : i32
    %c0_i32 = arith.constant 0 : i32
    %53 = arith.subi %52, %c0_i32 : i32
    %54 = arith.addi %c0_i32, %53 : i32
    %c1_i32_26 = arith.constant 1 : i32
    %55:3 = scf.for %arg18 = %c0_i32 to %54 step %c1_i32_26 iter_args(%arg19 = %49, %arg20 = %50, %arg21 = %51) -> (vector<4x16x1xf32>, vector<4x16x1xf32>, vector<4x16x8xf32>)  : i32 {
      %106 = arith.index_cast %arg18 : i32 to index
      %c0_55 = arith.constant 0 : index
      %c0_56 = arith.constant 0 : index
      %c0_57 = arith.constant 0 : index
      %107 = vector.load %arg16[%106, %c0_55, %c0_56, %c0_57] : memref<1x4x16x8xf32, #tpu.memory_space<vmem>>, vector<1x4x16x8xf32>
      %108 = vector.shape_cast %107 : vector<1x4x16x8xf32> to vector<4x16x8xf32>
      %109 = arith.index_cast %arg18 : i32 to index
      %c0_58 = arith.constant 0 : index
      %c0_59 = arith.constant 0 : index
      %c0_60 = arith.constant 0 : index
      %110 = vector.load %arg17[%109, %c0_58, %c0_59, %c0_60] : memref<1x4x16x8xf32, #tpu.memory_space<vmem>>, vector<1x4x16x8xf32>
      %111 = vector.shape_cast %110 : vector<1x4x16x8xf32> to vector<4x16x8xf32>
      "tpu.trace_start"() <{level = 10 : i32, message = "hqd,hkd->hqk"}> : () -> ()
      %cst_61 = arith.constant dense<0.000000e+00> : vector<4x16x16xf32>
      %112 = tpu.matmul %47, %108, %cst_61 {dimension_numbers = #tpu.dot_dimension_numbers<[2], [2], [1], [1], [0, 0, 0, 1, 1, 1], [0], [0]>} : vector<4x16x8xf32>, vector<4x16x8xf32>, vector<4x16x16xf32> -> vector<4x16x16xf32>
      "tpu.trace_stop"() : () -> ()
      %113 = tpu.iota {dimensions = array<i32: 1>} : vector<1x16x16xi32>
      %114 = vector.broadcast %48 : i32 to vector<1x16x16xi32>
      %115 = arith.addi %114, %113 : vector<1x16x16xi32>
      %c16_i32_62 = arith.constant 16 : i32
      %116 = arith.muli %arg18, %c16_i32_62 : i32
      %117 = tpu.iota {dimensions = array<i32: 2>} : vector<1x16x16xi32>
      %118 = vector.broadcast %116 : i32 to vector<1x16x16xi32>
      %119 = arith.addi %118, %117 : vector<1x16x16xi32>
      %120 = arith.cmpi sle, %119, %115 : vector<1x16x16xi32>
      %cst_63 = arith.constant -1.000000e+30 : f32
      %121 = vector.shape_cast %120 : vector<1x16x16xi1> to vector<1x16x16xi1>
      %122 = vector.broadcast %121 : vector<1x16x16xi1> to vector<4x16x16xi1>
      %123 = vector.broadcast %cst_63 : f32 to vector<4x16x16xf32>
      %124 = arith.select %122, %112, %123 : vector<4x16x16xi1>, vector<4x16x16xf32>
      %cst_64 = arith.constant dense<0xFF800000> : vector<4x16xf32>
      %125 = vector.multi_reduction <maximumf>, %124, %cst_64 [2] : vector<4x16x16xf32> to vector<4x16xf32>
      %126 = vector.shape_cast %125 : vector<4x16xf32> to vector<4x16x1xf32>
      %127 = arith.maximumf %arg19, %126 : vector<4x16x1xf32>
      %128 = arith.subf %arg19, %127 : vector<4x16x1xf32>
      %129 = math.exp %128 : vector<4x16x1xf32>
      %130 = vector.broadcast %127 : vector<4x16x1xf32> to vector<4x16x16xf32>
      %131 = arith.subf %124, %130 : vector<4x16x16xf32>
      %132 = math.exp %131 : vector<4x16x16xf32>
      %133 = arith.mulf %129, %arg20 : vector<4x16x1xf32>
      %cst_65 = arith.constant dense<0.000000e+00> : vector<4x16xf32>
      %134 = vector.multi_reduction <add>, %132, %cst_65 [2] : vector<4x16x16xf32> to vector<4x16xf32>
      %135 = vector.shape_cast %134 : vector<4x16xf32> to vector<4x16x1xf32>
      %136 = arith.addf %133, %135 : vector<4x16x1xf32>
      %137 = vector.broadcast %129 : vector<4x16x1xf32> to vector<4x16x8xf32>
      %138 = arith.mulf %137, %arg21 : vector<4x16x8xf32>
      "tpu.trace_start"() <{level = 10 : i32, message = "hqk,hkd->hqd"}> : () -> ()
      %cst_66 = arith.constant dense<0.000000e+00> : vector<4x16x8xf32>
      %139 = tpu.matmul %132, %111, %cst_66 {dimension_numbers = #tpu.dot_dimension_numbers<[2], [1], [1], [2], [0, 0, 0, 1, 1, 2], [0], [0]>} : vector<4x16x16xf32>, vector<4x16x8xf32>, vector<4x16x8xf32> -> vector<4x16x8xf32>
      "tpu.trace_stop"() : () -> ()
      %140 = arith.addf %138, %139 : vector<4x16x8xf32>
      scf.yield %127, %136, %140 : vector<4x16x1xf32>, vector<4x16x1xf32>, vector<4x16x8xf32>
    }
    %56 = vector.broadcast %55#1 : vector<4x16x1xf32> to vector<4x16x8xf32>
    %57 = arith.divf %55#2, %56 : vector<4x16x8xf32>
    %58 = tpu.transpose %57, [1, 0, 2] : vector<4x16x8xf32> -> vector<16x4x8xf32>
    %59 = vector.shape_cast %58 : vector<16x4x8xf32> to vector<16x32xf32>
    %c0_27 = arith.constant 0 : index
    %c0_28 = arith.constant 0 : index
    %60 = vector.load %arg7[%c0_27, %c0_28] : memref<32x32xf32, #tpu.memory_space<vmem>>, vector<32x32xf32>
    %cst_29 = arith.constant dense<0.000000e+00> : vector<16x32xf32>
    %61 = tpu.matmul %59, %60, %cst_29 {dimension_numbers = #tpu.dot_dimension_numbers<[1], [0], [0], [1], [0, 0, 1, 1], [], []>} : vector<16x32xf32>, vector<32x32xf32>, vector<16x32xf32> -> vector<16x32xf32>
    %c0_30 = arith.constant 0 : index
    %c0_31 = arith.constant 0 : index
    %62 = vector.load %arg8[%c0_30, %c0_31] : memref<1x32xf32, #tpu.memory_space<vmem>>, vector<1x32xf32>
    %63 = vector.broadcast %62 : vector<1x32xf32> to vector<16x32xf32>
    %64 = arith.addf %61, %63 : vector<16x32xf32>
    %65 = arith.addf %3, %64 : vector<16x32xf32>
    %c0_32 = arith.constant 0 : index
    %c0_33 = arith.constant 0 : index
    %66 = vector.load %arg9[%c0_32, %c0_33] : memref<1x32xf32, #tpu.memory_space<vmem>>, vector<1x32xf32>
    %c0_34 = arith.constant 0 : index
    %c0_35 = arith.constant 0 : index
    %67 = vector.load %arg10[%c0_34, %c0_35] : memref<1x32xf32, #tpu.memory_space<vmem>>, vector<1x32xf32>
    %cst_36 = arith.constant dense<0.000000e+00> : vector<16xf32>
    %68 = vector.multi_reduction <add>, %65, %cst_36 [1] : vector<16x32xf32> to vector<16xf32>
    %69 = vector.shape_cast %68 : vector<16xf32> to vector<16x1xf32>
    %cst_37 = arith.constant 3.200000e+01 : f32
    %70 = vector.broadcast %cst_37 : f32 to vector<16x1xf32>
    %71 = arith.divf %69, %70 : vector<16x1xf32>
    %72 = vector.broadcast %71 : vector<16x1xf32> to vector<16x32xf32>
    %73 = arith.subf %65, %72 : vector<16x32xf32>
    %74 = arith.mulf %73, %73 : vector<16x32xf32>
    %cst_38 = arith.constant dense<0.000000e+00> : vector<16xf32>
    %75 = vector.multi_reduction <add>, %74, %cst_38 [1] : vector<16x32xf32> to vector<16xf32>
    %76 = vector.shape_cast %75 : vector<16xf32> to vector<16x1xf32>
    %cst_39 = arith.constant 3.200000e+01 : f32
    %77 = vector.broadcast %cst_39 : f32 to vector<16x1xf32>
    %78 = arith.divf %76, %77 : vector<16x1xf32>
    %79 = vector.broadcast %71 : vector<16x1xf32> to vector<16x32xf32>
    %80 = arith.subf %65, %79 : vector<16x32xf32>
    %cst_40 = arith.constant 9.99999974E-6 : f32
    %81 = vector.broadcast %cst_40 : f32 to vector<16x1xf32>
    %82 = arith.addf %78, %81 : vector<16x1xf32>
    %83 = math.rsqrt %82 : vector<16x1xf32>
    %84 = vector.broadcast %83 : vector<16x1xf32> to vector<16x32xf32>
    %85 = arith.mulf %80, %84 : vector<16x32xf32>
    %86 = vector.broadcast %66 : vector<1x32xf32> to vector<16x32xf32>
    %87 = arith.mulf %85, %86 : vector<16x32xf32>
    %88 = vector.broadcast %67 : vector<1x32xf32> to vector<16x32xf32>
    %89 = arith.addf %87, %88 : vector<16x32xf32>
    %c0_41 = arith.constant 0 : index
    %c0_42 = arith.constant 0 : index
    %90 = vector.load %arg11[%c0_41, %c0_42] : memref<32x128xf32, #tpu.memory_space<vmem>>, vector<32x128xf32>
    %cst_43 = arith.constant dense<0.000000e+00> : vector<16x128xf32>
    %91 = tpu.matmul %89, %90, %cst_43 {dimension_numbers = #tpu.dot_dimension_numbers<[1], [0], [0], [1], [0, 0, 1, 1], [], []>} : vector<16x32xf32>, vector<32x128xf32>, vector<16x128xf32> -> vector<16x128xf32>
    %c0_44 = arith.constant 0 : index
    %c0_45 = arith.constant 0 : index
    %92 = vector.load %arg12[%c0_44, %c0_45] : memref<1x128xf32, #tpu.memory_space<vmem>>, vector<1x128xf32>
    %93 = vector.broadcast %92 : vector<1x128xf32> to vector<16x128xf32>
    %94 = arith.addf %91, %93 : vector<16x128xf32>
    %cst_46 = arith.constant 0.000000e+00 : f32
    %95 = vector.broadcast %cst_46 : f32 to vector<16x128xf32>
    %96 = arith.maximumf %94, %95 : vector<16x128xf32>
    %c0_47 = arith.constant 0 : index
    %c0_48 = arith.constant 0 : index
    %97 = vector.load %arg13[%c0_47, %c0_48] : memref<128x32xf32, #tpu.memory_space<vmem>>, vector<128x32xf32>
    %cst_49 = arith.constant dense<0.000000e+00> : vector<16x32xf32>
    %98 = tpu.matmul %96, %97, %cst_49 {dimension_numbers = #tpu.dot_dimension_numbers<[1], [0], [0], [1], [0, 0, 1, 1], [], []>} : vector<16x128xf32>, vector<128x32xf32>, vector<16x32xf32> -> vector<16x32xf32>
    %c0_50 = arith.constant 0 : index
    %c0_51 = arith.constant 0 : index
    %99 = vector.load %arg14[%c0_50, %c0_51] : memref<1x32xf32, #tpu.memory_space<vmem>>, vector<1x32xf32>
    %100 = vector.broadcast %99 : vector<1x32xf32> to vector<16x32xf32>
    %101 = arith.addf %98, %100 : vector<16x32xf32>
    %102 = arith.addf %65, %101 : vector<16x32xf32>
    %c0_52 = arith.constant 0 : index
    %c0_53 = arith.constant 0 : index
    %c0_54 = arith.constant 0 : index
    %103 = vector.load %arg15[%c0_52, %c0_53, %c0_54] : memref<1x16x32xf32, #tpu.memory_space<vmem>>, vector<1x16x32xf32>
    %104 = vector.shape_cast %103 : vector<1x16x32xf32> to vector<16x32xf32>
    %105 = vector.shape_cast %102 : vector<16x32xf32> to vector<1x16x32xf32>
    tpu.vector_store %arg15[%c0_52, %c0_53, %c0_54], %105 {strides = array<i32>} : memref<1x16x32xf32, #tpu.memory_space<vmem>>, vector<1x16x32xf32>,
    return
  }
  func.func @transform_0(%arg0: i32, %arg1: i32) -> (i32, i32, i32) {
    %c0_i32 = arith.constant 0 : i32
    %c0_i32_0 = arith.constant 0 : i32
    return %arg0, %arg1, %c0_i32 : i32, i32, i32
  }
  func.func @transform_1(%arg0: i32, %arg1: i32) -> (i32, i32) {
    %c0_i32 = arith.constant 0 : i32
    %c0_i32_0 = arith.constant 0 : i32
    %c0_i32_1 = arith.constant 0 : i32
    return %c0_i32, %c0_i32_0 : i32, i32
  }
  func.func @transform_2(%arg0: i32, %arg1: i32) -> (i32, i32) {
    %c0_i32 = arith.constant 0 : i32
    %c0_i32_0 = arith.constant 0 : i32
    %c0_i32_1 = arith.constant 0 : i32
    return %c0_i32, %c0_i32_0 : i32, i32
  }
  func.func @transform_3(%arg0: i32, %arg1: i32) -> (i32, i32) {
    %c0_i32 = arith.constant 0 : i32
    %c0_i32_0 = arith.constant 0 : i32
    %c0_i32_1 = arith.constant 0 : i32
    return %c0_i32, %c0_i32_0 : i32, i32
  }
  func.func @transform_4(%arg0: i32, %arg1: i32) -> (i32, i32) {
    %c0_i32 = arith.constant 0 : i32
    %c0_i32_0 = arith.constant 0 : i32
    %c0_i32_1 = arith.constant 0 : i32
    return %c0_i32, %c0_i32_0 : i32, i32
  }
  func.func @transform_5(%arg0: i32, %arg1: i32) -> (i32, i32) {
    %c0_i32 = arith.constant 0 : i32
    %c0_i32_0 = arith.constant 0 : i32
    %c0_i32_1 = arith.constant 0 : i32
    return %c0_i32, %c0_i32_0 : i32, i32
  }
  func.func @transform_6(%arg0: i32, %arg1: i32) -> (i32, i32) {
    %c0_i32 = arith.constant 0 : i32
    %c0_i32_0 = arith.constant 0 : i32
    %c0_i32_1 = arith.constant 0 : i32
    return %c0_i32, %c0_i32_0 : i32, i32
  }
  func.func @transform_7(%arg0: i32, %arg1: i32) -> (i32, i32) {
    %c0_i32 = arith.constant 0 : i32
    %c0_i32_0 = arith.constant 0 : i32
    %c0_i32_1 = arith.constant 0 : i32
    return %c0_i32, %c0_i32_0 : i32, i32
  }
  func.func @transform_8(%arg0: i32, %arg1: i32) -> (i32, i32) {
    %c0_i32 = arith.constant 0 : i32
    %c0_i32_0 = arith.constant 0 : i32
    %c0_i32_1 = arith.constant 0 : i32
    return %c0_i32, %c0_i32_0 : i32, i32
  }
  func.func @transform_9(%arg0: i32, %arg1: i32) -> (i32, i32) {
    %c0_i32 = arith.constant 0 : i32
    %c0_i32_0 = arith.constant 0 : i32
    %c0_i32_1 = arith.constant 0 : i32
    return %c0_i32, %c0_i32_0 : i32, i32
  }
  func.func @transform_10(%arg0: i32, %arg1: i32) -> (i32, i32) {
    %c0_i32 = arith.constant 0 : i32
    %c0_i32_0 = arith.constant 0 : i32
    %c0_i32_1 = arith.constant 0 : i32
    return %c0_i32, %c0_i32_0 : i32, i32
  }
  func.func @transform_11(%arg0: i32, %arg1: i32) -> (i32, i32) {
    %c0_i32 = arith.constant 0 : i32
    %c0_i32_0 = arith.constant 0 : i32
    %c0_i32_1 = arith.constant 0 : i32
    return %c0_i32, %c0_i32_0 : i32, i32
  }
  func.func @transform_12(%arg0: i32, %arg1: i32) -> (i32, i32) {
    %c0_i32 = arith.constant 0 : i32
    %c0_i32_0 = arith.constant 0 : i32
    %c0_i32_1 = arith.constant 0 : i32
    return %c0_i32, %c0_i32_0 : i32, i32
  }
  func.func @transform_13(%arg0: i32, %arg1: i32) -> (i32, i32, i32) {
    %c0_i32 = arith.constant 0 : i32
    %c0_i32_0 = arith.constant 0 : i32
    return %arg0, %arg1, %c0_i32 : i32, i32, i32
  }
}

</mosaic_0001>

<llo_original>
// kernel: tpu_custom_call.1
$region0: #{tpu_custom_call.1}
  #allocation0 [shape = 'u32[]', space=smem, size = 0x4, offset = 0x4, fixed_abs, tag = 'smem constant byte address 0x4 - core index']
  #allocation1 [shape = 'u32[144,128]{1,0:T(1,128)}', space=vmem, size = 0x12000, scoped, tag = 'internal scratch']
  #allocation2 [shape = 'f32[1,4,16,8]{3,2,1,0:T(8,128)}', space=vmem, size = 0x8000, scoped, tag = 'scratch operand']
  #allocation3 [shape = 'f32[1,4,16,8]{3,2,1,0:T(8,128)}', space=vmem, size = 0x8000, scoped, tag = 'scratch operand']
  %s0 = inlined_call_operand.vmem [shape: f32[2,16,32], index: 0, kind: input, shape index: {}]
  %s1 = inlined_call_operand.vmem [shape: f32[1,32], index: 1, kind: input, shape index: {}]
  %s2 = inlined_call_operand.vmem [shape: f32[1,32], index: 2, kind: input, shape index: {}]
  %s3 = inlined_call_operand.vmem [shape: f32[32,32], index: 3, kind: input, shape index: {}]
  %s4 = inlined_call_operand.vmem [shape: f32[32,64], index: 4, kind: input, shape index: {}]
  %s5 = inlined_call_operand.vmem [shape: f32[32,32], index: 5, kind: input, shape index: {}]
  %s6 = inlined_call_operand.vmem [shape: f32[1,32], index: 6, kind: input, shape index: {}]
  %s7 = inlined_call_operand.vmem [shape: f32[1,32], index: 7, kind: input, shape index: {}]
  %s8 = inlined_call_operand.vmem [shape: f32[1,32], index: 8, kind: input, shape index: {}]
  %s9 = inlined_call_operand.vmem [shape: f32[32,128], index: 9, kind: input, shape index: {}]
  %s10 = inlined_call_operand.vmem [shape: f32[1,128], index: 10, kind: input, shape index: {}]
  %s11 = inlined_call_operand.vmem [shape: f32[128,32], index: 11, kind: input, shape index: {}]
  %s12 = inlined_call_operand.vmem [shape: f32[1,32], index: 12, kind: input, shape index: {}]
  %s13 = inlined_call_operand.hbm [shape: f32[2,16,32], index: 13, kind: output, shape index: {}]
  %s14 = sld [smem:[#allocation0]]
  $region92: #{tpu_custom_call.1} parent=0
    _
  %s16 = ssub.s32 1, %s14
  %s17 = scalar_select 0, %s16, %s14
  $region1: #{tpu_custom_call.1} parent=0
    #allocation4 [shape = 'u8[16384]{0}', space=vmem, size = 0x4000, scoped, tag = 'output window, operand 0']
    #allocation5 [shape = 's32[2]{0}', space=sflag, size = 0x8, scoped, tag = 'scoped memory for tpu_custom_call.1']
    %18 = vsyncpa [#allocation5], 0
    %s19 = scalar_lea.sflag [#allocation5], 1
    %20 = vsyncpa %s19, 0
    loop: start=0, step=1, limit=4
    $region2: #{tpu_custom_call.1} parent=1 // loop_pre_header
      _
    $region3: #{tpu_custom_call.1} parent=1 // loop_header
      %s22 = sphi 0, %s26
      %p23 = scmp.ge.s32.totalorder %s22, 4
      %s29 = sphi 0, %s41
      %s30 = sphi 0, %s37
      %s31 = sphi 0, %s29
      %s32 = sphi 0, %s30
      %s33 = sphi 0, %s31
      %s34 = sphi 0, %s32
      %s46 = sphi 0, %s48
      %s49 = sphi 0, %s46
      %s50 = sphi 0, %s49
      %s66 = sphi 0, %s50
      %s70 = sphi 0, %s70
      %s72 = sphi 0, %s70
      %s73 = sphi 0, %s72
      %s87 = sphi 0, %s73
      %s91 = sphi 0, %s91
      %s93 = sphi 0, %s91
      %s94 = sphi 0, %s93
      %s108 = sphi 0, %s94
      %s112 = sphi 0, %s112
      %s114 = sphi 0, %s112
      %s115 = sphi 0, %s114
      %s129 = sphi 0, %s115
      %s133 = sphi 0, %s133
      %s135 = sphi 0, %s133
      %s136 = sphi 0, %s135
      %s150 = sphi 0, %s136
      %s154 = sphi 0, %s154
      %s156 = sphi 0, %s154
      %s157 = sphi 0, %s156
      %s171 = sphi 0, %s157
      %s175 = sphi 0, %s175
      %s177 = sphi 0, %s175
      %s178 = sphi 0, %s177
      %s192 = sphi 0, %s178
      %s196 = sphi 0, %s196
      %s198 = sphi 0, %s196
      %s199 = sphi 0, %s198
      %s213 = sphi 0, %s199
      %s217 = sphi 0, %s217
      %s219 = sphi 0, %s217
      %s220 = sphi 0, %s219
      %s234 = sphi 0, %s220
      %s238 = sphi 0, %s238
      %s240 = sphi 0, %s238
      %s241 = sphi 0, %s240
      %s255 = sphi 0, %s241
      %s259 = sphi 0, %s259
      %s261 = sphi 0, %s259
      %s262 = sphi 0, %s261
      %s276 = sphi 0, %s262
      %s280 = sphi 0, %s280
      %s282 = sphi 0, %s280
      %s283 = sphi 0, %s282
      %s297 = sphi 0, %s283
      %s301 = sphi 0, %s301
      %s303 = sphi 0, %s301
      %s304 = sphi 0, %s303
      %s318 = sphi 0, %s304
      %s326 = sphi 0, %s328
      %s329 = sphi 0, %s326
      %s330 = sphi 0, %s329
      %s346 = sphi 0, %s330
    $region4: #{tpu_custom_call.1} parent=1 // loop_header_branch
      %25 = sbr.rel (%p23) target = $region8
    $region5: #{tpu_custom_call.1} parent=1 // loop_body
      %s27 = ssub.s32 %s22, 1
      %s28 = ssub.s32 %s22, 2
      %s35 = sadd.s32 1, %s30
      %p36 = scmp.ge.s32.totalorder %s35, 1
      %s37 = scalar_select %p36, 0, %s35
      %s38 = sadd.s32 1, %s29
      %s39 = scalar_select %p36, %s38, %s29
      %p40 = scmp.ge.s32.totalorder %s39, 2
      %s41 = scalar_select %p40, 0, %s39
      %s42 = ssub.s32 %s29, %s41
      %s43 = ssub.s32 %s30, %s37
      %s44 = sor.u32 %s42, %s43
      %p45 = scmp.eq.s32.totalorder %s44, 0
      %s47 = sadd.s32 %s46, 1
      %s48 = scalar_select %p45, %s46, %s47
      %p51 = pneg %p45
      %p52 = scmp.eq.s32.totalorder %s22, 1
      %p53 = por %p51, %p52
      %p54 = scmp.ne.s32.totalorder %s46, %s49
      %p55 = scmp.eq.s32.totalorder %s22, 0
      %p56 = por %p54, %p55
      %p57 = scmp.ne.s32.totalorder %s46, %s49
      %p58 = scmp.eq.s32.totalorder %s27, 1
      %p59 = por %p57, %p58
      %p60 = scmp.ne.s32.totalorder %s49, %s50
      %p61 = scmp.eq.s32.totalorder %s27, 0
      %p62 = por %p60, %p61
      %p63 = scmp.ne.s32.totalorder %s49, %s50
      %p64 = scmp.eq.s32.totalorder %s28, 1
      %p65 = por %p63, %p64
      %p67 = scmp.ne.s32.totalorder %s50, %s66
      %p68 = scmp.eq.s32.totalorder %s28, 0
      %p69 = por %p67, %p68
      %s71 = sadd.s32 %s70, 1
      %p74 = scmp.eq.s32.totalorder %s22, 1
      %p75 = scmp.ne.s32.totalorder %s70, %s72
      %p76 = scmp.eq.s32.totalorder %s22, 0
      %p77 = por %p75, %p76
      %p78 = scmp.ne.s32.totalorder %s70, %s72
      %p79 = scmp.eq.s32.totalorder %s27, 1
      %p80 = por %p78, %p79
      %p81 = scmp.ne.s32.totalorder %s72, %s73
      %p82 = scmp.eq.s32.totalorder %s27, 0
      %p83 = por %p81, %p82
      %p84 = scmp.ne.s32.totalorder %s72, %s73
      %p85 = scmp.eq.s32.totalorder %s28, 1
      %p86 = por %p84, %p85
      %p88 = scmp.ne.s32.totalorder %s73, %s87
      %p89 = scmp.eq.s32.totalorder %s28, 0
      %p90 = por %p88, %p89
      %s92 = sadd.s32 %s91, 1
      %p95 = scmp.eq.s32.totalorder %s22, 1
      %p96 = scmp.ne.s32.totalorder %s91, %s93
      %p97 = scmp.eq.s32.totalorder %s22, 0
      %p98 = por %p96, %p97
      %p99 = scmp.ne.s32.totalorder %s91, %s93
      %p100 = scmp.eq.s32.totalorder %s27, 1
      %p101 = por %p99, %p100
      %p102 = scmp.ne.s32.totalorder %s93, %s94
      %p103 = scmp.eq.s32.totalorder %s27, 0
      %p104 = por %p102, %p103
      %p105 = scmp.ne.s32.totalorder %s93, %s94
      %p106 = scmp.eq.s32.totalorder %s28, 1
      %p107 = por %p105, %p106
      %p109 = scmp.ne.s32.totalorder %s94, %s108
      %p110 = scmp.eq.s32.totalorder %s28, 0
      %p111 = por %p109, %p110
      %s113 = sadd.s32 %s112, 1
      %p116 = scmp.eq.s32.totalorder %s22, 1
      %p117 = scmp.ne.s32.totalorder %s112, %s114
      %p118 = scmp.eq.s32.totalorder %s22, 0
      %p119 = por %p117, %p118
      %p120 = scmp.ne.s32.totalorder %s112, %s114
      %p121 = scmp.eq.s32.totalorder %s27, 1
      %p122 = por %p120, %p121
      %p123 = scmp.ne.s32.totalorder %s114, %s115
      %p124 = scmp.eq.s32.totalorder %s27, 0
      %p125 = por %p123, %p124
      %p126 = scmp.ne.s32.totalorder %s114, %s115
      %p127 = scmp.eq.s32.totalorder %s28, 1
      %p128 = por %p126, %p127
      %p130 = scmp.ne.s32.totalorder %s115, %s129
      %p131 = scmp.eq.s32.totalorder %s28, 0
      %p132 = por %p130, %p131
      %s134 = sadd.s32 %s133, 1
      %p137 = scmp.eq.s32.totalorder %s22, 1
      %p138 = scmp.ne.s32.totalorder %s133, %s135
      %p139 = scmp.eq.s32.totalorder %s22, 0
      %p140 = por %p138, %p139
      %p141 = scmp.ne.s32.totalorder %s133, %s135
      %p142 = scmp.eq.s32.totalorder %s27, 1
      %p143 = por %p141, %p142
      %p144 = scmp.ne.s32.totalorder %s135, %s136
      %p145 = scmp.eq.s32.totalorder %s27, 0
      %p146 = por %p144, %p145
      %p147 = scmp.ne.s32.totalorder %s135, %s136
      %p148 = scmp.eq.s32.totalorder %s28, 1
      %p149 = por %p147, %p148
      %p151 = scmp.ne.s32.totalorder %s136, %s150
      %p152 = scmp.eq.s32.totalorder %s28, 0
      %p153 = por %p151, %p152
      %s155 = sadd.s32 %s154, 1
      %p158 = scmp.eq.s32.totalorder %s22, 1
      %p159 = scmp.ne.s32.totalorder %s154, %s156
      %p160 = scmp.eq.s32.totalorder %s22, 0
      %p161 = por %p159, %p160
      %p162 = scmp.ne.s32.totalorder %s154, %s156
      %p163 = scmp.eq.s32.totalorder %s27, 1
      %p164 = por %p162, %p163
      %p165 = scmp.ne.s32.totalorder %s156, %s157
      %p166 = scmp.eq.s32.totalorder %s27, 0
      %p167 = por %p165, %p166
      %p168 = scmp.ne.s32.totalorder %s156, %s157
      %p169 = scmp.eq.s32.totalorder %s28, 1
      %p170 = por %p168, %p169
      %p172 = scmp.ne.s32.totalorder %s157, %s171
      %p173 = scmp.eq.s32.totalorder %s28, 0
      %p174 = por %p172, %p173
      %s176 = sadd.s32 %s175, 1
      %p179 = scmp.eq.s32.totalorder %s22, 1
      %p180 = scmp.ne.s32.totalorder %s175, %s177
      %p181 = scmp.eq.s32.totalorder %s22, 0
      %p182 = por %p180, %p181
      %p183 = scmp.ne.s32.totalorder %s175, %s177
      %p184 = scmp.eq.s32.totalorder %s27, 1
      %p185 = por %p183, %p184
      %p186 = scmp.ne.s32.totalorder %s177, %s178
      %p187 = scmp.eq.s32.totalorder %s27, 0
      %p188 = por %p186, %p187
      %p189 = scmp.ne.s32.totalorder %s177, %s178
      %p190 = scmp.eq.s32.totalorder %s28, 1
      %p191 = por %p189, %p190
      %p193 = scmp.ne.s32.totalorder %s178, %s192
      %p194 = scmp.eq.s32.totalorder %s28, 0
      %p195 = por %p193, %p194
      %s197 = sadd.s32 %s196, 1
      %p200 = scmp.eq.s32.totalorder %s22, 1
      %p201 = scmp.ne.s32.totalorder %s196, %s198
      %p202 = scmp.eq.s32.totalorder %s22, 0
      %p203 = por %p201, %p202
      %p204 = scmp.ne.s32.totalorder %s196, %s198
      %p205 = scmp.eq.s32.totalorder %s27, 1
      %p206 = por %p204, %p205
      %p207 = scmp.ne.s32.totalorder %s198, %s199
      %p208 = scmp.eq.s32.totalorder %s27, 0
      %p209 = por %p207, %p208
      %p210 = scmp.ne.s32.totalorder %s198, %s199
      %p211 = scmp.eq.s32.totalorder %s28, 1
      %p212 = por %p210, %p211
      %p214 = scmp.ne.s32.totalorder %s199, %s213
      %p215 = scmp.eq.s32.totalorder %s28, 0
      %p216 = por %p214, %p215
      %s218 = sadd.s32 %s217, 1
      %p221 = scmp.eq.s32.totalorder %s22, 1
      %p222 = scmp.ne.s32.totalorder %s217, %s219
      %p223 = scmp.eq.s32.totalorder %s22, 0
      %p224 = por %p222, %p223
      %p225 = scmp.ne.s32.totalorder %s217, %s219
      %p226 = scmp.eq.s32.totalorder %s27, 1
      %p227 = por %p225, %p226
      %p228 = scmp.ne.s32.totalorder %s219, %s220
      %p229 = scmp.eq.s32.totalorder %s27, 0
      %p230 = por %p228, %p229
      %p231 = scmp.ne.s32.totalorder %s219, %s220
      %p232 = scmp.eq.s32.totalorder %s28, 1
      %p233 = por %p231, %p232
      %p235 = scmp.ne.s32.totalorder %s220, %s234
      %p236 = scmp.eq.s32.totalorder %s28, 0
      %p237 = por %p235, %p236
      %s239 = sadd.s32 %s238, 1
      %p242 = scmp.eq.s32.totalorder %s22, 1
      %p243 = scmp.ne.s32.totalorder %s238, %s240
      %p244 = scmp.eq.s32.totalorder %s22, 0
      %p245 = por %p243, %p244
      %p246 = scmp.ne.s32.totalorder %s238, %s240
      %p247 = scmp.eq.s32.totalorder %s27, 1
      %p248 = por %p246, %p247
      %p249 = scmp.ne.s32.totalorder %s240, %s241
      %p250 = scmp.eq.s32.totalorder %s27, 0
      %p251 = por %p249, %p250
      %p252 = scmp.ne.s32.totalorder %s240, %s241
      %p253 = scmp.eq.s32.totalorder %s28, 1
      %p254 = por %p252, %p253
      %p256 = scmp.ne.s32.totalorder %s241, %s255
      %p257 = scmp.eq.s32.totalorder %s28, 0
      %p258 = por %p256, %p257
      %s260 = sadd.s32 %s259, 1
      %p263 = scmp.eq.s32.totalorder %s22, 1
      %p264 = scmp.ne.s32.totalorder %s259, %s261
      %p265 = scmp.eq.s32.totalorder %s22, 0
      %p266 = por %p264, %p265
      %p267 = scmp.ne.s32.totalorder %s259, %s261
      %p268 = scmp.eq.s32.totalorder %s27, 1
      %p269 = por %p267, %p268
      %p270 = scmp.ne.s32.totalorder %s261, %s262
      %p271 = scmp.eq.s32.totalorder %s27, 0
      %p272 = por %p270, %p271
      %p273 = scmp.ne.s32.totalorder %s261, %s262
      %p274 = scmp.eq.s32.totalorder %s28, 1
      %p275 = por %p273, %p274
      %p277 = scmp.ne.s32.totalorder %s262, %s276
      %p278 = scmp.eq.s32.totalorder %s28, 0
      %p279 = por %p277, %p278
      %s281 = sadd.s32 %s280, 1
      %p284 = scmp.eq.s32.totalorder %s22, 1
      %p285 = scmp.ne.s32.totalorder %s280, %s282
      %p286 = scmp.eq.s32.totalorder %s22, 0
      %p287 = por %p285, %p286
      %p288 = scmp.ne.s32.totalorder %s280, %s282
      %p289 = scmp.eq.s32.totalorder %s27, 1
      %p290 = por %p288, %p289
      %p291 = scmp.ne.s32.totalorder %s282, %s283
      %p292 = scmp.eq.s32.totalorder %s27, 0
      %p293 = por %p291, %p292
      %p294 = scmp.ne.s32.totalorder %s282, %s283
      %p295 = scmp.eq.s32.totalorder %s28, 1
      %p296 = por %p294, %p295
      %p298 = scmp.ne.s32.totalorder %s283, %s297
      %p299 = scmp.eq.s32.totalorder %s28, 0
      %p300 = por %p298, %p299
      %s302 = sadd.s32 %s301, 1
      %p305 = scmp.eq.s32.totalorder %s22, 1
      %p306 = scmp.ne.s32.totalorder %s301, %s303
      %p307 = scmp.eq.s32.totalorder %s22, 0
      %p308 = por %p306, %p307
      %p309 = scmp.ne.s32.totalorder %s301, %s303
      %p310 = scmp.eq.s32.totalorder %s27, 1
      %p311 = por %p309, %p310
      %p312 = scmp.ne.s32.totalorder %s303, %s304
      %p313 = scmp.eq.s32.totalorder %s27, 0
      %p314 = por %p312, %p313
      %p315 = scmp.ne.s32.totalorder %s303, %s304
      %p316 = scmp.eq.s32.totalorder %s28, 1
      %p317 = por %p315, %p316
      %p319 = scmp.ne.s32.totalorder %s304, %s318
      %p320 = scmp.eq.s32.totalorder %s28, 0
      %p321 = por %p319, %p320
      %s322 = ssub.s32 %s29, %s41
      %s323 = ssub.s32 %s30, %s37
      %s324 = sor.u32 %s322, %s323
      %p325 = scmp.eq.s32.totalorder %s324, 0
      %s327 = sadd.s32 %s326, 1
      %s328 = scalar_select %p325, %s326, %s327
      %p331 = pneg %p325
      %p332 = scmp.eq.s32.totalorder %s22, 1
      %p333 = por %p331, %p332
      %p334 = scmp.ne.s32.totalorder %s326, %s329
      %p335 = scmp.eq.s32.totalorder %s22, 0
      %p336 = por %p334, %p335
      %p337 = scmp.ne.s32.totalorder %s326, %s329
      %p338 = scmp.eq.s32.totalorder %s27, 1
      %p339 = por %p337, %p338
      %p340 = scmp.ne.s32.totalorder %s329, %s330
      %p341 = scmp.eq.s32.totalorder %s27, 0
      %p342 = por %p340, %p341
      %p343 = scmp.ne.s32.totalorder %s329, %s330
      %p344 = scmp.eq.s32.totalorder %s28, 1
      %p345 = por %p343, %p344
      %p347 = scmp.ne.s32.totalorder %s330, %s346
      %p348 = scmp.eq.s32.totalorder %s28, 0
      %p349 = por %p347, %p348
      %p350 = scmp.le.s32.totalorder 1, %s22
      %p351 = scmp.lt.s32.totalorder %s22, 3
      %p352 = pnand %p350, %p351
      %p353 = pneg %p352
      // Predicated region
      $region9: #{tpu_custom_call.1} parent=5 // pred_check
        _
      $region10: #{tpu_custom_call.1} parent=5 // pred_check_branch
        %355 = sbr.rel (%p352) target = $region12
      $region11: #{tpu_custom_call.1} parent=5 // pred_region
        %s356 = ssub.s32 %s22, 1
        // Predicated region
        $region13: #{tpu_custom_call.1} parent=11 // pred_check
          %p357 = pneg %p83
        $region14: #{tpu_custom_call.1} parent=11 // pred_check_branch
          %359 = sbr.rel (%p357) target = $region16
        $region15: #{tpu_custom_call.1} parent=11 // pred_region
          _
        $region16: #{tpu_custom_call.1} parent=11 // pred_fallthru
          _
        // Predicated region
        $region17: #{tpu_custom_call.1} parent=11 // pred_check
          %p360 = pneg %p104
        $region18: #{tpu_custom_call.1} parent=11 // pred_check_branch
          %362 = sbr.rel (%p360) target = $region20
        $region19: #{tpu_custom_call.1} parent=11 // pred_region
          _
        $region20: #{tpu_custom_call.1} parent=11 // pred_fallthru
          _
        // Predicated region
        $region21: #{tpu_custom_call.1} parent=11 // pred_check
          %p363 = pneg %p125
        $region22: #{tpu_custom_call.1} parent=11 // pred_check_branch
          %365 = sbr.rel (%p363) target = $region24
        $region23: #{tpu_custom_call.1} parent=11 // pred_region
          _
        $region24: #{tpu_custom_call.1} parent=11 // pred_fallthru
          _
        // Predicated region
        $region25: #{tpu_custom_call.1} parent=11 // pred_check
          %p366 = pneg %p146
        $region26: #{tpu_custom_call.1} parent=11 // pred_check_branch
          %368 = sbr.rel (%p366) target = $region28
        $region27: #{tpu_custom_call.1} parent=11 // pred_region
          _
        $region28: #{tpu_custom_call.1} parent=11 // pred_fallthru
          _
        // Predicated region
        $region29: #{tpu_custom_call.1} parent=11 // pred_check
          %p369 = pneg %p167
        $region30: #{tpu_custom_call.1} parent=11 // pred_check_branch
          %371 = sbr.rel (%p369) target = $region32
        $region31: #{tpu_custom_call.1} parent=11 // pred_region
          _
        $region32: #{tpu_custom_call.1} parent=11 // pred_fallthru
          _
        // Predicated region
        $region33: #{tpu_custom_call.1} parent=11 // pred_check
          %p372 = pneg %p188
        $region34: #{tpu_custom_call.1} parent=11 // pred_check_branch
          %374 = sbr.rel (%p372) target = $region36
        $region35: #{tpu_custom_call.1} parent=11 // pred_region
          _
        $region36: #{tpu_custom_call.1} parent=11 // pred_fallthru
          _
        // Predicated region
        $region37: #{tpu_custom_call.1} parent=11 // pred_check
          %p375 = pneg %p209
        $region38: #{tpu_custom_call.1} parent=11 // pred_check_branch
          %377 = sbr.rel (%p375) target = $region40
        $region39: #{tpu_custom_call.1} parent=11 // pred_region
          _
        $region40: #{tpu_custom_call.1} parent=11 // pred_fallthru
          _
        // Predicated region
        $region41: #{tpu_custom_call.1} parent=11 // pred_check
          %p378 = pneg %p230
        $region42: #{tpu_custom_call.1} parent=11 // pred_check_branch
          %380 = sbr.rel (%p378) target = $region44
        $region43: #{tpu_custom_call.1} parent=11 // pred_region
          _
        $region44: #{tpu_custom_call.1} parent=11 // pred_fallthru
          _
        // Predicated region
        $region45: #{tpu_custom_call.1} parent=11 // pred_check
          %p381 = pneg %p251
        $region46: #{tpu_custom_call.1} parent=11 // pred_check_branch
          %383 = sbr.rel (%p381) target = $region48
        $region47: #{tpu_custom_call.1} parent=11 // pred_region
          _
        $region48: #{tpu_custom_call.1} parent=11 // pred_fallthru
          _
        // Predicated region
        $region49: #{tpu_custom_call.1} parent=11 // pred_check
          %p384 = pneg %p272
        $region50: #{tpu_custom_call.1} parent=11 // pred_check_branch
          %386 = sbr.rel (%p384) target = $region52
        $region51: #{tpu_custom_call.1} parent=11 // pred_region
          _
        $region52: #{tpu_custom_call.1} parent=11 // pred_fallthru
          _
        // Predicated region
        $region53: #{tpu_custom_call.1} parent=11 // pred_check
          %p387 = pneg %p293
        $region54: #{tpu_custom_call.1} parent=11 // pred_check_branch
          %389 = sbr.rel (%p387) target = $region56
        $region55: #{tpu_custom_call.1} parent=11 // pred_region
          _
        $region56: #{tpu_custom_call.1} parent=11 // pred_fallthru
          _
        // Predicated region
        $region57: #{tpu_custom_call.1} parent=11 // pred_check
          %p390 = pneg %p314
        $region58: #{tpu_custom_call.1} parent=11 // pred_check_branch
          %392 = sbr.rel (%p390) target = $region60
        $region59: #{tpu_custom_call.1} parent=11 // pred_region
          _
        $region60: #{tpu_custom_call.1} parent=11 // pred_fallthru
          _
      $region12: #{tpu_custom_call.1} parent=5 // pred_fallthru
        _
      %p393 = scmp.lt.s32.totalorder %s22, 2
      // Predicated region
      $region61: #{tpu_custom_call.1} parent=5 // pred_check
        %p394 = pneg %p393
      $region62: #{tpu_custom_call.1} parent=5 // pred_check_branch
        %396 = sbr.rel (%p394) target = $region64
      $region63: #{tpu_custom_call.1} parent=5 // pred_region
        // Predicated region
        $region65: #{tpu_custom_call.1} parent=63 // pred_check
          %p397 = pneg %p56
        $region66: #{tpu_custom_call.1} parent=63 // pred_check_branch
          %399 = sbr.rel (%p397) target = $region68
        $region67: #{tpu_custom_call.1} parent=63 // pred_region
          %s400 = smul.u32 2, %s30
          %p401 = scmp.lt.s32.totalorder %s29, 1
          %s402 = scalar_select %p401, %s29, 1
          %p403 = scmp.lt.s32.totalorder %s400, 1
          %s404 = scalar_select %p403, %s400, 1
          %s405 = smul.addr %s402, 2
          %s406 = sadd.s32 %s404, %s405
          %s407 = smul.addr %s406, 8
          %s408 = scalar_lea.vmem %s0, %s407
          %s409 = smul.u32 2, %s30
        $region68: #{tpu_custom_call.1} parent=63 // pred_fallthru
          _
      $region64: #{tpu_custom_call.1} parent=5 // pred_fallthru
        _
      %p410 = scmp.le.s32.totalorder 1, %s22
      %p411 = scmp.lt.s32.totalorder %s22, 3
      %p412 = pnand %p410, %p411
      %p413 = pneg %p412
      // Predicated region
      $region69: #{tpu_custom_call.1} parent=5 // pred_check
        _
      $region70: #{tpu_custom_call.1} parent=5 // pred_check_branch
        %415 = sbr.rel (%p412) target = $region72
      $region71: #{tpu_custom_call.1} parent=5 // pred_region
        %s416 = ssub.s32 %s22, 1
        %s417 = smul.u32 2, %s32
        %p418 = scmp.lt.s32.totalorder %s31, 1
        %s419 = scalar_select %p418, %s31, 1
        %p420 = scmp.lt.s32.totalorder %s417, 1
        %s421 = scalar_select %p420, %s417, 1
        %s422 = smul.addr %s419, 2
        %s423 = sadd.s32 %s421, %s422
        %s424 = smul.addr %s423, 8
        %s425 = scalar_lea.vmem %s0, %s424
        %p426 = pneg %p62
        %p427 = pneg %p59
        %p428 = pneg %p83
        %p429 = pneg %p80
        %p430 = pneg %p104
        %p431 = pneg %p101
        %p432 = pneg %p125
        %p433 = pneg %p122
        %p434 = pneg %p146
        %p435 = pneg %p143
        %p436 = pneg %p167
        %p437 = pneg %p164
        %p438 = pneg %p188
        %p439 = pneg %p185
        %p440 = pneg %p209
        %p441 = pneg %p206
        %p442 = pneg %p230
        %p443 = pneg %p227
        %p444 = pneg %p251
        %p445 = pneg %p248
        %p446 = pneg %p272
        %p447 = pneg %p269
        %p448 = pneg %p293
        %p449 = pneg %p290
        %p450 = pneg %p314
        %p451 = pneg %p311
        %p452 = pneg %p342
        %p453 = pneg %p339
        %s454 = sand.u32 %s329, 1
        %s455 = scalar_lea.sflag [#allocation5], %s454
        %s456 = sand.u32 %s329, 1
        %s457 = smul.addr %s456, 16
        %s458 = scalar_lea.vmem [#allocation4], %s457
        %s459 = smul.u32 2, %s32
        %p460 = scmp.lt.s32.totalorder %s31, 1
        %s461 = scalar_select %p460, %s31, 1
        %p462 = scmp.lt.s32.totalorder %s459, 1
        %s463 = scalar_select %p462, %s459, 1
        %s464 = smul.addr %s461, 2
        %s465 = sadd.s32 %s463, %s464
        %s466 = smul.addr %s465, 8
        %s467 = scalar_lea.vmem %s0, %s466
        %s468 = smul.u32 2, %s32
        %s469 = smul.u32 2, %s32
        %v470 = vld [vmem:[%s1] sm:$0x1]
        %v471 = vld [vmem:[%s2] sm:$0x1]
        %v472 = vld [vmem:[%s467] sm:$0xff]
        %v473 = vld [vmem:[%s467 + $0x8] sm:$0xff]
        %vm474 = vcmask 261120
        %v475 = vsel %vm474, %v472, 0.0
        %476 = vadd.xlane.f32.xlu0 %v475
        %v477 = vpop.xlane.xlu0 %476
        %v478 = vsel %vm474, %v473, 0.0
        %479 = vadd.xlane.f32.xlu0 %v478
        %v480 = vpop.xlane.xlu0 %479
        %v481 = vrcp.pop 32.0
        %v482 = vmul.f32 %v477, %v481
        %v483 = vmul.f32 %v480, %v481
        %v484 = vsub.f32 %v472, %v482
        %v485 = vsub.f32 %v473, %v483
        %v486 = vmul.f32 %v484, %v484
        %v487 = vmul.f32 %v485, %v485
        %v488 = vsel %vm474, %v486, 0.0
        %489 = vadd.xlane.f32.xlu0 %v488
        %v490 = vpop.xlane.xlu0 %489
        %v491 = vsel %vm474, %v487, 0.0
        %492 = vadd.xlane.f32.xlu0 %v491
        %v493 = vpop.xlane.xlu0 %492
        %v494 = vmul.f32 %v490, %v481
        %v495 = vmul.f32 %v493, %v481
        %v496 = vadd.f32 %v494, 1e-05
        %v497 = vadd.f32 %v495, 1e-05
        %v498 = vrsqrt.pop %v496
        %v499 = vrsqrt.pop %v497
        %v500 = vmul.f32 %v484, %v498
        %v501 = vmul.f32 %v485, %v499
        %v503 = vlaneseq
        %v504 = vshrl.u32 %v503, 7
        %v505 = vsub.s32 0, %v504
        %v506 = vrot.slane %v470, %v505
        %v508 = vmul.f32 %v500, %v506
        %v509 = vmul.f32 %v501, %v506
        %v511 = vlaneseq
        %v512 = vshrl.u32 %v511, 7
        %v513 = vsub.s32 0, %v512
        %v514 = vrot.slane %v471, %v513
        %v516 = vadd.f32 %v508, %v514
        %v517 = vadd.f32 %v509, %v514
        %v518 = vld [vmem:[%s4] sm:$0xff]
        %v519 = vld [vmem:[%s4 + $0x8] sm:$0xff]
        %v520 = vld [vmem:[%s4 + $0x10] sm:$0xff]
        %v521 = vld [vmem:[%s4 + $0x18] sm:$0xff]
        %v523 = vsel %vm474, %v516, 0
        %v526 = vsel %vm474, %v517, 0
        %528 = vmatprep.subr.mxu0 0.0
        %529 = vmatpush1.msra.mxu0 %v518
        %530 = vmatprep.subr.mxu0 0.0
        %531 = vmatpush1.msra.mxu0 %v519
        %532 = vmatprep.subr.mxu0 0.0
        %533 = vmatpush1.msra.mxu0 %v520
        %534 = vmatprep.subr.mxu0 0.0
        %535 = vmatpush1.msra.mxu0 %v521
        %536 = vmatprep.subr.mxu0 0.0
        %537 = vmatpush1.msra.mxu0 0.0
        %538 = vmatprep.subr.mxu0 0.0
        %539 = vmatpush1.msra.mxu0 0.0
        %540 = vmatprep.subr.mxu0 0.0
        %541 = vmatpush1.msra.mxu0 0.0
        %542 = vmatprep.subr.mxu0 0.0
        %543 = vmatpush1.msra.mxu0 0.0
        %544 = vmatprep.subr.mxu0 0.0
        %545 = vmatpush1.msra.mxu0 0.0
        %546 = vmatprep.subr.mxu0 0.0
        %547 = vmatpush1.msra.mxu0 0.0
        %548 = vmatprep.subr.mxu0 0.0
        %549 = vmatpush1.msra.mxu0 0.0
        %550 = vmatprep.subr.mxu0 0.0
        %551 = vmatpush1.msra.mxu0 0.0
        %552 = vmatprep.subr.mxu0 0.0
        %553 = vmatpush1.msra.mxu0 0.0
        %554 = vmatprep.subr.mxu0 0.0
        %555 = vmatpush1.msra.mxu0 0.0
        %556 = vmatprep.subr.mxu0 0.0
        %557 = vmatpush1.msra.mxu0 0.0
        %558 = vmatprep.subr.mxu0 0.0
        %559 = vmatpush1.msra.mxu0 0.0
        %560 = vmatprep.subr.mxu0 0.0
        %561 = vmatpush1.msra.mxu0 0.0
        %562 = vmatprep.subr.mxu0 0.0
        %563 = vmatpush1.msra.mxu0 0.0
        %564 = vmatprep.subr.mxu0 0.0
        %565 = vmatpush1.msra.mxu0 0.0
        %566 = vmatprep.subr.mxu0 0.0
        %567 = vmatpush1.msra.mxu0 0.0
        %568 = vmatprep.subr.mxu0 0.0
        %569 = vmatpush1.msra.mxu0 0.0
        %570 = vmatprep.subr.mxu0 0.0
        %571 = vmatpush1.msra.mxu0 0.0
        %572 = vmatprep.subr.mxu0 0.0
        %573 = vmatpush1.msra.mxu0 0.0
        %574 = vmatprep.subr.mxu0 0.0
        %575 = vmatpush1.msra.mxu0 0.0
        %576 = vmatprep.subr.mxu0 0.0
        %577 = vmatpush1.msra.mxu0 0.0
        %578 = vmatprep.subr.mxu0 0.0
        %579 = vmatpush1.msra.mxu0 0.0
        %580 = vmatprep.subr.mxu0 0.0
        %581 = vmatpush1.msra.mxu0 0.0
        %582 = vmatprep.subr.mxu0 0.0
        %583 = vmatpush1.msra.mxu0 0.0
        %584 = vmatprep.subr.mxu0 0.0
        %585 = vmatpush1.msra.mxu0 0.0
        %586 = vmatprep.subr.mxu0 0.0
        %587 = vmatpush1.msra.mxu0 0.0
        %588 = vmatprep.subr.mxu0 0.0
        %589 = vmatpush1.msra.mxu0 0.0
        %590 = vmatprep.subr.mxu0 0.0
        %591 = vmatpush1.msra.mxu0 0.0
        %592 = vmatprep.mubr.f32.mxu0 0.0
        %593 = vmatmul.mubr.f32.gmra.mrb[0].mxu0 %v523
        %v594 = vpop.f32.mrb[0].mxu0
        %v595 = vadd.f32 0.0, %v594
        %v596 = vpop.f32.mrb[0].mxu0
        %597 = vmatprep.mubr.f32.mxu0 0.0
        %598 = vmatmul.mubr.f32.gmra.mrb[0].mxu0 %v526
        %v599 = vpop.f32.mrb[0].mxu0
        %v600 = vadd.f32 0.0, %v599
        %v601 = vpop.f32.mrb[0].mxu0
        %602 = vdwg.mxu0
        %605 = vrot.lane.b32.xlu0 %v595, 120
        %v606 = vpop.permute.xlu0 %605
        %607 = vrot.lane.b32.xlu0 %v600, 120
        %v608 = vpop.permute.xlu0 %607
        %611 = vrot.lane.b32.xlu0 %v595, 112
        %v612 = vpop.permute.xlu0 %611
        %613 = vrot.lane.b32.xlu0 %v600, 112
        %v614 = vpop.permute.xlu0 %613
        %617 = vrot.lane.b32.xlu0 %v595, 104
        %v618 = vpop.permute.xlu0 %617
        %619 = vrot.lane.b32.xlu0 %v600, 104
        %v620 = vpop.permute.xlu0 %619
        %v623 = vcombine.low %v595, %v612
        %v624 = vcombine.high %v595, %v612
        %v626 = vunpack.c.l.s4 1983009808
        %v627 = vunpack.c.0.s8 %v626
        %v628 = vlaneseq
        %v629 = vshrl.u32 %v628, 7
        %v630 = vsub.s32 %v627, %v629
        %v631 = vrot.slane %v623, %v630
        %v633 = vunpack.c.l.s4 1983009808
        %v634 = vunpack.c.0.s8 %v633
        %v635 = vlaneseq
        %v636 = vshrl.u32 %v635, 7
        %v637 = vsub.s32 %v634, %v636
        %v638 = vrot.slane %v624, %v637
        %v639 = vcombine.low %v606, %v618
        %v640 = vcombine.high %v606, %v618
        %v642 = vunpack.c.l.s4 1983009808
        %v643 = vunpack.c.0.s8 %v642
        %v644 = vlaneseq
        %v645 = vshrl.u32 %v644, 7
        %v646 = vsub.s32 %v643, %v645
        %v647 = vrot.slane %v639, %v646
        %v649 = vunpack.c.l.s4 1983009808
        %v650 = vunpack.c.0.s8 %v649
        %v651 = vlaneseq
        %v652 = vshrl.u32 %v651, 7
        %v653 = vsub.s32 %v650, %v652
        %v654 = vrot.slane %v640, %v653
        %v655 = vcombine.low %v631, %v647
        %v656 = vcombine.high %v631, %v647
        %v658 = vunpack.c.l.s4 1934713408
        %v659 = vunpack.c.0.s8 %v658
        %v660 = vlaneseq
        %v661 = vshrl.u32 %v660, 7
        %v662 = vsub.s32 %v659, %v661
        %v663 = vrot.slane %v655, %v662
        %v665 = vunpack.c.l.s4 1934713408
        %v666 = vunpack.c.0.s8 %v665
        %v667 = vlaneseq
        %v668 = vshrl.u32 %v667, 7
        %v669 = vsub.s32 %v666, %v668
        %v670 = vrot.slane %v656, %v669
        %v671 = vcombine.low %v638, %v654
        %v672 = vcombine.high %v638, %v654
        %v674 = vunpack.c.l.s4 1934713408
        %v675 = vunpack.c.0.s8 %v674
        %v676 = vlaneseq
        %v677 = vshrl.u32 %v676, 7
        %v678 = vsub.s32 %v675, %v677
        %v679 = vrot.slane %v671, %v678
        %v681 = vunpack.c.l.s4 1934713408
        %v682 = vunpack.c.0.s8 %v681
        %v683 = vlaneseq
        %v684 = vshrl.u32 %v683, 7
        %v685 = vsub.s32 %v682, %v684
        %v686 = vrot.slane %v672, %v685
        %v687 = vcombine.high %v663, 0.0
        %v688 = vcombine.high %v670, 0.0
        %v689 = vcombine.high %v679, 0.0
        %v690 = vcombine.high %v686, 0.0
        %v691 = vcombine.low %v600, %v614
        %v692 = vcombine.high %v600, %v614
        %v694 = vunpack.c.l.s4 1983009808
        %v695 = vunpack.c.0.s8 %v694
        %v696 = vlaneseq
        %v697 = vshrl.u32 %v696, 7
        %v698 = vsub.s32 %v695, %v697
        %v699 = vrot.slane %v691, %v698
        %v701 = vunpack.c.l.s4 1983009808
        %v702 = vunpack.c.0.s8 %v701
        %v703 = vlaneseq
        %v704 = vshrl.u32 %v703, 7
        %v705 = vsub.s32 %v702, %v704
        %v706 = vrot.slane %v692, %v705
        %v707 = vcombine.low %v608, %v620
        %v708 = vcombine.high %v608, %v620
        %v710 = vunpack.c.l.s4 1983009808
        %v711 = vunpack.c.0.s8 %v710
        %v712 = vlaneseq
        %v713 = vshrl.u32 %v712, 7
        %v714 = vsub.s32 %v711, %v713
        %v715 = vrot.slane %v707, %v714
        %v717 = vunpack.c.l.s4 1983009808
        %v718 = vunpack.c.0.s8 %v717
        %v719 = vlaneseq
        %v720 = vshrl.u32 %v719, 7
        %v721 = vsub.s32 %v718, %v720
        %v722 = vrot.slane %v708, %v721
        %v723 = vcombine.low %v699, %v715
        %v724 = vcombine.high %v699, %v715
        %v726 = vunpack.c.l.s4 1934713408
        %v727 = vunpack.c.0.s8 %v726
        %v728 = vlaneseq
        %v729 = vshrl.u32 %v728, 7
        %v730 = vsub.s32 %v727, %v729
        %v731 = vrot.slane %v723, %v730
        %v733 = vunpack.c.l.s4 1934713408
        %v734 = vunpack.c.0.s8 %v733
        %v735 = vlaneseq
        %v736 = vshrl.u32 %v735, 7
        %v737 = vsub.s32 %v734, %v736
        %v738 = vrot.slane %v724, %v737
        %v739 = vcombine.low %v706, %v722
        %v740 = vcombine.high %v706, %v722
        %v742 = vunpack.c.l.s4 1934713408
        %v743 = vunpack.c.0.s8 %v742
        %v744 = vlaneseq
        %v745 = vshrl.u32 %v744, 7
        %v746 = vsub.s32 %v743, %v745
        %v747 = vrot.slane %v739, %v746
        %v749 = vunpack.c.l.s4 1934713408
        %v750 = vunpack.c.0.s8 %v749
        %v751 = vlaneseq
        %v752 = vshrl.u32 %v751, 7
        %v753 = vsub.s32 %v750, %v752
        %v754 = vrot.slane %v740, %v753
        %v755 = vcombine.high %v731, 0.0
        %v756 = vcombine.high %v738, 0.0
        %v757 = vcombine.high %v747, 0.0
        %v758 = vcombine.high %v754, 0.0
        %v759 = vcombine.low %v663, %v670
        %v761 = vunpack.c.l.s4 1983009808
        %v762 = vunpack.c.0.s8 %v761
        %v763 = vlaneseq
        %v764 = vshrl.u32 %v763, 7
        %v765 = vsub.s32 %v762, %v764
        %v766 = vrot.slane %v759, %v765
        %v767 = vcombine.low %v687, %v688
        %v769 = vunpack.c.l.s4 1983009808
        %v770 = vunpack.c.0.s8 %v769
        %v771 = vlaneseq
        %v772 = vshrl.u32 %v771, 7
        %v773 = vsub.s32 %v770, %v772
        %v774 = vrot.slane %v767, %v773
        %v775 = vcombine.low %v679, %v686
        %v777 = vunpack.c.l.s4 1983009808
        %v778 = vunpack.c.0.s8 %v777
        %v779 = vlaneseq
        %v780 = vshrl.u32 %v779, 7
        %v781 = vsub.s32 %v778, %v780
        %v782 = vrot.slane %v775, %v781
        %v783 = vcombine.low %v689, %v690
        %v785 = vunpack.c.l.s4 1983009808
        %v786 = vunpack.c.0.s8 %v785
        %v787 = vlaneseq
        %v788 = vshrl.u32 %v787, 7
        %v789 = vsub.s32 %v786, %v788
        %v790 = vrot.slane %v783, %v789
        %v791 = vcombine.low %v766, %v774
        %v792 = vcombine.high %v766, %v774
        %v794 = vunpack.c.l.s4 1934713408
        %v795 = vunpack.c.0.s8 %v794
        %v796 = vlaneseq
        %v797 = vshrl.u32 %v796, 7
        %v798 = vsub.s32 %v795, %v797
        %v799 = vrot.slane %v791, %v798
        %v801 = vunpack.c.l.s4 1934713408
        %v802 = vunpack.c.0.s8 %v801
        %v803 = vlaneseq
        %v804 = vshrl.u32 %v803, 7
        %v805 = vsub.s32 %v802, %v804
        %v806 = vrot.slane %v792, %v805
        %v807 = vcombine.low %v782, %v790
        %v808 = vcombine.high %v782, %v790
        %v810 = vunpack.c.l.s4 1934713408
        %v811 = vunpack.c.0.s8 %v810
        %v812 = vlaneseq
        %v813 = vshrl.u32 %v812, 7
        %v814 = vsub.s32 %v811, %v813
        %v815 = vrot.slane %v807, %v814
        %v817 = vunpack.c.l.s4 1934713408
        %v818 = vunpack.c.0.s8 %v817
        %v819 = vlaneseq
        %v820 = vshrl.u32 %v819, 7
        %v821 = vsub.s32 %v818, %v820
        %v822 = vrot.slane %v808, %v821
        %v823 = vcombine.low %v799, %v815
        %v824 = vcombine.high %v799, %v815
        %v825 = vcombine.low %v806, %v822
        %v826 = vcombine.high %v806, %v822
        %v827 = vcombine.low %v731, %v738
        %v829 = vunpack.c.l.s4 1983009808
        %v830 = vunpack.c.0.s8 %v829
        %v831 = vlaneseq
        %v832 = vshrl.u32 %v831, 7
        %v833 = vsub.s32 %v830, %v832
        %v834 = vrot.slane %v827, %v833
        %v835 = vcombine.low %v755, %v756
        %v837 = vunpack.c.l.s4 1983009808
        %v838 = vunpack.c.0.s8 %v837
        %v839 = vlaneseq
        %v840 = vshrl.u32 %v839, 7
        %v841 = vsub.s32 %v838, %v840
        %v842 = vrot.slane %v835, %v841
        %v843 = vcombine.low %v747, %v754
        %v845 = vunpack.c.l.s4 1983009808
        %v846 = vunpack.c.0.s8 %v845
        %v847 = vlaneseq
        %v848 = vshrl.u32 %v847, 7
        %v849 = vsub.s32 %v846, %v848
        %v850 = vrot.slane %v843, %v849
        %v851 = vcombine.low %v757, %v758
        %v853 = vunpack.c.l.s4 1983009808
        %v854 = vunpack.c.0.s8 %v853
        %v855 = vlaneseq
        %v856 = vshrl.u32 %v855, 7
        %v857 = vsub.s32 %v854, %v856
        %v858 = vrot.slane %v851, %v857
        %v859 = vcombine.low %v834, %v842
        %v860 = vcombine.high %v834, %v842
        %v862 = vunpack.c.l.s4 1934713408
        %v863 = vunpack.c.0.s8 %v862
        %v864 = vlaneseq
        %v865 = vshrl.u32 %v864, 7
        %v866 = vsub.s32 %v863, %v865
        %v867 = vrot.slane %v859, %v866
        %v869 = vunpack.c.l.s4 1934713408
        %v870 = vunpack.c.0.s8 %v869
        %v871 = vlaneseq
        %v872 = vshrl.u32 %v871, 7
        %v873 = vsub.s32 %v870, %v872
        %v874 = vrot.slane %v860, %v873
        %v875 = vcombine.low %v850, %v858
        %v876 = vcombine.high %v850, %v858
        %v878 = vunpack.c.l.s4 1934713408
        %v879 = vunpack.c.0.s8 %v878
        %v880 = vlaneseq
        %v881 = vshrl.u32 %v880, 7
        %v882 = vsub.s32 %v879, %v881
        %v883 = vrot.slane %v875, %v882
        %v885 = vunpack.c.l.s4 1934713408
        %v886 = vunpack.c.0.s8 %v885
        %v887 = vlaneseq
        %v888 = vshrl.u32 %v887, 7
        %v889 = vsub.s32 %v886, %v888
        %v890 = vrot.slane %v876, %v889
        %v891 = vcombine.low %v867, %v883
        %v892 = vcombine.high %v867, %v883
        %v893 = vcombine.low %v874, %v890
        %v894 = vcombine.high %v874, %v890
        %s895 = smul.u32 %s32, 64
        %s896 = scalar_lea.vmem [#allocation2], %s895
        %vm897 = vcmask 64512
        %898 = vst.msk [vmem:[%s896] sm:$0xff] %vm897, %v823
        %899 = vst.msk [vmem:[%s896 + $0x8] sm:$0xff] %vm897, %v891
        %900 = vst.msk [vmem:[%s896 + $0x10] sm:$0xff] %vm897, %v824
        %901 = vst.msk [vmem:[%s896 + $0x18] sm:$0xff] %vm897, %v892
        %902 = vst.msk [vmem:[%s896 + $0x20] sm:$0xff] %vm897, %v825
        %903 = vst.msk [vmem:[%s896 + $0x28] sm:$0xff] %vm897, %v893
        %904 = vst.msk [vmem:[%s896 + $0x30] sm:$0xff] %vm897, %v826
        %905 = vst.msk [vmem:[%s896 + $0x38] sm:$0xff] %vm897, %v894
        %906 = vrot.lane.b32.xlu0 %v595, 96
        %v907 = vpop.permute.xlu0 %906
        %908 = vrot.lane.b32.xlu0 %v600, 96
        %v909 = vpop.permute.xlu0 %908
        %910 = vrot.lane.b32.xlu0 %v606, 96
        %v911 = vpop.permute.xlu0 %910
        %912 = vrot.lane.b32.xlu0 %v608, 96
        %v913 = vpop.permute.xlu0 %912
        %914 = vrot.lane.b32.xlu0 %v612, 96
        %v915 = vpop.permute.xlu0 %914
        %916 = vrot.lane.b32.xlu0 %v614, 96
        %v917 = vpop.permute.xlu0 %916
        %918 = vrot.lane.b32.xlu0 %v618, 96
        %v919 = vpop.permute.xlu0 %918
        %920 = vrot.lane.b32.xlu0 %v620, 96
        %v921 = vpop.permute.xlu0 %920
        %v930 = vcombine.low %v907, %v915
        %v931 = vcombine.high %v907, %v915
        %v933 = vunpack.c.l.s4 1983009808
        %v934 = vunpack.c.0.s8 %v933
        %v935 = vlaneseq
        %v936 = vshrl.u32 %v935, 7
        %v937 = vsub.s32 %v934, %v936
        %v938 = vrot.slane %v930, %v937
        %v940 = vunpack.c.l.s4 1983009808
        %v941 = vunpack.c.0.s8 %v940
        %v942 = vlaneseq
        %v943 = vshrl.u32 %v942, 7
        %v944 = vsub.s32 %v941, %v943
        %v945 = vrot.slane %v931, %v944
        %v946 = vcombine.low %v911, %v919
        %v947 = vcombine.high %v911, %v919
        %v949 = vunpack.c.l.s4 1983009808
        %v950 = vunpack.c.0.s8 %v949
        %v951 = vlaneseq
        %v952 = vshrl.u32 %v951, 7
        %v953 = vsub.s32 %v950, %v952
        %v954 = vrot.slane %v946, %v953
        %v956 = vunpack.c.l.s4 1983009808
        %v957 = vunpack.c.0.s8 %v956
        %v958 = vlaneseq
        %v959 = vshrl.u32 %v958, 7
        %v960 = vsub.s32 %v957, %v959
        %v961 = vrot.slane %v947, %v960
        %v962 = vcombine.low %v938, %v954
        %v963 = vcombine.high %v938, %v954
        %v965 = vunpack.c.l.s4 1934713408
        %v966 = vunpack.c.0.s8 %v965
        %v967 = vlaneseq
        %v968 = vshrl.u32 %v967, 7
        %v969 = vsub.s32 %v966, %v968
        %v970 = vrot.slane %v962, %v969
        %v972 = vunpack.c.l.s4 1934713408
        %v973 = vunpack.c.0.s8 %v972
        %v974 = vlaneseq
        %v975 = vshrl.u32 %v974, 7
        %v976 = vsub.s32 %v973, %v975
        %v977 = vrot.slane %v963, %v976
        %v978 = vcombine.low %v945, %v961
        %v979 = vcombine.high %v945, %v961
        %v981 = vunpack.c.l.s4 1934713408
        %v982 = vunpack.c.0.s8 %v981
        %v983 = vlaneseq
        %v984 = vshrl.u32 %v983, 7
        %v985 = vsub.s32 %v982, %v984
        %v986 = vrot.slane %v978, %v985
        %v988 = vunpack.c.l.s4 1934713408
        %v989 = vunpack.c.0.s8 %v988
        %v990 = vlaneseq
        %v991 = vshrl.u32 %v990, 7
        %v992 = vsub.s32 %v989, %v991
        %v993 = vrot.slane %v979, %v992
        %v994 = vcombine.high %v970, 0.0
        %v995 = vcombine.high %v977, 0.0
        %v996 = vcombine.high %v986, 0.0
        %v997 = vcombine.high %v993, 0.0
        %v998 = vcombine.low %v909, %v917
        %v999 = vcombine.high %v909, %v917
        %v1001 = vunpack.c.l.s4 1983009808
        %v1002 = vunpack.c.0.s8 %v1001
        %v1003 = vlaneseq
        %v1004 = vshrl.u32 %v1003, 7
        %v1005 = vsub.s32 %v1002, %v1004
        %v1006 = vrot.slane %v998, %v1005
        %v1008 = vunpack.c.l.s4 1983009808
        %v1009 = vunpack.c.0.s8 %v1008
        %v1010 = vlaneseq
        %v1011 = vshrl.u32 %v1010, 7
        %v1012 = vsub.s32 %v1009, %v1011
        %v1013 = vrot.slane %v999, %v1012
        %v1014 = vcombine.low %v913, %v921
        %v1015 = vcombine.high %v913, %v921
        %v1017 = vunpack.c.l.s4 1983009808
        %v1018 = vunpack.c.0.s8 %v1017
        %v1019 = vlaneseq
        %v1020 = vshrl.u32 %v1019, 7
        %v1021 = vsub.s32 %v1018, %v1020
        %v1022 = vrot.slane %v1014, %v1021
        %v1024 = vunpack.c.l.s4 1983009808
        %v1025 = vunpack.c.0.s8 %v1024
        %v1026 = vlaneseq
        %v1027 = vshrl.u32 %v1026, 7
        %v1028 = vsub.s32 %v1025, %v1027
        %v1029 = vrot.slane %v1015, %v1028
        %v1030 = vcombine.low %v1006, %v1022
        %v1031 = vcombine.high %v1006, %v1022
        %v1033 = vunpack.c.l.s4 1934713408
        %v1034 = vunpack.c.0.s8 %v1033
        %v1035 = vlaneseq
        %v1036 = vshrl.u32 %v1035, 7
        %v1037 = vsub.s32 %v1034, %v1036
        %v1038 = vrot.slane %v1030, %v1037
        %v1040 = vunpack.c.l.s4 1934713408
        %v1041 = vunpack.c.0.s8 %v1040
        %v1042 = vlaneseq
        %v1043 = vshrl.u32 %v1042, 7
        %v1044 = vsub.s32 %v1041, %v1043
        %v1045 = vrot.slane %v1031, %v1044
        %v1046 = vcombine.low %v1013, %v1029
        %v1047 = vcombine.high %v1013, %v1029
        %v1049 = vunpack.c.l.s4 1934713408
        %v1050 = vunpack.c.0.s8 %v1049
        %v1051 = vlaneseq
        %v1052 = vshrl.u32 %v1051, 7
        %v1053 = vsub.s32 %v1050, %v1052
        %v1054 = vrot.slane %v1046, %v1053
        %v1056 = vunpack.c.l.s4 1934713408
        %v1057 = vunpack.c.0.s8 %v1056
        %v1058 = vlaneseq
        %v1059 = vshrl.u32 %v1058, 7
        %v1060 = vsub.s32 %v1057, %v1059
        %v1061 = vrot.slane %v1047, %v1060
        %v1062 = vcombine.high %v1038, 0.0
        %v1063 = vcombine.high %v1045, 0.0
        %v1064 = vcombine.high %v1054, 0.0
        %v1065 = vcombine.high %v1061, 0.0
        %v1066 = vcombine.low %v970, %v977
        %v1068 = vunpack.c.l.s4 1983009808
        %v1069 = vunpack.c.0.s8 %v1068
        %v1070 = vlaneseq
        %v1071 = vshrl.u32 %v1070, 7
        %v1072 = vsub.s32 %v1069, %v1071
        %v1073 = vrot.slane %v1066, %v1072
        %v1074 = vcombine.low %v994, %v995
        %v1076 = vunpack.c.l.s4 1983009808
        %v1077 = vunpack.c.0.s8 %v1076
        %v1078 = vlaneseq
        %v1079 = vshrl.u32 %v1078, 7
        %v1080 = vsub.s32 %v1077, %v1079
        %v1081 = vrot.slane %v1074, %v1080
        %v1082 = vcombine.low %v986, %v993
        %v1084 = vunpack.c.l.s4 1983009808
        %v1085 = vunpack.c.0.s8 %v1084
        %v1086 = vlaneseq
        %v1087 = vshrl.u32 %v1086, 7
        %v1088 = vsub.s32 %v1085, %v1087
        %v1089 = vrot.slane %v1082, %v1088
        %v1090 = vcombine.low %v996, %v997
        %v1092 = vunpack.c.l.s4 1983009808
        %v1093 = vunpack.c.0.s8 %v1092
        %v1094 = vlaneseq
        %v1095 = vshrl.u32 %v1094, 7
        %v1096 = vsub.s32 %v1093, %v1095
        %v1097 = vrot.slane %v1090, %v1096
        %v1098 = vcombine.low %v1073, %v1081
        %v1099 = vcombine.high %v1073, %v1081
        %v1101 = vunpack.c.l.s4 1934713408
        %v1102 = vunpack.c.0.s8 %v1101
        %v1103 = vlaneseq
        %v1104 = vshrl.u32 %v1103, 7
        %v1105 = vsub.s32 %v1102, %v1104
        %v1106 = vrot.slane %v1098, %v1105
        %v1108 = vunpack.c.l.s4 1934713408
        %v1109 = vunpack.c.0.s8 %v1108
        %v1110 = vlaneseq
        %v1111 = vshrl.u32 %v1110, 7
        %v1112 = vsub.s32 %v1109, %v1111
        %v1113 = vrot.slane %v1099, %v1112
        %v1114 = vcombine.low %v1089, %v1097
        %v1115 = vcombine.high %v1089, %v1097
        %v1117 = vunpack.c.l.s4 1934713408
        %v1118 = vunpack.c.0.s8 %v1117
        %v1119 = vlaneseq
        %v1120 = vshrl.u32 %v1119, 7
        %v1121 = vsub.s32 %v1118, %v1120
        %v1122 = vrot.slane %v1114, %v1121
        %v1124 = vunpack.c.l.s4 1934713408
        %v1125 = vunpack.c.0.s8 %v1124
        %v1126 = vlaneseq
        %v1127 = vshrl.u32 %v1126, 7
        %v1128 = vsub.s32 %v1125, %v1127
        %v1129 = vrot.slane %v1115, %v1128
        %v1130 = vcombine.low %v1106, %v1122
        %v1131 = vcombine.high %v1106, %v1122
        %v1132 = vcombine.low %v1113, %v1129
        %v1133 = vcombine.high %v1113, %v1129
        %v1134 = vcombine.low %v1038, %v1045
        %v1136 = vunpack.c.l.s4 1983009808
        %v1137 = vunpack.c.0.s8 %v1136
        %v1138 = vlaneseq
        %v1139 = vshrl.u32 %v1138, 7
        %v1140 = vsub.s32 %v1137, %v1139
        %v1141 = vrot.slane %v1134, %v1140
        %v1142 = vcombine.low %v1062, %v1063
        %v1144 = vunpack.c.l.s4 1983009808
        %v1145 = vunpack.c.0.s8 %v1144
        %v1146 = vlaneseq
        %v1147 = vshrl.u32 %v1146, 7
        %v1148 = vsub.s32 %v1145, %v1147
        %v1149 = vrot.slane %v1142, %v1148
        %v1150 = vcombine.low %v1054, %v1061
        %v1152 = vunpack.c.l.s4 1983009808
        %v1153 = vunpack.c.0.s8 %v1152
        %v1154 = vlaneseq
        %v1155 = vshrl.u32 %v1154, 7
        %v1156 = vsub.s32 %v1153, %v1155
        %v1157 = vrot.slane %v1150, %v1156
        %v1158 = vcombine.low %v1064, %v1065
        %v1160 = vunpack.c.l.s4 1983009808
        %v1161 = vunpack.c.0.s8 %v1160
        %v1162 = vlaneseq
        %v1163 = vshrl.u32 %v1162, 7
        %v1164 = vsub.s32 %v1161, %v1163
        %v1165 = vrot.slane %v1158, %v1164
        %v1166 = vcombine.low %v1141, %v1149
        %v1167 = vcombine.high %v1141, %v1149
        %v1169 = vunpack.c.l.s4 1934713408
        %v1170 = vunpack.c.0.s8 %v1169
        %v1171 = vlaneseq
        %v1172 = vshrl.u32 %v1171, 7
        %v1173 = vsub.s32 %v1170, %v1172
        %v1174 = vrot.slane %v1166, %v1173
        %v1176 = vunpack.c.l.s4 1934713408
        %v1177 = vunpack.c.0.s8 %v1176
        %v1178 = vlaneseq
        %v1179 = vshrl.u32 %v1178, 7
        %v1180 = vsub.s32 %v1177, %v1179
        %v1181 = vrot.slane %v1167, %v1180
        %v1182 = vcombine.low %v1157, %v1165
        %v1183 = vcombine.high %v1157, %v1165
        %v1185 = vunpack.c.l.s4 1934713408
        %v1186 = vunpack.c.0.s8 %v1185
        %v1187 = vlaneseq
        %v1188 = vshrl.u32 %v1187, 7
        %v1189 = vsub.s32 %v1186, %v1188
        %v1190 = vrot.slane %v1182, %v1189
        %v1192 = vunpack.c.l.s4 1934713408
        %v1193 = vunpack.c.0.s8 %v1192
        %v1194 = vlaneseq
        %v1195 = vshrl.u32 %v1194, 7
        %v1196 = vsub.s32 %v1193, %v1195
        %v1197 = vrot.slane %v1183, %v1196
        %v1198 = vcombine.low %v1174, %v1190
        %v1199 = vcombine.high %v1174, %v1190
        %v1200 = vcombine.low %v1181, %v1197
        %v1201 = vcombine.high %v1181, %v1197
        %s1202 = scalar_lea.vmem [#allocation3], %s895
        %1203 = vst.msk [vmem:[%s1202] sm:$0xff] %vm897, %v1130
        %1204 = vst.msk [vmem:[%s1202 + $0x8] sm:$0xff] %vm897, %v1198
        %1205 = vst.msk [vmem:[%s1202 + $0x10] sm:$0xff] %vm897, %v1131
        %1206 = vst.msk [vmem:[%s1202 + $0x18] sm:$0xff] %vm897, %v1199
        %1207 = vst.msk [vmem:[%s1202 + $0x20] sm:$0xff] %vm897, %v1132
        %1208 = vst.msk [vmem:[%s1202 + $0x28] sm:$0xff] %vm897, %v1200
        %1209 = vst.msk [vmem:[%s1202 + $0x30] sm:$0xff] %vm897, %v1133
        %1210 = vst.msk [vmem:[%s1202 + $0x38] sm:$0xff] %vm897, %v1201
        %v1211 = vld [vmem:[%s3] sm:$0xff]
        %v1212 = vld [vmem:[%s3 + $0x8] sm:$0xff]
        %v1213 = vld [vmem:[%s3 + $0x10] sm:$0xff]
        %v1214 = vld [vmem:[%s3 + $0x18] sm:$0xff]
        %1215 = vmatprep.subr.mxu0 0.0
        %1216 = vmatpush1.msra.mxu0 %v1211
        %1217 = vmatprep.subr.mxu0 0.0
        %1218 = vmatpush1.msra.mxu0 %v1212
        %1219 = vmatprep.subr.mxu0 0.0
        %1220 = vmatpush1.msra.mxu0 %v1213
        %1221 = vmatprep.subr.mxu0 0.0
        %1222 = vmatpush1.msra.mxu0 %v1214
        %1223 = vmatprep.subr.mxu0 0.0
        %1224 = vmatpush1.msra.mxu0 0.0
        %1225 = vmatprep.subr.mxu0 0.0
        %1226 = vmatpush1.msra.mxu0 0.0
        %1227 = vmatprep.subr.mxu0 0.0
        %1228 = vmatpush1.msra.mxu0 0.0
        %1229 = vmatprep.subr.mxu0 0.0
        %1230 = vmatpush1.msra.mxu0 0.0
        %1231 = vmatprep.subr.mxu0 0.0
        %1232 = vmatpush1.msra.mxu0 0.0
        %1233 = vmatprep.subr.mxu0 0.0
        %1234 = vmatpush1.msra.mxu0 0.0
        %1235 = vmatprep.subr.mxu0 0.0
        %1236 = vmatpush1.msra.mxu0 0.0
        %1237 = vmatprep.subr.mxu0 0.0
        %1238 = vmatpush1.msra.mxu0 0.0
        %1239 = vmatprep.subr.mxu0 0.0
        %1240 = vmatpush1.msra.mxu0 0.0
        %1241 = vmatprep.subr.mxu0 0.0
        %1242 = vmatpush1.msra.mxu0 0.0
        %1243 = vmatprep.subr.mxu0 0.0
        %1244 = vmatpush1.msra.mxu0 0.0
        %1245 = vmatprep.subr.mxu0 0.0
        %1246 = vmatpush1.msra.mxu0 0.0
        %1247 = vmatprep.subr.mxu0 0.0
        %1248 = vmatpush1.msra.mxu0 0.0
        %1249 = vmatprep.subr.mxu0 0.0
        %1250 = vmatpush1.msra.mxu0 0.0
        %1251 = vmatprep.subr.mxu0 0.0
        %1252 = vmatpush1.msra.mxu0 0.0
        %1253 = vmatprep.subr.mxu0 0.0
        %1254 = vmatpush1.msra.mxu0 0.0
        %1255 = vmatprep.subr.mxu0 0.0
        %1256 = vmatpush1.msra.mxu0 0.0
        %1257 = vmatprep.subr.mxu0 0.0
        %1258 = vmatpush1.msra.mxu0 0.0
        %1259 = vmatprep.subr.mxu0 0.0
        %1260 = vmatpush1.msra.mxu0 0.0
        %1261 = vmatprep.subr.mxu0 0.0
        %1262 = vmatpush1.msra.mxu0 0.0
        %1263 = vmatprep.subr.mxu0 0.0
        %1264 = vmatpush1.msra.mxu0 0.0
        %1265 = vmatprep.subr.mxu0 0.0
        %1266 = vmatpush1.msra.mxu0 0.0
        %1267 = vmatprep.subr.mxu0 0.0
        %1268 = vmatpush1.msra.mxu0 0.0
        %1269 = vmatprep.subr.mxu0 0.0
        %1270 = vmatpush1.msra.mxu0 0.0
        %1271 = vmatprep.subr.mxu0 0.0
        %1272 = vmatpush1.msra.mxu0 0.0
        %1273 = vmatprep.subr.mxu0 0.0
        %1274 = vmatpush1.msra.mxu0 0.0
        %1275 = vmatprep.subr.mxu0 0.0
        %1276 = vmatpush1.msra.mxu0 0.0
        %1277 = vmatprep.subr.mxu0 0.0
        %1278 = vmatpush1.msra.mxu0 0.0
        %1279 = vmatprep.mubr.f32.mxu0 0.0
        %1280 = vmatmul.mubr.f32.gmra.mrb[0].mxu0 %v523
        %v1281 = vpop.f32.mrb[0].mxu0
        %v1282 = vadd.f32 0.0, %v1281
        %v1283 = vpop.f32.mrb[0].mxu0
        %1284 = vmatprep.mubr.f32.mxu0 0.0
        %1285 = vmatmul.mubr.f32.gmra.mrb[0].mxu0 %v526
        %v1286 = vpop.f32.mrb[0].mxu0
        %v1287 = vadd.f32 0.0, %v1286
        %v1288 = vpop.f32.mrb[0].mxu0
        %1289 = vdwg.mxu0
        %v1290 = vmul.f32 %v1282, 0.35355338
        %v1291 = vmul.f32 %v1287, 0.35355338
        %1294 = vrot.lane.b32.xlu0 %v1290, 120
        %v1295 = vpop.permute.xlu0 %1294
        %1296 = vrot.lane.b32.xlu0 %v1291, 120
        %v1297 = vpop.permute.xlu0 %1296
        %1300 = vrot.lane.b32.xlu0 %v1290, 112
        %v1301 = vpop.permute.xlu0 %1300
        %1302 = vrot.lane.b32.xlu0 %v1291, 112
        %v1303 = vpop.permute.xlu0 %1302
        %1306 = vrot.lane.b32.xlu0 %v1290, 104
        %v1307 = vpop.permute.xlu0 %1306
        %1308 = vrot.lane.b32.xlu0 %v1291, 104
        %v1309 = vpop.permute.xlu0 %1308
        %v1312 = vcombine.low %v1290, %v1301
        %v1313 = vcombine.high %v1290, %v1301
        %v1315 = vunpack.c.l.s4 1983009808
        %v1316 = vunpack.c.0.s8 %v1315
        %v1317 = vlaneseq
        %v1318 = vshrl.u32 %v1317, 7
        %v1319 = vsub.s32 %v1316, %v1318
        %v1320 = vrot.slane %v1312, %v1319
        %v1322 = vunpack.c.l.s4 1983009808
        %v1323 = vunpack.c.0.s8 %v1322
        %v1324 = vlaneseq
        %v1325 = vshrl.u32 %v1324, 7
        %v1326 = vsub.s32 %v1323, %v1325
        %v1327 = vrot.slane %v1313, %v1326
        %v1328 = vcombine.low %v1295, %v1307
        %v1329 = vcombine.high %v1295, %v1307
        %v1331 = vunpack.c.l.s4 1983009808
        %v1332 = vunpack.c.0.s8 %v1331
        %v1333 = vlaneseq
        %v1334 = vshrl.u32 %v1333, 7
        %v1335 = vsub.s32 %v1332, %v1334
        %v1336 = vrot.slane %v1328, %v1335
        %v1338 = vunpack.c.l.s4 1983009808
        %v1339 = vunpack.c.0.s8 %v1338
        %v1340 = vlaneseq
        %v1341 = vshrl.u32 %v1340, 7
        %v1342 = vsub.s32 %v1339, %v1341
        %v1343 = vrot.slane %v1329, %v1342
        %v1344 = vcombine.low %v1320, %v1336
        %v1345 = vcombine.high %v1320, %v1336
        %v1347 = vunpack.c.l.s4 1934713408
        %v1348 = vunpack.c.0.s8 %v1347
        %v1349 = vlaneseq
        %v1350 = vshrl.u32 %v1349, 7
        %v1351 = vsub.s32 %v1348, %v1350
        %v1352 = vrot.slane %v1344, %v1351
        %v1354 = vunpack.c.l.s4 1934713408
        %v1355 = vunpack.c.0.s8 %v1354
        %v1356 = vlaneseq
        %v1357 = vshrl.u32 %v1356, 7
        %v1358 = vsub.s32 %v1355, %v1357
        %v1359 = vrot.slane %v1345, %v1358
        %v1360 = vcombine.low %v1327, %v1343
        %v1361 = vcombine.high %v1327, %v1343
        %v1363 = vunpack.c.l.s4 1934713408
        %v1364 = vunpack.c.0.s8 %v1363
        %v1365 = vlaneseq
        %v1366 = vshrl.u32 %v1365, 7
        %v1367 = vsub.s32 %v1364, %v1366
        %v1368 = vrot.slane %v1360, %v1367
        %v1370 = vunpack.c.l.s4 1934713408
        %v1371 = vunpack.c.0.s8 %v1370
        %v1372 = vlaneseq
        %v1373 = vshrl.u32 %v1372, 7
        %v1374 = vsub.s32 %v1371, %v1373
        %v1375 = vrot.slane %v1361, %v1374
        %v1376 = vcombine.high %v1352, 0.0
        %v1377 = vcombine.high %v1359, 0.0
        %v1378 = vcombine.high %v1368, 0.0
        %v1379 = vcombine.high %v1375, 0.0
        %v1380 = vcombine.low %v1291, %v1303
        %v1381 = vcombine.high %v1291, %v1303
        %v1383 = vunpack.c.l.s4 1983009808
        %v1384 = vunpack.c.0.s8 %v1383
        %v1385 = vlaneseq
        %v1386 = vshrl.u32 %v1385, 7
        %v1387 = vsub.s32 %v1384, %v1386
        %v1388 = vrot.slane %v1380, %v1387
        %v1390 = vunpack.c.l.s4 1983009808
        %v1391 = vunpack.c.0.s8 %v1390
        %v1392 = vlaneseq
        %v1393 = vshrl.u32 %v1392, 7
        %v1394 = vsub.s32 %v1391, %v1393
        %v1395 = vrot.slane %v1381, %v1394
        %v1396 = vcombine.low %v1297, %v1309
        %v1397 = vcombine.high %v1297, %v1309
        %v1399 = vunpack.c.l.s4 1983009808
        %v1400 = vunpack.c.0.s8 %v1399
        %v1401 = vlaneseq
        %v1402 = vshrl.u32 %v1401, 7
        %v1403 = vsub.s32 %v1400, %v1402
        %v1404 = vrot.slane %v1396, %v1403
        %v1406 = vunpack.c.l.s4 1983009808
        %v1407 = vunpack.c.0.s8 %v1406
        %v1408 = vlaneseq
        %v1409 = vshrl.u32 %v1408, 7
        %v1410 = vsub.s32 %v1407, %v1409
        %v1411 = vrot.slane %v1397, %v1410
        %v1412 = vcombine.low %v1388, %v1404
        %v1413 = vcombine.high %v1388, %v1404
        %v1415 = vunpack.c.l.s4 1934713408
        %v1416 = vunpack.c.0.s8 %v1415
        %v1417 = vlaneseq
        %v1418 = vshrl.u32 %v1417, 7
        %v1419 = vsub.s32 %v1416, %v1418
        %v1420 = vrot.slane %v1412, %v1419
        %v1422 = vunpack.c.l.s4 1934713408
        %v1423 = vunpack.c.0.s8 %v1422
        %v1424 = vlaneseq
        %v1425 = vshrl.u32 %v1424, 7
        %v1426 = vsub.s32 %v1423, %v1425
        %v1427 = vrot.slane %v1413, %v1426
        %v1428 = vcombine.low %v1395, %v1411
        %v1429 = vcombine.high %v1395, %v1411
        %v1431 = vunpack.c.l.s4 1934713408
        %v1432 = vunpack.c.0.s8 %v1431
        %v1433 = vlaneseq
        %v1434 = vshrl.u32 %v1433, 7
        %v1435 = vsub.s32 %v1432, %v1434
        %v1436 = vrot.slane %v1428, %v1435
        %v1438 = vunpack.c.l.s4 1934713408
        %v1439 = vunpack.c.0.s8 %v1438
        %v1440 = vlaneseq
        %v1441 = vshrl.u32 %v1440, 7
        %v1442 = vsub.s32 %v1439, %v1441
        %v1443 = vrot.slane %v1429, %v1442
        %v1444 = vcombine.high %v1420, 0.0
        %v1445 = vcombine.high %v1427, 0.0
        %v1446 = vcombine.high %v1436, 0.0
        %v1447 = vcombine.high %v1443, 0.0
        %v1448 = vcombine.low %v1352, %v1359
        %v1450 = vunpack.c.l.s4 1983009808
        %v1451 = vunpack.c.0.s8 %v1450
        %v1452 = vlaneseq
        %v1453 = vshrl.u32 %v1452, 7
        %v1454 = vsub.s32 %v1451, %v1453
        %v1455 = vrot.slane %v1448, %v1454
        %v1456 = vcombine.low %v1376, %v1377
        %v1458 = vunpack.c.l.s4 1983009808
        %v1459 = vunpack.c.0.s8 %v1458
        %v1460 = vlaneseq
        %v1461 = vshrl.u32 %v1460, 7
        %v1462 = vsub.s32 %v1459, %v1461
        %v1463 = vrot.slane %v1456, %v1462
        %v1464 = vcombine.low %v1368, %v1375
        %v1466 = vunpack.c.l.s4 1983009808
        %v1467 = vunpack.c.0.s8 %v1466
        %v1468 = vlaneseq
        %v1469 = vshrl.u32 %v1468, 7
        %v1470 = vsub.s32 %v1467, %v1469
        %v1471 = vrot.slane %v1464, %v1470
        %v1472 = vcombine.low %v1378, %v1379
        %v1474 = vunpack.c.l.s4 1983009808
        %v1475 = vunpack.c.0.s8 %v1474
        %v1476 = vlaneseq
        %v1477 = vshrl.u32 %v1476, 7
        %v1478 = vsub.s32 %v1475, %v1477
        %v1479 = vrot.slane %v1472, %v1478
        %v1480 = vcombine.low %v1455, %v1463
        %v1481 = vcombine.high %v1455, %v1463
        %v1483 = vunpack.c.l.s4 1934713408
        %v1484 = vunpack.c.0.s8 %v1483
        %v1485 = vlaneseq
        %v1486 = vshrl.u32 %v1485, 7
        %v1487 = vsub.s32 %v1484, %v1486
        %v1488 = vrot.slane %v1480, %v1487
        %v1490 = vunpack.c.l.s4 1934713408
        %v1491 = vunpack.c.0.s8 %v1490
        %v1492 = vlaneseq
        %v1493 = vshrl.u32 %v1492, 7
        %v1494 = vsub.s32 %v1491, %v1493
        %v1495 = vrot.slane %v1481, %v1494
        %v1496 = vcombine.low %v1471, %v1479
        %v1497 = vcombine.high %v1471, %v1479
        %v1499 = vunpack.c.l.s4 1934713408
        %v1500 = vunpack.c.0.s8 %v1499
        %v1501 = vlaneseq
        %v1502 = vshrl.u32 %v1501, 7
        %v1503 = vsub.s32 %v1500, %v1502
        %v1504 = vrot.slane %v1496, %v1503
        %v1506 = vunpack.c.l.s4 1934713408
        %v1507 = vunpack.c.0.s8 %v1506
        %v1508 = vlaneseq
        %v1509 = vshrl.u32 %v1508, 7
        %v1510 = vsub.s32 %v1507, %v1509
        %v1511 = vrot.slane %v1497, %v1510
        %v1512 = vcombine.low %v1488, %v1504
        %v1513 = vcombine.high %v1488, %v1504
        %v1514 = vcombine.low %v1495, %v1511
        %v1515 = vcombine.high %v1495, %v1511
        %v1516 = vcombine.low %v1420, %v1427
        %v1518 = vunpack.c.l.s4 1983009808
        %v1519 = vunpack.c.0.s8 %v1518
        %v1520 = vlaneseq
        %v1521 = vshrl.u32 %v1520, 7
        %v1522 = vsub.s32 %v1519, %v1521
        %v1523 = vrot.slane %v1516, %v1522
        %v1524 = vcombine.low %v1444, %v1445
        %v1526 = vunpack.c.l.s4 1983009808
        %v1527 = vunpack.c.0.s8 %v1526
        %v1528 = vlaneseq
        %v1529 = vshrl.u32 %v1528, 7
        %v1530 = vsub.s32 %v1527, %v1529
        %v1531 = vrot.slane %v1524, %v1530
        %v1532 = vcombine.low %v1436, %v1443
        %v1534 = vunpack.c.l.s4 1983009808
        %v1535 = vunpack.c.0.s8 %v1534
        %v1536 = vlaneseq
        %v1537 = vshrl.u32 %v1536, 7
        %v1538 = vsub.s32 %v1535, %v1537
        %v1539 = vrot.slane %v1532, %v1538
        %v1540 = vcombine.low %v1446, %v1447
        %v1542 = vunpack.c.l.s4 1983009808
        %v1543 = vunpack.c.0.s8 %v1542
        %v1544 = vlaneseq
        %v1545 = vshrl.u32 %v1544, 7
        %v1546 = vsub.s32 %v1543, %v1545
        %v1547 = vrot.slane %v1540, %v1546
        %v1548 = vcombine.low %v1523, %v1531
        %v1549 = vcombine.high %v1523, %v1531
        %v1551 = vunpack.c.l.s4 1934713408
        %v1552 = vunpack.c.0.s8 %v1551
        %v1553 = vlaneseq
        %v1554 = vshrl.u32 %v1553, 7
        %v1555 = vsub.s32 %v1552, %v1554
        %v1556 = vrot.slane %v1548, %v1555
        %v1558 = vunpack.c.l.s4 1934713408
        %v1559 = vunpack.c.0.s8 %v1558
        %v1560 = vlaneseq
        %v1561 = vshrl.u32 %v1560, 7
        %v1562 = vsub.s32 %v1559, %v1561
        %v1563 = vrot.slane %v1549, %v1562
        %v1564 = vcombine.low %v1539, %v1547
        %v1565 = vcombine.high %v1539, %v1547
        %v1567 = vunpack.c.l.s4 1934713408
        %v1568 = vunpack.c.0.s8 %v1567
        %v1569 = vlaneseq
        %v1570 = vshrl.u32 %v1569, 7
        %v1571 = vsub.s32 %v1568, %v1570
        %v1572 = vrot.slane %v1564, %v1571
        %v1574 = vunpack.c.l.s4 1934713408
        %v1575 = vunpack.c.0.s8 %v1574
        %v1576 = vlaneseq
        %v1577 = vshrl.u32 %v1576, 7
        %v1578 = vsub.s32 %v1575, %v1577
        %v1579 = vrot.slane %v1565, %v1578
        %v1580 = vcombine.low %v1556, %v1572
        %v1581 = vcombine.high %v1556, %v1572
        %v1582 = vcombine.low %v1563, %v1579
        %v1583 = vcombine.high %v1563, %v1579
        %s1584 = smul.u32 %s32, 16
        %s1585 = sadd.s32 %s32, 1
        // While loop
        $region73: #{tpu_custom_call.1} parent=71 // loop_pre_header
          _
        $region74: #{tpu_custom_call.1} parent=71 // loop_header
          %s1587 = sphi 0, %s1589
          %p1588 = scmp.ge.s32.totalorder %s1587, %s1585
          %v1592 = vphi -1e+30, %v2033
          %v1593 = vphi -1e+30, %v2034
          %v1594 = vphi -1e+30, %v2035
          %v1595 = vphi -1e+30, %v2036
          %v1596 = vphi -1e+30, %v2037
          %v1597 = vphi -1e+30, %v2038
          %v1598 = vphi -1e+30, %v2039
          %v1599 = vphi -1e+30, %v2040
          %v1600 = vphi 0.0, %v2121
          %v1601 = vphi 0.0, %v2122
          %v1602 = vphi 0.0, %v2123
          %v1603 = vphi 0.0, %v2124
          %v1604 = vphi 0.0, %v2125
          %v1605 = vphi 0.0, %v2126
          %v1606 = vphi 0.0, %v2127
          %v1607 = vphi 0.0, %v2128
          %v1608 = vphi 0.0, %v2461
          %v1609 = vphi 0.0, %v2462
          %v1610 = vphi 0.0, %v2463
          %v1611 = vphi 0.0, %v2464
          %v1612 = vphi 0.0, %v2465
          %v1613 = vphi 0.0, %v2466
          %v1614 = vphi 0.0, %v2467
          %v1615 = vphi 0.0, %v2468
        $region75: #{tpu_custom_call.1} parent=71 // loop_header_branch
          %1591 = sbr.rel (%p1588) target = $region79
        $region76: #{tpu_custom_call.1} parent=71 // loop_body
          %s1616 = smul.u32 %s1587, 64
          %s1617 = scalar_lea.vmem [#allocation2], %s1616
          %v1618 = vld [vmem:[%s1617] sm:$0xff]
          %v1619 = vld [vmem:[%s1617 + $0x8] sm:$0xff]
          %v1620 = vld [vmem:[%s1617 + $0x10] sm:$0xff]
          %v1621 = vld [vmem:[%s1617 + $0x18] sm:$0xff]
          %v1622 = vld [vmem:[%s1617 + $0x20] sm:$0xff]
          %v1623 = vld [vmem:[%s1617 + $0x28] sm:$0xff]
          %v1624 = vld [vmem:[%s1617 + $0x30] sm:$0xff]
          %v1625 = vld [vmem:[%s1617 + $0x38] sm:$0xff]
          %s1626 = scalar_lea.vmem [#allocation3], %s1616
          %v1627 = vld [vmem:[%s1626] sm:$0xff]
          %v1628 = vld [vmem:[%s1626 + $0x8] sm:$0xff]
          %v1629 = vld [vmem:[%s1626 + $0x10] sm:$0xff]
          %v1630 = vld [vmem:[%s1626 + $0x18] sm:$0xff]
          %v1631 = vld [vmem:[%s1626 + $0x20] sm:$0xff]
          %v1632 = vld [vmem:[%s1626 + $0x28] sm:$0xff]
          %v1633 = vld [vmem:[%s1626 + $0x30] sm:$0xff]
          %v1634 = vld [vmem:[%s1626 + $0x38] sm:$0xff]
          %v1636 = vsel %vm897, %v1512, 0
          %v1639 = vsel %vm897, %v1580, 0
          %v1642 = vsel %vm897, %v1618, 0
          %v1645 = vsel %vm897, %v1619, 0
          %1647 = vmatprep.subr.mxu0 0.0
          %1648 = vmatpush1.xpose.msra.mxu0 %v1642
          %1649 = vmatprep.subr.mxu0 0.0
          %1650 = vmatpush1.xpose.msra.mxu0 %v1645
          %1651 = vmatprep.subr.mxu0 0.0
          %1652 = vmatpush1.xpose.msra.mxu0 0.0
          %1653 = vmatprep.subr.mxu0 0.0
          %1654 = vmatpush1.xpose.msra.mxu0 0.0
          %1655 = vmatprep.subr.mxu0 0.0
          %1656 = vmatpush1.xpose.msra.mxu0 0.0
          %1657 = vmatprep.subr.mxu0 0.0
          %1658 = vmatpush1.xpose.msra.mxu0 0.0
          %1659 = vmatprep.subr.mxu0 0.0
          %1660 = vmatpush1.xpose.msra.mxu0 0.0
          %1661 = vmatprep.subr.mxu0 0.0
          %1662 = vmatpush1.xpose.msra.mxu0 0.0
          %1663 = vmatprep.subr.mxu0 0.0
          %1664 = vmatpush1.xpose.msra.mxu0 0.0
          %1665 = vmatprep.subr.mxu0 0.0
          %1666 = vmatpush1.xpose.msra.mxu0 0.0
          %1667 = vmatprep.subr.mxu0 0.0
          %1668 = vmatpush1.xpose.msra.mxu0 0.0
          %1669 = vmatprep.subr.mxu0 0.0
          %1670 = vmatpush1.xpose.msra.mxu0 0.0
          %1671 = vmatprep.subr.mxu0 0.0
          %1672 = vmatpush1.xpose.msra.mxu0 0.0
          %1673 = vmatprep.subr.mxu0 0.0
          %1674 = vmatpush1.xpose.msra.mxu0 0.0
          %1675 = vmatprep.subr.mxu0 0.0
          %1676 = vmatpush1.xpose.msra.mxu0 0.0
          %1677 = vmatprep.subr.mxu0 0.0
          %1678 = vmatpush1.xpose.msra.mxu0 0.0
          %1679 = vmatprep.subr.mxu0 0.0
          %1680 = vmatpush1.xpose.msra.mxu0 0.0
          %1681 = vmatprep.subr.mxu0 0.0
          %1682 = vmatpush1.xpose.msra.mxu0 0.0
          %1683 = vmatprep.subr.mxu0 0.0
          %1684 = vmatpush1.xpose.msra.mxu0 0.0
          %1685 = vmatprep.subr.mxu0 0.0
          %1686 = vmatpush1.xpose.msra.mxu0 0.0
          %1687 = vmatprep.subr.mxu0 0.0
          %1688 = vmatpush1.xpose.msra.mxu0 0.0
          %1689 = vmatprep.subr.mxu0 0.0
          %1690 = vmatpush1.xpose.msra.mxu0 0.0
          %1691 = vmatprep.subr.mxu0 0.0
          %1692 = vmatpush1.xpose.msra.mxu0 0.0
          %1693 = vmatprep.subr.mxu0 0.0
          %1694 = vmatpush1.xpose.msra.mxu0 0.0
          %1695 = vmatprep.subr.mxu0 0.0
          %1696 = vmatpush1.xpose.msra.mxu0 0.0
          %1697 = vmatprep.subr.mxu0 0.0
          %1698 = vmatpush1.xpose.msra.mxu0 0.0
          %1699 = vmatprep.subr.mxu0 0.0
          %1700 = vmatpush1.xpose.msra.mxu0 0.0
          %1701 = vmatprep.subr.mxu0 0.0
          %1702 = vmatpush1.xpose.msra.mxu0 0.0
          %1703 = vmatprep.subr.mxu0 0.0
          %1704 = vmatpush1.xpose.msra.mxu0 0.0
          %1705 = vmatprep.subr.mxu0 0.0
          %1706 = vmatpush1.xpose.msra.mxu0 0.0
          %1707 = vmatprep.subr.mxu0 0.0
          %1708 = vmatpush1.xpose.msra.mxu0 0.0
          %1709 = vmatprep.subr.mxu0 0.0
          %1710 = vmatpush1.xpose.msra.mxu0 0.0
          %1711 = vmatprep.mubr.f32.mxu0 0.0
          %1712 = vmatmul.mubr.f32.gmra.mrb[0].mxu0 %v1636
          %v1713 = vpop.f32.mrb[0].mxu0
          %v1714 = vadd.f32 0.0, %v1713
          %v1715 = vpop.f32.mrb[0].mxu0
          %1716 = vmatprep.mubr.f32.mxu0 0.0
          %1717 = vmatmul.mubr.f32.gmra.mrb[0].mxu0 %v1639
          %v1718 = vpop.f32.mrb[0].mxu0
          %v1719 = vadd.f32 0.0, %v1718
          %v1720 = vpop.f32.mrb[0].mxu0
          %1721 = vdwg.mxu0
          %v1723 = vsel %vm897, %v1513, 0
          %v1726 = vsel %vm897, %v1581, 0
          %v1729 = vsel %vm897, %v1620, 0
          %v1732 = vsel %vm897, %v1621, 0
          %1734 = vmatprep.subr.mxu0 0.0
          %1735 = vmatpush1.xpose.msra.mxu0 %v1729
          %1736 = vmatprep.subr.mxu0 0.0
          %1737 = vmatpush1.xpose.msra.mxu0 %v1732
          %1738 = vmatprep.subr.mxu0 0.0
          %1739 = vmatpush1.xpose.msra.mxu0 0.0
          %1740 = vmatprep.subr.mxu0 0.0
          %1741 = vmatpush1.xpose.msra.mxu0 0.0
          %1742 = vmatprep.subr.mxu0 0.0
          %1743 = vmatpush1.xpose.msra.mxu0 0.0
          %1744 = vmatprep.subr.mxu0 0.0
          %1745 = vmatpush1.xpose.msra.mxu0 0.0
          %1746 = vmatprep.subr.mxu0 0.0
          %1747 = vmatpush1.xpose.msra.mxu0 0.0
          %1748 = vmatprep.subr.mxu0 0.0
          %1749 = vmatpush1.xpose.msra.mxu0 0.0
          %1750 = vmatprep.subr.mxu0 0.0
          %1751 = vmatpush1.xpose.msra.mxu0 0.0
          %1752 = vmatprep.subr.mxu0 0.0
          %1753 = vmatpush1.xpose.msra.mxu0 0.0
          %1754 = vmatprep.subr.mxu0 0.0
          %1755 = vmatpush1.xpose.msra.mxu0 0.0
          %1756 = vmatprep.subr.mxu0 0.0
          %1757 = vmatpush1.xpose.msra.mxu0 0.0
          %1758 = vmatprep.subr.mxu0 0.0
          %1759 = vmatpush1.xpose.msra.mxu0 0.0
          %1760 = vmatprep.subr.mxu0 0.0
          %1761 = vmatpush1.xpose.msra.mxu0 0.0
          %1762 = vmatprep.subr.mxu0 0.0
          %1763 = vmatpush1.xpose.msra.mxu0 0.0
          %1764 = vmatprep.subr.mxu0 0.0
          %1765 = vmatpush1.xpose.msra.mxu0 0.0
          %1766 = vmatprep.subr.mxu0 0.0
          %1767 = vmatpush1.xpose.msra.mxu0 0.0
          %1768 = vmatprep.subr.mxu0 0.0
          %1769 = vmatpush1.xpose.msra.mxu0 0.0
          %1770 = vmatprep.subr.mxu0 0.0
          %1771 = vmatpush1.xpose.msra.mxu0 0.0
          %1772 = vmatprep.subr.mxu0 0.0
          %1773 = vmatpush1.xpose.msra.mxu0 0.0
          %1774 = vmatprep.subr.mxu0 0.0
          %1775 = vmatpush1.xpose.msra.mxu0 0.0
          %1776 = vmatprep.subr.mxu0 0.0
          %1777 = vmatpush1.xpose.msra.mxu0 0.0
          %1778 = vmatprep.subr.mxu0 0.0
          %1779 = vmatpush1.xpose.msra.mxu0 0.0
          %1780 = vmatprep.subr.mxu0 0.0
          %1781 = vmatpush1.xpose.msra.mxu0 0.0
          %1782 = vmatprep.subr.mxu0 0.0
          %1783 = vmatpush1.xpose.msra.mxu0 0.0
          %1784 = vmatprep.subr.mxu0 0.0
          %1785 = vmatpush1.xpose.msra.mxu0 0.0
          %1786 = vmatprep.subr.mxu0 0.0
          %1787 = vmatpush1.xpose.msra.mxu0 0.0
          %1788 = vmatprep.subr.mxu0 0.0
          %1789 = vmatpush1.xpose.msra.mxu0 0.0
          %1790 = vmatprep.subr.mxu0 0.0
          %1791 = vmatpush1.xpose.msra.mxu0 0.0
          %1792 = vmatprep.subr.mxu0 0.0
          %1793 = vmatpush1.xpose.msra.mxu0 0.0
          %1794 = vmatprep.subr.mxu0 0.0
          %1795 = vmatpush1.xpose.msra.mxu0 0.0
          %1796 = vmatprep.subr.mxu0 0.0
          %1797 = vmatpush1.xpose.msra.mxu0 0.0
          %1798 = vmatprep.mubr.f32.mxu0 0.0
          %1799 = vmatmul.mubr.f32.gmra.mrb[0].mxu0 %v1723
          %v1800 = vpop.f32.mrb[0].mxu0
          %v1801 = vadd.f32 0.0, %v1800
          %v1802 = vpop.f32.mrb[0].mxu0
          %1803 = vmatprep.mubr.f32.mxu0 0.0
          %1804 = vmatmul.mubr.f32.gmra.mrb[0].mxu0 %v1726
          %v1805 = vpop.f32.mrb[0].mxu0
          %v1806 = vadd.f32 0.0, %v1805
          %v1807 = vpop.f32.mrb[0].mxu0
          %1808 = vdwg.mxu0
          %v1810 = vsel %vm897, %v1514, 0
          %v1813 = vsel %vm897, %v1582, 0
          %v1816 = vsel %vm897, %v1622, 0
          %v1819 = vsel %vm897, %v1623, 0
          %1821 = vmatprep.subr.mxu0 0.0
          %1822 = vmatpush1.xpose.msra.mxu0 %v1816
          %1823 = vmatprep.subr.mxu0 0.0
          %1824 = vmatpush1.xpose.msra.mxu0 %v1819
          %1825 = vmatprep.subr.mxu0 0.0
          %1826 = vmatpush1.xpose.msra.mxu0 0.0
          %1827 = vmatprep.subr.mxu0 0.0
          %1828 = vmatpush1.xpose.msra.mxu0 0.0
          %1829 = vmatprep.subr.mxu0 0.0
          %1830 = vmatpush1.xpose.msra.mxu0 0.0
          %1831 = vmatprep.subr.mxu0 0.0
          %1832 = vmatpush1.xpose.msra.mxu0 0.0
          %1833 = vmatprep.subr.mxu0 0.0
          %1834 = vmatpush1.xpose.msra.mxu0 0.0
          %1835 = vmatprep.subr.mxu0 0.0
          %1836 = vmatpush1.xpose.msra.mxu0 0.0
          %1837 = vmatprep.subr.mxu0 0.0
          %1838 = vmatpush1.xpose.msra.mxu0 0.0
          %1839 = vmatprep.subr.mxu0 0.0
          %1840 = vmatpush1.xpose.msra.mxu0 0.0
          %1841 = vmatprep.subr.mxu0 0.0
          %1842 = vmatpush1.xpose.msra.mxu0 0.0
          %1843 = vmatprep.subr.mxu0 0.0
          %1844 = vmatpush1.xpose.msra.mxu0 0.0
          %1845 = vmatprep.subr.mxu0 0.0
          %1846 = vmatpush1.xpose.msra.mxu0 0.0
          %1847 = vmatprep.subr.mxu0 0.0
          %1848 = vmatpush1.xpose.msra.mxu0 0.0
          %1849 = vmatprep.subr.mxu0 0.0
          %1850 = vmatpush1.xpose.msra.mxu0 0.0
          %1851 = vmatprep.subr.mxu0 0.0
          %1852 = vmatpush1.xpose.msra.mxu0 0.0
          %1853 = vmatprep.subr.mxu0 0.0
          %1854 = vmatpush1.xpose.msra.mxu0 0.0
          %1855 = vmatprep.subr.mxu0 0.0
          %1856 = vmatpush1.xpose.msra.mxu0 0.0
          %1857 = vmatprep.subr.mxu0 0.0
          %1858 = vmatpush1.xpose.msra.mxu0 0.0
          %1859 = vmatprep.subr.mxu0 0.0
          %1860 = vmatpush1.xpose.msra.mxu0 0.0
          %1861 = vmatprep.subr.mxu0 0.0
          %1862 = vmatpush1.xpose.msra.mxu0 0.0
          %1863 = vmatprep.subr.mxu0 0.0
          %1864 = vmatpush1.xpose.msra.mxu0 0.0
          %1865 = vmatprep.subr.mxu0 0.0
          %1866 = vmatpush1.xpose.msra.mxu0 0.0
          %1867 = vmatprep.subr.mxu0 0.0
          %1868 = vmatpush1.xpose.msra.mxu0 0.0
          %1869 = vmatprep.subr.mxu0 0.0
          %1870 = vmatpush1.xpose.msra.mxu0 0.0
          %1871 = vmatprep.subr.mxu0 0.0
          %1872 = vmatpush1.xpose.msra.mxu0 0.0
          %1873 = vmatprep.subr.mxu0 0.0
          %1874 = vmatpush1.xpose.msra.mxu0 0.0
          %1875 = vmatprep.subr.mxu0 0.0
          %1876 = vmatpush1.xpose.msra.mxu0 0.0
          %1877 = vmatprep.subr.mxu0 0.0
          %1878 = vmatpush1.xpose.msra.mxu0 0.0
          %1879 = vmatprep.subr.mxu0 0.0
          %1880 = vmatpush1.xpose.msra.mxu0 0.0
          %1881 = vmatprep.subr.mxu0 0.0
          %1882 = vmatpush1.xpose.msra.mxu0 0.0
          %1883 = vmatprep.subr.mxu0 0.0
          %1884 = vmatpush1.xpose.msra.mxu0 0.0
          %1885 = vmatprep.mubr.f32.mxu0 0.0
          %1886 = vmatmul.mubr.f32.gmra.mrb[0].mxu0 %v1810
          %v1887 = vpop.f32.mrb[0].mxu0
          %v1888 = vadd.f32 0.0, %v1887
          %v1889 = vpop.f32.mrb[0].mxu0
          %1890 = vmatprep.mubr.f32.mxu0 0.0
          %1891 = vmatmul.mubr.f32.gmra.mrb[0].mxu0 %v1813
          %v1892 = vpop.f32.mrb[0].mxu0
          %v1893 = vadd.f32 0.0, %v1892
          %v1894 = vpop.f32.mrb[0].mxu0
          %1895 = vdwg.mxu0
          %v1897 = vsel %vm897, %v1515, 0
          %v1900 = vsel %vm897, %v1583, 0
          %v1903 = vsel %vm897, %v1624, 0
          %v1906 = vsel %vm897, %v1625, 0
          %1908 = vmatprep.subr.mxu0 0.0
          %1909 = vmatpush1.xpose.msra.mxu0 %v1903
          %1910 = vmatprep.subr.mxu0 0.0
          %1911 = vmatpush1.xpose.msra.mxu0 %v1906
          %1912 = vmatprep.subr.mxu0 0.0
          %1913 = vmatpush1.xpose.msra.mxu0 0.0
          %1914 = vmatprep.subr.mxu0 0.0
          %1915 = vmatpush1.xpose.msra.mxu0 0.0
          %1916 = vmatprep.subr.mxu0 0.0
          %1917 = vmatpush1.xpose.msra.mxu0 0.0
          %1918 = vmatprep.subr.mxu0 0.0
          %1919 = vmatpush1.xpose.msra.mxu0 0.0
          %1920 = vmatprep.subr.mxu0 0.0
          %1921 = vmatpush1.xpose.msra.mxu0 0.0
          %1922 = vmatprep.subr.mxu0 0.0
          %1923 = vmatpush1.xpose.msra.mxu0 0.0
          %1924 = vmatprep.subr.mxu0 0.0
          %1925 = vmatpush1.xpose.msra.mxu0 0.0
          %1926 = vmatprep.subr.mxu0 0.0
          %1927 = vmatpush1.xpose.msra.mxu0 0.0
          %1928 = vmatprep.subr.mxu0 0.0
          %1929 = vmatpush1.xpose.msra.mxu0 0.0
          %1930 = vmatprep.subr.mxu0 0.0
          %1931 = vmatpush1.xpose.msra.mxu0 0.0
          %1932 = vmatprep.subr.mxu0 0.0
          %1933 = vmatpush1.xpose.msra.mxu0 0.0
          %1934 = vmatprep.subr.mxu0 0.0
          %1935 = vmatpush1.xpose.msra.mxu0 0.0
          %1936 = vmatprep.subr.mxu0 0.0
          %1937 = vmatpush1.xpose.msra.mxu0 0.0
          %1938 = vmatprep.subr.mxu0 0.0
          %1939 = vmatpush1.xpose.msra.mxu0 0.0
          %1940 = vmatprep.subr.mxu0 0.0
          %1941 = vmatpush1.xpose.msra.mxu0 0.0
          %1942 = vmatprep.subr.mxu0 0.0
          %1943 = vmatpush1.xpose.msra.mxu0 0.0
          %1944 = vmatprep.subr.mxu0 0.0
          %1945 = vmatpush1.xpose.msra.mxu0 0.0
          %1946 = vmatprep.subr.mxu0 0.0
          %1947 = vmatpush1.xpose.msra.mxu0 0.0
          %1948 = vmatprep.subr.mxu0 0.0
          %1949 = vmatpush1.xpose.msra.mxu0 0.0
          %1950 = vmatprep.subr.mxu0 0.0
          %1951 = vmatpush1.xpose.msra.mxu0 0.0
          %1952 = vmatprep.subr.mxu0 0.0
          %1953 = vmatpush1.xpose.msra.mxu0 0.0
          %1954 = vmatprep.subr.mxu0 0.0
          %1955 = vmatpush1.xpose.msra.mxu0 0.0
          %1956 = vmatprep.subr.mxu0 0.0
          %1957 = vmatpush1.xpose.msra.mxu0 0.0
          %1958 = vmatprep.subr.mxu0 0.0
          %1959 = vmatpush1.xpose.msra.mxu0 0.0
          %1960 = vmatprep.subr.mxu0 0.0
          %1961 = vmatpush1.xpose.msra.mxu0 0.0
          %1962 = vmatprep.subr.mxu0 0.0
          %1963 = vmatpush1.xpose.msra.mxu0 0.0
          %1964 = vmatprep.subr.mxu0 0.0
          %1965 = vmatpush1.xpose.msra.mxu0 0.0
          %1966 = vmatprep.subr.mxu0 0.0
          %1967 = vmatpush1.xpose.msra.mxu0 0.0
          %1968 = vmatprep.subr.mxu0 0.0
          %1969 = vmatpush1.xpose.msra.mxu0 0.0
          %1970 = vmatprep.subr.mxu0 0.0
          %1971 = vmatpush1.xpose.msra.mxu0 0.0
          %1972 = vmatprep.mubr.f32.mxu0 0.0
          %1973 = vmatmul.mubr.f32.gmra.mrb[0].mxu0 %v1897
          %v1974 = vpop.f32.mrb[0].mxu0
          %v1975 = vadd.f32 0.0, %v1974
          %v1976 = vpop.f32.mrb[0].mxu0
          %1977 = vmatprep.mubr.f32.mxu0 0.0
          %1978 = vmatmul.mubr.f32.gmra.mrb[0].mxu0 %v1900
          %v1979 = vpop.f32.mrb[0].mxu0
          %v1980 = vadd.f32 0.0, %v1979
          %v1981 = vpop.f32.mrb[0].mxu0
          %1982 = vdwg.mxu0
          %v1983 = vlaneseq
          %v1984 = vshrl.u32 %v1983, 7
          %v1985 = vadd.s32 %v1984, 8
          %v1986 = vstv %s1584
          %v1987 = vadd.s32 %v1986, %v1984
          %v1988 = vadd.s32 %v1986, %v1985
          %s1989 = smul.u32 %s1587, 16
          %v1990 = vlaneseq
          %v1991 = vand.u32 %v1990, 127
          %v1992 = vstv %s1989
          %v1993 = vadd.s32 %v1992, %v1991
          %vm1994 = vcmp.le.s32.totalorder %v1993, %v1987
          %vm1995 = vcmp.le.s32.totalorder %v1993, %v1988
          %v1996 = vsel %vm1994, 1, 0
          %v1997 = vsel %vm1995, 1, 0
          %vm1998 = vcmp.eq.s32.totalorder %v1996, 1
          %vm1999 = vcmp.eq.s32.totalorder %v1997, 1
          %v2000 = vsel %vm1998, %v1714, -1e+30
          %v2001 = vsel %vm1999, %v1719, -1e+30
          %v2002 = vsel %vm1998, %v1801, -1e+30
          %v2003 = vsel %vm1999, %v1806, -1e+30
          %v2004 = vsel %vm1998, %v1888, -1e+30
          %v2005 = vsel %vm1999, %v1893, -1e+30
          %v2006 = vsel %vm1998, %v1975, -1e+30
          %v2007 = vsel %vm1999, %v1980, -1e+30
          %vm2008 = vcmask 130048
          %v2009 = vsel %vm2008, %v2000, -inf
          %2010 = vmax.xlane.f32.xlu0 %v2009
          %v2011 = vpop.xlane.xlu0 %2010
          %v2012 = vsel %vm2008, %v2001, -inf
          %2013 = vmax.xlane.f32.xlu0 %v2012
          %v2014 = vpop.xlane.xlu0 %2013
          %v2015 = vsel %vm2008, %v2002, -inf
          %2016 = vmax.xlane.f32.xlu0 %v2015
          %v2017 = vpop.xlane.xlu0 %2016
          %v2018 = vsel %vm2008, %v2003, -inf
          %2019 = vmax.xlane.f32.xlu0 %v2018
          %v2020 = vpop.xlane.xlu0 %2019
          %v2021 = vsel %vm2008, %v2004, -inf
          %2022 = vmax.xlane.f32.xlu0 %v2021
          %v2023 = vpop.xlane.xlu0 %2022
          %v2024 = vsel %vm2008, %v2005, -inf
          %2025 = vmax.xlane.f32.xlu0 %v2024
          %v2026 = vpop.xlane.xlu0 %2025
          %v2027 = vsel %vm2008, %v2006, -inf
          %2028 = vmax.xlane.f32.xlu0 %v2027
          %v2029 = vpop.xlane.xlu0 %2028
          %v2030 = vsel %vm2008, %v2007, -inf
          %2031 = vmax.xlane.f32.xlu0 %v2030
          %v2032 = vpop.xlane.xlu0 %2031
          %v2033 = vmax.f32 %v1592, %v2011
          %v2034 = vmax.f32 %v1593, %v2014
          %v2035 = vmax.f32 %v1594, %v2017
          %v2036 = vmax.f32 %v1595, %v2020
          %v2037 = vmax.f32 %v1596, %v2023
          %v2038 = vmax.f32 %v1597, %v2026
          %v2039 = vmax.f32 %v1598, %v2029
          %v2040 = vmax.f32 %v1599, %v2032
          %v2041 = vsub.f32 %v1592, %v2033
          %v2042 = vsub.f32 %v1593, %v2034
          %v2043 = vsub.f32 %v1594, %v2035
          %v2044 = vsub.f32 %v1595, %v2036
          %v2045 = vsub.f32 %v1596, %v2037
          %v2046 = vsub.f32 %v1597, %v2038
          %v2047 = vsub.f32 %v1598, %v2039
          %v2048 = vsub.f32 %v1599, %v2040
          %v2049 = vmul.f32 %v2041, 1.442695
          %v2050 = vpow.pop %v2049
          %v2051 = vmul.f32 %v2042, 1.442695
          %v2052 = vpow.pop %v2051
          %v2053 = vmul.f32 %v2043, 1.442695
          %v2054 = vpow.pop %v2053
          %v2055 = vmul.f32 %v2044, 1.442695
          %v2056 = vpow.pop %v2055
          %v2057 = vmul.f32 %v2045, 1.442695
          %v2058 = vpow.pop %v2057
          %v2059 = vmul.f32 %v2046, 1.442695
          %v2060 = vpow.pop %v2059
          %v2061 = vmul.f32 %v2047, 1.442695
          %v2062 = vpow.pop %v2061
          %v2063 = vmul.f32 %v2048, 1.442695
          %v2064 = vpow.pop %v2063
          %v2065 = vsub.f32 %v2000, %v2033
          %v2066 = vsub.f32 %v2001, %v2034
          %v2067 = vsub.f32 %v2002, %v2035
          %v2068 = vsub.f32 %v2003, %v2036
          %v2069 = vsub.f32 %v2004, %v2037
          %v2070 = vsub.f32 %v2005, %v2038
          %v2071 = vsub.f32 %v2006, %v2039
          %v2072 = vsub.f32 %v2007, %v2040
          %v2073 = vmul.f32 %v2065, 1.442695
          %v2074 = vpow.pop %v2073
          %v2075 = vmul.f32 %v2066, 1.442695
          %v2076 = vpow.pop %v2075
          %v2077 = vmul.f32 %v2067, 1.442695
          %v2078 = vpow.pop %v2077
          %v2079 = vmul.f32 %v2068, 1.442695
          %v2080 = vpow.pop %v2079
          %v2081 = vmul.f32 %v2069, 1.442695
          %v2082 = vpow.pop %v2081
          %v2083 = vmul.f32 %v2070, 1.442695
          %v2084 = vpow.pop %v2083
          %v2085 = vmul.f32 %v2071, 1.442695
          %v2086 = vpow.pop %v2085
          %v2087 = vmul.f32 %v2072, 1.442695
          %v2088 = vpow.pop %v2087
          %v2089 = vmul.f32 %v2050, %v1600
          %v2090 = vmul.f32 %v2052, %v1601
          %v2091 = vmul.f32 %v2054, %v1602
          %v2092 = vmul.f32 %v2056, %v1603
          %v2093 = vmul.f32 %v2058, %v1604
          %v2094 = vmul.f32 %v2060, %v1605
          %v2095 = vmul.f32 %v2062, %v1606
          %v2096 = vmul.f32 %v2064, %v1607
          %v2097 = vsel %vm2008, %v2074, 0.0
          %2098 = vadd.xlane.f32.xlu0 %v2097
          %v2099 = vpop.xlane.xlu0 %2098
          %v2100 = vsel %vm2008, %v2076, 0.0
          %2101 = vadd.xlane.f32.xlu0 %v2100
          %v2102 = vpop.xlane.xlu0 %2101
          %v2103 = vsel %vm2008, %v2078, 0.0
          %2104 = vadd.xlane.f32.xlu0 %v2103
          %v2105 = vpop.xlane.xlu0 %2104
          %v2106 = vsel %vm2008, %v2080, 0.0
          %2107 = vadd.xlane.f32.xlu0 %v2106
          %v2108 = vpop.xlane.xlu0 %2107
          %v2109 = vsel %vm2008, %v2082, 0.0
          %2110 = vadd.xlane.f32.xlu0 %v2109
          %v2111 = vpop.xlane.xlu0 %2110
          %v2112 = vsel %vm2008, %v2084, 0.0
          %2113 = vadd.xlane.f32.xlu0 %v2112
          %v2114 = vpop.xlane.xlu0 %2113
          %v2115 = vsel %vm2008, %v2086, 0.0
          %2116 = vadd.xlane.f32.xlu0 %v2115
          %v2117 = vpop.xlane.xlu0 %2116
          %v2118 = vsel %vm2008, %v2088, 0.0
          %2119 = vadd.xlane.f32.xlu0 %v2118
          %v2120 = vpop.xlane.xlu0 %2119
          %v2121 = vadd.f32 %v2089, %v2099
          %v2122 = vadd.f32 %v2090, %v2102
          %v2123 = vadd.f32 %v2091, %v2105
          %v2124 = vadd.f32 %v2092, %v2108
          %v2125 = vadd.f32 %v2093, %v2111
          %v2126 = vadd.f32 %v2094, %v2114
          %v2127 = vadd.f32 %v2095, %v2117
          %v2128 = vadd.f32 %v2096, %v2120
          %v2129 = vmul.f32 %v2050, %v1608
          %v2130 = vmul.f32 %v2052, %v1609
          %v2131 = vmul.f32 %v2054, %v1610
          %v2132 = vmul.f32 %v2056, %v1611
          %v2133 = vmul.f32 %v2058, %v1612
          %v2134 = vmul.f32 %v2060, %v1613
          %v2135 = vmul.f32 %v2062, %v1614
          %v2136 = vmul.f32 %v2064, %v1615
          %v2138 = vsel %vm2008, %v2074, 0
          %v2141 = vsel %vm2008, %v2076, 0
          %2143 = vmatprep.subr.mxu0 0.0
          %2144 = vmatpush1.msra.mxu0 %v1627
          %2145 = vmatprep.subr.mxu0 0.0
          %2146 = vmatpush1.msra.mxu0 %v1628
          %2147 = vmatprep.subr.mxu0 0.0
          %2148 = vmatpush1.msra.mxu0 0.0
          %2149 = vmatprep.subr.mxu0 0.0
          %2150 = vmatpush1.msra.mxu0 0.0
          %2151 = vmatprep.subr.mxu0 0.0
          %2152 = vmatpush1.msra.mxu0 0.0
          %2153 = vmatprep.subr.mxu0 0.0
          %2154 = vmatpush1.msra.mxu0 0.0
          %2155 = vmatprep.subr.mxu0 0.0
          %2156 = vmatpush1.msra.mxu0 0.0
          %2157 = vmatprep.subr.mxu0 0.0
          %2158 = vmatpush1.msra.mxu0 0.0
          %2159 = vmatprep.subr.mxu0 0.0
          %2160 = vmatpush1.msra.mxu0 0.0
          %2161 = vmatprep.subr.mxu0 0.0
          %2162 = vmatpush1.msra.mxu0 0.0
          %2163 = vmatprep.subr.mxu0 0.0
          %2164 = vmatpush1.msra.mxu0 0.0
          %2165 = vmatprep.subr.mxu0 0.0
          %2166 = vmatpush1.msra.mxu0 0.0
          %2167 = vmatprep.subr.mxu0 0.0
          %2168 = vmatpush1.msra.mxu0 0.0
          %2169 = vmatprep.subr.mxu0 0.0
          %2170 = vmatpush1.msra.mxu0 0.0
          %2171 = vmatprep.subr.mxu0 0.0
          %2172 = vmatpush1.msra.mxu0 0.0
          %2173 = vmatprep.subr.mxu0 0.0
          %2174 = vmatpush1.msra.mxu0 0.0
          %2175 = vmatprep.subr.mxu0 0.0
          %2176 = vmatpush1.msra.mxu0 0.0
          %2177 = vmatprep.subr.mxu0 0.0
          %2178 = vmatpush1.msra.mxu0 0.0
          %2179 = vmatprep.subr.mxu0 0.0
          %2180 = vmatpush1.msra.mxu0 0.0
          %2181 = vmatprep.subr.mxu0 0.0
          %2182 = vmatpush1.msra.mxu0 0.0
          %2183 = vmatprep.subr.mxu0 0.0
          %2184 = vmatpush1.msra.mxu0 0.0
          %2185 = vmatprep.subr.mxu0 0.0
          %2186 = vmatpush1.msra.mxu0 0.0
          %2187 = vmatprep.subr.mxu0 0.0
          %2188 = vmatpush1.msra.mxu0 0.0
          %2189 = vmatprep.subr.mxu0 0.0
          %2190 = vmatpush1.msra.mxu0 0.0
          %2191 = vmatprep.subr.mxu0 0.0
          %2192 = vmatpush1.msra.mxu0 0.0
          %2193 = vmatprep.subr.mxu0 0.0
          %2194 = vmatpush1.msra.mxu0 0.0
          %2195 = vmatprep.subr.mxu0 0.0
          %2196 = vmatpush1.msra.mxu0 0.0
          %2197 = vmatprep.subr.mxu0 0.0
          %2198 = vmatpush1.msra.mxu0 0.0
          %2199 = vmatprep.subr.mxu0 0.0
          %2200 = vmatpush1.msra.mxu0 0.0
          %2201 = vmatprep.subr.mxu0 0.0
          %2202 = vmatpush1.msra.mxu0 0.0
          %2203 = vmatprep.subr.mxu0 0.0
          %2204 = vmatpush1.msra.mxu0 0.0
          %2205 = vmatprep.subr.mxu0 0.0
          %2206 = vmatpush1.msra.mxu0 0.0
          %2207 = vmatprep.mubr.f32.mxu0 0.0
          %2208 = vmatmul.mubr.f32.gmra.mrb[0].mxu0 %v2138
          %v2209 = vpop.f32.mrb[0].mxu0
          %v2210 = vadd.f32 0.0, %v2209
          %v2211 = vpop.f32.mrb[0].mxu0
          %2212 = vmatprep.mubr.f32.mxu0 0.0
          %2213 = vmatmul.mubr.f32.gmra.mrb[0].mxu0 %v2141
          %v2214 = vpop.f32.mrb[0].mxu0
          %v2215 = vadd.f32 0.0, %v2214
          %v2216 = vpop.f32.mrb[0].mxu0
          %2217 = vdwg.mxu0
          %v2219 = vsel %vm2008, %v2078, 0
          %v2222 = vsel %vm2008, %v2080, 0
          %2224 = vmatprep.subr.mxu0 0.0
          %2225 = vmatpush1.msra.mxu0 %v1629
          %2226 = vmatprep.subr.mxu0 0.0
          %2227 = vmatpush1.msra.mxu0 %v1630
          %2228 = vmatprep.subr.mxu0 0.0
          %2229 = vmatpush1.msra.mxu0 0.0
          %2230 = vmatprep.subr.mxu0 0.0
          %2231 = vmatpush1.msra.mxu0 0.0
          %2232 = vmatprep.subr.mxu0 0.0
          %2233 = vmatpush1.msra.mxu0 0.0
          %2234 = vmatprep.subr.mxu0 0.0
          %2235 = vmatpush1.msra.mxu0 0.0
          %2236 = vmatprep.subr.mxu0 0.0
          %2237 = vmatpush1.msra.mxu0 0.0
          %2238 = vmatprep.subr.mxu0 0.0
          %2239 = vmatpush1.msra.mxu0 0.0
          %2240 = vmatprep.subr.mxu0 0.0
          %2241 = vmatpush1.msra.mxu0 0.0
          %2242 = vmatprep.subr.mxu0 0.0
          %2243 = vmatpush1.msra.mxu0 0.0
          %2244 = vmatprep.subr.mxu0 0.0
          %2245 = vmatpush1.msra.mxu0 0.0
          %2246 = vmatprep.subr.mxu0 0.0
          %2247 = vmatpush1.msra.mxu0 0.0
          %2248 = vmatprep.subr.mxu0 0.0
          %2249 = vmatpush1.msra.mxu0 0.0
          %2250 = vmatprep.subr.mxu0 0.0
          %2251 = vmatpush1.msra.mxu0 0.0
          %2252 = vmatprep.subr.mxu0 0.0
          %2253 = vmatpush1.msra.mxu0 0.0
          %2254 = vmatprep.subr.mxu0 0.0
          %2255 = vmatpush1.msra.mxu0 0.0
          %2256 = vmatprep.subr.mxu0 0.0
          %2257 = vmatpush1.msra.mxu0 0.0
          %2258 = vmatprep.subr.mxu0 0.0
          %2259 = vmatpush1.msra.mxu0 0.0
          %2260 = vmatprep.subr.mxu0 0.0
          %2261 = vmatpush1.msra.mxu0 0.0
          %2262 = vmatprep.subr.mxu0 0.0
          %2263 = vmatpush1.msra.mxu0 0.0
          %2264 = vmatprep.subr.mxu0 0.0
          %2265 = vmatpush1.msra.mxu0 0.0
          %2266 = vmatprep.subr.mxu0 0.0
          %2267 = vmatpush1.msra.mxu0 0.0
          %2268 = vmatprep.subr.mxu0 0.0
          %2269 = vmatpush1.msra.mxu0 0.0
          %2270 = vmatprep.subr.mxu0 0.0
          %2271 = vmatpush1.msra.mxu0 0.0
          %2272 = vmatprep.subr.mxu0 0.0
          %2273 = vmatpush1.msra.mxu0 0.0
          %2274 = vmatprep.subr.mxu0 0.0
          %2275 = vmatpush1.msra.mxu0 0.0
          %2276 = vmatprep.subr.mxu0 0.0
          %2277 = vmatpush1.msra.mxu0 0.0
          %2278 = vmatprep.subr.mxu0 0.0
          %2279 = vmatpush1.msra.mxu0 0.0
          %2280 = vmatprep.subr.mxu0 0.0
          %2281 = vmatpush1.msra.mxu0 0.0
          %2282 = vmatprep.subr.mxu0 0.0
          %2283 = vmatpush1.msra.mxu0 0.0
          %2284 = vmatprep.subr.mxu0 0.0
          %2285 = vmatpush1.msra.mxu0 0.0
          %2286 = vmatprep.subr.mxu0 0.0
          %2287 = vmatpush1.msra.mxu0 0.0
          %2288 = vmatprep.mubr.f32.mxu0 0.0
          %2289 = vmatmul.mubr.f32.gmra.mrb[0].mxu0 %v2219
          %v2290 = vpop.f32.mrb[0].mxu0
          %v2291 = vadd.f32 0.0, %v2290
          %v2292 = vpop.f32.mrb[0].mxu0
          %2293 = vmatprep.mubr.f32.mxu0 0.0
          %2294 = vmatmul.mubr.f32.gmra.mrb[0].mxu0 %v2222
          %v2295 = vpop.f32.mrb[0].mxu0
          %v2296 = vadd.f32 0.0, %v2295
          %v2297 = vpop.f32.mrb[0].mxu0
          %2298 = vdwg.mxu0
          %v2300 = vsel %vm2008, %v2082, 0
          %v2303 = vsel %vm2008, %v2084, 0
          %2305 = vmatprep.subr.mxu0 0.0
          %2306 = vmatpush1.msra.mxu0 %v1631
          %2307 = vmatprep.subr.mxu0 0.0
          %2308 = vmatpush1.msra.mxu0 %v1632
          %2309 = vmatprep.subr.mxu0 0.0
          %2310 = vmatpush1.msra.mxu0 0.0
          %2311 = vmatprep.subr.mxu0 0.0
          %2312 = vmatpush1.msra.mxu0 0.0
          %2313 = vmatprep.subr.mxu0 0.0
          %2314 = vmatpush1.msra.mxu0 0.0
          %2315 = vmatprep.subr.mxu0 0.0
          %2316 = vmatpush1.msra.mxu0 0.0
          %2317 = vmatprep.subr.mxu0 0.0
          %2318 = vmatpush1.msra.mxu0 0.0
          %2319 = vmatprep.subr.mxu0 0.0
          %2320 = vmatpush1.msra.mxu0 0.0
          %2321 = vmatprep.subr.mxu0 0.0
          %2322 = vmatpush1.msra.mxu0 0.0
          %2323 = vmatprep.subr.mxu0 0.0
          %2324 = vmatpush1.msra.mxu0 0.0
          %2325 = vmatprep.subr.mxu0 0.0
          %2326 = vmatpush1.msra.mxu0 0.0
          %2327 = vmatprep.subr.mxu0 0.0
          %2328 = vmatpush1.msra.mxu0 0.0
          %2329 = vmatprep.subr.mxu0 0.0
          %2330 = vmatpush1.msra.mxu0 0.0
          %2331 = vmatprep.subr.mxu0 0.0
          %2332 = vmatpush1.msra.mxu0 0.0
          %2333 = vmatprep.subr.mxu0 0.0
          %2334 = vmatpush1.msra.mxu0 0.0
          %2335 = vmatprep.subr.mxu0 0.0
          %2336 = vmatpush1.msra.mxu0 0.0
          %2337 = vmatprep.subr.mxu0 0.0
          %2338 = vmatpush1.msra.mxu0 0.0
          %2339 = vmatprep.subr.mxu0 0.0
          %2340 = vmatpush1.msra.mxu0 0.0
          %2341 = vmatprep.subr.mxu0 0.0
          %2342 = vmatpush1.msra.mxu0 0.0
          %2343 = vmatprep.subr.mxu0 0.0
          %2344 = vmatpush1.msra.mxu0 0.0
          %2345 = vmatprep.subr.mxu0 0.0
          %2346 = vmatpush1.msra.mxu0 0.0
          %2347 = vmatprep.subr.mxu0 0.0
          %2348 = vmatpush1.msra.mxu0 0.0
          %2349 = vmatprep.subr.mxu0 0.0
          %2350 = vmatpush1.msra.mxu0 0.0
          %2351 = vmatprep.subr.mxu0 0.0
          %2352 = vmatpush1.msra.mxu0 0.0
          %2353 = vmatprep.subr.mxu0 0.0
          %2354 = vmatpush1.msra.mxu0 0.0
          %2355 = vmatprep.subr.mxu0 0.0
          %2356 = vmatpush1.msra.mxu0 0.0
          %2357 = vmatprep.subr.mxu0 0.0
          %2358 = vmatpush1.msra.mxu0 0.0
          %2359 = vmatprep.subr.mxu0 0.0
          %2360 = vmatpush1.msra.mxu0 0.0
          %2361 = vmatprep.subr.mxu0 0.0
          %2362 = vmatpush1.msra.mxu0 0.0
          %2363 = vmatprep.subr.mxu0 0.0
          %2364 = vmatpush1.msra.mxu0 0.0
          %2365 = vmatprep.subr.mxu0 0.0
          %2366 = vmatpush1.msra.mxu0 0.0
          %2367 = vmatprep.subr.mxu0 0.0
          %2368 = vmatpush1.msra.mxu0 0.0
          %2369 = vmatprep.mubr.f32.mxu0 0.0
          %2370 = vmatmul.mubr.f32.gmra.mrb[0].mxu0 %v2300
          %v2371 = vpop.f32.mrb[0].mxu0
          %v2372 = vadd.f32 0.0, %v2371
          %v2373 = vpop.f32.mrb[0].mxu0
          %2374 = vmatprep.mubr.f32.mxu0 0.0
          %2375 = vmatmul.mubr.f32.gmra.mrb[0].mxu0 %v2303
          %v2376 = vpop.f32.mrb[0].mxu0
          %v2377 = vadd.f32 0.0, %v2376
          %v2378 = vpop.f32.mrb[0].mxu0
          %2379 = vdwg.mxu0
          %v2381 = vsel %vm2008, %v2086, 0
          %v2384 = vsel %vm2008, %v2088, 0
          %2386 = vmatprep.subr.mxu0 0.0
          %2387 = vmatpush1.msra.mxu0 %v1633
          %2388 = vmatprep.subr.mxu0 0.0
          %2389 = vmatpush1.msra.mxu0 %v1634
          %2390 = vmatprep.subr.mxu0 0.0
          %2391 = vmatpush1.msra.mxu0 0.0
          %2392 = vmatprep.subr.mxu0 0.0
          %2393 = vmatpush1.msra.mxu0 0.0
          %2394 = vmatprep.subr.mxu0 0.0
          %2395 = vmatpush1.msra.mxu0 0.0
          %2396 = vmatprep.subr.mxu0 0.0
          %2397 = vmatpush1.msra.mxu0 0.0
          %2398 = vmatprep.subr.mxu0 0.0
          %2399 = vmatpush1.msra.mxu0 0.0
          %2400 = vmatprep.subr.mxu0 0.0
          %2401 = vmatpush1.msra.mxu0 0.0
          %2402 = vmatprep.subr.mxu0 0.0
          %2403 = vmatpush1.msra.mxu0 0.0
          %2404 = vmatprep.subr.mxu0 0.0
          %2405 = vmatpush1.msra.mxu0 0.0
          %2406 = vmatprep.subr.mxu0 0.0
          %2407 = vmatpush1.msra.mxu0 0.0
          %2408 = vmatprep.subr.mxu0 0.0
          %2409 = vmatpush1.msra.mxu0 0.0
          %2410 = vmatprep.subr.mxu0 0.0
          %2411 = vmatpush1.msra.mxu0 0.0
          %2412 = vmatprep.subr.mxu0 0.0
          %2413 = vmatpush1.msra.mxu0 0.0
          %2414 = vmatprep.subr.mxu0 0.0
          %2415 = vmatpush1.msra.mxu0 0.0
          %2416 = vmatprep.subr.mxu0 0.0
          %2417 = vmatpush1.msra.mxu0 0.0
          %2418 = vmatprep.subr.mxu0 0.0
          %2419 = vmatpush1.msra.mxu0 0.0
          %2420 = vmatprep.subr.mxu0 0.0
          %2421 = vmatpush1.msra.mxu0 0.0
          %2422 = vmatprep.subr.mxu0 0.0
          %2423 = vmatpush1.msra.mxu0 0.0
          %2424 = vmatprep.subr.mxu0 0.0
          %2425 = vmatpush1.msra.mxu0 0.0
          %2426 = vmatprep.subr.mxu0 0.0
          %2427 = vmatpush1.msra.mxu0 0.0
          %2428 = vmatprep.subr.mxu0 0.0
          %2429 = vmatpush1.msra.mxu0 0.0
          %2430 = vmatprep.subr.mxu0 0.0
          %2431 = vmatpush1.msra.mxu0 0.0
          %2432 = vmatprep.subr.mxu0 0.0
          %2433 = vmatpush1.msra.mxu0 0.0
          %2434 = vmatprep.subr.mxu0 0.0
          %2435 = vmatpush1.msra.mxu0 0.0
          %2436 = vmatprep.subr.mxu0 0.0
          %2437 = vmatpush1.msra.mxu0 0.0
          %2438 = vmatprep.subr.mxu0 0.0
          %2439 = vmatpush1.msra.mxu0 0.0
          %2440 = vmatprep.subr.mxu0 0.0
          %2441 = vmatpush1.msra.mxu0 0.0
          %2442 = vmatprep.subr.mxu0 0.0
          %2443 = vmatpush1.msra.mxu0 0.0
          %2444 = vmatprep.subr.mxu0 0.0
          %2445 = vmatpush1.msra.mxu0 0.0
          %2446 = vmatprep.subr.mxu0 0.0
          %2447 = vmatpush1.msra.mxu0 0.0
          %2448 = vmatprep.subr.mxu0 0.0
          %2449 = vmatpush1.msra.mxu0 0.0
          %2450 = vmatprep.mubr.f32.mxu0 0.0
          %2451 = vmatmul.mubr.f32.gmra.mrb[0].mxu0 %v2381
          %v2452 = vpop.f32.mrb[0].mxu0
          %v2453 = vadd.f32 0.0, %v2452
          %v2454 = vpop.f32.mrb[0].mxu0
          %2455 = vmatprep.mubr.f32.mxu0 0.0
          %2456 = vmatmul.mubr.f32.gmra.mrb[0].mxu0 %v2384
          %v2457 = vpop.f32.mrb[0].mxu0
          %v2458 = vadd.f32 0.0, %v2457
          %v2459 = vpop.f32.mrb[0].mxu0
          %2460 = vdwg.mxu0
          %v2461 = vadd.f32 %v2129, %v2210
          %v2462 = vadd.f32 %v2130, %v2215
          %v2463 = vadd.f32 %v2131, %v2291
          %v2464 = vadd.f32 %v2132, %v2296
          %v2465 = vadd.f32 %v2133, %v2372
          %v2466 = vadd.f32 %v2134, %v2377
          %v2467 = vadd.f32 %v2135, %v2453
          %v2468 = vadd.f32 %v2136, %v2458
        $region77: #{tpu_custom_call.1} parent=71 // loop_footer
          %s1589 = sadd.s32 %s1587, 1
        $region78: #{tpu_custom_call.1} parent=71 // loop_footer_branch
          %1586 = sbr.rel target = $region74
        $region79: #{tpu_custom_call.1} parent=71 // loop_exit
          _
        %v2469 = vrcp.pop %v1600
        %v2470 = vmul.f32 %v1608, %v2469
        %v2471 = vrcp.pop %v1601
        %v2472 = vmul.f32 %v1609, %v2471
        %v2473 = vrcp.pop %v1602
        %v2474 = vmul.f32 %v1610, %v2473
        %v2475 = vrcp.pop %v1603
        %v2476 = vmul.f32 %v1611, %v2475
        %v2477 = vrcp.pop %v1604
        %v2478 = vmul.f32 %v1612, %v2477
        %v2479 = vrcp.pop %v1605
        %v2480 = vmul.f32 %v1613, %v2479
        %v2481 = vrcp.pop %v1606
        %v2482 = vmul.f32 %v1614, %v2481
        %v2483 = vrcp.pop %v1607
        %v2484 = vmul.f32 %v1615, %v2483
        %v2485 = vcombine.low %v2470, %v2478
        %v2486 = vcombine.high %v2470, %v2478
        %v2488 = vunpack.c.l.s4 1983009808
        %v2489 = vunpack.c.0.s8 %v2488
        %v2490 = vlaneseq
        %v2491 = vshrl.u32 %v2490, 7
        %v2492 = vsub.s32 %v2489, %v2491
        %v2493 = vrot.slane %v2485, %v2492
        %v2495 = vunpack.c.l.s4 1983009808
        %v2496 = vunpack.c.0.s8 %v2495
        %v2497 = vlaneseq
        %v2498 = vshrl.u32 %v2497, 7
        %v2499 = vsub.s32 %v2496, %v2498
        %v2500 = vrot.slane %v2486, %v2499
        %v2501 = vcombine.low %v2474, %v2482
        %v2502 = vcombine.high %v2474, %v2482
        %v2504 = vunpack.c.l.s4 1983009808
        %v2505 = vunpack.c.0.s8 %v2504
        %v2506 = vlaneseq
        %v2507 = vshrl.u32 %v2506, 7
        %v2508 = vsub.s32 %v2505, %v2507
        %v2509 = vrot.slane %v2501, %v2508
        %v2511 = vunpack.c.l.s4 1983009808
        %v2512 = vunpack.c.0.s8 %v2511
        %v2513 = vlaneseq
        %v2514 = vshrl.u32 %v2513, 7
        %v2515 = vsub.s32 %v2512, %v2514
        %v2516 = vrot.slane %v2502, %v2515
        %v2517 = vcombine.low %v2493, %v2509
        %v2518 = vcombine.high %v2493, %v2509
        %v2520 = vunpack.c.l.s4 1934713408
        %v2521 = vunpack.c.0.s8 %v2520
        %v2522 = vlaneseq
        %v2523 = vshrl.u32 %v2522, 7
        %v2524 = vsub.s32 %v2521, %v2523
        %v2525 = vrot.slane %v2517, %v2524
        %v2527 = vunpack.c.l.s4 1934713408
        %v2528 = vunpack.c.0.s8 %v2527
        %v2529 = vlaneseq
        %v2530 = vshrl.u32 %v2529, 7
        %v2531 = vsub.s32 %v2528, %v2530
        %v2532 = vrot.slane %v2518, %v2531
        %v2533 = vcombine.low %v2500, %v2516
        %v2534 = vcombine.high %v2500, %v2516
        %v2536 = vunpack.c.l.s4 1934713408
        %v2537 = vunpack.c.0.s8 %v2536
        %v2538 = vlaneseq
        %v2539 = vshrl.u32 %v2538, 7
        %v2540 = vsub.s32 %v2537, %v2539
        %v2541 = vrot.slane %v2533, %v2540
        %v2543 = vunpack.c.l.s4 1934713408
        %v2544 = vunpack.c.0.s8 %v2543
        %v2545 = vlaneseq
        %v2546 = vshrl.u32 %v2545, 7
        %v2547 = vsub.s32 %v2544, %v2546
        %v2548 = vrot.slane %v2534, %v2547
        %v2549 = vcombine.high %v2525, 0.0
        %v2550 = vcombine.high %v2532, 0.0
        %v2551 = vcombine.high %v2541, 0.0
        %v2552 = vcombine.high %v2548, 0.0
        %v2553 = vcombine.low %v2472, %v2480
        %v2554 = vcombine.high %v2472, %v2480
        %v2556 = vunpack.c.l.s4 1983009808
        %v2557 = vunpack.c.0.s8 %v2556
        %v2558 = vlaneseq
        %v2559 = vshrl.u32 %v2558, 7
        %v2560 = vsub.s32 %v2557, %v2559
        %v2561 = vrot.slane %v2553, %v2560
        %v2563 = vunpack.c.l.s4 1983009808
        %v2564 = vunpack.c.0.s8 %v2563
        %v2565 = vlaneseq
        %v2566 = vshrl.u32 %v2565, 7
        %v2567 = vsub.s32 %v2564, %v2566
        %v2568 = vrot.slane %v2554, %v2567
        %v2569 = vcombine.low %v2476, %v2484
        %v2570 = vcombine.high %v2476, %v2484
        %v2572 = vunpack.c.l.s4 1983009808
        %v2573 = vunpack.c.0.s8 %v2572
        %v2574 = vlaneseq
        %v2575 = vshrl.u32 %v2574, 7
        %v2576 = vsub.s32 %v2573, %v2575
        %v2577 = vrot.slane %v2569, %v2576
        %v2579 = vunpack.c.l.s4 1983009808
        %v2580 = vunpack.c.0.s8 %v2579
        %v2581 = vlaneseq
        %v2582 = vshrl.u32 %v2581, 7
        %v2583 = vsub.s32 %v2580, %v2582
        %v2584 = vrot.slane %v2570, %v2583
        %v2585 = vcombine.low %v2561, %v2577
        %v2586 = vcombine.high %v2561, %v2577
        %v2588 = vunpack.c.l.s4 1934713408
        %v2589 = vunpack.c.0.s8 %v2588
        %v2590 = vlaneseq
        %v2591 = vshrl.u32 %v2590, 7
        %v2592 = vsub.s32 %v2589, %v2591
        %v2593 = vrot.slane %v2585, %v2592
        %v2595 = vunpack.c.l.s4 1934713408
        %v2596 = vunpack.c.0.s8 %v2595
        %v2597 = vlaneseq
        %v2598 = vshrl.u32 %v2597, 7
        %v2599 = vsub.s32 %v2596, %v2598
        %v2600 = vrot.slane %v2586, %v2599
        %v2601 = vcombine.low %v2568, %v2584
        %v2602 = vcombine.high %v2568, %v2584
        %v2604 = vunpack.c.l.s4 1934713408
        %v2605 = vunpack.c.0.s8 %v2604
        %v2606 = vlaneseq
        %v2607 = vshrl.u32 %v2606, 7
        %v2608 = vsub.s32 %v2605, %v2607
        %v2609 = vrot.slane %v2601, %v2608
        %v2611 = vunpack.c.l.s4 1934713408
        %v2612 = vunpack.c.0.s8 %v2611
        %v2613 = vlaneseq
        %v2614 = vshrl.u32 %v2613, 7
        %v2615 = vsub.s32 %v2612, %v2614
        %v2616 = vrot.slane %v2602, %v2615
        %v2617 = vcombine.high %v2593, 0.0
        %v2618 = vcombine.high %v2600, 0.0
        %v2619 = vcombine.high %v2609, 0.0
        %v2620 = vcombine.high %v2616, 0.0
        %v2621 = vcombine.low %v2525, %v2532
        %v2623 = vunpack.c.l.s4 1983009808
        %v2624 = vunpack.c.0.s8 %v2623
        %v2625 = vlaneseq
        %v2626 = vshrl.u32 %v2625, 7
        %v2627 = vsub.s32 %v2624, %v2626
        %v2628 = vrot.slane %v2621, %v2627
        %v2629 = vcombine.low %v2549, %v2550
        %v2631 = vunpack.c.l.s4 1983009808
        %v2632 = vunpack.c.0.s8 %v2631
        %v2633 = vlaneseq
        %v2634 = vshrl.u32 %v2633, 7
        %v2635 = vsub.s32 %v2632, %v2634
        %v2636 = vrot.slane %v2629, %v2635
        %v2637 = vcombine.low %v2541, %v2548
        %v2639 = vunpack.c.l.s4 1983009808
        %v2640 = vunpack.c.0.s8 %v2639
        %v2641 = vlaneseq
        %v2642 = vshrl.u32 %v2641, 7
        %v2643 = vsub.s32 %v2640, %v2642
        %v2644 = vrot.slane %v2637, %v2643
        %v2645 = vcombine.low %v2551, %v2552
        %v2647 = vunpack.c.l.s4 1983009808
        %v2648 = vunpack.c.0.s8 %v2647
        %v2649 = vlaneseq
        %v2650 = vshrl.u32 %v2649, 7
        %v2651 = vsub.s32 %v2648, %v2650
        %v2652 = vrot.slane %v2645, %v2651
        %v2653 = vcombine.low %v2628, %v2636
        %v2654 = vcombine.high %v2628, %v2636
        %v2656 = vunpack.c.l.s4 1934713408
        %v2657 = vunpack.c.0.s8 %v2656
        %v2658 = vlaneseq
        %v2659 = vshrl.u32 %v2658, 7
        %v2660 = vsub.s32 %v2657, %v2659
        %v2661 = vrot.slane %v2653, %v2660
        %v2663 = vunpack.c.l.s4 1934713408
        %v2664 = vunpack.c.0.s8 %v2663
        %v2665 = vlaneseq
        %v2666 = vshrl.u32 %v2665, 7
        %v2667 = vsub.s32 %v2664, %v2666
        %v2668 = vrot.slane %v2654, %v2667
        %v2669 = vcombine.low %v2644, %v2652
        %v2670 = vcombine.high %v2644, %v2652
        %v2672 = vunpack.c.l.s4 1934713408
        %v2673 = vunpack.c.0.s8 %v2672
        %v2674 = vlaneseq
        %v2675 = vshrl.u32 %v2674, 7
        %v2676 = vsub.s32 %v2673, %v2675
        %v2677 = vrot.slane %v2669, %v2676
        %v2679 = vunpack.c.l.s4 1934713408
        %v2680 = vunpack.c.0.s8 %v2679
        %v2681 = vlaneseq
        %v2682 = vshrl.u32 %v2681, 7
        %v2683 = vsub.s32 %v2680, %v2682
        %v2684 = vrot.slane %v2670, %v2683
        %v2685 = vcombine.low %v2661, %v2677
        %v2686 = vcombine.high %v2661, %v2677
        %v2687 = vcombine.low %v2668, %v2684
        %v2688 = vcombine.high %v2668, %v2684
        %v2689 = vcombine.low %v2593, %v2600
        %v2691 = vunpack.c.l.s4 1983009808
        %v2692 = vunpack.c.0.s8 %v2691
        %v2693 = vlaneseq
        %v2694 = vshrl.u32 %v2693, 7
        %v2695 = vsub.s32 %v2692, %v2694
        %v2696 = vrot.slane %v2689, %v2695
        %v2697 = vcombine.low %v2617, %v2618
        %v2699 = vunpack.c.l.s4 1983009808
        %v2700 = vunpack.c.0.s8 %v2699
        %v2701 = vlaneseq
        %v2702 = vshrl.u32 %v2701, 7
        %v2703 = vsub.s32 %v2700, %v2702
        %v2704 = vrot.slane %v2697, %v2703
        %v2705 = vcombine.low %v2609, %v2616
        %v2707 = vunpack.c.l.s4 1983009808
        %v2708 = vunpack.c.0.s8 %v2707
        %v2709 = vlaneseq
        %v2710 = vshrl.u32 %v2709, 7
        %v2711 = vsub.s32 %v2708, %v2710
        %v2712 = vrot.slane %v2705, %v2711
        %v2713 = vcombine.low %v2619, %v2620
        %v2715 = vunpack.c.l.s4 1983009808
        %v2716 = vunpack.c.0.s8 %v2715
        %v2717 = vlaneseq
        %v2718 = vshrl.u32 %v2717, 7
        %v2719 = vsub.s32 %v2716, %v2718
        %v2720 = vrot.slane %v2713, %v2719
        %v2721 = vcombine.low %v2696, %v2704
        %v2722 = vcombine.high %v2696, %v2704
        %v2724 = vunpack.c.l.s4 1934713408
        %v2725 = vunpack.c.0.s8 %v2724
        %v2726 = vlaneseq
        %v2727 = vshrl.u32 %v2726, 7
        %v2728 = vsub.s32 %v2725, %v2727
        %v2729 = vrot.slane %v2721, %v2728
        %v2731 = vunpack.c.l.s4 1934713408
        %v2732 = vunpack.c.0.s8 %v2731
        %v2733 = vlaneseq
        %v2734 = vshrl.u32 %v2733, 7
        %v2735 = vsub.s32 %v2732, %v2734
        %v2736 = vrot.slane %v2722, %v2735
        %v2737 = vcombine.low %v2712, %v2720
        %v2738 = vcombine.high %v2712, %v2720
        %v2740 = vunpack.c.l.s4 1934713408
        %v2741 = vunpack.c.0.s8 %v2740
        %v2742 = vlaneseq
        %v2743 = vshrl.u32 %v2742, 7
        %v2744 = vsub.s32 %v2741, %v2743
        %v2745 = vrot.slane %v2737, %v2744
        %v2747 = vunpack.c.l.s4 1934713408
        %v2748 = vunpack.c.0.s8 %v2747
        %v2749 = vlaneseq
        %v2750 = vshrl.u32 %v2749, 7
        %v2751 = vsub.s32 %v2748, %v2750
        %v2752 = vrot.slane %v2738, %v2751
        %v2753 = vcombine.low %v2729, %v2745
        %v2754 = vcombine.high %v2729, %v2745
        %v2755 = vcombine.low %v2736, %v2752
        %v2756 = vcombine.high %v2736, %v2752
        %2759 = vrot.lane.b32.xlu0 %v2686, 8
        %v2760 = vpop.permute.xlu0 %2759
        %2761 = vrot.lane.b32.xlu0 %v2754, 8
        %v2762 = vpop.permute.xlu0 %2761
        %2767 = vrot.lane.b32.xlu0 %v2687, 16
        %v2768 = vpop.permute.xlu0 %2767
        %2769 = vrot.lane.b32.xlu0 %v2755, 16
        %v2770 = vpop.permute.xlu0 %2769
        %2775 = vrot.lane.b32.xlu0 %v2688, 24
        %v2776 = vpop.permute.xlu0 %2775
        %2777 = vrot.lane.b32.xlu0 %v2756, 24
        %v2778 = vpop.permute.xlu0 %2777
        %v2781 = vsel %vm897, %v2685, %v2760
        %v2782 = vsel %vm897, %v2753, %v2762
        %vm2783 = vcmask 130048
        %v2784 = vsel %vm2783, %v2781, %v2768
        %v2785 = vsel %vm2783, %v2782, %v2770
        %vm2786 = vcmask 195584
        %v2787 = vsel %vm2786, %v2784, %v2776
        %v2788 = vsel %vm2786, %v2785, %v2778
        %v2789 = vld [vmem:[%s5] sm:$0xff]
        %v2790 = vld [vmem:[%s5 + $0x8] sm:$0xff]
        %v2791 = vld [vmem:[%s5 + $0x10] sm:$0xff]
        %v2792 = vld [vmem:[%s5 + $0x18] sm:$0xff]
        %v2793 = vld [vmem:[%s6] sm:$0x1]
        %v2795 = vlaneseq
        %v2796 = vshrl.u32 %v2795, 7
        %v2797 = vsub.s32 0, %v2796
        %v2798 = vrot.slane %v2793, %v2797
        %v2801 = vsel %vm474, %v2787, 0
        %v2804 = vsel %vm474, %v2788, 0
        %2806 = vmatprep.subr.mxu0 0.0
        %2807 = vmatpush1.msra.mxu0 %v2789
        %2808 = vmatprep.subr.mxu0 0.0
        %2809 = vmatpush1.msra.mxu0 %v2790
        %2810 = vmatprep.subr.mxu0 0.0
        %2811 = vmatpush1.msra.mxu0 %v2791
        %2812 = vmatprep.subr.mxu0 0.0
        %2813 = vmatpush1.msra.mxu0 %v2792
        %2814 = vmatprep.subr.mxu0 0.0
        %2815 = vmatpush1.msra.mxu0 0.0
        %2816 = vmatprep.subr.mxu0 0.0
        %2817 = vmatpush1.msra.mxu0 0.0
        %2818 = vmatprep.subr.mxu0 0.0
        %2819 = vmatpush1.msra.mxu0 0.0
        %2820 = vmatprep.subr.mxu0 0.0
        %2821 = vmatpush1.msra.mxu0 0.0
        %2822 = vmatprep.subr.mxu0 0.0
        %2823 = vmatpush1.msra.mxu0 0.0
        %2824 = vmatprep.subr.mxu0 0.0
        %2825 = vmatpush1.msra.mxu0 0.0
        %2826 = vmatprep.subr.mxu0 0.0
        %2827 = vmatpush1.msra.mxu0 0.0
        %2828 = vmatprep.subr.mxu0 0.0
        %2829 = vmatpush1.msra.mxu0 0.0
        %2830 = vmatprep.subr.mxu0 0.0
        %2831 = vmatpush1.msra.mxu0 0.0
        %2832 = vmatprep.subr.mxu0 0.0
        %2833 = vmatpush1.msra.mxu0 0.0
        %2834 = vmatprep.subr.mxu0 0.0
        %2835 = vmatpush1.msra.mxu0 0.0
        %2836 = vmatprep.subr.mxu0 0.0
        %2837 = vmatpush1.msra.mxu0 0.0
        %2838 = vmatprep.subr.mxu0 0.0
        %2839 = vmatpush1.msra.mxu0 0.0
        %2840 = vmatprep.subr.mxu0 0.0
        %2841 = vmatpush1.msra.mxu0 0.0
        %2842 = vmatprep.subr.mxu0 0.0
        %2843 = vmatpush1.msra.mxu0 0.0
        %2844 = vmatprep.subr.mxu0 0.0
        %2845 = vmatpush1.msra.mxu0 0.0
        %2846 = vmatprep.subr.mxu0 0.0
        %2847 = vmatpush1.msra.mxu0 0.0
        %2848 = vmatprep.subr.mxu0 0.0
        %2849 = vmatpush1.msra.mxu0 0.0
        %2850 = vmatprep.subr.mxu0 0.0
        %2851 = vmatpush1.msra.mxu0 0.0
        %2852 = vmatprep.subr.mxu0 0.0
        %2853 = vmatpush1.msra.mxu0 0.0
        %2854 = vmatprep.subr.mxu0 0.0
        %2855 = vmatpush1.msra.mxu0 0.0
        %2856 = vmatprep.subr.mxu0 0.0
        %2857 = vmatpush1.msra.mxu0 0.0
        %2858 = vmatprep.subr.mxu0 0.0
        %2859 = vmatpush1.msra.mxu0 0.0
        %2860 = vmatprep.subr.mxu0 0.0
        %2861 = vmatpush1.msra.mxu0 0.0
        %2862 = vmatprep.subr.mxu0 0.0
        %2863 = vmatpush1.msra.mxu0 0.0
        %2864 = vmatprep.subr.mxu0 0.0
        %2865 = vmatpush1.msra.mxu0 0.0
        %2866 = vmatprep.subr.mxu0 0.0
        %2867 = vmatpush1.msra.mxu0 0.0
        %2868 = vmatprep.subr.mxu0 0.0
        %2869 = vmatpush1.msra.mxu0 0.0
        %2870 = vmatprep.mubr.f32.mxu0 0.0
        %2871 = vmatmul.mubr.f32.gmra.mrb[0].mxu0 %v2801
        %v2872 = vpop.f32.mrb[0].mxu0
        %v2873 = vadd.f32 %v2798, %v2872
        %v2874 = vpop.f32.mrb[0].mxu0
        %2875 = vmatprep.mubr.f32.mxu0 0.0
        %2876 = vmatmul.mubr.f32.gmra.mrb[0].mxu0 %v2804
        %v2877 = vpop.f32.mrb[0].mxu0
        %v2878 = vadd.f32 %v2798, %v2877
        %v2879 = vpop.f32.mrb[0].mxu0
        %2880 = vdwg.mxu0
        %v2881 = vadd.f32 %v472, %v2873
        %v2882 = vadd.f32 %v473, %v2878
        %v2883 = vld [vmem:[%s7] sm:$0x1]
        %v2884 = vld [vmem:[%s8] sm:$0x1]
        %v2885 = vsel %vm474, %v2881, 0.0
        %2886 = vadd.xlane.f32.xlu0 %v2885
        %v2887 = vpop.xlane.xlu0 %2886
        %v2888 = vsel %vm474, %v2882, 0.0
        %2889 = vadd.xlane.f32.xlu0 %v2888
        %v2890 = vpop.xlane.xlu0 %2889
        %v2891 = vmul.f32 %v2887, %v481
        %v2892 = vmul.f32 %v2890, %v481
        %v2893 = vsub.f32 %v2881, %v2891
        %v2894 = vsub.f32 %v2882, %v2892
        %v2895 = vmul.f32 %v2893, %v2893
        %v2896 = vmul.f32 %v2894, %v2894
        %v2897 = vsel %vm474, %v2895, 0.0
        %2898 = vadd.xlane.f32.xlu0 %v2897
        %v2899 = vpop.xlane.xlu0 %2898
        %v2900 = vsel %vm474, %v2896, 0.0
        %2901 = vadd.xlane.f32.xlu0 %v2900
        %v2902 = vpop.xlane.xlu0 %2901
        %v2903 = vmul.f32 %v2899, %v481
        %v2904 = vmul.f32 %v2902, %v481
        %v2905 = vadd.f32 %v2903, 1e-05
        %v2906 = vadd.f32 %v2904, 1e-05
        %v2907 = vrsqrt.pop %v2905
        %v2908 = vrsqrt.pop %v2906
        %v2909 = vmul.f32 %v2893, %v2907
        %v2910 = vmul.f32 %v2894, %v2908
        %v2912 = vlaneseq
        %v2913 = vshrl.u32 %v2912, 7
        %v2914 = vsub.s32 0, %v2913
        %v2915 = vrot.slane %v2883, %v2914
        %v2917 = vmul.f32 %v2909, %v2915
        %v2918 = vmul.f32 %v2910, %v2915
        %v2920 = vlaneseq
        %v2921 = vshrl.u32 %v2920, 7
        %v2922 = vsub.s32 0, %v2921
        %v2923 = vrot.slane %v2884, %v2922
        %v2925 = vadd.f32 %v2917, %v2923
        %v2926 = vadd.f32 %v2918, %v2923
        %v2927 = vld [vmem:[%s9] sm:$0xff]
        %v2928 = vld [vmem:[%s9 + $0x8] sm:$0xff]
        %v2929 = vld [vmem:[%s9 + $0x10] sm:$0xff]
        %v2930 = vld [vmem:[%s9 + $0x18] sm:$0xff]
        %v2931 = vld [vmem:[%s10] sm:$0x1]
        %v2933 = vlaneseq
        %v2934 = vshrl.u32 %v2933, 7
        %v2935 = vsub.s32 0, %v2934
        %v2936 = vrot.slane %v2931, %v2935
        %v2939 = vsel %vm474, %v2925, 0
        %v2942 = vsel %vm474, %v2926, 0
        %2944 = vmatprep.subr.mxu0 0.0
        %2945 = vmatpush1.msra.mxu0 %v2927
        %2946 = vmatprep.subr.mxu0 0.0
        %2947 = vmatpush1.msra.mxu0 %v2928
        %2948 = vmatprep.subr.mxu0 0.0
        %2949 = vmatpush1.msra.mxu0 %v2929
        %2950 = vmatprep.subr.mxu0 0.0
        %2951 = vmatpush1.msra.mxu0 %v2930
        %2952 = vmatprep.subr.mxu0 0.0
        %2953 = vmatpush1.msra.mxu0 0.0
        %2954 = vmatprep.subr.mxu0 0.0
        %2955 = vmatpush1.msra.mxu0 0.0
        %2956 = vmatprep.subr.mxu0 0.0
        %2957 = vmatpush1.msra.mxu0 0.0
        %2958 = vmatprep.subr.mxu0 0.0
        %2959 = vmatpush1.msra.mxu0 0.0
        %2960 = vmatprep.subr.mxu0 0.0
        %2961 = vmatpush1.msra.mxu0 0.0
        %2962 = vmatprep.subr.mxu0 0.0
        %2963 = vmatpush1.msra.mxu0 0.0
        %2964 = vmatprep.subr.mxu0 0.0
        %2965 = vmatpush1.msra.mxu0 0.0
        %2966 = vmatprep.subr.mxu0 0.0
        %2967 = vmatpush1.msra.mxu0 0.0
        %2968 = vmatprep.subr.mxu0 0.0
        %2969 = vmatpush1.msra.mxu0 0.0
        %2970 = vmatprep.subr.mxu0 0.0
        %2971 = vmatpush1.msra.mxu0 0.0
        %2972 = vmatprep.subr.mxu0 0.0
        %2973 = vmatpush1.msra.mxu0 0.0
        %2974 = vmatprep.subr.mxu0 0.0
        %2975 = vmatpush1.msra.mxu0 0.0
        %2976 = vmatprep.subr.mxu0 0.0
        %2977 = vmatpush1.msra.mxu0 0.0
        %2978 = vmatprep.subr.mxu0 0.0
        %2979 = vmatpush1.msra.mxu0 0.0
        %2980 = vmatprep.subr.mxu0 0.0
        %2981 = vmatpush1.msra.mxu0 0.0
        %2982 = vmatprep.subr.mxu0 0.0
        %2983 = vmatpush1.msra.mxu0 0.0
        %2984 = vmatprep.subr.mxu0 0.0
        %2985 = vmatpush1.msra.mxu0 0.0
        %2986 = vmatprep.subr.mxu0 0.0
        %2987 = vmatpush1.msra.mxu0 0.0
        %2988 = vmatprep.subr.mxu0 0.0
        %2989 = vmatpush1.msra.mxu0 0.0
        %2990 = vmatprep.subr.mxu0 0.0
        %2991 = vmatpush1.msra.mxu0 0.0
        %2992 = vmatprep.subr.mxu0 0.0
        %2993 = vmatpush1.msra.mxu0 0.0
        %2994 = vmatprep.subr.mxu0 0.0
        %2995 = vmatpush1.msra.mxu0 0.0
        %2996 = vmatprep.subr.mxu0 0.0
        %2997 = vmatpush1.msra.mxu0 0.0
        %2998 = vmatprep.subr.mxu0 0.0
        %2999 = vmatpush1.msra.mxu0 0.0
        %3000 = vmatprep.subr.mxu0 0.0
        %3001 = vmatpush1.msra.mxu0 0.0
        %3002 = vmatprep.subr.mxu0 0.0
        %3003 = vmatpush1.msra.mxu0 0.0
        %3004 = vmatprep.subr.mxu0 0.0
        %3005 = vmatpush1.msra.mxu0 0.0
        %3006 = vmatprep.subr.mxu0 0.0
        %3007 = vmatpush1.msra.mxu0 0.0
        %3008 = vmatprep.mubr.f32.mxu0 0.0
        %3009 = vmatmul.mubr.f32.gmra.mrb[0].mxu0 %v2939
        %v3010 = vpop.f32.mrb[0].mxu0
        %v3011 = vadd.f32 %v2936, %v3010
        %v3012 = vpop.f32.mrb[0].mxu0
        %3013 = vmatprep.mubr.f32.mxu0 0.0
        %3014 = vmatmul.mubr.f32.gmra.mrb[0].mxu0 %v2942
        %v3015 = vpop.f32.mrb[0].mxu0
        %v3016 = vadd.f32 %v2936, %v3015
        %v3017 = vpop.f32.mrb[0].mxu0
        %3018 = vdwg.mxu0
        %v3019 = vmax.f32 %v3011, 0.0
        %v3020 = vmax.f32 %v3016, 0.0
        %v3021 = vld [vmem:[%s11] sm:$0xff]
        %v3022 = vld [vmem:[%s11 + $0x8] sm:$0xff]
        %v3023 = vld [vmem:[%s11 + $0x10] sm:$0xff]
        %v3024 = vld [vmem:[%s11 + $0x18] sm:$0xff]
        %v3025 = vld [vmem:[%s11 + $0x20] sm:$0xff]
        %v3026 = vld [vmem:[%s11 + $0x28] sm:$0xff]
        %v3027 = vld [vmem:[%s11 + $0x30] sm:$0xff]
        %v3028 = vld [vmem:[%s11 + $0x38] sm:$0xff]
        %v3029 = vld [vmem:[%s11 + $0x40] sm:$0xff]
        %v3030 = vld [vmem:[%s11 + $0x48] sm:$0xff]
        %v3031 = vld [vmem:[%s11 + $0x50] sm:$0xff]
        %v3032 = vld [vmem:[%s11 + $0x58] sm:$0xff]
        %v3033 = vld [vmem:[%s11 + $0x60] sm:$0xff]
        %v3034 = vld [vmem:[%s11 + $0x68] sm:$0xff]
        %v3035 = vld [vmem:[%s11 + $0x70] sm:$0xff]
        %v3036 = vld [vmem:[%s11 + $0x78] sm:$0xff]
        %v3037 = vld [vmem:[%s12] sm:$0x1]
        %v3039 = vlaneseq
        %v3040 = vshrl.u32 %v3039, 7
        %v3041 = vsub.s32 0, %v3040
        %v3042 = vrot.slane %v3037, %v3041
        %3044 = vmatprep.subr.mxu0 0.0
        %3045 = vmatpush1.msra.mxu0 %v3021
        %3046 = vmatprep.subr.mxu0 0.0
        %3047 = vmatpush1.msra.mxu0 %v3022
        %3048 = vmatprep.subr.mxu0 0.0
        %3049 = vmatpush1.msra.mxu0 %v3023
        %3050 = vmatprep.subr.mxu0 0.0
        %3051 = vmatpush1.msra.mxu0 %v3024
        %3052 = vmatprep.subr.mxu0 0.0
        %3053 = vmatpush1.msra.mxu0 %v3025
        %3054 = vmatprep.subr.mxu0 0.0
        %3055 = vmatpush1.msra.mxu0 %v3026
        %3056 = vmatprep.subr.mxu0 0.0
        %3057 = vmatpush1.msra.mxu0 %v3027
        %3058 = vmatprep.subr.mxu0 0.0
        %3059 = vmatpush1.msra.mxu0 %v3028
        %3060 = vmatprep.subr.mxu0 0.0
        %3061 = vmatpush1.msra.mxu0 %v3029
        %3062 = vmatprep.subr.mxu0 0.0
        %3063 = vmatpush1.msra.mxu0 %v3030
        %3064 = vmatprep.subr.mxu0 0.0
        %3065 = vmatpush1.msra.mxu0 %v3031
        %3066 = vmatprep.subr.mxu0 0.0
        %3067 = vmatpush1.msra.mxu0 %v3032
        %3068 = vmatprep.subr.mxu0 0.0
        %3069 = vmatpush1.msra.mxu0 %v3033
        %3070 = vmatprep.subr.mxu0 0.0
        %3071 = vmatpush1.msra.mxu0 %v3034
        %3072 = vmatprep.subr.mxu0 0.0
        %3073 = vmatpush1.msra.mxu0 %v3035
        %3074 = vmatprep.subr.mxu0 0.0
        %3075 = vmatpush1.msra.mxu0 %v3036
        %3076 = vmatprep.subr.mxu0 0.0
        %3077 = vmatpush1.msra.mxu0 0.0
        %3078 = vmatprep.subr.mxu0 0.0
        %3079 = vmatpush1.msra.mxu0 0.0
        %3080 = vmatprep.subr.mxu0 0.0
        %3081 = vmatpush1.msra.mxu0 0.0
        %3082 = vmatprep.subr.mxu0 0.0
        %3083 = vmatpush1.msra.mxu0 0.0
        %3084 = vmatprep.subr.mxu0 0.0
        %3085 = vmatpush1.msra.mxu0 0.0
        %3086 = vmatprep.subr.mxu0 0.0
        %3087 = vmatpush1.msra.mxu0 0.0
        %3088 = vmatprep.subr.mxu0 0.0
        %3089 = vmatpush1.msra.mxu0 0.0
        %3090 = vmatprep.subr.mxu0 0.0
        %3091 = vmatpush1.msra.mxu0 0.0
        %3092 = vmatprep.subr.mxu0 0.0
        %3093 = vmatpush1.msra.mxu0 0.0
        %3094 = vmatprep.subr.mxu0 0.0
        %3095 = vmatpush1.msra.mxu0 0.0
        %3096 = vmatprep.subr.mxu0 0.0
        %3097 = vmatpush1.msra.mxu0 0.0
        %3098 = vmatprep.subr.mxu0 0.0
        %3099 = vmatpush1.msra.mxu0 0.0
        %3100 = vmatprep.subr.mxu0 0.0
        %3101 = vmatpush1.msra.mxu0 0.0
        %3102 = vmatprep.subr.mxu0 0.0
        %3103 = vmatpush1.msra.mxu0 0.0
        %3104 = vmatprep.subr.mxu0 0.0
        %3105 = vmatpush1.msra.mxu0 0.0
        %3106 = vmatprep.subr.mxu0 0.0
        %3107 = vmatpush1.msra.mxu0 0.0
        %3108 = vmatprep.mubr.f32.mxu0 0.0
        %3109 = vmatmul.mubr.f32.gmra.mrb[0].mxu0 %v3019
        %v3110 = vpop.f32.mrb[0].mxu0
        %v3111 = vadd.f32 %v3042, %v3110
        %v3112 = vpop.f32.mrb[0].mxu0
        %3113 = vmatprep.mubr.f32.mxu0 0.0
        %3114 = vmatmul.mubr.f32.gmra.mrb[0].mxu0 %v3020
        %v3115 = vpop.f32.mrb[0].mxu0
        %v3116 = vadd.f32 %v3042, %v3115
        %v3117 = vpop.f32.mrb[0].mxu0
        %3118 = vdwg.mxu0
        %v3119 = vadd.f32 %v2881, %v3111
        %v3120 = vadd.f32 %v2882, %v3116
        %3121 = vst.msk [vmem:[%s458] sm:$0xff] %vm474, %v3119
        %3122 = vst.msk [vmem:[%s458 + $0x8] sm:$0xff] %vm474, %v3120
        %s3123 = sand.u32 %s329, 1
        %s3124 = scalar_lea.sflag [#allocation5], %s3123
        %s3125 = sand.u32 %s329, 1
        %s3126 = smul.addr %s3125, 16
        %s3127 = scalar_lea.vmem [#allocation4], %s3126
        // Predicated region
        $region80: #{tpu_custom_call.1} parent=71 // pred_check
          %p3128 = pneg %p339
        $region81: #{tpu_custom_call.1} parent=71 // pred_check_branch
          %3130 = sbr.rel (%p3128) target = $region83
        $region82: #{tpu_custom_call.1} parent=71 // pred_region
          %s3131 = smul.u32 2, %s32
          %s3133 = ssub.s32 256, 256
          %3134 = vsyncadd %s3124, %s3133
          %s3135 = smul.addr %s31, 2
          %s3136 = sadd.s32 %s3131, %s3135
          %s3137 = smul.addr %s3136, 128
          %s3138 = scalar_lea.hbm %s13, %s3137
          %s3139 = sshll.u32 %s3127, 4
          %s3140 = int_to_ptr.vmem [resolvable:$true] %s3139
          %3145 = dma.vmem_to_hbm [thread:$0]  %s3140, 256, %s3138, %s3124, 128, 128, 8
        $region83: #{tpu_custom_call.1} parent=71 // pred_fallthru
          _
      $region72: #{tpu_custom_call.1} parent=5 // pred_fallthru
        _
      %p3146 = scmp.le.s32.totalorder 2, %s22
      // Predicated region
      $region84: #{tpu_custom_call.1} parent=5 // pred_check
        %p3147 = pneg %p3146
      $region85: #{tpu_custom_call.1} parent=5 // pred_check_branch
        %3149 = sbr.rel (%p3147) target = $region87
      $region86: #{tpu_custom_call.1} parent=5 // pred_region
        %s3150 = ssub.s32 %s22, 2
        // Predicated region
        $region88: #{tpu_custom_call.1} parent=86 // pred_check
          %p3151 = pneg %p345
        $region89: #{tpu_custom_call.1} parent=86 // pred_check_branch
          %3153 = sbr.rel (%p3151) target = $region91
        $region90: #{tpu_custom_call.1} parent=86 // pred_region
          %s3154 = sand.u32 %s330, 1
          %s3155 = scalar_lea.sflag [#allocation5], %s3154
          %s3156 = sand.u32 %s330, 1
          %s3157 = smul.addr %s3156, 16
          %s3158 = scalar_lea.vmem [#allocation4], %s3157
          %3159 = dma.done %s3155, 256
        $region91: #{tpu_custom_call.1} parent=86 // pred_fallthru
          _
      $region87: #{tpu_custom_call.1} parent=5 // pred_fallthru
        _
    $region6: #{tpu_custom_call.1} parent=1 // loop_footer
      %s26 = sadd.s32 1, %s22
    $region7: #{tpu_custom_call.1} parent=1 // loop_footer_branch
      %21 = sbr.rel target = $region3
    $region8: #{tpu_custom_call.1} parent=1 // loop_exit
      _
    %3160 = vsyncpa [#allocation5], 1
    %s3161 = scalar_lea.sflag [#allocation5], 1
    %3162 = vsyncpa %s3161, 1

// kernel: tpu_custom_call.1
$region0: #{tpu_custom_call.1}
  #allocation0 [shape = 'u32[]', space=smem, size = 0x4, offset = 0x4, fixed_abs, tag = 'smem constant byte address 0x4 - core index']
  #allocation1 [shape = 'u32[144,128]{1,0:T(1,128)}', space=vmem, size = 0x12000, scoped, tag = 'internal scratch']
  #allocation2 [shape = 'f32[1,4,16,8]{3,2,1,0:T(8,128)}', space=vmem, size = 0x8000, scoped, tag = 'scratch operand']
  #allocation3 [shape = 'f32[1,4,16,8]{3,2,1,0:T(8,128)}', space=vmem, size = 0x8000, scoped, tag = 'scratch operand']
  %s0 = inlined_call_operand.vmem [shape: f32[2,16,32], index: 0, kind: input, shape index: {}]
  %s1 = inlined_call_operand.vmem [shape: f32[1,32], index: 1, kind: input, shape index: {}]
  %s2 = inlined_call_operand.vmem [shape: f32[1,32], index: 2, kind: input, shape index: {}]
  %s3 = inlined_call_operand.vmem [shape: f32[32,32], index: 3, kind: input, shape index: {}]
  %s4 = inlined_call_operand.vmem [shape: f32[32,64], index: 4, kind: input, shape index: {}]
  %s5 = inlined_call_operand.vmem [shape: f32[32,32], index: 5, kind: input, shape index: {}]
  %s6 = inlined_call_operand.vmem [shape: f32[1,32], index: 6, kind: input, shape index: {}]
  %s7 = inlined_call_operand.vmem [shape: f32[1,32], index: 7, kind: input, shape index: {}]
  %s8 = inlined_call_operand.vmem [shape: f32[1,32], index: 8, kind: input, shape index: {}]
  %s9 = inlined_call_operand.vmem [shape: f32[32,128], index: 9, kind: input, shape index: {}]
  %s10 = inlined_call_operand.vmem [shape: f32[1,128], index: 10, kind: input, shape index: {}]
  %s11 = inlined_call_operand.vmem [shape: f32[128,32], index: 11, kind: input, shape index: {}]
  %s12 = inlined_call_operand.vmem [shape: f32[1,32], index: 12, kind: input, shape index: {}]
  %s13 = inlined_call_operand.hbm [shape: f32[2,16,32], index: 13, kind: output, shape index: {}]
  %s14 = sld [smem:[#allocation0]]
  $region92: #{tpu_custom_call.1} parent=0
    _
  %s16 = ssub.s32 1, %s14
  %s17 = scalar_select 0, %s16, %s14
  $region1: #{tpu_custom_call.1} parent=0
    #allocation4 [shape = 'u8[16384]{0}', space=vmem, size = 0x4000, scoped, tag = 'output window, operand 0']
    #allocation5 [shape = 's32[2]{0}', space=sflag, size = 0x8, scoped, tag = 'scoped memory for tpu_custom_call.1']
    %18 = vsyncpa [#allocation5], 0
    %s19 = scalar_lea.sflag [#allocation5], 1
    %20 = vsyncpa %s19, 0
    loop: start=0, step=1, limit=4
    $region2: #{tpu_custom_call.1} parent=1 // loop_pre_header
      _
    $region3: #{tpu_custom_call.1} parent=1 // loop_header
      %s22 = sphi 0, %s26
      %p23 = scmp.ge.s32.totalorder %s22, 4
      %s29 = sphi 0, %s41
      %s30 = sphi 0, %s37
      %s31 = sphi 0, %s29
      %s32 = sphi 0, %s30
      %s33 = sphi 0, %s31
      %s34 = sphi 0, %s32
      %s46 = sphi 0, %s48
      %s49 = sphi 0, %s46
      %s50 = sphi 0, %s49
      %s66 = sphi 0, %s50
      %s70 = sphi 0, %s70
      %s72 = sphi 0, %s70
      %s73 = sphi 0, %s72
      %s87 = sphi 0, %s73
      %s91 = sphi 0, %s91
      %s93 = sphi 0, %s91
      %s94 = sphi 0, %s93
      %s108 = sphi 0, %s94
      %s112 = sphi 0, %s112
      %s114 = sphi 0, %s112
      %s115 = sphi 0, %s114
      %s129 = sphi 0, %s115
      %s133 = sphi 0, %s133
      %s135 = sphi 0, %s133
      %s136 = sphi 0, %s135
      %s150 = sphi 0, %s136
      %s154 = sphi 0, %s154
      %s156 = sphi 0, %s154
      %s157 = sphi 0, %s156
      %s171 = sphi 0, %s157
      %s175 = sphi 0, %s175
      %s177 = sphi 0, %s175
      %s178 = sphi 0, %s177
      %s192 = sphi 0, %s178
      %s196 = sphi 0, %s196
      %s198 = sphi 0, %s196
      %s199 = sphi 0, %s198
      %s213 = sphi 0, %s199
      %s217 = sphi 0, %s217
      %s219 = sphi 0, %s217
      %s220 = sphi 0, %s219
      %s234 = sphi 0, %s220
      %s238 = sphi 0, %s238
      %s240 = sphi 0, %s238
      %s241 = sphi 0, %s240
      %s255 = sphi 0, %s241
      %s259 = sphi 0, %s259
      %s261 = sphi 0, %s259
      %s262 = sphi 0, %s261
      %s276 = sphi 0, %s262
      %s280 = sphi 0, %s280
      %s282 = sphi 0, %s280
      %s283 = sphi 0, %s282
      %s297 = sphi 0, %s283
      %s301 = sphi 0, %s301
      %s303 = sphi 0, %s301
      %s304 = sphi 0, %s303
      %s318 = sphi 0, %s304
      %s326 = sphi 0, %s328
      %s329 = sphi 0, %s326
      %s330 = sphi 0, %s329
      %s346 = sphi 0, %s330
    $region4: #{tpu_custom_call.1} parent=1 // loop_header_branch
      %25 = sbr.rel (%p23) target = $region8
    $region5: #{tpu_custom_call.1} parent=1 // loop_body
      %s27 = ssub.s32 %s22, 1
      %s28 = ssub.s32 %s22, 2
      %s35 = sadd.s32 1, %s30
      %p36 = scmp.ge.s32.totalorder %s35, 1
      %s37 = scalar_select %p36, 0, %s35
      %s38 = sadd.s32 1, %s29
      %s39 = scalar_select %p36, %s38, %s29
      %p40 = scmp.ge.s32.totalorder %s39, 2
      %s41 = scalar_select %p40, 0, %s39
      %s42 = ssub.s32 %s29, %s41
      %s43 = ssub.s32 %s30, %s37
      %s44 = sor.u32 %s42, %s43
      %p45 = scmp.eq.s32.totalorder %s44, 0
      %s47 = sadd.s32 %s46, 1
      %s48 = scalar_select %p45, %s46, %s47
      %p51 = pneg %p45
      %p52 = scmp.eq.s32.totalorder %s22, 1
      %p53 = por %p51, %p52
      %p54 = scmp.ne.s32.totalorder %s46, %s49
      %p55 = scmp.eq.s32.totalorder %s22, 0
      %p56 = por %p54, %p55
      %p57 = scmp.ne.s32.totalorder %s46, %s49
      %p58 = scmp.eq.s32.totalorder %s27, 1
      %p59 = por %p57, %p58
      %p60 = scmp.ne.s32.totalorder %s49, %s50
      %p61 = scmp.eq.s32.totalorder %s27, 0
      %p62 = por %p60, %p61
      %p63 = scmp.ne.s32.totalorder %s49, %s50
      %p64 = scmp.eq.s32.totalorder %s28, 1
      %p65 = por %p63, %p64
      %p67 = scmp.ne.s32.totalorder %s50, %s66
      %p68 = scmp.eq.s32.totalorder %s28, 0
      %p69 = por %p67, %p68
      %s71 = sadd.s32 %s70, 1
      %p74 = scmp.eq.s32.totalorder %s22, 1
      %p75 = scmp.ne.s32.totalorder %s70, %s72
      %p76 = scmp.eq.s32.totalorder %s22, 0
      %p77 = por %p75, %p76
      %p78 = scmp.ne.s32.totalorder %s70, %s72
      %p79 = scmp.eq.s32.totalorder %s27, 1
      %p80 = por %p78, %p79
      %p81 = scmp.ne.s32.totalorder %s72, %s73
      %p82 = scmp.eq.s32.totalorder %s27, 0
      %p83 = por %p81, %p82
      %p84 = scmp.ne.s32.totalorder %s72, %s73
      %p85 = scmp.eq.s32.totalorder %s28, 1
      %p86 = por %p84, %p85
      %p88 = scmp.ne.s32.totalorder %s73, %s87
      %p89 = scmp.eq.s32.totalorder %s28, 0
      %p90 = por %p88, %p89
      %s92 = sadd.s32 %s91, 1
      %p95 = scmp.eq.s32.totalorder %s22, 1
      %p96 = scmp.ne.s32.totalorder %s91, %s93
      %p97 = scmp.eq.s32.totalorder %s22, 0
      %p98 = por %p96, %p97
      %p99 = scmp.ne.s32.totalorder %s91, %s93
      %p100 = scmp.eq.s32.totalorder %s27, 1
      %p101 = por %p99, %p100
      %p102 = scmp.ne.s32.totalorder %s93, %s94
      %p103 = scmp.eq.s32.totalorder %s27, 0
      %p104 = por %p102, %p103
      %p105 = scmp.ne.s32.totalorder %s93, %s94
      %p106 = scmp.eq.s32.totalorder %s28, 1
      %p107 = por %p105, %p106
      %p109 = scmp.ne.s32.totalorder %s94, %s108
      %p110 = scmp.eq.s32.totalorder %s28, 0
      %p111 = por %p109, %p110
      %s113 = sadd.s32 %s112, 1
      %p116 = scmp.eq.s32.totalorder %s22, 1
      %p117 = scmp.ne.s32.totalorder %s112, %s114
      %p118 = scmp.eq.s32.totalorder %s22, 0
      %p119 = por %p117, %p118
      %p120 = scmp.ne.s32.totalorder %s112, %s114
      %p121 = scmp.eq.s32.totalorder %s27, 1
      %p122 = por %p120, %p121
      %p123 = scmp.ne.s32.totalorder %s114, %s115
      %p124 = scmp.eq.s32.totalorder %s27, 0
      %p125 = por %p123, %p124
      %p126 = scmp.ne.s32.totalorder %s114, %s115
      %p127 = scmp.eq.s32.totalorder %s28, 1
      %p128 = por %p126, %p127
      %p130 = scmp.ne.s32.totalorder %s115, %s129
      %p131 = scmp.eq.s32.totalorder %s28, 0
      %p132 = por %p130, %p131
      %s134 = sadd.s32 %s133, 1
      %p137 = scmp.eq.s32.totalorder %s22, 1
      %p138 = scmp.ne.s32.totalorder %s133, %s135
      %p139 = scmp.eq.s32.totalorder %s22, 0
      %p140 = por %p138, %p139
      %p141 = scmp.ne.s32.totalorder %s133, %s135
      %p142 = scmp.eq.s32.totalorder %s27, 1
      %p143 = por %p141, %p142
      %p144 = scmp.ne.s32.totalorder %s135, %s136
      %p145 = scmp.eq.s32.totalorder %s27, 0
      %p146 = por %p144, %p145
      %p147 = scmp.ne.s32.totalorder %s135, %s136
      %p148 = scmp.eq.s32.totalorder %s28, 1
      %p149 = por %p147, %p148
      %p151 = scmp.ne.s32.totalorder %s136, %s150
      %p152 = scmp.eq.s32.totalorder %s28, 0
      %p153 = por %p151, %p152
      %s155 = sadd.s32 %s154, 1
      %p158 = scmp.eq.s32.totalorder %s22, 1
      %p159 = scmp.ne.s32.totalorder %s154, %s156
      %p160 = scmp.eq.s32.totalorder %s22, 0
      %p161 = por %p159, %p160
      %p162 = scmp.ne.s32.totalorder %s154, %s156
      %p163 = scmp.eq.s32.totalorder %s27, 1
      %p164 = por %p162, %p163
      %p165 = scmp.ne.s32.totalorder %s156, %s157
      %p166 = scmp.eq.s32.totalorder %s27, 0
      %p167 = por %p165, %p166
      %p168 = scmp.ne.s32.totalorder %s156, %s157
      %p169 = scmp.eq.s32.totalorder %s28, 1
      %p170 = por %p168, %p169
      %p172 = scmp.ne.s32.totalorder %s157, %s171
      %p173 = scmp.eq.s32.totalorder %s28, 0
      %p174 = por %p172, %p173
      %s176 = sadd.s32 %s175, 1
      %p179 = scmp.eq.s32.totalorder %s22, 1
      %p180 = scmp.ne.s32.totalorder %s175, %s177
      %p181 = scmp.eq.s32.totalorder %s22, 0
      %p182 = por %p180, %p181
      %p183 = scmp.ne.s32.totalorder %s175, %s177
      %p184 = scmp.eq.s32.totalorder %s27, 1
      %p185 = por %p183, %p184
      %p186 = scmp.ne.s32.totalorder %s177, %s178
      %p187 = scmp.eq.s32.totalorder %s27, 0
      %p188 = por %p186, %p187
      %p189 = scmp.ne.s32.totalorder %s177, %s178
      %p190 = scmp.eq.s32.totalorder %s28, 1
      %p191 = por %p189, %p190
      %p193 = scmp.ne.s32.totalorder %s178, %s192
      %p194 = scmp.eq.s32.totalorder %s28, 0
      %p195 = por %p193, %p194
      %s197 = sadd.s32 %s196, 1
      %p200 = scmp.eq.s32.totalorder %s22, 1
      %p201 = scmp.ne.s32.totalorder %s196, %s198
      %p202 = scmp.eq.s32.totalorder %s22, 0
      %p203 = por %p201, %p202
      %p204 = scmp.ne.s32.totalorder %s196, %s198
      %p205 = scmp.eq.s32.totalorder %s27, 1
      %p206 = por %p204, %p205
      %p207 = scmp.ne.s32.totalorder %s198, %s199
      %p208 = scmp.eq.s32.totalorder %s27, 0
      %p209 = por %p207, %p208
      %p210 = scmp.ne.s32.totalorder %s198, %s199
      %p211 = scmp.eq.s32.totalorder %s28, 1
      %p212 = por %p210, %p211
      %p214 = scmp.ne.s32.totalorder %s199, %s213
      %p215 = scmp.eq.s32.totalorder %s28, 0
      %p216 = por %p214, %p215
      %s218 = sadd.s32 %s217, 1
      %p221 = scmp.eq.s32.totalorder %s22, 1
      %p222 = scmp.ne.s32.totalorder %s217, %s219
      %p223 = scmp.eq.s32.totalorder %s22, 0
      %p224 = por %p222, %p223
      %p225 = scmp.ne.s32.totalorder %s217, %s219
      %p226 = scmp.eq.s32.totalorder %s27, 1
      %p227 = por %p225, %p226
      %p228 = scmp.ne.s32.totalorder %s219, %s220
      %p229 = scmp.eq.s32.totalorder %s27, 0
      %p230 = por %p228, %p229
      %p231 = scmp.ne.s32.totalorder %s219, %s220
      %p232 = scmp.eq.s32.totalorder %s28, 1
      %p233 = por %p231, %p232
      %p235 = scmp.ne.s32.totalorder %s220, %s234
      %p236 = scmp.eq.s32.totalorder %s28, 0
      %p237 = por %p235, %p236
      %s239 = sadd.s32 %s238, 1
      %p242 = scmp.eq.s32.totalorder %s22, 1
      %p243 = scmp.ne.s32.totalorder %s238, %s240
      %p244 = scmp.eq.s32.totalorder %s22, 0
      %p245 = por %p243, %p244
      %p246 = scmp.ne.s32.totalorder %s238, %s240
      %p247 = scmp.eq.s32.totalorder %s27, 1
      %p248 = por %p246, %p247
      %p249 = scmp.ne.s32.totalorder %s240, %s241
      %p250 = scmp.eq.s32.totalorder %s27, 0
      %p251 = por %p249, %p250
      %p252 = scmp.ne.s32.totalorder %s240, %s241
      %p253 = scmp.eq.s32.totalorder %s28, 1
      %p254 = por %p252, %p253
      %p256 = scmp.ne.s32.totalorder %s241, %s255
      %p257 = scmp.eq.s32.totalorder %s28, 0
      %p258 = por %p256, %p257
      %s260 = sadd.s32 %s259, 1
      %p263 = scmp.eq.s32.totalorder %s22, 1
      %p264 = scmp.ne.s32.totalorder %s259, %s261
      %p265 = scmp.eq.s32.totalorder %s22, 0
      %p266 = por %p264, %p265
      %p267 = scmp.ne.s32.totalorder %s259, %s261
      %p268 = scmp.eq.s32.totalorder %s27, 1
      %p269 = por %p267, %p268
      %p270 = scmp.ne.s32.totalorder %s261, %s262
      %p271 = scmp.eq.s32.totalorder %s27, 0
      %p272 = por %p270, %p271
      %p273 = scmp.ne.s32.totalorder %s261, %s262
      %p274 = scmp.eq.s32.totalorder %s28, 1
      %p275 = por %p273, %p274
      %p277 = scmp.ne.s32.totalorder %s262, %s276
      %p278 = scmp.eq.s32.totalorder %s28, 0
      %p279 = por %p277, %p278
      %s281 = sadd.s32 %s280, 1
      %p284 = scmp.eq.s32.totalorder %s22, 1
      %p285 = scmp.ne.s32.totalorder %s280, %s282
      %p286 = scmp.eq.s32.totalorder %s22, 0
      %p287 = por %p285, %p286
      %p288 = scmp.ne.s32.totalorder %s280, %s282
      %p289 = scmp.eq.s32.totalorder %s27, 1
      %p290 = por %p288, %p289
      %p291 = scmp.ne.s32.totalorder %s282, %s283
      %p292 = scmp.eq.s32.totalorder %s27, 0
      %p293 = por %p291, %p292
      %p294 = scmp.ne.s32.totalorder %s282, %s283
      %p295 = scmp.eq.s32.totalorder %s28, 1
      %p296 = por %p294, %p295
      %p298 = scmp.ne.s32.totalorder %s283, %s297
      %p299 = scmp.eq.s32.totalorder %s28, 0
      %p300 = por %p298, %p299
      %s302 = sadd.s32 %s301, 1
      %p305 = scmp.eq.s32.totalorder %s22, 1
      %p306 = scmp.ne.s32.totalorder %s301, %s303
      %p307 = scmp.eq.s32.totalorder %s22, 0
      %p308 = por %p306, %p307
      %p309 = scmp.ne.s32.totalorder %s301, %s303
      %p310 = scmp.eq.s32.totalorder %s27, 1
      %p311 = por %p309, %p310
      %p312 = scmp.ne.s32.totalorder %s303, %s304
      %p313 = scmp.eq.s32.totalorder %s27, 0
      %p314 = por %p312, %p313
      %p315 = scmp.ne.s32.totalorder %s303, %s304
      %p316 = scmp.eq.s32.totalorder %s28, 1
      %p317 = por %p315, %p316
      %p319 = scmp.ne.s32.totalorder %s304, %s318
      %p320 = scmp.eq.s32.totalorder %s28, 0
      %p321 = por %p319, %p320
      %s322 = ssub.s32 %s29, %s41
      %s323 = ssub.s32 %s30, %s37
      %s324 = sor.u32 %s322, %s323
      %p325 = scmp.eq.s32.totalorder %s324, 0
      %s327 = sadd.s32 %s326, 1
      %s328 = scalar_select %p325, %s326, %s327
      %p331 = pneg %p325
      %p332 = scmp.eq.s32.totalorder %s22, 1
      %p333 = por %p331, %p332
      %p334 = scmp.ne.s32.totalorder %s326, %s329
      %p335 = scmp.eq.s32.totalorder %s22, 0
      %p336 = por %p334, %p335
      %p337 = scmp.ne.s32.totalorder %s326, %s329
      %p338 = scmp.eq.s32.totalorder %s27, 1
      %p339 = por %p337, %p338
      %p340 = scmp.ne.s32.totalorder %s329, %s330
      %p341 = scmp.eq.s32.totalorder %s27, 0
      %p342 = por %p340, %p341
      %p343 = scmp.ne.s32.totalorder %s329, %s330
      %p344 = scmp.eq.s32.totalorder %s28, 1
      %p345 = por %p343, %p344
      %p347 = scmp.ne.s32.totalorder %s330, %s346
      %p348 = scmp.eq.s32.totalorder %s28, 0
      %p349 = por %p347, %p348
      %p350 = scmp.le.s32.totalorder 1, %s22
      %p351 = scmp.lt.s32.totalorder %s22, 3
      %p352 = pnand %p350, %p351
      %p353 = pneg %p352
      // Predicated region
      $region9: #{tpu_custom_call.1} parent=5 // pred_check
        _
      $region10: #{tpu_custom_call.1} parent=5 // pred_check_branch
        %355 = sbr.rel (%p352) target = $region12
      $region11: #{tpu_custom_call.1} parent=5 // pred_region
        %s356 = ssub.s32 %s22, 1
        // Predicated region
        $region13: #{tpu_custom_call.1} parent=11 // pred_check
          %p357 = pneg %p83
        $region14: #{tpu_custom_call.1} parent=11 // pred_check_branch
          %359 = sbr.rel (%p357) target = $region16
        $region15: #{tpu_custom_call.1} parent=11 // pred_region
          _
        $region16: #{tpu_custom_call.1} parent=11 // pred_fallthru
          _
        // Predicated region
        $region17: #{tpu_custom_call.1} parent=11 // pred_check
          %p360 = pneg %p104
        $region18: #{tpu_custom_call.1} parent=11 // pred_check_branch
          %362 = sbr.rel (%p360) target = $region20
        $region19: #{tpu_custom_call.1} parent=11 // pred_region
          _
        $region20: #{tpu_custom_call.1} parent=11 // pred_fallthru
          _
        // Predicated region
        $region21: #{tpu_custom_call.1} parent=11 // pred_check
          %p363 = pneg %p125
        $region22: #{tpu_custom_call.1} parent=11 // pred_check_branch
          %365 = sbr.rel (%p363) target = $region24
        $region23: #{tpu_custom_call.1} parent=11 // pred_region
          _
        $region24: #{tpu_custom_call.1} parent=11 // pred_fallthru
          _
        // Predicated region
        $region25: #{tpu_custom_call.1} parent=11 // pred_check
          %p366 = pneg %p146
        $region26: #{tpu_custom_call.1} parent=11 // pred_check_branch
          %368 = sbr.rel (%p366) target = $region28
        $region27: #{tpu_custom_call.1} parent=11 // pred_region
          _
        $region28: #{tpu_custom_call.1} parent=11 // pred_fallthru
          _
        // Predicated region
        $region29: #{tpu_custom_call.1} parent=11 // pred_check
          %p369 = pneg %p167
        $region30: #{tpu_custom_call.1} parent=11 // pred_check_branch
          %371 = sbr.rel (%p369) target = $region32
        $region31: #{tpu_custom_call.1} parent=11 // pred_region
          _
        $region32: #{tpu_custom_call.1} parent=11 // pred_fallthru
          _
        // Predicated region
        $region33: #{tpu_custom_call.1} parent=11 // pred_check
          %p372 = pneg %p188
        $region34: #{tpu_custom_call.1} parent=11 // pred_check_branch
          %374 = sbr.rel (%p372) target = $region36
        $region35: #{tpu_custom_call.1} parent=11 // pred_region
          _
        $region36: #{tpu_custom_call.1} parent=11 // pred_fallthru
          _
        // Predicated region
        $region37: #{tpu_custom_call.1} parent=11 // pred_check
          %p375 = pneg %p209
        $region38: #{tpu_custom_call.1} parent=11 // pred_check_branch
          %377 = sbr.rel (%p375) target = $region40
        $region39: #{tpu_custom_call.1} parent=11 // pred_region
          _
        $region40: #{tpu_custom_call.1} parent=11 // pred_fallthru
          _
        // Predicated region
        $region41: #{tpu_custom_call.1} parent=11 // pred_check
          %p378 = pneg %p230
        $region42: #{tpu_custom_call.1} parent=11 // pred_check_branch
          %380 = sbr.rel (%p378) target = $region44
        $region43: #{tpu_custom_call.1} parent=11 // pred_region
          _
        $region44: #{tpu_custom_call.1} parent=11 // pred_fallthru
          _
        // Predicated region
        $region45: #{tpu_custom_call.1} parent=11 // pred_check
          %p381 = pneg %p251
        $region46: #{tpu_custom_call.1} parent=11 // pred_check_branch
          %383 = sbr.rel (%p381) target = $region48
        $region47: #{tpu_custom_call.1} parent=11 // pred_region
          _
        $region48: #{tpu_custom_call.1} parent=11 // pred_fallthru
          _
        // Predicated region
        $region49: #{tpu_custom_call.1} parent=11 // pred_check
          %p384 = pneg %p272
        $region50: #{tpu_custom_call.1} parent=11 // pred_check_branch
          %386 = sbr.rel (%p384) target = $region52
        $region51: #{tpu_custom_call.1} parent=11 // pred_region
          _
        $region52: #{tpu_custom_call.1} parent=11 // pred_fallthru
          _
        // Predicated region
        $region53: #{tpu_custom_call.1} parent=11 // pred_check
          %p387 = pneg %p293
        $region54: #{tpu_custom_call.1} parent=11 // pred_check_branch
          %389 = sbr.rel (%p387) target = $region56
        $region55: #{tpu_custom_call.1} parent=11 // pred_region
          _
        $region56: #{tpu_custom_call.1} parent=11 // pred_fallthru
          _
        // Predicated region
        $region57: #{tpu_custom_call.1} parent=11 // pred_check
          %p390 = pneg %p314
        $region58: #{tpu_custom_call.1} parent=11 // pred_check_branch
          %392 = sbr.rel (%p390) target = $region60
        $region59: #{tpu_custom_call.1} parent=11 // pred_region
          _
        $region60: #{tpu_custom_call.1} parent=11 // pred_fallthru
          _
      $region12: #{tpu_custom_call.1} parent=5 // pred_fallthru
        _
      %p393 = scmp.lt.s32.totalorder %s22, 2
      // Predicated region
      $region61: #{tpu_custom_call.1} parent=5 // pred_check
        %p394 = pneg %p393
      $region62: #{tpu_custom_call.1} parent=5 // pred_check_branch
        %396 = sbr.rel (%p394) target = $region64
      $region63: #{tpu_custom_call.1} parent=5 // pred_region
        // Predicated region
        $region65: #{tpu_custom_call.1} parent=63 // pred_check
          %p397 = pneg %p56
        $region66: #{tpu_custom_call.1} parent=63 // pred_check_branch
          %399 = sbr.rel (%p397) target = $region68
        $region67: #{tpu_custom_call.1} parent=63 // pred_region
          %s400 = smul.u32 2, %s30
          %p401 = scmp.lt.s32.totalorder %s29, 1
          %s402 = scalar_select %p401, %s29, 1
          %p403 = scmp.lt.s32.totalorder %s400, 1
          %s404 = scalar_select %p403, %s400, 1
          %s405 = smul.addr %s402, 2
          %s406 = sadd.s32 %s404, %s405
          %s407 = smul.addr %s406, 8
          %s408 = scalar_lea.vmem %s0, %s407
          %s409 = smul.u32 2, %s30
        $region68: #{tpu_custom_call.1} parent=63 // pred_fallthru
          _
      $region64: #{tpu_custom_call.1} parent=5 // pred_fallthru
        _
      %p410 = scmp.le.s32.totalorder 1, %s22
      %p411 = scmp.lt.s32.totalorder %s22, 3
      %p412 = pnand %p410, %p411
      %p413 = pneg %p412
      // Predicated region
      $region69: #{tpu_custom_call.1} parent=5 // pred_check
        _
      $region70: #{tpu_custom_call.1} parent=5 // pred_check_branch
        %415 = sbr.rel (%p412) target = $region72
      $region71: #{tpu_custom_call.1} parent=5 // pred_region
        %s416 = ssub.s32 %s22, 1
        %s417 = smul.u32 2, %s32
        %p418 = scmp.lt.s32.totalorder %s31, 1
        %s419 = scalar_select %p418, %s31, 1
        %p420 = scmp.lt.s32.totalorder %s417, 1
        %s421 = scalar_select %p420, %s417, 1
        %s422 = smul.addr %s419, 2
        %s423 = sadd.s32 %s421, %s422
        %s424 = smul.addr %s423, 8
        %s425 = scalar_lea.vmem %s0, %s424
        %p426 = pneg %p62
        %p427 = pneg %p59
        %p428 = pneg %p83
        %p429 = pneg %p80
        %p430 = pneg %p104
        %p431 = pneg %p101
        %p432 = pneg %p125
        %p433 = pneg %p122
        %p434 = pneg %p146
        %p435 = pneg %p143
        %p436 = pneg %p167
        %p437 = pneg %p164
        %p438 = pneg %p188
        %p439 = pneg %p185
        %p440 = pneg %p209
        %p441 = pneg %p206
        %p442 = pneg %p230
        %p443 = pneg %p227
        %p444 = pneg %p251
        %p445 = pneg %p248
        %p446 = pneg %p272
        %p447 = pneg %p269
        %p448 = pneg %p293
        %p449 = pneg %p290
        %p450 = pneg %p314
        %p451 = pneg %p311
        %p452 = pneg %p342
        %p453 = pneg %p339
        %s454 = sand.u32 %s329, 1
        %s455 = scalar_lea.sflag [#allocation5], %s454
        %s456 = sand.u32 %s329, 1
        %s457 = smul.addr %s456, 16
        %s458 = scalar_lea.vmem [#allocation4], %s457
        %s459 = smul.u32 2, %s32
        %p460 = scmp.lt.s32.totalorder %s31, 1
        %s461 = scalar_select %p460, %s31, 1
        %p462 = scmp.lt.s32.totalorder %s459, 1
        %s463 = scalar_select %p462, %s459, 1
        %s464 = smul.addr %s461, 2
        %s465 = sadd.s32 %s463, %s464
        %s466 = smul.addr %s465, 8
        %s467 = scalar_lea.vmem %s0, %s466
        %s468 = smul.u32 2, %s32
        %s469 = smul.u32 2, %s32
        %v470 = vld [vmem:[%s1] sm:$0x1]
        %v471 = vld [vmem:[%s2] sm:$0x1]
        %v472 = vld [vmem:[%s467] sm:$0xff]
        %v473 = vld [vmem:[%s467 + $0x8] sm:$0xff]
        %vm474 = vcmask 261120
        %v475 = vsel %vm474, %v472, 0.0
        %476 = vadd.xlane.f32.xlu0 %v475
        %v477 = vpop.xlane.xlu0 %476
        %v478 = vsel %vm474, %v473, 0.0
        %479 = vadd.xlane.f32.xlu0 %v478
        %v480 = vpop.xlane.xlu0 %479
        %v481 = vrcp.pop 32.0
        %v482 = vmul.f32 %v477, %v481
        %v483 = vmul.f32 %v480, %v481
        %v484 = vsub.f32 %v472, %v482
        %v485 = vsub.f32 %v473, %v483
        %v486 = vmul.f32 %v484, %v484
        %v487 = vmul.f32 %v485, %v485
        %v488 = vsel %vm474, %v486, 0.0
        %489 = vadd.xlane.f32.xlu0 %v488
        %v490 = vpop.xlane.xlu0 %489
        %v491 = vsel %vm474, %v487, 0.0
        %492 = vadd.xlane.f32.xlu0 %v491
        %v493 = vpop.xlane.xlu0 %492
        %v494 = vmul.f32 %v490, %v481
        %v495 = vmul.f32 %v493, %v481
        %v496 = vadd.f32 %v494, 1e-05
        %v497 = vadd.f32 %v495, 1e-05
        %v498 = vrsqrt.pop %v496
        %v499 = vrsqrt.pop %v497
        %v500 = vmul.f32 %v484, %v498
        %v501 = vmul.f32 %v485, %v499
        %v503 = vlaneseq
        %v504 = vshrl.u32 %v503, 7
        %v505 = vsub.s32 0, %v504
        %v506 = vrot.slane %v470, %v505
        %v508 = vmul.f32 %v500, %v506
        %v509 = vmul.f32 %v501, %v506
        %v511 = vlaneseq
        %v512 = vshrl.u32 %v511, 7
        %v513 = vsub.s32 0, %v512
        %v514 = vrot.slane %v471, %v513
        %v516 = vadd.f32 %v508, %v514
        %v517 = vadd.f32 %v509, %v514
        %v518 = vld [vmem:[%s4] sm:$0xff]
        %v519 = vld [vmem:[%s4 + $0x8] sm:$0xff]
        %v520 = vld [vmem:[%s4 + $0x10] sm:$0xff]
        %v521 = vld [vmem:[%s4 + $0x18] sm:$0xff]
        %v523 = vsel %vm474, %v516, 0
        %v526 = vsel %vm474, %v517, 0
        %528 = vmatprep.subr.mxu0 0.0
        %529 = vmatpush1.msra.mxu0 %v518
        %530 = vmatprep.subr.mxu0 0.0
        %531 = vmatpush1.msra.mxu0 %v519
        %532 = vmatprep.subr.mxu0 0.0
        %533 = vmatpush1.msra.mxu0 %v520
        %534 = vmatprep.subr.mxu0 0.0
        %535 = vmatpush1.msra.mxu0 %v521
        %536 = vmatprep.subr.mxu0 0.0
        %537 = vmatpush1.msra.mxu0 0.0
        %538 = vmatprep.subr.mxu0 0.0
        %539 = vmatpush1.msra.mxu0 0.0
        %540 = vmatprep.subr.mxu0 0.0
        %541 = vmatpush1.msra.mxu0 0.0
        %542 = vmatprep.subr.mxu0 0.0
        %543 = vmatpush1.msra.mxu0 0.0
        %544 = vmatprep.subr.mxu0 0.0
        %545 = vmatpush1.msra.mxu0 0.0
        %546 = vmatprep.subr.mxu0 0.0
        %547 = vmatpush1.msra.mxu0 0.0
        %548 = vmatprep.subr.mxu0 0.0
        %549 = vmatpush1.msra.mxu0 0.0
        %550 = vmatprep.subr.mxu0 0.0
        %551 = vmatpush1.msra.mxu0 0.0
        %552 = vmatprep.subr.mxu0 0.0
        %553 = vmatpush1.msra.mxu0 0.0
        %554 = vmatprep.subr.mxu0 0.0
        %555 = vmatpush1.msra.mxu0 0.0
        %556 = vmatprep.subr.mxu0 0.0
        %557 = vmatpush1.msra.mxu0 0.0
        %558 = vmatprep.subr.mxu0 0.0
        %559 = vmatpush1.msra.mxu0 0.0
        %560 = vmatprep.subr.mxu0 0.0
        %561 = vmatpush1.msra.mxu0 0.0
        %562 = vmatprep.subr.mxu0 0.0
        %563 = vmatpush1.msra.mxu0 0.0
        %564 = vmatprep.subr.mxu0 0.0
        %565 = vmatpush1.msra.mxu0 0.0
        %566 = vmatprep.subr.mxu0 0.0
        %567 = vmatpush1.msra.mxu0 0.0
        %568 = vmatprep.subr.mxu0 0.0
        %569 = vmatpush1.msra.mxu0 0.0
        %570 = vmatprep.subr.mxu0 0.0
        %571 = vmatpush1.msra.mxu0 0.0
        %572 = vmatprep.subr.mxu0 0.0
        %573 = vmatpush1.msra.mxu0 0.0
        %574 = vmatprep.subr.mxu0 0.0
        %575 = vmatpush1.msra.mxu0 0.0
        %576 = vmatprep.subr.mxu0 0.0
        %577 = vmatpush1.msra.mxu0 0.0
        %578 = vmatprep.subr.mxu0 0.0
        %579 = vmatpush1.msra.mxu0 0.0
        %580 = vmatprep.subr.mxu0 0.0
        %581 = vmatpush1.msra.mxu0 0.0
        %582 = vmatprep.subr.mxu0 0.0
        %583 = vmatpush1.msra.mxu0 0.0
        %584 = vmatprep.subr.mxu0 0.0
        %585 = vmatpush1.msra.mxu0 0.0
        %586 = vmatprep.subr.mxu0 0.0
        %587 = vmatpush1.msra.mxu0 0.0
        %588 = vmatprep.subr.mxu0 0.0
        %589 = vmatpush1.msra.mxu0 0.0
        %590 = vmatprep.subr.mxu0 0.0
        %591 = vmatpush1.msra.mxu0 0.0
        %592 = vmatprep.mubr.f32.mxu0 0.0
        %593 = vmatmul.mubr.f32.gmra.mrb[0].mxu0 %v523
        %v594 = vpop.f32.mrb[0].mxu0
        %v595 = vadd.f32 0.0, %v594
        %v596 = vpop.f32.mrb[0].mxu0
        %597 = vmatprep.mubr.f32.mxu0 0.0
        %598 = vmatmul.mubr.f32.gmra.mrb[0].mxu0 %v526
        %v599 = vpop.f32.mrb[0].mxu0
        %v600 = vadd.f32 0.0, %v599
        %v601 = vpop.f32.mrb[0].mxu0
        %602 = vdwg.mxu0
        %605 = vrot.lane.b32.xlu0 %v595, 120
        %v606 = vpop.permute.xlu0 %605
        %607 = vrot.lane.b32.xlu0 %v600, 120
        %v608 = vpop.permute.xlu0 %607
        %611 = vrot.lane.b32.xlu0 %v595, 112
        %v612 = vpop.permute.xlu0 %611
        %613 = vrot.lane.b32.xlu0 %v600, 112
        %v614 = vpop.permute.xlu0 %613
        %617 = vrot.lane.b32.xlu0 %v595, 104
        %v618 = vpop.permute.xlu0 %617
        %619 = vrot.lane.b32.xlu0 %v600, 104
        %v620 = vpop.permute.xlu0 %619
        %v623 = vcombine.low %v595, %v612
        %v624 = vcombine.high %v595, %v612
        %v626 = vunpack.c.l.s4 1983009808
        %v627 = vunpack.c.0.s8 %v626
        %v628 = vlaneseq
        %v629 = vshrl.u32 %v628, 7
        %v630 = vsub.s32 %v627, %v629
        %v631 = vrot.slane %v623, %v630
        %v633 = vunpack.c.l.s4 1983009808
        %v634 = vunpack.c.0.s8 %v633
        %v635 = vlaneseq
        %v636 = vshrl.u32 %v635, 7
        %v637 = vsub.s32 %v634, %v636
        %v638 = vrot.slane %v624, %v637
        %v639 = vcombine.low %v606, %v618
        %v640 = vcombine.high %v606, %v618
        %v642 = vunpack.c.l.s4 1983009808
        %v643 = vunpack.c.0.s8 %v642
        %v644 = vlaneseq
        %v645 = vshrl.u32 %v644, 7
        %v646 = vsub.s32 %v643, %v645
        %v647 = vrot.slane %v639, %v646
        %v649 = vunpack.c.l.s4 1983009808
        %v650 = vunpack.c.0.s8 %v649
        %v651 = vlaneseq
        %v652 = vshrl.u32 %v651, 7
        %v653 = vsub.s32 %v650, %v652
        %v654 = vrot.slane %v640, %v653
        %v655 = vcombine.low %v631, %v647
        %v656 = vcombine.high %v631, %v647
        %v658 = vunpack.c.l.s4 1934713408
        %v659 = vunpack.c.0.s8 %v658
        %v660 = vlaneseq
        %v661 = vshrl.u32 %v660, 7
        %v662 = vsub.s32 %v659, %v661
        %v663 = vrot.slane %v655, %v662
        %v665 = vunpack.c.l.s4 1934713408
        %v666 = vunpack.c.0.s8 %v665
        %v667 = vlaneseq
        %v668 = vshrl.u32 %v667, 7
        %v669 = vsub.s32 %v666, %v668
        %v670 = vrot.slane %v656, %v669
        %v671 = vcombine.low %v638, %v654
        %v672 = vcombine.high %v638, %v654
        %v674 = vunpack.c.l.s4 1934713408
        %v675 = vunpack.c.0.s8 %v674
        %v676 = vlaneseq
        %v677 = vshrl.u32 %v676, 7
        %v678 = vsub.s32 %v675, %v677
        %v679 = vrot.slane %v671, %v678
        %v681 = vunpack.c.l.s4 1934713408
        %v682 = vunpack.c.0.s8 %v681
        %v683 = vlaneseq
        %v684 = vshrl.u32 %v683, 7
        %v685 = vsub.s32 %v682, %v684
        %v686 = vrot.slane %v672, %v685
        %v687 = vcombine.high %v663, 0.0
        %v688 = vcombine.high %v670, 0.0
        %v689 = vcombine.high %v679, 0.0
        %v690 = vcombine.high %v686, 0.0
        %v691 = vcombine.low %v600, %v614
        %v692 = vcombine.high %v600, %v614
        %v694 = vunpack.c.l.s4 1983009808
        %v695 = vunpack.c.0.s8 %v694
        %v696 = vlaneseq
        %v697 = vshrl.u32 %v696, 7
        %v698 = vsub.s32 %v695, %v697
        %v699 = vrot.slane %v691, %v698
        %v701 = vunpack.c.l.s4 1983009808
        %v702 = vunpack.c.0.s8 %v701
        %v703 = vlaneseq
        %v704 = vshrl.u32 %v703, 7
        %v705 = vsub.s32 %v702, %v704
        %v706 = vrot.slane %v692, %v705
        %v707 = vcombine.low %v608, %v620
        %v708 = vcombine.high %v608, %v620
        %v710 = vunpack.c.l.s4 1983009808
        %v711 = vunpack.c.0.s8 %v710
        %v712 = vlaneseq
        %v713 = vshrl.u32 %v712, 7
        %v714 = vsub.s32 %v711, %v713
        %v715 = vrot.slane %v707, %v714
        %v717 = vunpack.c.l.s4 1983009808
        %v718 = vunpack.c.0.s8 %v717
        %v719 = vlaneseq
        %v720 = vshrl.u32 %v719, 7
        %v721 = vsub.s32 %v718, %v720
        %v722 = vrot.slane %v708, %v721
        %v723 = vcombine.low %v699, %v715
        %v724 = vcombine.high %v699, %v715
        %v726 = vunpack.c.l.s4 1934713408
        %v727 = vunpack.c.0.s8 %v726
        %v728 = vlaneseq
        %v729 = vshrl.u32 %v728, 7
        %v730 = vsub.s32 %v727, %v729
        %v731 = vrot.slane %v723, %v730
        %v733 = vunpack.c.l.s4 1934713408
        %v734 = vunpack.c.0.s8 %v733
        %v735 = vlaneseq
        %v736 = vshrl.u32 %v735, 7
        %v737 = vsub.s32 %v734, %v736
        %v738 = vrot.slane %v724, %v737
        %v739 = vcombine.low %v706, %v722
        %v740 = vcombine.high %v706, %v722
        %v742 = vunpack.c.l.s4 1934713408
        %v743 = vunpack.c.0.s8 %v742
        %v744 = vlaneseq
        %v745 = vshrl.u32 %v744, 7
        %v746 = vsub.s32 %v743, %v745
        %v747 = vrot.slane %v739, %v746
        %v749 = vunpack.c.l.s4 1934713408
        %v750 = vunpack.c.0.s8 %v749
        %v751 = vlaneseq
        %v752 = vshrl.u32 %v751, 7
        %v753 = vsub.s32 %v750, %v752
        %v754 = vrot.slane %v740, %v753
        %v755 = vcombine.high %v731, 0.0
        %v756 = vcombine.high %v738, 0.0
        %v757 = vcombine.high %v747, 0.0
        %v758 = vcombine.high %v754, 0.0
        %v759 = vcombine.low %v663, %v670
        %v761 = vunpack.c.l.s4 1983009808
        %v762 = vunpack.c.0.s8 %v761
        %v763 = vlaneseq
        %v764 = vshrl.u32 %v763, 7
        %v765 = vsub.s32 %v762, %v764
        %v766 = vrot.slane %v759, %v765
        %v767 = vcombine.low %v687, %v688
        %v769 = vunpack.c.l.s4 1983009808
        %v770 = vunpack.c.0.s8 %v769
        %v771 = vlaneseq
        %v772 = vshrl.u32 %v771, 7
        %v773 = vsub.s32 %v770, %v772
        %v774 = vrot.slane %v767, %v773
        %v775 = vcombine.low %v679, %v686
        %v777 = vunpack.c.l.s4 1983009808
        %v778 = vunpack.c.0.s8 %v777
        %v779 = vlaneseq
        %v780 = vshrl.u32 %v779, 7
        %v781 = vsub.s32 %v778, %v780
        %v782 = vrot.slane %v775, %v781
        %v783 = vcombine.low %v689, %v690
        %v785 = vunpack.c.l.s4 1983009808
        %v786 = vunpack.c.0.s8 %v785
        %v787 = vlaneseq
        %v788 = vshrl.u32 %v787, 7
        %v789 = vsub.s32 %v786, %v788
        %v790 = vrot.slane %v783, %v789
        %v791 = vcombine.low %v766, %v774
        %v792 = vcombine.high %v766, %v774
        %v794 = vunpack.c.l.s4 1934713408
        %v795 = vunpack.c.0.s8 %v794
        %v796 = vlaneseq
        %v797 = vshrl.u32 %v796, 7
        %v798 = vsub.s32 %v795, %v797
        %v799 = vrot.slane %v791, %v798
        %v801 = vunpack.c.l.s4 1934713408
        %v802 = vunpack.c.0.s8 %v801
        %v803 = vlaneseq
        %v804 = vshrl.u32 %v803, 7
        %v805 = vsub.s32 %v802, %v804
        %v806 = vrot.slane %v792, %v805
        %v807 = vcombine.low %v782, %v790
        %v808 = vcombine.high %v782, %v790
        %v810 = vunpack.c.l.s4 1934713408
        %v811 = vunpack.c.0.s8 %v810
        %v812 = vlaneseq
        %v813 = vshrl.u32 %v812, 7
        %v814 = vsub.s32 %v811, %v813
        %v815 = vrot.slane %v807, %v814
        %v817 = vunpack.c.l.s4 1934713408
        %v818 = vunpack.c.0.s8 %v817
        %v819 = vlaneseq
        %v820 = vshrl.u32 %v819, 7
        %v821 = vsub.s32 %v818, %v820
        %v822 = vrot.slane %v808, %v821
        %v823 = vcombine.low %v799, %v815
        %v824 = vcombine.high %v799, %v815
        %v825 = vcombine.low %v806, %v822
        %v826 = vcombine.high %v806, %v822
        %v827 = vcombine.low %v731, %v738
        %v829 = vunpack.c.l.s4 1983009808
        %v830 = vunpack.c.0.s8 %v829
        %v831 = vlaneseq
        %v832 = vshrl.u32 %v831, 7
        %v833 = vsub.s32 %v830, %v832
        %v834 = vrot.slane %v827, %v833
        %v835 = vcombine.low %v755, %v756
        %v837 = vunpack.c.l.s4 1983009808
        %v838 = vunpack.c.0.s8 %v837
        %v839 = vlaneseq
        %v840 = vshrl.u32 %v839, 7
        %v841 = vsub.s32 %v838, %v840
        %v842 = vrot.slane %v835, %v841
        %v843 = vcombine.low %v747, %v754
        %v845 = vunpack.c.l.s4 1983009808
        %v846 = vunpack.c.0.s8 %v845
        %v847 = vlaneseq
        %v848 = vshrl.u32 %v847, 7
        %v849 = vsub.s32 %v846, %v848
        %v850 = vrot.slane %v843, %v849
        %v851 = vcombine.low %v757, %v758
        %v853 = vunpack.c.l.s4 1983009808
        %v854 = vunpack.c.0.s8 %v853
        %v855 = vlaneseq
        %v856 = vshrl.u32 %v855, 7
        %v857 = vsub.s32 %v854, %v856
        %v858 = vrot.slane %v851, %v857
        %v859 = vcombine.low %v834, %v842
        %v860 = vcombine.high %v834, %v842
        %v862 = vunpack.c.l.s4 1934713408
        %v863 = vunpack.c.0.s8 %v862
        %v864 = vlaneseq
        %v865 = vshrl.u32 %v864, 7
        %v866 = vsub.s32 %v863, %v865
        %v867 = vrot.slane %v859, %v866
        %v869 = vunpack.c.l.s4 1934713408
        %v870 = vunpack.c.0.s8 %v869
        %v871 = vlaneseq
        %v872 = vshrl.u32 %v871, 7
        %v873 = vsub.s32 %v870, %v872
        %v874 = vrot.slane %v860, %v873
        %v875 = vcombine.low %v850, %v858
        %v876 = vcombine.high %v850, %v858
        %v878 = vunpack.c.l.s4 1934713408
        %v879 = vunpack.c.0.s8 %v878
        %v880 = vlaneseq
        %v881 = vshrl.u32 %v880, 7
        %v882 = vsub.s32 %v879, %v881
        %v883 = vrot.slane %v875, %v882
        %v885 = vunpack.c.l.s4 1934713408
        %v886 = vunpack.c.0.s8 %v885
        %v887 = vlaneseq
        %v888 = vshrl.u32 %v887, 7
        %v889 = vsub.s32 %v886, %v888
        %v890 = vrot.slane %v876, %v889
        %v891 = vcombine.low %v867, %v883
        %v892 = vcombine.high %v867, %v883
        %v893 = vcombine.low %v874, %v890
        %v894 = vcombine.high %v874, %v890
        %s895 = smul.u32 %s32, 64
        %s896 = scalar_lea.vmem [#allocation2], %s895
        %vm897 = vcmask 64512
        %898 = vst.msk [vmem:[%s896] sm:$0xff] %vm897, %v823
        %899 = vst.msk [vmem:[%s896 + $0x8] sm:$0xff] %vm897, %v891
        %900 = vst.msk [vmem:[%s896 + $0x10] sm:$0xff] %vm897, %v824
        %901 = vst.msk [vmem:[%s896 + $0x18] sm:$0xff] %vm897, %v892
        %902 = vst.msk [vmem:[%s896 + $0x20] sm:$0xff] %vm897, %v825
        %903 = vst.msk [vmem:[%s896 + $0x28] sm:$0xff] %vm897, %v893
        %904 = vst.msk [vmem:[%s896 + $0x30] sm:$0xff] %vm897, %v826
        %905 = vst.msk [vmem:[%s896 + $0x38] sm:$0xff] %vm897, %v894
        %906 = vrot.lane.b32.xlu0 %v595, 96
        %v907 = vpop.permute.xlu0 %906
        %908 = vrot.lane.b32.xlu0 %v600, 96
        %v909 = vpop.permute.xlu0 %908
        %910 = vrot.lane.b32.xlu0 %v606, 96
        %v911 = vpop.permute.xlu0 %910
        %912 = vrot.lane.b32.xlu0 %v608, 96
        %v913 = vpop.permute.xlu0 %912
        %914 = vrot.lane.b32.xlu0 %v612, 96
        %v915 = vpop.permute.xlu0 %914
        %916 = vrot.lane.b32.xlu0 %v614, 96
        %v917 = vpop.permute.xlu0 %916
        %918 = vrot.lane.b32.xlu0 %v618, 96
        %v919 = vpop.permute.xlu0 %918
        %920 = vrot.lane.b32.xlu0 %v620, 96
        %v921 = vpop.permute.xlu0 %920
        %v930 = vcombine.low %v907, %v915
        %v931 = vcombine.high %v907, %v915
        %v933 = vunpack.c.l.s4 1983009808
        %v934 = vunpack.c.0.s8 %v933
        %v935 = vlaneseq
        %v936 = vshrl.u32 %v935, 7
        %v937 = vsub.s32 %v934, %v936
        %v938 = vrot.slane %v930, %v937
        %v940 = vunpack.c.l.s4 1983009808
        %v941 = vunpack.c.0.s8 %v940
        %v942 = vlaneseq
        %v943 = vshrl.u32 %v942, 7
        %v944 = vsub.s32 %v941, %v943
        %v945 = vrot.slane %v931, %v944
        %v946 = vcombine.low %v911, %v919
        %v947 = vcombine.high %v911, %v919
        %v949 = vunpack.c.l.s4 1983009808
        %v950 = vunpack.c.0.s8 %v949
        %v951 = vlaneseq
        %v952 = vshrl.u32 %v951, 7
        %v953 = vsub.s32 %v950, %v952
        %v954 = vrot.slane %v946, %v953
        %v956 = vunpack.c.l.s4 1983009808
        %v957 = vunpack.c.0.s8 %v956
        %v958 = vlaneseq
        %v959 = vshrl.u32 %v958, 7
        %v960 = vsub.s32 %v957, %v959
        %v961 = vrot.slane %v947, %v960
        %v962 = vcombine.low %v938, %v954
        %v963 = vcombine.high %v938, %v954
        %v965 = vunpack.c.l.s4 1934713408
        %v966 = vunpack.c.0.s8 %v965
        %v967 = vlaneseq
        %v968 = vshrl.u32 %v967, 7
        %v969 = vsub.s32 %v966, %v968
        %v970 = vrot.slane %v962, %v969
        %v972 = vunpack.c.l.s4 1934713408
        %v973 = vunpack.c.0.s8 %v972
        %v974 = vlaneseq
        %v975 = vshrl.u32 %v974, 7
        %v976 = vsub.s32 %v973, %v975
        %v977 = vrot.slane %v963, %v976
        %v978 = vcombine.low %v945, %v961
        %v979 = vcombine.high %v945, %v961
        %v981 = vunpack.c.l.s4 1934713408
        %v982 = vunpack.c.0.s8 %v981
        %v983 = vlaneseq
        %v984 = vshrl.u32 %v983, 7
        %v985 = vsub.s32 %v982, %v984
        %v986 = vrot.slane %v978, %v985
        %v988 = vunpack.c.l.s4 1934713408
        %v989 = vunpack.c.0.s8 %v988
        %v990 = vlaneseq
        %v991 = vshrl.u32 %v990, 7
        %v992 = vsub.s32 %v989, %v991
        %v993 = vrot.slane %v979, %v992
        %v994 = vcombine.high %v970, 0.0
        %v995 = vcombine.high %v977, 0.0
        %v996 = vcombine.high %v986, 0.0
        %v997 = vcombine.high %v993, 0.0
        %v998 = vcombine.low %v909, %v917
        %v999 = vcombine.high %v909, %v917
        %v1001 = vunpack.c.l.s4 1983009808
        %v1002 = vunpack.c.0.s8 %v1001
        %v1003 = vlaneseq
        %v1004 = vshrl.u32 %v1003, 7
        %v1005 = vsub.s32 %v1002, %v1004
        %v1006 = vrot.slane %v998, %v1005
        %v1008 = vunpack.c.l.s4 1983009808
        %v1009 = vunpack.c.0.s8 %v1008
        %v1010 = vlaneseq
        %v1011 = vshrl.u32 %v1010, 7
        %v1012 = vsub.s32 %v1009, %v1011
        %v1013 = vrot.slane %v999, %v1012
        %v1014 = vcombine.low %v913, %v921
        %v1015 = vcombine.high %v913, %v921
        %v1017 = vunpack.c.l.s4 1983009808
        %v1018 = vunpack.c.0.s8 %v1017
        %v1019 = vlaneseq
        %v1020 = vshrl.u32 %v1019, 7
        %v1021 = vsub.s32 %v1018, %v1020
        %v1022 = vrot.slane %v1014, %v1021
        %v1024 = vunpack.c.l.s4 1983009808
        %v1025 = vunpack.c.0.s8 %v1024
        %v1026 = vlaneseq
        %v1027 = vshrl.u32 %v1026, 7
        %v1028 = vsub.s32 %v1025, %v1027
        %v1029 = vrot.slane %v1015, %v1028
        %v1030 = vcombine.low %v1006, %v1022
        %v1031 = vcombine.high %v1006, %v1022
        %v1033 = vunpack.c.l.s4 1934713408
        %v1034 = vunpack.c.0.s8 %v1033
        %v1035 = vlaneseq
        %v1036 = vshrl.u32 %v1035, 7
        %v1037 = vsub.s32 %v1034, %v1036
        %v1038 = vrot.slane %v1030, %v1037
        %v1040 = vunpack.c.l.s4 1934713408
        %v1041 = vunpack.c.0.s8 %v1040
        %v1042 = vlaneseq
        %v1043 = vshrl.u32 %v1042, 7
        %v1044 = vsub.s32 %v1041, %v1043
        %v1045 = vrot.slane %v1031, %v1044
        %v1046 = vcombine.low %v1013, %v1029
        %v1047 = vcombine.high %v1013, %v1029
        %v1049 = vunpack.c.l.s4 1934713408
        %v1050 = vunpack.c.0.s8 %v1049
        %v1051 = vlaneseq
        %v1052 = vshrl.u32 %v1051, 7
        %v1053 = vsub.s32 %v1050, %v1052
        %v1054 = vrot.slane %v1046, %v1053
        %v1056 = vunpack.c.l.s4 1934713408
        %v1057 = vunpack.c.0.s8 %v1056
        %v1058 = vlaneseq
        %v1059 = vshrl.u32 %v1058, 7
        %v1060 = vsub.s32 %v1057, %v1059
        %v1061 = vrot.slane %v1047, %v1060
        %v1062 = vcombine.high %v1038, 0.0
        %v1063 = vcombine.high %v1045, 0.0
        %v1064 = vcombine.high %v1054, 0.0
        %v1065 = vcombine.high %v1061, 0.0
        %v1066 = vcombine.low %v970, %v977
        %v1068 = vunpack.c.l.s4 1983009808
        %v1069 = vunpack.c.0.s8 %v1068
        %v1070 = vlaneseq
        %v1071 = vshrl.u32 %v1070, 7
        %v1072 = vsub.s32 %v1069, %v1071
        %v1073 = vrot.slane %v1066, %v1072
        %v1074 = vcombine.low %v994, %v995
        %v1076 = vunpack.c.l.s4 1983009808
        %v1077 = vunpack.c.0.s8 %v1076
        %v1078 = vlaneseq
        %v1079 = vshrl.u32 %v1078, 7
        %v1080 = vsub.s32 %v1077, %v1079
        %v1081 = vrot.slane %v1074, %v1080
        %v1082 = vcombine.low %v986, %v993
        %v1084 = vunpack.c.l.s4 1983009808
        %v1085 = vunpack.c.0.s8 %v1084
        %v1086 = vlaneseq
        %v1087 = vshrl.u32 %v1086, 7
        %v1088 = vsub.s32 %v1085, %v1087
        %v1089 = vrot.slane %v1082, %v1088
        %v1090 = vcombine.low %v996, %v997
        %v1092 = vunpack.c.l.s4 1983009808
        %v1093 = vunpack.c.0.s8 %v1092
        %v1094 = vlaneseq
        %v1095 = vshrl.u32 %v1094, 7
        %v1096 = vsub.s32 %v1093, %v1095
        %v1097 = vrot.slane %v1090, %v1096
        %v1098 = vcombine.low %v1073, %v1081
        %v1099 = vcombine.high %v1073, %v1081
        %v1101 = vunpack.c.l.s4 1934713408
        %v1102 = vunpack.c.0.s8 %v1101
        %v1103 = vlaneseq
        %v1104 = vshrl.u32 %v1103, 7
        %v1105 = vsub.s32 %v1102, %v1104
        %v1106 = vrot.slane %v1098, %v1105
        %v1108 = vunpack.c.l.s4 1934713408
        %v1109 = vunpack.c.0.s8 %v1108
        %v1110 = vlaneseq
        %v1111 = vshrl.u32 %v1110, 7
        %v1112 = vsub.s32 %v1109, %v1111
        %v1113 = vrot.slane %v1099, %v1112
        %v1114 = vcombine.low %v1089, %v1097
        %v1115 = vcombine.high %v1089, %v1097
        %v1117 = vunpack.c.l.s4 1934713408
        %v1118 = vunpack.c.0.s8 %v1117
        %v1119 = vlaneseq
        %v1120 = vshrl.u32 %v1119, 7
        %v1121 = vsub.s32 %v1118, %v1120
        %v1122 = vrot.slane %v1114, %v1121
        %v1124 = vunpack.c.l.s4 1934713408
        %v1125 = vunpack.c.0.s8 %v1124
        %v1126 = vlaneseq
        %v1127 = vshrl.u32 %v1126, 7
        %v1128 = vsub.s32 %v1125, %v1127
        %v1129 = vrot.slane %v1115, %v1128
        %v1130 = vcombine.low %v1106, %v1122
        %v1131 = vcombine.high %v1106, %v1122
        %v1132 = vcombine.low %v1113, %v1129
        %v1133 = vcombine.high %v1113, %v1129
        %v1134 = vcombine.low %v1038, %v1045
        %v1136 = vunpack.c.l.s4 1983009808
        %v1137 = vunpack.c.0.s8 %v1136
        %v1138 = vlaneseq
        %v1139 = vshrl.u32 %v1138, 7
        %v1140 = vsub.s32 %v1137, %v1139
        %v1141 = vrot.slane %v1134, %v1140
        %v1142 = vcombine.low %v1062, %v1063
        %v1144 = vunpack.c.l.s4 1983009808
        %v1145 = vunpack.c.0.s8 %v1144
        %v1146 = vlaneseq
        %v1147 = vshrl.u32 %v1146, 7
        %v1148 = vsub.s32 %v1145, %v1147
        %v1149 = vrot.slane %v1142, %v1148
        %v1150 = vcombine.low %v1054, %v1061
        %v1152 = vunpack.c.l.s4 1983009808
        %v1153 = vunpack.c.0.s8 %v1152
        %v1154 = vlaneseq
        %v1155 = vshrl.u32 %v1154, 7
        %v1156 = vsub.s32 %v1153, %v1155
        %v1157 = vrot.slane %v1150, %v1156
        %v1158 = vcombine.low %v1064, %v1065
        %v1160 = vunpack.c.l.s4 1983009808
        %v1161 = vunpack.c.0.s8 %v1160
        %v1162 = vlaneseq
        %v1163 = vshrl.u32 %v1162, 7
        %v1164 = vsub.s32 %v1161, %v1163
        %v1165 = vrot.slane %v1158, %v1164
        %v1166 = vcombine.low %v1141, %v1149
        %v1167 = vcombine.high %v1141, %v1149
        %v1169 = vunpack.c.l.s4 1934713408
        %v1170 = vunpack.c.0.s8 %v1169
        %v1171 = vlaneseq
        %v1172 = vshrl.u32 %v1171, 7
        %v1173 = vsub.s32 %v1170, %v1172
        %v1174 = vrot.slane %v1166, %v1173
        %v1176 = vunpack.c.l.s4 1934713408
        %v1177 = vunpack.c.0.s8 %v1176
        %v1178 = vlaneseq
        %v1179 = vshrl.u32 %v1178, 7
        %v1180 = vsub.s32 %v1177, %v1179
        %v1181 = vrot.slane %v1167, %v1180
        %v1182 = vcombine.low %v1157, %v1165
        %v1183 = vcombine.high %v1157, %v1165
        %v1185 = vunpack.c.l.s4 1934713408
        %v1186 = vunpack.c.0.s8 %v1185
        %v1187 = vlaneseq
        %v1188 = vshrl.u32 %v1187, 7
        %v1189 = vsub.s32 %v1186, %v1188
        %v1190 = vrot.slane %v1182, %v1189
        %v1192 = vunpack.c.l.s4 1934713408
        %v1193 = vunpack.c.0.s8 %v1192
        %v1194 = vlaneseq
        %v1195 = vshrl.u32 %v1194, 7
        %v1196 = vsub.s32 %v1193, %v1195
        %v1197 = vrot.slane %v1183, %v1196
        %v1198 = vcombine.low %v1174, %v1190
        %v1199 = vcombine.high %v1174, %v1190
        %v1200 = vcombine.low %v1181, %v1197
        %v1201 = vcombine.high %v1181, %v1197
        %s1202 = scalar_lea.vmem [#allocation3], %s895
        %1203 = vst.msk [vmem:[%s1202] sm:$0xff] %vm897, %v1130
        %1204 = vst.msk [vmem:[%s1202 + $0x8] sm:$0xff] %vm897, %v1198
        %1205 = vst.msk [vmem:[%s1202 + $0x10] sm:$0xff] %vm897, %v1131
        %1206 = vst.msk [vmem:[%s1202 + $0x18] sm:$0xff] %vm897, %v1199
        %1207 = vst.msk [vmem:[%s1202 + $0x20] sm:$0xff] %vm897, %v1132
        %1208 = vst.msk [vmem:[%s1202 + $0x28] sm:$0xff] %vm897, %v1200
        %1209 = vst.msk [vmem:[%s1202 + $0x30] sm:$0xff] %vm897, %v1133
        %1210 = vst.msk [vmem:[%s1202 + $0x38] sm:$0xff] %vm897, %v1201
        %v1211 = vld [vmem:[%s3] sm:$0xff]
        %v1212 = vld [vmem:[%s3 + $0x8] sm:$0xff]
        %v1213 = vld [vmem:[%s3 + $0x10] sm:$0xff]
        %v1214 = vld [vmem:[%s3 + $0x18] sm:$0xff]
        %1215 = vmatprep.subr.mxu0 0.0
        %1216 = vmatpush1.msra.mxu0 %v1211
        %1217 = vmatprep.subr.mxu0 0.0
        %1218 = vmatpush1.msra.mxu0 %v1212
        %1219 = vmatprep.subr.mxu0 0.0
        %1220 = vmatpush1.msra.mxu0 %v1213
        %1221 = vmatprep.subr.mxu0 0.0
        %1222 = vmatpush1.msra.mxu0 %v1214
        %1223 = vmatprep.subr.mxu0 0.0
        %1224 = vmatpush1.msra.mxu0 0.0
        %1225 = vmatprep.subr.mxu0 0.0
        %1226 = vmatpush1.msra.mxu0 0.0
        %1227 = vmatprep.subr.mxu0 0.0
        %1228 = vmatpush1.msra.mxu0 0.0
        %1229 = vmatprep.subr.mxu0 0.0
        %1230 = vmatpush1.msra.mxu0 0.0
        %1231 = vmatprep.subr.mxu0 0.0
        %1232 = vmatpush1.msra.mxu0 0.0
        %1233 = vmatprep.subr.mxu0 0.0
        %1234 = vmatpush1.msra.mxu0 0.0
        %1235 = vmatprep.subr.mxu0 0.0
        %1236 = vmatpush1.msra.mxu0 0.0
        %1237 = vmatprep.subr.mxu0 0.0
        %1238 = vmatpush1.msra.mxu0 0.0
        %1239 = vmatprep.subr.mxu0 0.0
        %1240 = vmatpush1.msra.mxu0 0.0
        %1241 = vmatprep.subr.mxu0 0.0
        %1242 = vmatpush1.msra.mxu0 0.0
        %1243 = vmatprep.subr.mxu0 0.0
        %1244 = vmatpush1.msra.mxu0 0.0
        %1245 = vmatprep.subr.mxu0 0.0
        %1246 = vmatpush1.msra.mxu0 0.0
        %1247 = vmatprep.subr.mxu0 0.0
        %1248 = vmatpush1.msra.mxu0 0.0
        %1249 = vmatprep.subr.mxu0 0.0
        %1250 = vmatpush1.msra.mxu0 0.0
        %1251 = vmatprep.subr.mxu0 0.0
        %1252 = vmatpush1.msra.mxu0 0.0
        %1253 = vmatprep.subr.mxu0 0.0
        %1254 = vmatpush1.msra.mxu0 0.0
        %1255 = vmatprep.subr.mxu0 0.0
        %1256 = vmatpush1.msra.mxu0 0.0
        %1257 = vmatprep.subr.mxu0 0.0
        %1258 = vmatpush1.msra.mxu0 0.0
        %1259 = vmatprep.subr.mxu0 0.0
        %1260 = vmatpush1.msra.mxu0 0.0
        %1261 = vmatprep.subr.mxu0 0.0
        %1262 = vmatpush1.msra.mxu0 0.0
        %1263 = vmatprep.subr.mxu0 0.0
        %1264 = vmatpush1.msra.mxu0 0.0
        %1265 = vmatprep.subr.mxu0 0.0
        %1266 = vmatpush1.msra.mxu0 0.0
        %1267 = vmatprep.subr.mxu0 0.0
        %1268 = vmatpush1.msra.mxu0 0.0
        %1269 = vmatprep.subr.mxu0 0.0
        %1270 = vmatpush1.msra.mxu0 0.0
        %1271 = vmatprep.subr.mxu0 0.0
        %1272 = vmatpush1.msra.mxu0 0.0
        %1273 = vmatprep.subr.mxu0 0.0
        %1274 = vmatpush1.msra.mxu0 0.0
        %1275 = vmatprep.subr.mxu0 0.0
        %1276 = vmatpush1.msra.mxu0 0.0
        %1277 = vmatprep.subr.mxu0 0.0
        %1278 = vmatpush1.msra.mxu0 0.0
        %1279 = vmatprep.mubr.f32.mxu0 0.0
        %1280 = vmatmul.mubr.f32.gmra.mrb[0].mxu0 %v523
        %v1281 = vpop.f32.mrb[0].mxu0
        %v1282 = vadd.f32 0.0, %v1281
        %v1283 = vpop.f32.mrb[0].mxu0
        %1284 = vmatprep.mubr.f32.mxu0 0.0
        %1285 = vmatmul.mubr.f32.gmra.mrb[0].mxu0 %v526
        %v1286 = vpop.f32.mrb[0].mxu0
        %v1287 = vadd.f32 0.0, %v1286
        %v1288 = vpop.f32.mrb[0].mxu0
        %1289 = vdwg.mxu0
        %v1290 = vmul.f32 %v1282, 0.35355338
        %v1291 = vmul.f32 %v1287, 0.35355338
        %1294 = vrot.lane.b32.xlu0 %v1290, 120
        %v1295 = vpop.permute.xlu0 %1294
        %1296 = vrot.lane.b32.xlu0 %v1291, 120
        %v1297 = vpop.permute.xlu0 %1296
        %1300 = vrot.lane.b32.xlu0 %v1290, 112
        %v1301 = vpop.permute.xlu0 %1300
        %1302 = vrot.lane.b32.xlu0 %v1291, 112
        %v1303 = vpop.permute.xlu0 %1302
        %1306 = vrot.lane.b32.xlu0 %v1290, 104
        %v1307 = vpop.permute.xlu0 %1306
        %1308 = vrot.lane.b32.xlu0 %v1291, 104
        %v1309 = vpop.permute.xlu0 %1308
        %v1312 = vcombine.low %v1290, %v1301
        %v1313 = vcombine.high %v1290, %v1301
        %v1315 = vunpack.c.l.s4 1983009808
        %v1316 = vunpack.c.0.s8 %v1315
        %v1317 = vlaneseq
        %v1318 = vshrl.u32 %v1317, 7
        %v1319 = vsub.s32 %v1316, %v1318
        %v1320 = vrot.slane %v1312, %v1319
        %v1322 = vunpack.c.l.s4 1983009808
        %v1323 = vunpack.c.0.s8 %v1322
        %v1324 = vlaneseq
        %v1325 = vshrl.u32 %v1324, 7
        %v1326 = vsub.s32 %v1323, %v1325
        %v1327 = vrot.slane %v1313, %v1326
        %v1328 = vcombine.low %v1295, %v1307
        %v1329 = vcombine.high %v1295, %v1307
        %v1331 = vunpack.c.l.s4 1983009808
        %v1332 = vunpack.c.0.s8 %v1331
        %v1333 = vlaneseq
        %v1334 = vshrl.u32 %v1333, 7
        %v1335 = vsub.s32 %v1332, %v1334
        %v1336 = vrot.slane %v1328, %v1335
        %v1338 = vunpack.c.l.s4 1983009808
        %v1339 = vunpack.c.0.s8 %v1338
        %v1340 = vlaneseq
        %v1341 = vshrl.u32 %v1340, 7
        %v1342 = vsub.s32 %v1339, %v1341
        %v1343 = vrot.slane %v1329, %v1342
        %v1344 = vcombine.low %v1320, %v1336
        %v1345 = vcombine.high %v1320, %v1336
        %v1347 = vunpack.c.l.s4 1934713408
        %v1348 = vunpack.c.0.s8 %v1347
        %v1349 = vlaneseq
        %v1350 = vshrl.u32 %v1349, 7
        %v1351 = vsub.s32 %v1348, %v1350
        %v1352 = vrot.slane %v1344, %v1351
        %v1354 = vunpack.c.l.s4 1934713408
        %v1355 = vunpack.c.0.s8 %v1354
        %v1356 = vlaneseq
        %v1357 = vshrl.u32 %v1356, 7
        %v1358 = vsub.s32 %v1355, %v1357
        %v1359 = vrot.slane %v1345, %v1358
        %v1360 = vcombine.low %v1327, %v1343
        %v1361 = vcombine.high %v1327, %v1343
        %v1363 = vunpack.c.l.s4 1934713408
        %v1364 = vunpack.c.0.s8 %v1363
        %v1365 = vlaneseq
        %v1366 = vshrl.u32 %v1365, 7
        %v1367 = vsub.s32 %v1364, %v1366
        %v1368 = vrot.slane %v1360, %v1367
        %v1370 = vunpack.c.l.s4 1934713408
        %v1371 = vunpack.c.0.s8 %v1370
        %v1372 = vlaneseq
        %v1373 = vshrl.u32 %v1372, 7
        %v1374 = vsub.s32 %v1371, %v1373
        %v1375 = vrot.slane %v1361, %v1374
        %v1376 = vcombine.high %v1352, 0.0
        %v1377 = vcombine.high %v1359, 0.0
        %v1378 = vcombine.high %v1368, 0.0
        %v1379 = vcombine.high %v1375, 0.0
        %v1380 = vcombine.low %v1291, %v1303
        %v1381 = vcombine.high %v1291, %v1303
        %v1383 = vunpack.c.l.s4 1983009808
        %v1384 = vunpack.c.0.s8 %v1383
        %v1385 = vlaneseq
        %v1386 = vshrl.u32 %v1385, 7
        %v1387 = vsub.s32 %v1384, %v1386
        %v1388 = vrot.slane %v1380, %v1387
        %v1390 = vunpack.c.l.s4 1983009808
        %v1391 = vunpack.c.0.s8 %v1390
        %v1392 = vlaneseq
        %v1393 = vshrl.u32 %v1392, 7
        %v1394 = vsub.s32 %v1391, %v1393
        %v1395 = vrot.slane %v1381, %v1394
        %v1396 = vcombine.low %v1297, %v1309
        %v1397 = vcombine.high %v1297, %v1309
        %v1399 = vunpack.c.l.s4 1983009808
        %v1400 = vunpack.c.0.s8 %v1399
        %v1401 = vlaneseq
        %v1402 = vshrl.u32 %v1401, 7
        %v1403 = vsub.s32 %v1400, %v1402
        %v1404 = vrot.slane %v1396, %v1403
        %v1406 = vunpack.c.l.s4 1983009808
        %v1407 = vunpack.c.0.s8 %v1406
        %v1408 = vlaneseq
        %v1409 = vshrl.u32 %v1408, 7
        %v1410 = vsub.s32 %v1407, %v1409
        %v1411 = vrot.slane %v1397, %v1410
        %v1412 = vcombine.low %v1388, %v1404
        %v1413 = vcombine.high %v1388, %v1404
        %v1415 = vunpack.c.l.s4 1934713408
        %v1416 = vunpack.c.0.s8 %v1415
        %v1417 = vlaneseq
        %v1418 = vshrl.u32 %v1417, 7
        %v1419 = vsub.s32 %v1416, %v1418
        %v1420 = vrot.slane %v1412, %v1419
        %v1422 = vunpack.c.l.s4 1934713408
        %v1423 = vunpack.c.0.s8 %v1422
        %v1424 = vlaneseq
        %v1425 = vshrl.u32 %v1424, 7
        %v1426 = vsub.s32 %v1423, %v1425
        %v1427 = vrot.slane %v1413, %v1426
        %v1428 = vcombine.low %v1395, %v1411
        %v1429 = vcombine.high %v1395, %v1411
        %v1431 = vunpack.c.l.s4 1934713408
        %v1432 = vunpack.c.0.s8 %v1431
        %v1433 = vlaneseq
        %v1434 = vshrl.u32 %v1433, 7
        %v1435 = vsub.s32 %v1432, %v1434
        %v1436 = vrot.slane %v1428, %v1435
        %v1438 = vunpack.c.l.s4 1934713408
        %v1439 = vunpack.c.0.s8 %v1438
        %v1440 = vlaneseq
        %v1441 = vshrl.u32 %v1440, 7
        %v1442 = vsub.s32 %v1439, %v1441
        %v1443 = vrot.slane %v1429, %v1442
        %v1444 = vcombine.high %v1420, 0.0
        %v1445 = vcombine.high %v1427, 0.0
        %v1446 = vcombine.high %v1436, 0.0
        %v1447 = vcombine.high %v1443, 0.0
        %v1448 = vcombine.low %v1352, %v1359
        %v1450 = vunpack.c.l.s4 1983009808
        %v1451 = vunpack.c.0.s8 %v1450
        %v1452 = vlaneseq
        %v1453 = vshrl.u32 %v1452, 7
        %v1454 = vsub.s32 %v1451, %v1453
        %v1455 = vrot.slane %v1448, %v1454
        %v1456 = vcombine.low %v1376, %v1377
        %v1458 = vunpack.c.l.s4 1983009808
        %v1459 = vunpack.c.0.s8 %v1458
        %v1460 = vlaneseq
        %v1461 = vshrl.u32 %v1460, 7
        %v1462 = vsub.s32 %v1459, %v1461
        %v1463 = vrot.slane %v1456, %v1462
        %v1464 = vcombine.low %v1368, %v1375
        %v1466 = vunpack.c.l.s4 1983009808
        %v1467 = vunpack.c.0.s8 %v1466
        %v1468 = vlaneseq
        %v1469 = vshrl.u32 %v1468, 7
        %v1470 = vsub.s32 %v1467, %v1469
        %v1471 = vrot.slane %v1464, %v1470
        %v1472 = vcombine.low %v1378, %v1379
        %v1474 = vunpack.c.l.s4 1983009808
        %v1475 = vunpack.c.0.s8 %v1474
        %v1476 = vlaneseq
        %v1477 = vshrl.u32 %v1476, 7
        %v1478 = vsub.s32 %v1475, %v1477
        %v1479 = vrot.slane %v1472, %v1478
        %v1480 = vcombine.low %v1455, %v1463
        %v1481 = vcombine.high %v1455, %v1463
        %v1483 = vunpack.c.l.s4 1934713408
        %v1484 = vunpack.c.0.s8 %v1483
        %v1485 = vlaneseq
        %v1486 = vshrl.u32 %v1485, 7
        %v1487 = vsub.s32 %v1484, %v1486
        %v1488 = vrot.slane %v1480, %v1487
        %v1490 = vunpack.c.l.s4 1934713408
        %v1491 = vunpack.c.0.s8 %v1490
        %v1492 = vlaneseq
        %v1493 = vshrl.u32 %v1492, 7
        %v1494 = vsub.s32 %v1491, %v1493
        %v1495 = vrot.slane %v1481, %v1494
        %v1496 = vcombine.low %v1471, %v1479
        %v1497 = vcombine.high %v1471, %v1479
        %v1499 = vunpack.c.l.s4 1934713408
        %v1500 = vunpack.c.0.s8 %v1499
        %v1501 = vlaneseq
        %v1502 = vshrl.u32 %v1501, 7
        %v1503 = vsub.s32 %v1500, %v1502
        %v1504 = vrot.slane %v1496, %v1503
        %v1506 = vunpack.c.l.s4 1934713408
        %v1507 = vunpack.c.0.s8 %v1506
        %v1508 = vlaneseq
        %v1509 = vshrl.u32 %v1508, 7
        %v1510 = vsub.s32 %v1507, %v1509
        %v1511 = vrot.slane %v1497, %v1510
        %v1512 = vcombine.low %v1488, %v1504
        %v1513 = vcombine.high %v1488, %v1504
        %v1514 = vcombine.low %v1495, %v1511
        %v1515 = vcombine.high %v1495, %v1511
        %v1516 = vcombine.low %v1420, %v1427
        %v1518 = vunpack.c.l.s4 1983009808
        %v1519 = vunpack.c.0.s8 %v1518
        %v1520 = vlaneseq
        %v1521 = vshrl.u32 %v1520, 7
        %v1522 = vsub.s32 %v1519, %v1521
        %v1523 = vrot.slane %v1516, %v1522
        %v1524 = vcombine.low %v1444, %v1445
        %v1526 = vunpack.c.l.s4 1983009808
        %v1527 = vunpack.c.0.s8 %v1526
        %v1528 = vlaneseq
        %v1529 = vshrl.u32 %v1528, 7
        %v1530 = vsub.s32 %v1527, %v1529
        %v1531 = vrot.slane %v1524, %v1530
        %v1532 = vcombine.low %v1436, %v1443
        %v1534 = vunpack.c.l.s4 1983009808
        %v1535 = vunpack.c.0.s8 %v1534
        %v1536 = vlaneseq
        %v1537 = vshrl.u32 %v1536, 7
        %v1538 = vsub.s32 %v1535, %v1537
        %v1539 = vrot.slane %v1532, %v1538
        %v1540 = vcombine.low %v1446, %v1447
        %v1542 = vunpack.c.l.s4 1983009808
        %v1543 = vunpack.c.0.s8 %v1542
        %v1544 = vlaneseq
        %v1545 = vshrl.u32 %v1544, 7
        %v1546 = vsub.s32 %v1543, %v1545
        %v1547 = vrot.slane %v1540, %v1546
        %v1548 = vcombine.low %v1523, %v1531
        %v1549 = vcombine.high %v1523, %v1531
        %v1551 = vunpack.c.l.s4 1934713408
        %v1552 = vunpack.c.0.s8 %v1551
        %v1553 = vlaneseq
        %v1554 = vshrl.u32 %v1553, 7
        %v1555 = vsub.s32 %v1552, %v1554
        %v1556 = vrot.slane %v1548, %v1555
        %v1558 = vunpack.c.l.s4 1934713408
        %v1559 = vunpack.c.0.s8 %v1558
        %v1560 = vlaneseq
        %v1561 = vshrl.u32 %v1560, 7
        %v1562 = vsub.s32 %v1559, %v1561
        %v1563 = vrot.slane %v1549, %v1562
        %v1564 = vcombine.low %v1539, %v1547
        %v1565 = vcombine.high %v1539, %v1547
        %v1567 = vunpack.c.l.s4 1934713408
        %v1568 = vunpack.c.0.s8 %v1567
        %v1569 = vlaneseq
        %v1570 = vshrl.u32 %v1569, 7
        %v1571 = vsub.s32 %v1568, %v1570
        %v1572 = vrot.slane %v1564, %v1571
        %v1574 = vunpack.c.l.s4 1934713408
        %v1575 = vunpack.c.0.s8 %v1574
        %v1576 = vlaneseq
        %v1577 = vshrl.u32 %v1576, 7
        %v1578 = vsub.s32 %v1575, %v1577
        %v1579 = vrot.slane %v1565, %v1578
        %v1580 = vcombine.low %v1556, %v1572
        %v1581 = vcombine.high %v1556, %v1572
        %v1582 = vcombine.low %v1563, %v1579
        %v1583 = vcombine.high %v1563, %v1579
        %s1584 = smul.u32 %s32, 16
        %s1585 = sadd.s32 %s32, 1
        // While loop
        $region73: #{tpu_custom_call.1} parent=71 // loop_pre_header
          _
        $region74: #{tpu_custom_call.1} parent=71 // loop_header
          %s1587 = sphi 0, %s1589
          %p1588 = scmp.ge.s32.totalorder %s1587, %s1585
          %v1592 = vphi -1e+30, %v2033
          %v1593 = vphi -1e+30, %v2034
          %v1594 = vphi -1e+30, %v2035
          %v1595 = vphi -1e+30, %v2036
          %v1596 = vphi -1e+30, %v2037
          %v1597 = vphi -1e+30, %v2038
          %v1598 = vphi -1e+30, %v2039
          %v1599 = vphi -1e+30, %v2040
          %v1600 = vphi 0.0, %v2121
          %v1601 = vphi 0.0, %v2122
          %v1602 = vphi 0.0, %v2123
          %v1603 = vphi 0.0, %v2124
          %v1604 = vphi 0.0, %v2125
          %v1605 = vphi 0.0, %v2126
          %v1606 = vphi 0.0, %v2127
          %v1607 = vphi 0.0, %v2128
          %v1608 = vphi 0.0, %v2461
          %v1609 = vphi 0.0, %v2462
          %v1610 = vphi 0.0, %v2463
          %v1611 = vphi 0.0, %v2464
          %v1612 = vphi 0.0, %v2465
          %v1613 = vphi 0.0, %v2466
          %v1614 = vphi 0.0, %v2467
          %v1615 = vphi 0.0, %v2468
        $region75: #{tpu_custom_call.1} parent=71 // loop_header_branch
          %1591 = sbr.rel (%p1588) target = $region79
        $region76: #{tpu_custom_call.1} parent=71 // loop_body
          %s1616 = smul.u32 %s1587, 64
          %s1617 = scalar_lea.vmem [#allocation2], %s1616
          %v1618 = vld [vmem:[%s1617] sm:$0xff]
          %v1619 = vld [vmem:[%s1617 + $0x8] sm:$0xff]
          %v1620 = vld [vmem:[%s1617 + $0x10] sm:$0xff]
          %v1621 = vld [vmem:[%s1617 + $0x18] sm:$0xff]
          %v1622 = vld [vmem:[%s1617 + $0x20] sm:$0xff]
          %v1623 = vld [vmem:[%s1617 + $0x28] sm:$0xff]
          %v1624 = vld [vmem:[%s1617 + $0x30] sm:$0xff]
          %v1625 = vld [vmem:[%s1617 + $0x38] sm:$0xff]
          %s1626 = scalar_lea.vmem [#allocation3], %s1616
          %v1627 = vld [vmem:[%s1626] sm:$0xff]
          %v1628 = vld [vmem:[%s1626 + $0x8] sm:$0xff]
          %v1629 = vld [vmem:[%s1626 + $0x10] sm:$0xff]
          %v1630 = vld [vmem:[%s1626 + $0x18] sm:$0xff]
          %v1631 = vld [vmem:[%s1626 + $0x20] sm:$0xff]
          %v1632 = vld [vmem:[%s1626 + $0x28] sm:$0xff]
          %v1633 = vld [vmem:[%s1626 + $0x30] sm:$0xff]
          %v1634 = vld [vmem:[%s1626 + $0x38] sm:$0xff]
          %v1636 = vsel %vm897, %v1512, 0
          %v1639 = vsel %vm897, %v1580, 0
          %v1642 = vsel %vm897, %v1618, 0
          %v1645 = vsel %vm897, %v1619, 0
          %1647 = vmatprep.subr.mxu0 0.0
          %1648 = vmatpush1.xpose.msra.mxu0 %v1642
          %1649 = vmatprep.subr.mxu0 0.0
          %1650 = vmatpush1.xpose.msra.mxu0 %v1645
          %1651 = vmatprep.subr.mxu0 0.0
          %1652 = vmatpush1.xpose.msra.mxu0 0.0
          %1653 = vmatprep.subr.mxu0 0.0
          %1654 = vmatpush1.xpose.msra.mxu0 0.0
          %1655 = vmatprep.subr.mxu0 0.0
          %1656 = vmatpush1.xpose.msra.mxu0 0.0
          %1657 = vmatprep.subr.mxu0 0.0
          %1658 = vmatpush1.xpose.msra.mxu0 0.0
          %1659 = vmatprep.subr.mxu0 0.0
          %1660 = vmatpush1.xpose.msra.mxu0 0.0
          %1661 = vmatprep.subr.mxu0 0.0
          %1662 = vmatpush1.xpose.msra.mxu0 0.0
          %1663 = vmatprep.subr.mxu0 0.0
          %1664 = vmatpush1.xpose.msra.mxu0 0.0
          %1665 = vmatprep.subr.mxu0 0.0
          %1666 = vmatpush1.xpose.msra.mxu0 0.0
          %1667 = vmatprep.subr.mxu0 0.0
          %1668 = vmatpush1.xpose.msra.mxu0 0.0
          %1669 = vmatprep.subr.mxu0 0.0
          %1670 = vmatpush1.xpose.msra.mxu0 0.0
          %1671 = vmatprep.subr.mxu0 0.0
          %1672 = vmatpush1.xpose.msra.mxu0 0.0
          %1673 = vmatprep.subr.mxu0 0.0
          %1674 = vmatpush1.xpose.msra.mxu0 0.0
          %1675 = vmatprep.subr.mxu0 0.0
          %1676 = vmatpush1.xpose.msra.mxu0 0.0
          %1677 = vmatprep.subr.mxu0 0.0
          %1678 = vmatpush1.xpose.msra.mxu0 0.0
          %1679 = vmatprep.subr.mxu0 0.0
          %1680 = vmatpush1.xpose.msra.mxu0 0.0
          %1681 = vmatprep.subr.mxu0 0.0
          %1682 = vmatpush1.xpose.msra.mxu0 0.0
          %1683 = vmatprep.subr.mxu0 0.0
          %1684 = vmatpush1.xpose.msra.mxu0 0.0
          %1685 = vmatprep.subr.mxu0 0.0
          %1686 = vmatpush1.xpose.msra.mxu0 0.0
          %1687 = vmatprep.subr.mxu0 0.0
          %1688 = vmatpush1.xpose.msra.mxu0 0.0
          %1689 = vmatprep.subr.mxu0 0.0
          %1690 = vmatpush1.xpose.msra.mxu0 0.0
          %1691 = vmatprep.subr.mxu0 0.0
          %1692 = vmatpush1.xpose.msra.mxu0 0.0
          %1693 = vmatprep.subr.mxu0 0.0
          %1694 = vmatpush1.xpose.msra.mxu0 0.0
          %1695 = vmatprep.subr.mxu0 0.0
          %1696 = vmatpush1.xpose.msra.mxu0 0.0
          %1697 = vmatprep.subr.mxu0 0.0
          %1698 = vmatpush1.xpose.msra.mxu0 0.0
          %1699 = vmatprep.subr.mxu0 0.0
          %1700 = vmatpush1.xpose.msra.mxu0 0.0
          %1701 = vmatprep.subr.mxu0 0.0
          %1702 = vmatpush1.xpose.msra.mxu0 0.0
          %1703 = vmatprep.subr.mxu0 0.0
          %1704 = vmatpush1.xpose.msra.mxu0 0.0
          %1705 = vmatprep.subr.mxu0 0.0
          %1706 = vmatpush1.xpose.msra.mxu0 0.0
          %1707 = vmatprep.subr.mxu0 0.0
          %1708 = vmatpush1.xpose.msra.mxu0 0.0
          %1709 = vmatprep.subr.mxu0 0.0
          %1710 = vmatpush1.xpose.msra.mxu0 0.0
          %1711 = vmatprep.mubr.f32.mxu0 0.0
          %1712 = vmatmul.mubr.f32.gmra.mrb[0].mxu0 %v1636
          %v1713 = vpop.f32.mrb[0].mxu0
          %v1714 = vadd.f32 0.0, %v1713
          %v1715 = vpop.f32.mrb[0].mxu0
          %1716 = vmatprep.mubr.f32.mxu0 0.0
          %1717 = vmatmul.mubr.f32.gmra.mrb[0].mxu0 %v1639
          %v1718 = vpop.f32.mrb[0].mxu0
          %v1719 = vadd.f32 0.0, %v1718
          %v1720 = vpop.f32.mrb[0].mxu0
          %1721 = vdwg.mxu0
          %v1723 = vsel %vm897, %v1513, 0
          %v1726 = vsel %vm897, %v1581, 0
          %v1729 = vsel %vm897, %v1620, 0
          %v1732 = vsel %vm897, %v1621, 0
          %1734 = vmatprep.subr.mxu0 0.0
          %1735 = vmatpush1.xpose.msra.mxu0 %v1729
          %1736 = vmatprep.subr.mxu0 0.0
          %1737 = vmatpush1.xpose.msra.mxu0 %v1732
          %1738 = vmatprep.subr.mxu0 0.0
          %1739 = vmatpush1.xpose.msra.mxu0 0.0
          %1740 = vmatprep.subr.mxu0 0.0
          %1741 = vmatpush1.xpose.msra.mxu0 0.0
          %1742 = vmatprep.subr.mxu0 0.0
          %1743 = vmatpush1.xpose.msra.mxu0 0.0
          %1744 = vmatprep.subr.mxu0 0.0
          %1745 = vmatpush1.xpose.msra.mxu0 0.0
          %1746 = vmatprep.subr.mxu0 0.0
          %1747 = vmatpush1.xpose.msra.mxu0 0.0
          %1748 = vmatprep.subr.mxu0 0.0
          %1749 = vmatpush1.xpose.msra.mxu0 0.0
          %1750 = vmatprep.subr.mxu0 0.0
          %1751 = vmatpush1.xpose.msra.mxu0 0.0
          %1752 = vmatprep.subr.mxu0 0.0
          %1753 = vmatpush1.xpose.msra.mxu0 0.0
          %1754 = vmatprep.subr.mxu0 0.0
          %1755 = vmatpush1.xpose.msra.mxu0 0.0
          %1756 = vmatprep.subr.mxu0 0.0
          %1757 = vmatpush1.xpose.msra.mxu0 0.0
          %1758 = vmatprep.subr.mxu0 0.0
          %1759 = vmatpush1.xpose.msra.mxu0 0.0
          %1760 = vmatprep.subr.mxu0 0.0
          %1761 = vmatpush1.xpose.msra.mxu0 0.0
          %1762 = vmatprep.subr.mxu0 0.0
          %1763 = vmatpush1.xpose.msra.mxu0 0.0
          %1764 = vmatprep.subr.mxu0 0.0
          %1765 = vmatpush1.xpose.msra.mxu0 0.0
          %1766 = vmatprep.subr.mxu0 0.0
          %1767 = vmatpush1.xpose.msra.mxu0 0.0
          %1768 = vmatprep.subr.mxu0 0.0
          %1769 = vmatpush1.xpose.msra.mxu0 0.0
          %1770 = vmatprep.subr.mxu0 0.0
          %1771 = vmatpush1.xpose.msra.mxu0 0.0
          %1772 = vmatprep.subr.mxu0 0.0
          %1773 = vmatpush1.xpose.msra.mxu0 0.0
          %1774 = vmatprep.subr.mxu0 0.0
          %1775 = vmatpush1.xpose.msra.mxu0 0.0
          %1776 = vmatprep.subr.mxu0 0.0
          %1777 = vmatpush1.xpose.msra.mxu0 0.0
          %1778 = vmatprep.subr.mxu0 0.0
          %1779 = vmatpush1.xpose.msra.mxu0 0.0
          %1780 = vmatprep.subr.mxu0 0.0
          %1781 = vmatpush1.xpose.msra.mxu0 0.0
          %1782 = vmatprep.subr.mxu0 0.0
          %1783 = vmatpush1.xpose.msra.mxu0 0.0
          %1784 = vmatprep.subr.mxu0 0.0
          %1785 = vmatpush1.xpose.msra.mxu0 0.0
          %1786 = vmatprep.subr.mxu0 0.0
          %1787 = vmatpush1.xpose.msra.mxu0 0.0
          %1788 = vmatprep.subr.mxu0 0.0
          %1789 = vmatpush1.xpose.msra.mxu0 0.0
          %1790 = vmatprep.subr.mxu0 0.0
          %1791 = vmatpush1.xpose.msra.mxu0 0.0
          %1792 = vmatprep.subr.mxu0 0.0
          %1793 = vmatpush1.xpose.msra.mxu0 0.0
          %1794 = vmatprep.subr.mxu0 0.0
          %1795 = vmatpush1.xpose.msra.mxu0 0.0
          %1796 = vmatprep.subr.mxu0 0.0
          %1797 = vmatpush1.xpose.msra.mxu0 0.0
          %1798 = vmatprep.mubr.f32.mxu0 0.0
          %1799 = vmatmul.mubr.f32.gmra.mrb[0].mxu0 %v1723
          %v1800 = vpop.f32.mrb[0].mxu0
          %v1801 = vadd.f32 0.0, %v1800
          %v1802 = vpop.f32.mrb[0].mxu0
          %1803 = vmatprep.mubr.f32.mxu0 0.0
          %1804 = vmatmul.mubr.f32.gmra.mrb[0].mxu0 %v1726
          %v1805 = vpop.f32.mrb[0].mxu0
          %v1806 = vadd.f32 0.0, %v1805
          %v1807 = vpop.f32.mrb[0].mxu0
          %1808 = vdwg.mxu0
          %v1810 = vsel %vm897, %v1514, 0
          %v1813 = vsel %vm897, %v1582, 0
          %v1816 = vsel %vm897, %v1622, 0
          %v1819 = vsel %vm897, %v1623, 0
          %1821 = vmatprep.subr.mxu0 0.0
          %1822 = vmatpush1.xpose.msra.mxu0 %v1816
          %1823 = vmatprep.subr.mxu0 0.0
          %1824 = vmatpush1.xpose.msra.mxu0 %v1819
          %1825 = vmatprep.subr.mxu0 0.0
          %1826 = vmatpush1.xpose.msra.mxu0 0.0
          %1827 = vmatprep.subr.mxu0 0.0
          %1828 = vmatpush1.xpose.msra.mxu0 0.0
          %1829 = vmatprep.subr.mxu0 0.0
          %1830 = vmatpush1.xpose.msra.mxu0 0.0
          %1831 = vmatprep.subr.mxu0 0.0
          %1832 = vmatpush1.xpose.msra.mxu0 0.0
          %1833 = vmatprep.subr.mxu0 0.0
          %1834 = vmatpush1.xpose.msra.mxu0 0.0
          %1835 = vmatprep.subr.mxu0 0.0
          %1836 = vmatpush1.xpose.msra.mxu0 0.0
          %1837 = vmatprep.subr.mxu0 0.0
          %1838 = vmatpush1.xpose.msra.mxu0 0.0
          %1839 = vmatprep.subr.mxu0 0.0
          %1840 = vmatpush1.xpose.msra.mxu0 0.0
          %1841 = vmatprep.subr.mxu0 0.0
          %1842 = vmatpush1.xpose.msra.mxu0 0.0
          %1843 = vmatprep.subr.mxu0 0.0
          %1844 = vmatpush1.xpose.msra.mxu0 0.0
          %1845 = vmatprep.subr.mxu0 0.0
          %1846 = vmatpush1.xpose.msra.mxu0 0.0
          %1847 = vmatprep.subr.mxu0 0.0
          %1848 = vmatpush1.xpose.msra.mxu0 0.0
          %1849 = vmatprep.subr.mxu0 0.0
          %1850 = vmatpush1.xpose.msra.mxu0 0.0
          %1851 = vmatprep.subr.mxu0 0.0
          %1852 = vmatpush1.xpose.msra.mxu0 0.0
          %1853 = vmatprep.subr.mxu0 0.0
          %1854 = vmatpush1.xpose.msra.mxu0 0.0
          %1855 = vmatprep.subr.mxu0 0.0
          %1856 = vmatpush1.xpose.msra.mxu0 0.0
          %1857 = vmatprep.subr.mxu0 0.0
          %1858 = vmatpush1.xpose.msra.mxu0 0.0
          %1859 = vmatprep.subr.mxu0 0.0
          %1860 = vmatpush1.xpose.msra.mxu0 0.0
          %1861 = vmatprep.subr.mxu0 0.0
          %1862 = vmatpush1.xpose.msra.mxu0 0.0
          %1863 = vmatprep.subr.mxu0 0.0
          %1864 = vmatpush1.xpose.msra.mxu0 0.0
          %1865 = vmatprep.subr.mxu0 0.0
          %1866 = vmatpush1.xpose.msra.mxu0 0.0
          %1867 = vmatprep.subr.mxu0 0.0
          %1868 = vmatpush1.xpose.msra.mxu0 0.0
          %1869 = vmatprep.subr.mxu0 0.0
          %1870 = vmatpush1.xpose.msra.mxu0 0.0
          %1871 = vmatprep.subr.mxu0 0.0
          %1872 = vmatpush1.xpose.msra.mxu0 0.0
          %1873 = vmatprep.subr.mxu0 0.0
          %1874 = vmatpush1.xpose.msra.mxu0 0.0
          %1875 = vmatprep.subr.mxu0 0.0
          %1876 = vmatpush1.xpose.msra.mxu0 0.0
          %1877 = vmatprep.subr.mxu0 0.0
          %1878 = vmatpush1.xpose.msra.mxu0 0.0
          %1879 = vmatprep.subr.mxu0 0.0
          %1880 = vmatpush1.xpose.msra.mxu0 0.0
          %1881 = vmatprep.subr.mxu0 0.0
          %1882 = vmatpush1.xpose.msra.mxu0 0.0
          %1883 = vmatprep.subr.mxu0 0.0
          %1884 = vmatpush1.xpose.msra.mxu0 0.0
          %1885 = vmatprep.mubr.f32.mxu0 0.0
          %1886 = vmatmul.mubr.f32.gmra.mrb[0].mxu0 %v1810
          %v1887 = vpop.f32.mrb[0].mxu0
          %v1888 = vadd.f32 0.0, %v1887
          %v1889 = vpop.f32.mrb[0].mxu0
          %1890 = vmatprep.mubr.f32.mxu0 0.0
          %1891 = vmatmul.mubr.f32.gmra.mrb[0].mxu0 %v1813
          %v1892 = vpop.f32.mrb[0].mxu0
          %v1893 = vadd.f32 0.0, %v1892
          %v1894 = vpop.f32.mrb[0].mxu0
          %1895 = vdwg.mxu0
          %v1897 = vsel %vm897, %v1515, 0
          %v1900 = vsel %vm897, %v1583, 0
          %v1903 = vsel %vm897, %v1624, 0
          %v1906 = vsel %vm897, %v1625, 0
          %1908 = vmatprep.subr.mxu0 0.0
          %1909 = vmatpush1.xpose.msra.mxu0 %v1903
          %1910 = vmatprep.subr.mxu0 0.0
          %1911 = vmatpush1.xpose.msra.mxu0 %v1906
          %1912 = vmatprep.subr.mxu0 0.0
          %1913 = vmatpush1.xpose.msra.mxu0 0.0
          %1914 = vmatprep.subr.mxu0 0.0
          %1915 = vmatpush1.xpose.msra.mxu0 0.0
          %1916 = vmatprep.subr.mxu0 0.0
          %1917 = vmatpush1.xpose.msra.mxu0 0.0
          %1918 = vmatprep.subr.mxu0 0.0
          %1919 = vmatpush1.xpose.msra.mxu0 0.0
          %1920 = vmatprep.subr.mxu0 0.0
          %1921 = vmatpush1.xpose.msra.mxu0 0.0
          %1922 = vmatprep.subr.mxu0 0.0
          %1923 = vmatpush1.xpose.msra.mxu0 0.0
          %1924 = vmatprep.subr.mxu0 0.0
          %1925 = vmatpush1.xpose.msra.mxu0 0.0
          %1926 = vmatprep.subr.mxu0 0.0
          %1927 = vmatpush1.xpose.msra.mxu0 0.0
          %1928 = vmatprep.subr.mxu0 0.0
          %1929 = vmatpush1.xpose.msra.mxu0 0.0
          %1930 = vmatprep.subr.mxu0 0.0
          %1931 = vmatpush1.xpose.msra.mxu0 0.0
          %1932 = vmatprep.subr.mxu0 0.0
          %1933 = vmatpush1.xpose.msra.mxu0 0.0
          %1934 = vmatprep.subr.mxu0 0.0
          %1935 = vmatpush1.xpose.msra.mxu0 0.0
          %1936 = vmatprep.subr.mxu0 0.0
          %1937 = vmatpush1.xpose.msra.mxu0 0.0
          %1938 = vmatprep.subr.mxu0 0.0
          %1939 = vmatpush1.xpose.msra.mxu0 0.0
          %1940 = vmatprep.subr.mxu0 0.0
          %1941 = vmatpush1.xpose.msra.mxu0 0.0
          %1942 = vmatprep.subr.mxu0 0.0
          %1943 = vmatpush1.xpose.msra.mxu0 0.0
          %1944 = vmatprep.subr.mxu0 0.0
          %1945 = vmatpush1.xpose.msra.mxu0 0.0
          %1946 = vmatprep.subr.mxu0 0.0
          %1947 = vmatpush1.xpose.msra.mxu0 0.0
          %1948 = vmatprep.subr.mxu0 0.0
          %1949 = vmatpush1.xpose.msra.mxu0 0.0
          %1950 = vmatprep.subr.mxu0 0.0
          %1951 = vmatpush1.xpose.msra.mxu0 0.0
          %1952 = vmatprep.subr.mxu0 0.0
          %1953 = vmatpush1.xpose.msra.mxu0 0.0
          %1954 = vmatprep.subr.mxu0 0.0
          %1955 = vmatpush1.xpose.msra.mxu0 0.0
          %1956 = vmatprep.subr.mxu0 0.0
          %1957 = vmatpush1.xpose.msra.mxu0 0.0
          %1958 = vmatprep.subr.mxu0 0.0
          %1959 = vmatpush1.xpose.msra.mxu0 0.0
          %1960 = vmatprep.subr.mxu0 0.0
          %1961 = vmatpush1.xpose.msra.mxu0 0.0
          %1962 = vmatprep.subr.mxu0 0.0
          %1963 = vmatpush1.xpose.msra.mxu0 0.0
          %1964 = vmatprep.subr.mxu0 0.0
          %1965 = vmatpush1.xpose.msra.mxu0 0.0
          %1966 = vmatprep.subr.mxu0 0.0
          %1967 = vmatpush1.xpose.msra.mxu0 0.0
          %1968 = vmatprep.subr.mxu0 0.0
          %1969 = vmatpush1.xpose.msra.mxu0 0.0
          %1970 = vmatprep.subr.mxu0 0.0
          %1971 = vmatpush1.xpose.msra.mxu0 0.0
          %1972 = vmatprep.mubr.f32.mxu0 0.0
          %1973 = vmatmul.mubr.f32.gmra.mrb[0].mxu0 %v1897
          %v1974 = vpop.f32.mrb[0].mxu0
          %v1975 = vadd.f32 0.0, %v1974
          %v1976 = vpop.f32.mrb[0].mxu0
          %1977 = vmatprep.mubr.f32.mxu0 0.0
          %1978 = vmatmul.mubr.f32.gmra.mrb[0].mxu0 %v1900
          %v1979 = vpop.f32.mrb[0].mxu0
          %v1980 = vadd.f32 0.0, %v1979
          %v1981 = vpop.f32.mrb[0].mxu0
          %1982 = vdwg.mxu0
          %v1983 = vlaneseq
          %v1984 = vshrl.u32 %v1983, 7
          %v1985 = vadd.s32 %v1984, 8
          %v1986 = vstv %s1584
          %v1987 = vadd.s32 %v1986, %v1984
          %v1988 = vadd.s32 %v1986, %v1985
          %s1989 = smul.u32 %s1587, 16
          %v1990 = vlaneseq
          %v1991 = vand.u32 %v1990, 127
          %v1992 = vstv %s1989
          %v1993 = vadd.s32 %v1992, %v1991
          %vm1994 = vcmp.le.s32.totalorder %v1993, %v1987
          %vm1995 = vcmp.le.s32.totalorder %v1993, %v1988
          %v1996 = vsel %vm1994, 1, 0
          %v1997 = vsel %vm1995, 1, 0
          %vm1998 = vcmp.eq.s32.totalorder %v1996, 1
          %vm1999 = vcmp.eq.s32.totalorder %v1997, 1
          %v2000 = vsel %vm1998, %v1714, -1e+30
          %v2001 = vsel %vm1999, %v1719, -1e+30
          %v2002 = vsel %vm1998, %v1801, -1e+30
          %v2003 = vsel %vm1999, %v1806, -1e+30
          %v2004 = vsel %vm1998, %v1888, -1e+30
          %v2005 = vsel %vm1999, %v1893, -1e+30
          %v2006 = vsel %vm1998, %v1975, -1e+30
          %v2007 = vsel %vm1999, %v1980, -1e+30
          %vm2008 = vcmask 130048
          %v2009 = vsel %vm2008, %v2000, -inf
          %2010 = vmax.xlane.f32.xlu0 %v2009
          %v2011 = vpop.xlane.xlu0 %2010
          %v2012 = vsel %vm2008, %v2001, -inf
          %2013 = vmax.xlane.f32.xlu0 %v2012
          %v2014 = vpop.xlane.xlu0 %2013
          %v2015 = vsel %vm2008, %v2002, -inf
          %2016 = vmax.xlane.f32.xlu0 %v2015
          %v2017 = vpop.xlane.xlu0 %2016
          %v2018 = vsel %vm2008, %v2003, -inf
          %2019 = vmax.xlane.f32.xlu0 %v2018
          %v2020 = vpop.xlane.xlu0 %2019
          %v2021 = vsel %vm2008, %v2004, -inf
          %2022 = vmax.xlane.f32.xlu0 %v2021
          %v2023 = vpop.xlane.xlu0 %2022
          %v2024 = vsel %vm2008, %v2005, -inf
          %2025 = vmax.xlane.f32.xlu0 %v2024
          %v2026 = vpop.xlane.xlu0 %2025
          %v2027 = vsel %vm2008, %v2006, -inf
          %2028 = vmax.xlane.f32.xlu0 %v2027
          %v2029 = vpop.xlane.xlu0 %2028
          %v2030 = vsel %vm2008, %v2007, -inf
          %2031 = vmax.xlane.f32.xlu0 %v2030
          %v2032 = vpop.xlane.xlu0 %2031
          %v2033 = vmax.f32 %v1592, %v2011
          %v2034 = vmax.f32 %v1593, %v2014
          %v2035 = vmax.f32 %v1594, %v2017
          %v2036 = vmax.f32 %v1595, %v2020
          %v2037 = vmax.f32 %v1596, %v2023
          %v2038 = vmax.f32 %v1597, %v2026
          %v2039 = vmax.f32 %v1598, %v2029
          %v2040 = vmax.f32 %v1599, %v2032
          %v2041 = vsub.f32 %v1592, %v2033
          %v2042 = vsub.f32 %v1593, %v2034
          %v2043 = vsub.f32 %v1594, %v2035
          %v2044 = vsub.f32 %v1595, %v2036
          %v2045 = vsub.f32 %v1596, %v2037
          %v2046 = vsub.f32 %v1597, %v2038
          %v2047 = vsub.f32 %v1598, %v2039
          %v2048 = vsub.f32 %v1599, %v2040
          %v2049 = vmul.f32 %v2041, 1.442695
          %v2050 = vpow.pop %v2049
          %v2051 = vmul.f32 %v2042, 1.442695
          %v2052 = vpow.pop %v2051
          %v2053 = vmul.f32 %v2043, 1.442695
          %v2054 = vpow.pop %v2053
          %v2055 = vmul.f32 %v2044, 1.442695
          %v2056 = vpow.pop %v2055
          %v2057 = vmul.f32 %v2045, 1.442695
          %v2058 = vpow.pop %v2057
          %v2059 = vmul.f32 %v2046, 1.442695
          %v2060 = vpow.pop %v2059
          %v2061 = vmul.f32 %v2047, 1.442695
          %v2062 = vpow.pop %v2061
          %v2063 = vmul.f32 %v2048, 1.442695
          %v2064 = vpow.pop %v2063
          %v2065 = vsub.f32 %v2000, %v2033
          %v2066 = vsub.f32 %v2001, %v2034
          %v2067 = vsub.f32 %v2002, %v2035
          %v2068 = vsub.f32 %v2003, %v2036
          %v2069 = vsub.f32 %v2004, %v2037
          %v2070 = vsub.f32 %v2005, %v2038
          %v2071 = vsub.f32 %v2006, %v2039
          %v2072 = vsub.f32 %v2007, %v2040
          %v2073 = vmul.f32 %v2065, 1.442695
          %v2074 = vpow.pop %v2073
          %v2075 = vmul.f32 %v2066, 1.442695
          %v2076 = vpow.pop %v2075
          %v2077 = vmul.f32 %v2067, 1.442695
          %v2078 = vpow.pop %v2077
          %v2079 = vmul.f32 %v2068, 1.442695
          %v2080 = vpow.pop %v2079
          %v2081 = vmul.f32 %v2069, 1.442695
          %v2082 = vpow.pop %v2081
          %v2083 = vmul.f32 %v2070, 1.442695
          %v2084 = vpow.pop %v2083
          %v2085 = vmul.f32 %v2071, 1.442695
          %v2086 = vpow.pop %v2085
          %v2087 = vmul.f32 %v2072, 1.442695
          %v2088 = vpow.pop %v2087
          %v2089 = vmul.f32 %v2050, %v1600
          %v2090 = vmul.f32 %v2052, %v1601
          %v2091 = vmul.f32 %v2054, %v1602
          %v2092 = vmul.f32 %v2056, %v1603
          %v2093 = vmul.f32 %v2058, %v1604
          %v2094 = vmul.f32 %v2060, %v1605
          %v2095 = vmul.f32 %v2062, %v1606
          %v2096 = vmul.f32 %v2064, %v1607
          %v2097 = vsel %vm2008, %v2074, 0.0
          %2098 = vadd.xlane.f32.xlu0 %v2097
          %v2099 = vpop.xlane.xlu0 %2098
          %v2100 = vsel %vm2008, %v2076, 0.0
          %2101 = vadd.xlane.f32.xlu0 %v2100
          %v2102 = vpop.xlane.xlu0 %2101
          %v2103 = vsel %vm2008, %v2078, 0.0
          %2104 = vadd.xlane.f32.xlu0 %v2103
          %v2105 = vpop.xlane.xlu0 %2104
          %v2106 = vsel %vm2008, %v2080, 0.0
          %2107 = vadd.xlane.f32.xlu0 %v2106
          %v2108 = vpop.xlane.xlu0 %2107
          %v2109 = vsel %vm2008, %v2082, 0.0
          %2110 = vadd.xlane.f32.xlu0 %v2109
          %v2111 = vpop.xlane.xlu0 %2110
          %v2112 = vsel %vm2008, %v2084, 0.0
          %2113 = vadd.xlane.f32.xlu0 %v2112
          %v2114 = vpop.xlane.xlu0 %2113
          %v2115 = vsel %vm2008, %v2086, 0.0
          %2116 = vadd.xlane.f32.xlu0 %v2115
          %v2117 = vpop.xlane.xlu0 %2116
          %v2118 = vsel %vm2008, %v2088, 0.0
          %2119 = vadd.xlane.f32.xlu0 %v2118
          %v2120 = vpop.xlane.xlu0 %2119
          %v2121 = vadd.f32 %v2089, %v2099
          %v2122 = vadd.f32 %v2090, %v2102
          %v2123 = vadd.f32 %v2091, %v2105
          %v2124 = vadd.f32 %v2092, %v2108
          %v2125 = vadd.f32 %v2093, %v2111
          %v2126 = vadd.f32 %v2094, %v2114
          %v2127 = vadd.f32 %v2095, %v2117
          %v2128 = vadd.f32 %v2096, %v2120
          %v2129 = vmul.f32 %v2050, %v1608
          %v2130 = vmul.f32 %v2052, %v1609
          %v2131 = vmul.f32 %v2054, %v1610
          %v2132 = vmul.f32 %v2056, %v1611
          %v2133 = vmul.f32 %v2058, %v1612
          %v2134 = vmul.f32 %v2060, %v1613
          %v2135 = vmul.f32 %v2062, %v1614
          %v2136 = vmul.f32 %v2064, %v1615
          %v2138 = vsel %vm2008, %v2074, 0
          %v2141 = vsel %vm2008, %v2076, 0
          %2143 = vmatprep.subr.mxu0 0.0
          %2144 = vmatpush1.msra.mxu0 %v1627
          %2145 = vmatprep.subr.mxu0 0.0
          %2146 = vmatpush1.msra.mxu0 %v1628
          %2147 = vmatprep.subr.mxu0 0.0
          %2148 = vmatpush1.msra.mxu0 0.0
          %2149 = vmatprep.subr.mxu0 0.0
          %2150 = vmatpush1.msra.mxu0 0.0
          %2151 = vmatprep.subr.mxu0 0.0
          %2152 = vmatpush1.msra.mxu0 0.0
          %2153 = vmatprep.subr.mxu0 0.0
          %2154 = vmatpush1.msra.mxu0 0.0
          %2155 = vmatprep.subr.mxu0 0.0
          %2156 = vmatpush1.msra.mxu0 0.0
          %2157 = vmatprep.subr.mxu0 0.0
          %2158 = vmatpush1.msra.mxu0 0.0
          %2159 = vmatprep.subr.mxu0 0.0
          %2160 = vmatpush1.msra.mxu0 0.0
          %2161 = vmatprep.subr.mxu0 0.0
          %2162 = vmatpush1.msra.mxu0 0.0
          %2163 = vmatprep.subr.mxu0 0.0
          %2164 = vmatpush1.msra.mxu0 0.0
          %2165 = vmatprep.subr.mxu0 0.0
          %2166 = vmatpush1.msra.mxu0 0.0
          %2167 = vmatprep.subr.mxu0 0.0
          %2168 = vmatpush1.msra.mxu0 0.0
          %2169 = vmatprep.subr.mxu0 0.0
          %2170 = vmatpush1.msra.mxu0 0.0
          %2171 = vmatprep.subr.mxu0 0.0
          %2172 = vmatpush1.msra.mxu0 0.0
          %2173 = vmatprep.subr.mxu0 0.0
          %2174 = vmatpush1.msra.mxu0 0.0
          %2175 = vmatprep.subr.mxu0 0.0
          %2176 = vmatpush1.msra.mxu0 0.0
          %2177 = vmatprep.subr.mxu0 0.0
          %2178 = vmatpush1.msra.mxu0 0.0
          %2179 = vmatprep.subr.mxu0 0.0
          %2180 = vmatpush1.msra.mxu0 0.0
          %2181 = vmatprep.subr.mxu0 0.0
          %2182 = vmatpush1.msra.mxu0 0.0
          %2183 = vmatprep.subr.mxu0 0.0
          %2184 = vmatpush1.msra.mxu0 0.0
          %2185 = vmatprep.subr.mxu0 0.0
          %2186 = vmatpush1.msra.mxu0 0.0
          %2187 = vmatprep.subr.mxu0 0.0
          %2188 = vmatpush1.msra.mxu0 0.0
          %2189 = vmatprep.subr.mxu0 0.0
          %2190 = vmatpush1.msra.mxu0 0.0
          %2191 = vmatprep.subr.mxu0 0.0
          %2192 = vmatpush1.msra.mxu0 0.0
          %2193 = vmatprep.subr.mxu0 0.0
          %2194 = vmatpush1.msra.mxu0 0.0
          %2195 = vmatprep.subr.mxu0 0.0
          %2196 = vmatpush1.msra.mxu0 0.0
          %2197 = vmatprep.subr.mxu0 0.0
          %2198 = vmatpush1.msra.mxu0 0.0
          %2199 = vmatprep.subr.mxu0 0.0
          %2200 = vmatpush1.msra.mxu0 0.0
          %2201 = vmatprep.subr.mxu0 0.0
          %2202 = vmatpush1.msra.mxu0 0.0
          %2203 = vmatprep.subr.mxu0 0.0
          %2204 = vmatpush1.msra.mxu0 0.0
          %2205 = vmatprep.subr.mxu0 0.0
          %2206 = vmatpush1.msra.mxu0 0.0
          %2207 = vmatprep.mubr.f32.mxu0 0.0
          %2208 = vmatmul.mubr.f32.gmra.mrb[0].mxu0 %v2138
          %v2209 = vpop.f32.mrb[0].mxu0
          %v2210 = vadd.f32 0.0, %v2209
          %v2211 = vpop.f32.mrb[0].mxu0
          %2212 = vmatprep.mubr.f32.mxu0 0.0
          %2213 = vmatmul.mubr.f32.gmra.mrb[0].mxu0 %v2141
          %v2214 = vpop.f32.mrb[0].mxu0
          %v2215 = vadd.f32 0.0, %v2214
          %v2216 = vpop.f32.mrb[0].mxu0
          %2217 = vdwg.mxu0
          %v2219 = vsel %vm2008, %v2078, 0
          %v2222 = vsel %vm2008, %v2080, 0
          %2224 = vmatprep.subr.mxu0 0.0
          %2225 = vmatpush1.msra.mxu0 %v1629
          %2226 = vmatprep.subr.mxu0 0.0
          %2227 = vmatpush1.msra.mxu0 %v1630
          %2228 = vmatprep.subr.mxu0 0.0
          %2229 = vmatpush1.msra.mxu0 0.0
          %2230 = vmatprep.subr.mxu0 0.0
          %2231 = vmatpush1.msra.mxu0 0.0
          %2232 = vmatprep.subr.mxu0 0.0
          %2233 = vmatpush1.msra.mxu0 0.0
          %2234 = vmatprep.subr.mxu0 0.0
          %2235 = vmatpush1.msra.mxu0 0.0
          %2236 = vmatprep.subr.mxu0 0.0
          %2237 = vmatpush1.msra.mxu0 0.0
          %2238 = vmatprep.subr.mxu0 0.0
          %2239 = vmatpush1.msra.mxu0 0.0
          %2240 = vmatprep.subr.mxu0 0.0
          %2241 = vmatpush1.msra.mxu0 0.0
          %2242 = vmatprep.subr.mxu0 0.0
          %2243 = vmatpush1.msra.mxu0 0.0
          %2244 = vmatprep.subr.mxu0 0.0
          %2245 = vmatpush1.msra.mxu0 0.0
          %2246 = vmatprep.subr.mxu0 0.0
          %2247 = vmatpush1.msra.mxu0 0.0
          %2248 = vmatprep.subr.mxu0 0.0
          %2249 = vmatpush1.msra.mxu0 0.0
          %2250 = vmatprep.subr.mxu0 0.0
          %2251 = vmatpush1.msra.mxu0 0.0
          %2252 = vmatprep.subr.mxu0 0.0
          %2253 = vmatpush1.msra.mxu0 0.0
          %2254 = vmatprep.subr.mxu0 0.0
          %2255 = vmatpush1.msra.mxu0 0.0
          %2256 = vmatprep.subr.mxu0 0.0
          %2257 = vmatpush1.msra.mxu0 0.0
          %2258 = vmatprep.subr.mxu0 0.0
          %2259 = vmatpush1.msra.mxu0 0.0
          %2260 = vmatprep.subr.mxu0 0.0
          %2261 = vmatpush1.msra.mxu0 0.0
          %2262 = vmatprep.subr.mxu0 0.0
          %2263 = vmatpush1.msra.mxu0 0.0
          %2264 = vmatprep.subr.mxu0 0.0
          %2265 = vmatpush1.msra.mxu0 0.0
          %2266 = vmatprep.subr.mxu0 0.0
          %2267 = vmatpush1.msra.mxu0 0.0
          %2268 = vmatprep.subr.mxu0 0.0
          %2269 = vmatpush1.msra.mxu0 0.0
          %2270 = vmatprep.subr.mxu0 0.0
          %2271 = vmatpush1.msra.mxu0 0.0
          %2272 = vmatprep.subr.mxu0 0.0
          %2273 = vmatpush1.msra.mxu0 0.0
          %2274 = vmatprep.subr.mxu0 0.0
          %2275 = vmatpush1.msra.mxu0 0.0
          %2276 = vmatprep.subr.mxu0 0.0
          %2277 = vmatpush1.msra.mxu0 0.0
          %2278 = vmatprep.subr.mxu0 0.0
          %2279 = vmatpush1.msra.mxu0 0.0
          %2280 = vmatprep.subr.mxu0 0.0
          %2281 = vmatpush1.msra.mxu0 0.0
          %2282 = vmatprep.subr.mxu0 0.0
          %2283 = vmatpush1.msra.mxu0 0.0
          %2284 = vmatprep.subr.mxu0 0.0
          %2285 = vmatpush1.msra.mxu0 0.0
          %2286 = vmatprep.subr.mxu0 0.0
          %2287 = vmatpush1.msra.mxu0 0.0
          %2288 = vmatprep.mubr.f32.mxu0 0.0
          %2289 = vmatmul.mubr.f32.gmra.mrb[0].mxu0 %v2219
          %v2290 = vpop.f32.mrb[0].mxu0
          %v2291 = vadd.f32 0.0, %v2290
          %v2292 = vpop.f32.mrb[0].mxu0
          %2293 = vmatprep.mubr.f32.mxu0 0.0
          %2294 = vmatmul.mubr.f32.gmra.mrb[0].mxu0 %v2222
          %v2295 = vpop.f32.mrb[0].mxu0
          %v2296 = vadd.f32 0.0, %v2295
          %v2297 = vpop.f32.mrb[0].mxu0
          %2298 = vdwg.mxu0
          %v2300 = vsel %vm2008, %v2082, 0
          %v2303 = vsel %vm2008, %v2084, 0
          %2305 = vmatprep.subr.mxu0 0.0
          %2306 = vmatpush1.msra.mxu0 %v1631
          %2307 = vmatprep.subr.mxu0 0.0
          %2308 = vmatpush1.msra.mxu0 %v1632
          %2309 = vmatprep.subr.mxu0 0.0
          %2310 = vmatpush1.msra.mxu0 0.0
          %2311 = vmatprep.subr.mxu0 0.0
          %2312 = vmatpush1.msra.mxu0 0.0
          %2313 = vmatprep.subr.mxu0 0.0
          %2314 = vmatpush1.msra.mxu0 0.0
          %2315 = vmatprep.subr.mxu0 0.0
          %2316 = vmatpush1.msra.mxu0 0.0
          %2317 = vmatprep.subr.mxu0 0.0
          %2318 = vmatpush1.msra.mxu0 0.0
          %2319 = vmatprep.subr.mxu0 0.0
          %2320 = vmatpush1.msra.mxu0 0.0
          %2321 = vmatprep.subr.mxu0 0.0
          %2322 = vmatpush1.msra.mxu0 0.0
          %2323 = vmatprep.subr.mxu0 0.0
          %2324 = vmatpush1.msra.mxu0 0.0
          %2325 = vmatprep.subr.mxu0 0.0
          %2326 = vmatpush1.msra.mxu0 0.0
          %2327 = vmatprep.subr.mxu0 0.0
          %2328 = vmatpush1.msra.mxu0 0.0
          %2329 = vmatprep.subr.mxu0 0.0
          %2330 = vmatpush1.msra.mxu0 0.0
          %2331 = vmatprep.subr.mxu0 0.0
          %2332 = vmatpush1.msra.mxu0 0.0
          %2333 = vmatprep.subr.mxu0 0.0
          %2334 = vmatpush1.msra.mxu0 0.0
          %2335 = vmatprep.subr.mxu0 0.0
          %2336 = vmatpush1.msra.mxu0 0.0
          %2337 = vmatprep.subr.mxu0 0.0
          %2338 = vmatpush1.msra.mxu0 0.0
          %2339 = vmatprep.subr.mxu0 0.0
          %2340 = vmatpush1.msra.mxu0 0.0
          %2341 = vmatprep.subr.mxu0 0.0
          %2342 = vmatpush1.msra.mxu0 0.0
          %2343 = vmatprep.subr.mxu0 0.0
          %2344 = vmatpush1.msra.mxu0 0.0
          %2345 = vmatprep.subr.mxu0 0.0
          %2346 = vmatpush1.msra.mxu0 0.0
          %2347 = vmatprep.subr.mxu0 0.0
          %2348 = vmatpush1.msra.mxu0 0.0
          %2349 = vmatprep.subr.mxu0 0.0
          %2350 = vmatpush1.msra.mxu0 0.0
          %2351 = vmatprep.subr.mxu0 0.0
          %2352 = vmatpush1.msra.mxu0 0.0
          %2353 = vmatprep.subr.mxu0 0.0
          %2354 = vmatpush1.msra.mxu0 0.0
          %2355 = vmatprep.subr.mxu0 0.0
          %2356 = vmatpush1.msra.mxu0 0.0
          %2357 = vmatprep.subr.mxu0 0.0
          %2358 = vmatpush1.msra.mxu0 0.0
          %2359 = vmatprep.subr.mxu0 0.0
          %2360 = vmatpush1.msra.mxu0 0.0
          %2361 = vmatprep.subr.mxu0 0.0
          %2362 = vmatpush1.msra.mxu0 0.0
          %2363 = vmatprep.subr.mxu0 0.0
          %2364 = vmatpush1.msra.mxu0 0.0
          %2365 = vmatprep.subr.mxu0 0.0
          %2366 = vmatpush1.msra.mxu0 0.0
          %2367 = vmatprep.subr.mxu0 0.0
          %2368 = vmatpush1.msra.mxu0 0.0
          %2369 = vmatprep.mubr.f32.mxu0 0.0
          %2370 = vmatmul.mubr.f32.gmra.mrb[0].mxu0 %v2300
          %v2371 = vpop.f32.mrb[0].mxu0
          %v2372 = vadd.f32 0.0, %v2371
          %v2373 = vpop.f32.mrb[0].mxu0
          %2374 = vmatprep.mubr.f32.mxu0 0.0
          %2375 = vmatmul.mubr.f32.gmra.mrb[0].mxu0 %v2303
          %v2376 = vpop.f32.mrb[0].mxu0
          %v2377 = vadd.f32 0.0, %v2376
          %v2378 = vpop.f32.mrb[0].mxu0
          %2379 = vdwg.mxu0
          %v2381 = vsel %vm2008, %v2086, 0
          %v2384 = vsel %vm2008, %v2088, 0
          %2386 = vmatprep.subr.mxu0 0.0
          %2387 = vmatpush1.msra.mxu0 %v1633
          %2388 = vmatprep.subr.mxu0 0.0
          %2389 = vmatpush1.msra.mxu0 %v1634
          %2390 = vmatprep.subr.mxu0 0.0
          %2391 = vmatpush1.msra.mxu0 0.0
          %2392 = vmatprep.subr.mxu0 0.0
          %2393 = vmatpush1.msra.mxu0 0.0
          %2394 = vmatprep.subr.mxu0 0.0
          %2395 = vmatpush1.msra.mxu0 0.0
          %2396 = vmatprep.subr.mxu0 0.0
          %2397 = vmatpush1.msra.mxu0 0.0
          %2398 = vmatprep.subr.mxu0 0.0
          %2399 = vmatpush1.msra.mxu0 0.0
          %2400 = vmatprep.subr.mxu0 0.0
          %2401 = vmatpush1.msra.mxu0 0.0
          %2402 = vmatprep.subr.mxu0 0.0
          %2403 = vmatpush1.msra.mxu0 0.0
          %2404 = vmatprep.subr.mxu0 0.0
          %2405 = vmatpush1.msra.mxu0 0.0
          %2406 = vmatprep.subr.mxu0 0.0
          %2407 = vmatpush1.msra.mxu0 0.0
          %2408 = vmatprep.subr.mxu0 0.0
          %2409 = vmatpush1.msra.mxu0 0.0
          %2410 = vmatprep.subr.mxu0 0.0
          %2411 = vmatpush1.msra.mxu0 0.0
          %2412 = vmatprep.subr.mxu0 0.0
          %2413 = vmatpush1.msra.mxu0 0.0
          %2414 = vmatprep.subr.mxu0 0.0
          %2415 = vmatpush1.msra.mxu0 0.0
          %2416 = vmatprep.subr.mxu0 0.0
          %2417 = vmatpush1.msra.mxu0 0.0
          %2418 = vmatprep.subr.mxu0 0.0
          %2419 = vmatpush1.msra.mxu0 0.0
          %2420 = vmatprep.subr.mxu0 0.0
          %2421 = vmatpush1.msra.mxu0 0.0
          %2422 = vmatprep.subr.mxu0 0.0
          %2423 = vmatpush1.msra.mxu0 0.0
          %2424 = vmatprep.subr.mxu0 0.0
          %2425 = vmatpush1.msra.mxu0 0.0
          %2426 = vmatprep.subr.mxu0 0.0
          %2427 = vmatpush1.msra.mxu0 0.0
          %2428 = vmatprep.subr.mxu0 0.0
          %2429 = vmatpush1.msra.mxu0 0.0
          %2430 = vmatprep.subr.mxu0 0.0
          %2431 = vmatpush1.msra.mxu0 0.0
          %2432 = vmatprep.subr.mxu0 0.0
          %2433 = vmatpush1.msra.mxu0 0.0
          %2434 = vmatprep.subr.mxu0 0.0
          %2435 = vmatpush1.msra.mxu0 0.0
          %2436 = vmatprep.subr.mxu0 0.0
          %2437 = vmatpush1.msra.mxu0 0.0
          %2438 = vmatprep.subr.mxu0 0.0
          %2439 = vmatpush1.msra.mxu0 0.0
          %2440 = vmatprep.subr.mxu0 0.0
          %2441 = vmatpush1.msra.mxu0 0.0
          %2442 = vmatprep.subr.mxu0 0.0
          %2443 = vmatpush1.msra.mxu0 0.0
          %2444 = vmatprep.subr.mxu0 0.0
          %2445 = vmatpush1.msra.mxu0 0.0
          %2446 = vmatprep.subr.mxu0 0.0
          %2447 = vmatpush1.msra.mxu0 0.0
          %2448 = vmatprep.subr.mxu0 0.0
          %2449 = vmatpush1.msra.mxu0 0.0
          %2450 = vmatprep.mubr.f32.mxu0 0.0
          %2451 = vmatmul.mubr.f32.gmra.mrb[0].mxu0 %v2381
          %v2452 = vpop.f32.mrb[0].mxu0
          %v2453 = vadd.f32 0.0, %v2452
          %v2454 = vpop.f32.mrb[0].mxu0
          %2455 = vmatprep.mubr.f32.mxu0 0.0
          %2456 = vmatmul.mubr.f32.gmra.mrb[0].mxu0 %v2384
          %v2457 = vpop.f32.mrb[0].mxu0
          %v2458 = vadd.f32 0.0, %v2457
          %v2459 = vpop.f32.mrb[0].mxu0
          %2460 = vdwg.mxu0
          %v2461 = vadd.f32 %v2129, %v2210
          %v2462 = vadd.f32 %v2130, %v2215
          %v2463 = vadd.f32 %v2131, %v2291
          %v2464 = vadd.f32 %v2132, %v2296
          %v2465 = vadd.f32 %v2133, %v2372
          %v2466 = vadd.f32 %v2134, %v2377
          %v2467 = vadd.f32 %v2135, %v2453
          %v2468 = vadd.f32 %v2136, %v2458
        $region77: #{tpu_custom_call.1} parent=71 // loop_footer
          %s1589 = sadd.s32 %s1587, 1
        $region78: #{tpu_custom_call.1} parent=71 // loop_footer_branch
          %1586 = sbr.rel target = $region74
        $region79: #{tpu_custom_call.1} parent=71 // loop_exit
          _
        %v2469 = vrcp.pop %v1600
        %v2470 = vmul.f32 %v1608, %v2469
        %v2471 = vrcp.pop %v1601
        %v2472 = vmul.f32 %v1609, %v2471
        %v2473 = vrcp.pop %v1602
        %v2474 = vmul.f32 %v1610, %v2473
        %v2475 = vrcp.pop %v1603
        %v2476 = vmul.f32 %v1611, %v2475
        %v2477 = vrcp.pop %v1604
        %v2478 = vmul.f32 %v1612, %v2477
        %v2479 = vrcp.pop %v1605
        %v2480 = vmul.f32 %v1613, %v2479
        %v2481 = vrcp.pop %v1606
        %v2482 = vmul.f32 %v1614, %v2481
        %v2483 = vrcp.pop %v1607
        %v2484 = vmul.f32 %v1615, %v2483
        %v2485 = vcombine.low %v2470, %v2478
        %v2486 = vcombine.high %v2470, %v2478
        %v2488 = vunpack.c.l.s4 1983009808
        %v2489 = vunpack.c.0.s8 %v2488
        %v2490 = vlaneseq
        %v2491 = vshrl.u32 %v2490, 7
        %v2492 = vsub.s32 %v2489, %v2491
        %v2493 = vrot.slane %v2485, %v2492
        %v2495 = vunpack.c.l.s4 1983009808
        %v2496 = vunpack.c.0.s8 %v2495
        %v2497 = vlaneseq
        %v2498 = vshrl.u32 %v2497, 7
        %v2499 = vsub.s32 %v2496, %v2498
        %v2500 = vrot.slane %v2486, %v2499
        %v2501 = vcombine.low %v2474, %v2482
        %v2502 = vcombine.high %v2474, %v2482
        %v2504 = vunpack.c.l.s4 1983009808
        %v2505 = vunpack.c.0.s8 %v2504
        %v2506 = vlaneseq
        %v2507 = vshrl.u32 %v2506, 7
        %v2508 = vsub.s32 %v2505, %v2507
        %v2509 = vrot.slane %v2501, %v2508
        %v2511 = vunpack.c.l.s4 1983009808
        %v2512 = vunpack.c.0.s8 %v2511
        %v2513 = vlaneseq
        %v2514 = vshrl.u32 %v2513, 7
        %v2515 = vsub.s32 %v2512, %v2514
        %v2516 = vrot.slane %v2502, %v2515
        %v2517 = vcombine.low %v2493, %v2509
        %v2518 = vcombine.high %v2493, %v2509
        %v2520 = vunpack.c.l.s4 1934713408
        %v2521 = vunpack.c.0.s8 %v2520
        %v2522 = vlaneseq
        %v2523 = vshrl.u32 %v2522, 7
        %v2524 = vsub.s32 %v2521, %v2523
        %v2525 = vrot.slane %v2517, %v2524
        %v2527 = vunpack.c.l.s4 1934713408
        %v2528 = vunpack.c.0.s8 %v2527
        %v2529 = vlaneseq
        %v2530 = vshrl.u32 %v2529, 7
        %v2531 = vsub.s32 %v2528, %v2530
        %v2532 = vrot.slane %v2518, %v2531
        %v2533 = vcombine.low %v2500, %v2516
        %v2534 = vcombine.high %v2500, %v2516
        %v2536 = vunpack.c.l.s4 1934713408
        %v2537 = vunpack.c.0.s8 %v2536
        %v2538 = vlaneseq
        %v2539 = vshrl.u32 %v2538, 7
        %v2540 = vsub.s32 %v2537, %v2539
        %v2541 = vrot.slane %v2533, %v2540
        %v2543 = vunpack.c.l.s4 1934713408
        %v2544 = vunpack.c.0.s8 %v2543
        %v2545 = vlaneseq
        %v2546 = vshrl.u32 %v2545, 7
        %v2547 = vsub.s32 %v2544, %v2546
        %v2548 = vrot.slane %v2534, %v2547
        %v2549 = vcombine.high %v2525, 0.0
        %v2550 = vcombine.high %v2532, 0.0
        %v2551 = vcombine.high %v2541, 0.0
        %v2552 = vcombine.high %v2548, 0.0
        %v2553 = vcombine.low %v2472, %v2480
        %v2554 = vcombine.high %v2472, %v2480
        %v2556 = vunpack.c.l.s4 1983009808
        %v2557 = vunpack.c.0.s8 %v2556
        %v2558 = vlaneseq
        %v2559 = vshrl.u32 %v2558, 7
        %v2560 = vsub.s32 %v2557, %v2559
        %v2561 = vrot.slane %v2553, %v2560
        %v2563 = vunpack.c.l.s4 1983009808
        %v2564 = vunpack.c.0.s8 %v2563
        %v2565 = vlaneseq
        %v2566 = vshrl.u32 %v2565, 7
        %v2567 = vsub.s32 %v2564, %v2566
        %v2568 = vrot.slane %v2554, %v2567
        %v2569 = vcombine.low %v2476, %v2484
        %v2570 = vcombine.high %v2476, %v2484
        %v2572 = vunpack.c.l.s4 1983009808
        %v2573 = vunpack.c.0.s8 %v2572
        %v2574 = vlaneseq
        %v2575 = vshrl.u32 %v2574, 7
        %v2576 = vsub.s32 %v2573, %v2575
        %v2577 = vrot.slane %v2569, %v2576
        %v2579 = vunpack.c.l.s4 1983009808
        %v2580 = vunpack.c.0.s8 %v2579
        %v2581 = vlaneseq
        %v2582 = vshrl.u32 %v2581, 7
        %v2583 = vsub.s32 %v2580, %v2582
        %v2584 = vrot.slane %v2570, %v2583
        %v2585 = vcombine.low %v2561, %v2577
        %v2586 = vcombine.high %v2561, %v2577
        %v2588 = vunpack.c.l.s4 1934713408
        %v2589 = vunpack.c.0.s8 %v2588
        %v2590 = vlaneseq
        %v2591 = vshrl.u32 %v2590, 7
        %v2592 = vsub.s32 %v2589, %v2591
        %v2593 = vrot.slane %v2585, %v2592
        %v2595 = vunpack.c.l.s4 1934713408
        %v2596 = vunpack.c.0.s8 %v2595
        %v2597 = vlaneseq
        %v2598 = vshrl.u32 %v2597, 7
        %v2599 = vsub.s32 %v2596, %v2598
        %v2600 = vrot.slane %v2586, %v2599
        %v2601 = vcombine.low %v2568, %v2584
        %v2602 = vcombine.high %v2568, %v2584
        %v2604 = vunpack.c.l.s4 1934713408
        %v2605 = vunpack.c.0.s8 %v2604
        %v2606 = vlaneseq
        %v2607 = vshrl.u32 %v2606, 7
        %v2608 = vsub.s32 %v2605, %v2607
        %v2609 = vrot.slane %v2601, %v2608
        %v2611 = vunpack.c.l.s4 1934713408
        %v2612 = vunpack.c.0.s8 %v2611
        %v2613 = vlaneseq
        %v2614 = vshrl.u32 %v2613, 7
        %v2615 = vsub.s32 %v2612, %v2614
        %v2616 = vrot.slane %v2602, %v2615
        %v2617 = vcombine.high %v2593, 0.0
        %v2618 = vcombine.high %v2600, 0.0
        %v2619 = vcombine.high %v2609, 0.0
        %v2620 = vcombine.high %v2616, 0.0
        %v2621 = vcombine.low %v2525, %v2532
        %v2623 = vunpack.c.l.s4 1983009808
        %v2624 = vunpack.c.0.s8 %v2623
        %v2625 = vlaneseq
        %v2626 = vshrl.u32 %v2625, 7
        %v2627 = vsub.s32 %v2624, %v2626
        %v2628 = vrot.slane %v2621, %v2627
        %v2629 = vcombine.low %v2549, %v2550
        %v2631 = vunpack.c.l.s4 1983009808
        %v2632 = vunpack.c.0.s8 %v2631
        %v2633 = vlaneseq
        %v2634 = vshrl.u32 %v2633, 7
        %v2635 = vsub.s32 %v2632, %v2634
        %v2636 = vrot.slane %v2629, %v2635
        %v2637 = vcombine.low %v2541, %v2548
        %v2639 = vunpack.c.l.s4 1983009808
        %v2640 = vunpack.c.0.s8 %v2639
        %v2641 = vlaneseq
        %v2642 = vshrl.u32 %v2641, 7
        %v2643 = vsub.s32 %v2640, %v2642
        %v2644 = vrot.slane %v2637, %v2643
        %v2645 = vcombine.low %v2551, %v2552
        %v2647 = vunpack.c.l.s4 1983009808
        %v2648 = vunpack.c.0.s8 %v2647
        %v2649 = vlaneseq
        %v2650 = vshrl.u32 %v2649, 7
        %v2651 = vsub.s32 %v2648, %v2650
        %v2652 = vrot.slane %v2645, %v2651
        %v2653 = vcombine.low %v2628, %v2636
        %v2654 = vcombine.high %v2628, %v2636
        %v2656 = vunpack.c.l.s4 1934713408
        %v2657 = vunpack.c.0.s8 %v2656
        %v2658 = vlaneseq
        %v2659 = vshrl.u32 %v2658, 7
        %v2660 = vsub.s32 %v2657, %v2659
        %v2661 = vrot.slane %v2653, %v2660
        %v2663 = vunpack.c.l.s4 1934713408
        %v2664 = vunpack.c.0.s8 %v2663
        %v2665 = vlaneseq
        %v2666 = vshrl.u32 %v2665, 7
        %v2667 = vsub.s32 %v2664, %v2666
        %v2668 = vrot.slane %v2654, %v2667
        %v2669 = vcombine.low %v2644, %v2652
        %v2670 = vcombine.high %v2644, %v2652
        %v2672 = vunpack.c.l.s4 1934713408
        %v2673 = vunpack.c.0.s8 %v2672
        %v2674 = vlaneseq
        %v2675 = vshrl.u32 %v2674, 7
        %v2676 = vsub.s32 %v2673, %v2675
        %v2677 = vrot.slane %v2669, %v2676
        %v2679 = vunpack.c.l.s4 1934713408
        %v2680 = vunpack.c.0.s8 %v2679
        %v2681 = vlaneseq
        %v2682 = vshrl.u32 %v2681, 7
        %v2683 = vsub.s32 %v2680, %v2682
        %v2684 = vrot.slane %v2670, %v2683
        %v2685 = vcombine.low %v2661, %v2677
        %v2686 = vcombine.high %v2661, %v2677
        %v2687 = vcombine.low %v2668, %v2684
        %v2688 = vcombine.high %v2668, %v2684
        %v2689 = vcombine.low %v2593, %v2600
        %v2691 = vunpack.c.l.s4 1983009808
        %v2692 = vunpack.c.0.s8 %v2691
        %v2693 = vlaneseq
        %v2694 = vshrl.u32 %v2693, 7
        %v2695 = vsub.s32 %v2692, %v2694
        %v2696 = vrot.slane %v2689, %v2695
        %v2697 = vcombine.low %v2617, %v2618
        %v2699 = vunpack.c.l.s4 1983009808
        %v2700 = vunpack.c.0.s8 %v2699
        %v2701 = vlaneseq
        %v2702 = vshrl.u32 %v2701, 7
        %v2703 = vsub.s32 %v2700, %v2702
        %v2704 = vrot.slane %v2697, %v2703
        %v2705 = vcombine.low %v2609, %v2616
        %v2707 = vunpack.c.l.s4 1983009808
        %v2708 = vunpack.c.0.s8 %v2707
        %v2709 = vlaneseq
        %v2710 = vshrl.u32 %v2709, 7
        %v2711 = vsub.s32 %v2708, %v2710
        %v2712 = vrot.slane %v2705, %v2711
        %v2713 = vcombine.low %v2619, %v2620
        %v2715 = vunpack.c.l.s4 1983009808
        %v2716 = vunpack.c.0.s8 %v2715
        %v2717 = vlaneseq
        %v2718 = vshrl.u32 %v2717, 7
        %v2719 = vsub.s32 %v2716, %v2718
        %v2720 = vrot.slane %v2713, %v2719
        %v2721 = vcombine.low %v2696, %v2704
        %v2722 = vcombine.high %v2696, %v2704
        %v2724 = vunpack.c.l.s4 1934713408
        %v2725 = vunpack.c.0.s8 %v2724
        %v2726 = vlaneseq
        %v2727 = vshrl.u32 %v2726, 7
        %v2728 = vsub.s32 %v2725, %v2727
        %v2729 = vrot.slane %v2721, %v2728
        %v2731 = vunpack.c.l.s4 1934713408
        %v2732 = vunpack.c.0.s8 %v2731
        %v2733 = vlaneseq
        %v2734 = vshrl.u32 %v2733, 7
        %v2735 = vsub.s32 %v2732, %v2734
        %v2736 = vrot.slane %v2722, %v2735
        %v2737 = vcombine.low %v2712, %v2720
        %v2738 = vcombine.high %v2712, %v2720
        %v2740 = vunpack.c.l.s4 1934713408
        %v2741 = vunpack.c.0.s8 %v2740
        %v2742 = vlaneseq
        %v2743 = vshrl.u32 %v2742, 7
        %v2744 = vsub.s32 %v2741, %v2743
        %v2745 = vrot.slane %v2737, %v2744
        %v2747 = vunpack.c.l.s4 1934713408
        %v2748 = vunpack.c.0.s8 %v2747
        %v2749 = vlaneseq
        %v2750 = vshrl.u32 %v2749, 7
        %v2751 = vsub.s32 %v2748, %v2750
        %v2752 = vrot.slane %v2738, %v2751
        %v2753 = vcombine.low %v2729, %v2745
        %v2754 = vcombine.high %v2729, %v2745
        %v2755 = vcombine.low %v2736, %v2752
        %v2756 = vcombine.high %v2736, %v2752
        %2759 = vrot.lane.b32.xlu0 %v2686, 8
        %v2760 = vpop.permute.xlu0 %2759
        %2761 = vrot.lane.b32.xlu0 %v2754, 8
        %v2762 = vpop.permute.xlu0 %2761
        %2767 = vrot.lane.b32.xlu0 %v2687, 16
        %v2768 = vpop.permute.xlu0 %2767
        %2769 = vrot.lane.b32.xlu0 %v2755, 16
        %v2770 = vpop.permute.xlu0 %2769
        %2775 = vrot.lane.b32.xlu0 %v2688, 24
        %v2776 = vpop.permute.xlu0 %2775
        %2777 = vrot.lane.b32.xlu0 %v2756, 24
        %v2778 = vpop.permute.xlu0 %2777
        %v2781 = vsel %vm897, %v2685, %v2760
        %v2782 = vsel %vm897, %v2753, %v2762
        %vm2783 = vcmask 130048
        %v2784 = vsel %vm2783, %v2781, %v2768
        %v2785 = vsel %vm2783, %v2782, %v2770
        %vm2786 = vcmask 195584
        %v2787 = vsel %vm2786, %v2784, %v2776
        %v2788 = vsel %vm2786, %v2785, %v2778
        %v2789 = vld [vmem:[%s5] sm:$0xff]
        %v2790 = vld [vmem:[%s5 + $0x8] sm:$0xff]
        %v2791 = vld [vmem:[%s5 + $0x10] sm:$0xff]
        %v2792 = vld [vmem:[%s5 + $0x18] sm:$0xff]
        %v2793 = vld [vmem:[%s6] sm:$0x1]
        %v2795 = vlaneseq
        %v2796 = vshrl.u32 %v2795, 7
        %v2797 = vsub.s32 0, %v2796
        %v2798 = vrot.slane %v2793, %v2797
        %v2801 = vsel %vm474, %v2787, 0
        %v2804 = vsel %vm474, %v2788, 0
        %2806 = vmatprep.subr.mxu0 0.0
        %2807 = vmatpush1.msra.mxu0 %v2789
        %2808 = vmatprep.subr.mxu0 0.0
        %2809 = vmatpush1.msra.mxu0 %v2790
        %2810 = vmatprep.subr.mxu0 0.0
        %2811 = vmatpush1.msra.mxu0 %v2791
        %2812 = vmatprep.subr.mxu0 0.0
        %2813 = vmatpush1.msra.mxu0 %v2792
        %2814 = vmatprep.subr.mxu0 0.0
        %2815 = vmatpush1.msra.mxu0 0.0
        %2816 = vmatprep.subr.mxu0 0.0
        %2817 = vmatpush1.msra.mxu0 0.0
        %2818 = vmatprep.subr.mxu0 0.0
        %2819 = vmatpush1.msra.mxu0 0.0
        %2820 = vmatprep.subr.mxu0 0.0
        %2821 = vmatpush1.msra.mxu0 0.0
        %2822 = vmatprep.subr.mxu0 0.0
        %2823 = vmatpush1.msra.mxu0 0.0
        %2824 = vmatprep.subr.mxu0 0.0
        %2825 = vmatpush1.msra.mxu0 0.0
        %2826 = vmatprep.subr.mxu0 0.0
        %2827 = vmatpush1.msra.mxu0 0.0
        %2828 = vmatprep.subr.mxu0 0.0
        %2829 = vmatpush1.msra.mxu0 0.0
        %2830 = vmatprep.subr.mxu0 0.0
        %2831 = vmatpush1.msra.mxu0 0.0
        %2832 = vmatprep.subr.mxu0 0.0
        %2833 = vmatpush1.msra.mxu0 0.0
        %2834 = vmatprep.subr.mxu0 0.0
        %2835 = vmatpush1.msra.mxu0 0.0
        %2836 = vmatprep.subr.mxu0 0.0
        %2837 = vmatpush1.msra.mxu0 0.0
        %2838 = vmatprep.subr.mxu0 0.0
        %2839 = vmatpush1.msra.mxu0 0.0
        %2840 = vmatprep.subr.mxu0 0.0
        %2841 = vmatpush1.msra.mxu0 0.0
        %2842 = vmatprep.subr.mxu0 0.0
        %2843 = vmatpush1.msra.mxu0 0.0
        %2844 = vmatprep.subr.mxu0 0.0
        %2845 = vmatpush1.msra.mxu0 0.0
        %2846 = vmatprep.subr.mxu0 0.0
        %2847 = vmatpush1.msra.mxu0 0.0
        %2848 = vmatprep.subr.mxu0 0.0
        %2849 = vmatpush1.msra.mxu0 0.0
        %2850 = vmatprep.subr.mxu0 0.0
        %2851 = vmatpush1.msra.mxu0 0.0
        %2852 = vmatprep.subr.mxu0 0.0
        %2853 = vmatpush1.msra.mxu0 0.0
        %2854 = vmatprep.subr.mxu0 0.0
        %2855 = vmatpush1.msra.mxu0 0.0
        %2856 = vmatprep.subr.mxu0 0.0
        %2857 = vmatpush1.msra.mxu0 0.0
        %2858 = vmatprep.subr.mxu0 0.0
        %2859 = vmatpush1.msra.mxu0 0.0
        %2860 = vmatprep.subr.mxu0 0.0
        %2861 = vmatpush1.msra.mxu0 0.0
        %2862 = vmatprep.subr.mxu0 0.0
        %2863 = vmatpush1.msra.mxu0 0.0
        %2864 = vmatprep.subr.mxu0 0.0
        %2865 = vmatpush1.msra.mxu0 0.0
        %2866 = vmatprep.subr.mxu0 0.0
        %2867 = vmatpush1.msra.mxu0 0.0
        %2868 = vmatprep.subr.mxu0 0.0
        %2869 = vmatpush1.msra.mxu0 0.0
        %2870 = vmatprep.mubr.f32.mxu0 0.0
        %2871 = vmatmul.mubr.f32.gmra.mrb[0].mxu0 %v2801
        %v2872 = vpop.f32.mrb[0].mxu0
        %v2873 = vadd.f32 %v2798, %v2872
        %v2874 = vpop.f32.mrb[0].mxu0
        %2875 = vmatprep.mubr.f32.mxu0 0.0
        %2876 = vmatmul.mubr.f32.gmra.mrb[0].mxu0 %v2804
        %v2877 = vpop.f32.mrb[0].mxu0
        %v2878 = vadd.f32 %v2798, %v2877
        %v2879 = vpop.f32.mrb[0].mxu0
        %2880 = vdwg.mxu0
        %v2881 = vadd.f32 %v472, %v2873
        %v2882 = vadd.f32 %v473, %v2878
        %v2883 = vld [vmem:[%s7] sm:$0x1]
        %v2884 = vld [vmem:[%s8] sm:$0x1]
        %v2885 = vsel %vm474, %v2881, 0.0
        %2886 = vadd.xlane.f32.xlu0 %v2885
        %v2887 = vpop.xlane.xlu0 %2886
        %v2888 = vsel %vm474, %v2882, 0.0
        %2889 = vadd.xlane.f32.xlu0 %v2888
        %v2890 = vpop.xlane.xlu0 %2889
        %v2891 = vmul.f32 %v2887, %v481
        %v2892 = vmul.f32 %v2890, %v481
        %v2893 = vsub.f32 %v2881, %v2891
        %v2894 = vsub.f32 %v2882, %v2892
        %v2895 = vmul.f32 %v2893, %v2893
        %v2896 = vmul.f32 %v2894, %v2894
        %v2897 = vsel %vm474, %v2895, 0.0
        %2898 = vadd.xlane.f32.xlu0 %v2897
        %v2899 = vpop.xlane.xlu0 %2898
        %v2900 = vsel %vm474, %v2896, 0.0
        %2901 = vadd.xlane.f32.xlu0 %v2900
        %v2902 = vpop.xlane.xlu0 %2901
        %v2903 = vmul.f32 %v2899, %v481
        %v2904 = vmul.f32 %v2902, %v481
        %v2905 = vadd.f32 %v2903, 1e-05
        %v2906 = vadd.f32 %v2904, 1e-05
        %v2907 = vrsqrt.pop %v2905
        %v2908 = vrsqrt.pop %v2906
        %v2909 = vmul.f32 %v2893, %v2907
        %v2910 = vmul.f32 %v2894, %v2908
        %v2912 = vlaneseq
        %v2913 = vshrl.u32 %v2912, 7
        %v2914 = vsub.s32 0, %v2913
        %v2915 = vrot.slane %v2883, %v2914
        %v2917 = vmul.f32 %v2909, %v2915
        %v2918 = vmul.f32 %v2910, %v2915
        %v2920 = vlaneseq
        %v2921 = vshrl.u32 %v2920, 7
        %v2922 = vsub.s32 0, %v2921
        %v2923 = vrot.slane %v2884, %v2922
        %v2925 = vadd.f32 %v2917, %v2923
        %v2926 = vadd.f32 %v2918, %v2923
        %v2927 = vld [vmem:[%s9] sm:$0xff]
        %v2928 = vld [vmem:[%s9 + $0x8] sm:$0xff]
        %v2929 = vld [vmem:[%s9 + $0x10] sm:$0xff]
        %v2930 = vld [vmem:[%s9 + $0x18] sm:$0xff]
        %v2931 = vld [vmem:[%s10] sm:$0x1]
        %v2933 = vlaneseq
        %v2934 = vshrl.u32 %v2933, 7
        %v2935 = vsub.s32 0, %v2934
        %v2936 = vrot.slane %v2931, %v2935
        %v2939 = vsel %vm474, %v2925, 0
        %v2942 = vsel %vm474, %v2926, 0
        %2944 = vmatprep.subr.mxu0 0.0
        %2945 = vmatpush1.msra.mxu0 %v2927
        %2946 = vmatprep.subr.mxu0 0.0
        %2947 = vmatpush1.msra.mxu0 %v2928
        %2948 = vmatprep.subr.mxu0 0.0
        %2949 = vmatpush1.msra.mxu0 %v2929
        %2950 = vmatprep.subr.mxu0 0.0
        %2951 = vmatpush1.msra.mxu0 %v2930
        %2952 = vmatprep.subr.mxu0 0.0
        %2953 = vmatpush1.msra.mxu0 0.0
        %2954 = vmatprep.subr.mxu0 0.0
        %2955 = vmatpush1.msra.mxu0 0.0
        %2956 = vmatprep.subr.mxu0 0.0
        %2957 = vmatpush1.msra.mxu0 0.0
        %2958 = vmatprep.subr.mxu0 0.0
        %2959 = vmatpush1.msra.mxu0 0.0
        %2960 = vmatprep.subr.mxu0 0.0
        %2961 = vmatpush1.msra.mxu0 0.0
        %2962 = vmatprep.subr.mxu0 0.0
        %2963 = vmatpush1.msra.mxu0 0.0
        %2964 = vmatprep.subr.mxu0 0.0
        %2965 = vmatpush1.msra.mxu0 0.0
        %2966 = vmatprep.subr.mxu0 0.0
        %2967 = vmatpush1.msra.mxu0 0.0
        %2968 = vmatprep.subr.mxu0 0.0
        %2969 = vmatpush1.msra.mxu0 0.0
        %2970 = vmatprep.subr.mxu0 0.0
        %2971 = vmatpush1.msra.mxu0 0.0
        %2972 = vmatprep.subr.mxu0 0.0
        %2973 = vmatpush1.msra.mxu0 0.0
        %2974 = vmatprep.subr.mxu0 0.0
        %2975 = vmatpush1.msra.mxu0 0.0
        %2976 = vmatprep.subr.mxu0 0.0
        %2977 = vmatpush1.msra.mxu0 0.0
        %2978 = vmatprep.subr.mxu0 0.0
        %2979 = vmatpush1.msra.mxu0 0.0
        %2980 = vmatprep.subr.mxu0 0.0
        %2981 = vmatpush1.msra.mxu0 0.0
        %2982 = vmatprep.subr.mxu0 0.0
        %2983 = vmatpush1.msra.mxu0 0.0
        %2984 = vmatprep.subr.mxu0 0.0
        %2985 = vmatpush1.msra.mxu0 0.0
        %2986 = vmatprep.subr.mxu0 0.0
        %2987 = vmatpush1.msra.mxu0 0.0
        %2988 = vmatprep.subr.mxu0 0.0
        %2989 = vmatpush1.msra.mxu0 0.0
        %2990 = vmatprep.subr.mxu0 0.0
        %2991 = vmatpush1.msra.mxu0 0.0
        %2992 = vmatprep.subr.mxu0 0.0
        %2993 = vmatpush1.msra.mxu0 0.0
        %2994 = vmatprep.subr.mxu0 0.0
        %2995 = vmatpush1.msra.mxu0 0.0
        %2996 = vmatprep.subr.mxu0 0.0
        %2997 = vmatpush1.msra.mxu0 0.0
        %2998 = vmatprep.subr.mxu0 0.0
        %2999 = vmatpush1.msra.mxu0 0.0
        %3000 = vmatprep.subr.mxu0 0.0
        %3001 = vmatpush1.msra.mxu0 0.0
        %3002 = vmatprep.subr.mxu0 0.0
        %3003 = vmatpush1.msra.mxu0 0.0
        %3004 = vmatprep.subr.mxu0 0.0
        %3005 = vmatpush1.msra.mxu0 0.0
        %3006 = vmatprep.subr.mxu0 0.0
        %3007 = vmatpush1.msra.mxu0 0.0
        %3008 = vmatprep.mubr.f32.mxu0 0.0
        %3009 = vmatmul.mubr.f32.gmra.mrb[0].mxu0 %v2939
        %v3010 = vpop.f32.mrb[0].mxu0
        %v3011 = vadd.f32 %v2936, %v3010
        %v3012 = vpop.f32.mrb[0].mxu0
        %3013 = vmatprep.mubr.f32.mxu0 0.0
        %3014 = vmatmul.mubr.f32.gmra.mrb[0].mxu0 %v2942
        %v3015 = vpop.f32.mrb[0].mxu0
        %v3016 = vadd.f32 %v2936, %v3015
        %v3017 = vpop.f32.mrb[0].mxu0
        %3018 = vdwg.mxu0
        %v3019 = vmax.f32 %v3011, 0.0
        %v3020 = vmax.f32 %v3016, 0.0
        %v3021 = vld [vmem:[%s11] sm:$0xff]
        %v3022 = vld [vmem:[%s11 + $0x8] sm:$0xff]
        %v3023 = vld [vmem:[%s11 + $0x10] sm:$0xff]
        %v3024 = vld [vmem:[%s11 + $0x18] sm:$0xff]
        %v3025 = vld [vmem:[%s11 + $0x20] sm:$0xff]
        %v3026 = vld [vmem:[%s11 + $0x28] sm:$0xff]
        %v3027 = vld [vmem:[%s11 + $0x30] sm:$0xff]
        %v3028 = vld [vmem:[%s11 + $0x38] sm:$0xff]
        %v3029 = vld [vmem:[%s11 + $0x40] sm:$0xff]
        %v3030 = vld [vmem:[%s11 + $0x48] sm:$0xff]
        %v3031 = vld [vmem:[%s11 + $0x50] sm:$0xff]
        %v3032 = vld [vmem:[%s11 + $0x58] sm:$0xff]
        %v3033 = vld [vmem:[%s11 + $0x60] sm:$0xff]
        %v3034 = vld [vmem:[%s11 + $0x68] sm:$0xff]
        %v3035 = vld [vmem:[%s11 + $0x70] sm:$0xff]
        %v3036 = vld [vmem:[%s11 + $0x78] sm:$0xff]
        %v3037 = vld [vmem:[%s12] sm:$0x1]
        %v3039 = vlaneseq
        %v3040 = vshrl.u32 %v3039, 7
        %v3041 = vsub.s32 0, %v3040
        %v3042 = vrot.slane %v3037, %v3041
        %3044 = vmatprep.subr.mxu0 0.0
        %3045 = vmatpush1.msra.mxu0 %v3021
        %3046 = vmatprep.subr.mxu0 0.0
        %3047 = vmatpush1.msra.mxu0 %v3022
        %3048 = vmatprep.subr.mxu0 0.0
        %3049 = vmatpush1.msra.mxu0 %v3023
        %3050 = vmatprep.subr.mxu0 0.0
        %3051 = vmatpush1.msra.mxu0 %v3024
        %3052 = vmatprep.subr.mxu0 0.0
        %3053 = vmatpush1.msra.mxu0 %v3025
        %3054 = vmatprep.subr.mxu0 0.0
        %3055 = vmatpush1.msra.mxu0 %v3026
        %3056 = vmatprep.subr.mxu0 0.0
        %3057 = vmatpush1.msra.mxu0 %v3027
        %3058 = vmatprep.subr.mxu0 0.0
        %3059 = vmatpush1.msra.mxu0 %v3028
        %3060 = vmatprep.subr.mxu0 0.0
        %3061 = vmatpush1.msra.mxu0 %v3029
        %3062 = vmatprep.subr.mxu0 0.0
        %3063 = vmatpush1.msra.mxu0 %v3030
        %3064 = vmatprep.subr.mxu0 0.0
        %3065 = vmatpush1.msra.mxu0 %v3031
        %3066 = vmatprep.subr.mxu0 0.0
        %3067 = vmatpush1.msra.mxu0 %v3032
        %3068 = vmatprep.subr.mxu0 0.0
        %3069 = vmatpush1.msra.mxu0 %v3033
        %3070 = vmatprep.subr.mxu0 0.0
        %3071 = vmatpush1.msra.mxu0 %v3034
        %3072 = vmatprep.subr.mxu0 0.0
        %3073 = vmatpush1.msra.mxu0 %v3035
        %3074 = vmatprep.subr.mxu0 0.0
        %3075 = vmatpush1.msra.mxu0 %v3036
        %3076 = vmatprep.subr.mxu0 0.0
        %3077 = vmatpush1.msra.mxu0 0.0
        %3078 = vmatprep.subr.mxu0 0.0
        %3079 = vmatpush1.msra.mxu0 0.0
        %3080 = vmatprep.subr.mxu0 0.0
        %3081 = vmatpush1.msra.mxu0 0.0
        %3082 = vmatprep.subr.mxu0 0.0
        %3083 = vmatpush1.msra.mxu0 0.0
        %3084 = vmatprep.subr.mxu0 0.0
        %3085 = vmatpush1.msra.mxu0 0.0
        %3086 = vmatprep.subr.mxu0 0.0
        %3087 = vmatpush1.msra.mxu0 0.0
        %3088 = vmatprep.subr.mxu0 0.0
        %3089 = vmatpush1.msra.mxu0 0.0
        %3090 = vmatprep.subr.mxu0 0.0
        %3091 = vmatpush1.msra.mxu0 0.0
        %3092 = vmatprep.subr.mxu0 0.0
        %3093 = vmatpush1.msra.mxu0 0.0
        %3094 = vmatprep.subr.mxu0 0.0
        %3095 = vmatpush1.msra.mxu0 0.0
        %3096 = vmatprep.subr.mxu0 0.0
        %3097 = vmatpush1.msra.mxu0 0.0
        %3098 = vmatprep.subr.mxu0 0.0
        %3099 = vmatpush1.msra.mxu0 0.0
        %3100 = vmatprep.subr.mxu0 0.0
        %3101 = vmatpush1.msra.mxu0 0.0
        %3102 = vmatprep.subr.mxu0 0.0
        %3103 = vmatpush1.msra.mxu0 0.0
        %3104 = vmatprep.subr.mxu0 0.0
        %3105 = vmatpush1.msra.mxu0 0.0
        %3106 = vmatprep.subr.mxu0 0.0
        %3107 = vmatpush1.msra.mxu0 0.0
        %3108 = vmatprep.mubr.f32.mxu0 0.0
        %3109 = vmatmul.mubr.f32.gmra.mrb[0].mxu0 %v3019
        %v3110 = vpop.f32.mrb[0].mxu0
        %v3111 = vadd.f32 %v3042, %v3110
        %v3112 = vpop.f32.mrb[0].mxu0
        %3113 = vmatprep.mubr.f32.mxu0 0.0
        %3114 = vmatmul.mubr.f32.gmra.mrb[0].mxu0 %v3020
        %v3115 = vpop.f32.mrb[0].mxu0
        %v3116 = vadd.f32 %v3042, %v3115
        %v3117 = vpop.f32.mrb[0].mxu0
        %3118 = vdwg.mxu0
        %v3119 = vadd.f32 %v2881, %v3111
        %v3120 = vadd.f32 %v2882, %v3116
        %3121 = vst.msk [vmem:[%s458] sm:$0xff] %vm474, %v3119
        %3122 = vst.msk [vmem:[%s458 + $0x8] sm:$0xff] %vm474, %v3120
        %s3123 = sand.u32 %s329, 1
        %s3124 = scalar_lea.sflag [#allocation5], %s3123
        %s3125 = sand.u32 %s329, 1
        %s3126 = smul.addr %s3125, 16
        %s3127 = scalar_lea.vmem [#allocation4], %s3126
        // Predicated region
        $region80: #{tpu_custom_call.1} parent=71 // pred_check
          %p3128 = pneg %p339
        $region81: #{tpu_custom_call.1} parent=71 // pred_check_branch
          %3130 = sbr.rel (%p3128) target = $region83
        $region82: #{tpu_custom_call.1} parent=71 // pred_region
          %s3131 = smul.u32 2, %s32
          %s3133 = ssub.s32 256, 256
          %3134 = vsyncadd %s3124, %s3133
          %s3135 = smul.addr %s31, 2
          %s3136 = sadd.s32 %s3131, %s3135
          %s3137 = smul.addr %s3136, 128
          %s3138 = scalar_lea.hbm %s13, %s3137
          %s3139 = sshll.u32 %s3127, 4
          %s3140 = int_to_ptr.vmem [resolvable:$true] %s3139
          %3145 = dma.vmem_to_hbm [thread:$0]  %s3140, 256, %s3138, %s3124, 128, 128, 8
        $region83: #{tpu_custom_call.1} parent=71 // pred_fallthru
          _
      $region72: #{tpu_custom_call.1} parent=5 // pred_fallthru
        _
      %p3146 = scmp.le.s32.totalorder 2, %s22
      // Predicated region
      $region84: #{tpu_custom_call.1} parent=5 // pred_check
        %p3147 = pneg %p3146
      $region85: #{tpu_custom_call.1} parent=5 // pred_check_branch
        %3149 = sbr.rel (%p3147) target = $region87
      $region86: #{tpu_custom_call.1} parent=5 // pred_region
        %s3150 = ssub.s32 %s22, 2
        // Predicated region
        $region88: #{tpu_custom_call.1} parent=86 // pred_check
          %p3151 = pneg %p345
        $region89: #{tpu_custom_call.1} parent=86 // pred_check_branch
          %3153 = sbr.rel (%p3151) target = $region91
        $region90: #{tpu_custom_call.1} parent=86 // pred_region
          %s3154 = sand.u32 %s330, 1
          %s3155 = scalar_lea.sflag [#allocation5], %s3154
          %s3156 = sand.u32 %s330, 1
          %s3157 = smul.addr %s3156, 16
          %s3158 = scalar_lea.vmem [#allocation4], %s3157
          %3159 = dma.done %s3155, 256
        $region91: #{tpu_custom_call.1} parent=86 // pred_fallthru
          _
      $region87: #{tpu_custom_call.1} parent=5 // pred_fallthru
        _
    $region6: #{tpu_custom_call.1} parent=1 // loop_footer
      %s26 = sadd.s32 1, %s22
    $region7: #{tpu_custom_call.1} parent=1 // loop_footer_branch
      %21 = sbr.rel target = $region3
    $region8: #{tpu_custom_call.1} parent=1 // loop_exit
      _
    %3160 = vsyncpa [#allocation5], 1
    %s3161 = scalar_lea.sflag [#allocation5], 1
    %3162 = vsyncpa %s3161, 1

</llo_original>
